<compile_context>
chip_gen: v7x
topology: tpu7x:2x2x1
jax: 0.10.0
libtpu: 0.0.40
codegen_flags: <defaults>
</compile_context>

<pallas_src>
import jax
import jax.numpy as jnp
from jax import lax
from jax.experimental import pallas as pl
from jax.experimental.pallas import tpu as pltpu

EPS = 1e-5    # nn.BatchNorm2d default
LANE = 128
WOFF = 8      # sublane-aligned W offset of the halo interior


def _round_up(n, m=LANE):
    return ((n + m - 1) // m) * m


def _full_spec(shape, *, single_buffer=True):
    nd = len(shape)
    index_map = lambda i, _nd=nd: (0,) * _nd
    if single_buffer:
        # grid=(1,): the block index never changes, so double-buffering buys
        # nothing and doubles VMEM -- request a single buffer.
        return pl.BlockSpec(shape, index_map, pipeline_mode=pl.Buffered(1))
    return pl.BlockSpec(shape, index_map)


# ----------------------------- in-kernel helpers -----------------------------
def _bn_train(acc, gamma, beta):
    """Train-mode BatchNorm over rows (N*H*W) per channel, centred variance."""
    inv_m = 1.0 / acc.shape[0]
    mean = jnp.sum(acc, axis=0, keepdims=True) * inv_m
    diff = acc - mean
    var = jnp.sum(diff * diff, axis=0, keepdims=True) * inv_m   # biased variance
    return diff * (lax.rsqrt(var + EPS) * gamma) + beta


def _stage_halo(dst_ref, interior, N, Ho, Wo):
    """Stage `interior` (N,Ho,Wo,C) into dst rows [1,Ho], cols [WOFF, WOFF+Wo).

    Only the 1-pixel halo border the 3x3 taps actually read is zeroed (4 thin
    strips); the interior store is sublane-aligned (col offset 8)."""
    C = dst_ref.shape[-1]
    dt = dst_ref.dtype
    zrow = jnp.zeros((N, 1, dst_ref.shape[2], C), dt)
    dst_ref[:, 0:1, :, :] = zrow                                             # top halo row
    dst_ref[:, Ho + 1:Ho + 2, :, :] = zrow                                   # bottom halo row
    dst_ref[:, 1:Ho + 1, 0:WOFF, :] = jnp.zeros((N, Ho, WOFF, C), dt)        # left pad (incl. halo col)
    dst_ref[:, 1:Ho + 1, WOFF + Wo:WOFF + Wo + 1, :] = jnp.zeros((N, Ho, 1, C), dt)  # right halo col
    dst_ref[:, 1:Ho + 1, WOFF:WOFF + Wo, :] = interior.astype(dt)            # aligned interior store


def _conv3x3(xp_ref, w_ref, N, Ho, Wo):
    """3x3 conv as 9 accumulated bf16 matmuls (no im2col transient).

    xp_ref: (N, Ho+2, WOFF+Wo+1, Cin) bf16 halo buffer; w_ref: (9, Cin, Cout) bf16."""
    cin = xp_ref.shape[-1]
    cout = w_ref.shape[-1]
    M = N * Ho * Wo
    acc = jnp.zeros((M, cout), jnp.float32)
    for t in range(9):
        dy, dx = t // 3, t % 3
        c0 = WOFF - 1 + dx
        tap = xp_ref[:, dy:dy + Ho, c0:c0 + Wo, :].reshape(M, cin)   # bf16 load
        acc = acc + jnp.dot(tap, w_ref[t], preferred_element_type=jnp.float32)
    return acc


def _down_body(x_ref, w1_ref, g1_ref, b1_ref, w2_ref, g2_ref, b2_ref,
               o_ref, xp1_ref, xp2_ref, res_fn):
    N, Ho, Wo, cout = o_ref.shape
    M = N * Ho * Wo

    # ---- MaxPool2d(2), fused into the conv input staging ----
    a = x_ref[:, pl.ds(0, Ho, 2), pl.ds(0, Wo, 2), :]
    b = x_ref[:, pl.ds(0, Ho, 2), pl.ds(1, Wo, 2), :]
    c = x_ref[:, pl.ds(1, Ho, 2), pl.ds(0, Wo, 2), :]
    d = x_ref[:, pl.ds(1, Ho, 2), pl.ds(1, Wo, 2), :]
    pooled = jnp.maximum(jnp.maximum(a, b), jnp.maximum(c, d))
    _stage_halo(xp1_ref, pooled, N, Ho, Wo)
    # `pooled` is dead here; the residual is re-sliced from xp1_ref below so the
    # full (N,Ho,Wo,Cin) value is not held live across the two conv matmuls.

    # ---- conv1 => BN(train) => ReLU ----
    y1 = jnp.maximum(_bn_train(_conv3x3(xp1_ref, w1_ref, N, Ho, Wo),
                               g1_ref[...], b1_ref[...]), 0.0)
    _stage_halo(xp2_ref, y1.reshape(N, Ho, Wo, cout), N, Ho, Wo)

    # ---- conv2 => BN(train) => ReLU ----
    y2 = jnp.maximum(_bn_train(_conv3x3(xp2_ref, w2_ref, N, Ho, Wo),
                               g2_ref[...], b2_ref[...]), 0.0)

    # ---- residual (added after the 2nd ReLU, matching the PyTorch module) ----
    cin = xp1_ref.shape[-1]
    res_in = xp1_ref[:, 1:Ho + 1, WOFF:WOFF + Wo, :].reshape(M, cin)  # pooled (bf16)
    o_ref[...] = (y2 + res_fn(res_in)).reshape(N, Ho, Wo, cout)


def _down_kernel_identity(x_ref, w1_ref, g1_ref, b1_ref,
                          w2_ref, g2_ref, b2_ref,
                          o_ref, xp1_ref, xp2_ref):
    _down_body(x_ref, w1_ref, g1_ref, b1_ref, w2_ref, g2_ref, b2_ref,
               o_ref, xp1_ref, xp2_ref,
               res_fn=lambda r: r.astype(jnp.float32))


def _down_kernel_proj(x_ref, w1_ref, g1_ref, b1_ref,
                      w2_ref, g2_ref, b2_ref,
                      wc_ref, gc_ref, bc_ref,
                      o_ref, xp1_ref, xp2_ref):
    def res_fn(pooled_bf16):
        r = jnp.dot(pooled_bf16, wc_ref[...], preferred_element_type=jnp.float32)
        return _bn_train(r, gc_ref[...], bc_ref[...])   # 1x1 conv + BN, no ReLU
    _down_body(x_ref, w1_ref, g1_ref, b1_ref, w2_ref, g2_ref, b2_ref,
               o_ref, xp1_ref, xp2_ref, res_fn=res_fn)


# ----------------------------- parameter prep --------------------------------
def _prep_w3x3(w, cin_p, cout_p):
    # (3,3,Cin,Cout) HWIO -> channel-padded (9, Cin_p, Cout_p) bf16 (one slab per tap).
    kh, kw, cin, cout = w.shape
    wp = jnp.zeros((kh * kw, cin_p, cout_p), jnp.float32)
    wp = wp.at[:, :cin, :cout].set(w.reshape(kh * kw, cin, cout))
    return wp.astype(jnp.bfloat16)


def _prep_w1x1(w, cin_p, cout_p):
    cin, cout = w.shape
    wp = jnp.zeros((cin_p, cout_p), jnp.float32).at[:cin, :cout].set(w)
    return wp.astype(jnp.bfloat16)


def _prep_vec(v, cout_p):
    return jnp.zeros((1, cout_p), jnp.float32).at[:, :v.shape[-1]].set(v)


def init_down_params(key, in_ch, out_ch):
    ks = jax.random.split(key, 11)
    n = jax.random.normal
    return {
        # conv weights stored HWIO (== PyTorch OIHW transposed)
        "w1": 0.1 * n(ks[0], (3, 3, in_ch, out_ch), jnp.float32),
        "b1": 0.1 * n(ks[1], (1, out_ch), jnp.float32),   # cancelled by train-mode BN
        "g1": 1.0 + 0.1 * n(ks[2], (1, out_ch), jnp.float32),
        "beta1": 0.1 * n(ks[3], (1, out_ch), jnp.float32),
        "w2": 0.1 * n(ks[4], (3, 3, out_ch, out_ch), jnp.float32),
        "b2": 0.1 * n(ks[5], (1, out_ch), jnp.float32),   # cancelled by train-mode BN
        "g2": 1.0 + 0.1 * n(ks[6], (1, out_ch), jnp.float32),
        "beta2": 0.1 * n(ks[7], (1, out_ch), jnp.float32),
        "wc": 0.1 * n(ks[8], (in_ch, out_ch), jnp.float32),  # 1x1, bias=False
        "gc": 1.0 + 0.1 * n(ks[9], (1, out_ch), jnp.float32),
        "betac": 0.1 * n(ks[10], (1, out_ch), jnp.float32),
    }


# -------------------------------- forward ------------------------------------
def down_forward(x_nchw, p):
    N, in_ch, H, W = x_nchw.shape
    assert H % 2 == 0 and W % 2 == 0, "MaxPool2d(2) path assumes even H, W"
    out_ch = p["w1"].shape[-1]
    Ho, Wo = H // 2, W // 2
    cin_p, cout_p = _round_up(in_ch), _round_up(out_ch)

    # NCHW -> NHWC; lane-pad channels to a multiple of 128 (lane-dense stores).
    x = jnp.transpose(x_nchw, (0, 2, 3, 1))
    x = jnp.pad(x, ((0, 0), (0, 0), (0, 0), (0, cin_p - in_ch)))

    # Conv biases b1/b2 are exactly cancelled by train-mode BN mean subtraction
    # -> not passed to the kernel (dead compute / dead DMA).
    args = [x,
            _prep_w3x3(p["w1"], cin_p, cout_p),
            _prep_vec(p["g1"], cout_p), _prep_vec(p["beta1"], cout_p),
            _prep_w3x3(p["w2"], cout_p, cout_p),
            _prep_vec(p["g2"], cout_p), _prep_vec(p["beta2"], cout_p)]
    proj = in_ch != out_ch
    if proj:
        args += [_prep_w1x1(p["wc"], cin_p, cout_p),
                 _prep_vec(p["gc"], cout_p), _prep_vec(p["betac"], cout_p)]
        kernel = _down_kernel_proj
    else:
        kernel = _down_kernel_identity

    out_shape = (N, Ho, Wo, cout_p)
    halo_w = WOFF + Wo + 1
    scratch = [pltpu.VMEM((N, Ho + 2, halo_w, cin_p), jnp.bfloat16),   # padded pooled input
               pltpu.VMEM((N, Ho + 2, halo_w, cout_p), jnp.bfloat16)]  # padded y1

    # VMEM budget derived from actual buffer sizes (single-buffered inputs,
    # double-buffered output, bf16 scratch) + generous headroom, capped well
    # below physical VMEM on every generation.
    in_bytes = sum(a.size * a.dtype.itemsize for a in args)
    out_bytes = N * Ho * Wo * cout_p * 4
    scratch_bytes = N * (Ho + 2) * halo_w * (cin_p + cout_p) * 2
    need = in_bytes + 2 * out_bytes + scratch_bytes
    vmem_limit = int(min(max(4 * need + (4 << 20), 16 << 20), 64 << 20))

    M = N * Ho * Wo
    flops = 2 * M * 9 * (cin_p * cout_p + cout_p * cout_p)
    if proj:
        flops += 2 * M * cin_p * cout_p
    cost = pl.CostEstimate(flops=flops, transcendentals=4 * cout_p,
                           bytes_accessed=in_bytes + out_bytes)

    out = pl.pallas_call(
        kernel,
        grid=(1,),
        in_specs=[_full_spec(a.shape) for a in args],
        out_specs=_full_spec(out_shape, single_buffer=False),
        out_shape=jax.ShapeDtypeStruct(out_shape, jnp.float32),
        scratch_shapes=scratch,
        compiler_params=pltpu.CompilerParams(
            dimension_semantics=("arbitrary",),
            vmem_limit_bytes=vmem_limit,
        ),
        cost_estimate=cost,
    )(*args)

    return jnp.transpose(out[..., :out_ch], (0, 3, 1, 2))   # NHWC -> NCHW


if __name__ == "__main__":
    key = jax.random.PRNGKey(0)
    kx, kp = jax.random.split(key)
    N, in_ch, H, W, out_ch = 2, 4, 16, 16, 8
    x = jax.random.uniform(kx, (N, in_ch, H, W), jnp.float32)  # NCHW like torch
    params = init_down_params(kp, in_ch, out_ch)
    y = jax.jit(down_forward)(x, params)
    jax.block_until_ready(y)
    assert y.shape == (N, out_ch, H // 2, W // 2), y.shape
    print("KERNEL_OK")
</pallas_src>

<mosaic_0001>
module attributes {stable_mosaic.version = 11 : i64} {
  func.func @_down_kernel_proj(%arg0: i32, %arg1: memref<2x16x16x128xf32, #tpu.memory_space<vmem>>, %arg2: memref<9x128x128xbf16, #tpu.memory_space<vmem>>, %arg3: memref<1x128xf32, #tpu.memory_space<vmem>>, %arg4: memref<1x128xf32, #tpu.memory_space<vmem>>, %arg5: memref<9x128x128xbf16, #tpu.memory_space<vmem>>, %arg6: memref<1x128xf32, #tpu.memory_space<vmem>>, %arg7: memref<1x128xf32, #tpu.memory_space<vmem>>, %arg8: memref<128x128xbf16, #tpu.memory_space<vmem>>, %arg9: memref<1x128xf32, #tpu.memory_space<vmem>>, %arg10: memref<1x128xf32, #tpu.memory_space<vmem>>, %arg11: memref<2x8x8x128xf32, #tpu.memory_space<vmem>>, %arg12: memref<2x10x17x128xbf16, #tpu.memory_space<vmem>>, %arg13: memref<2x10x17x128xbf16, #tpu.memory_space<vmem>>) attributes {dimension_semantics = [#tpu.dimension_semantics<arbitrary>], iteration_bounds = array<i64: 1>, scalar_prefetch = 0 : i64, scratch_operands = 2 : i64, tpu.core_type = #tpu.core_type<tc>, window_params = [{pipeline_mode = #tpu.pipeline_mode<synchronous>, transform_indices = @transform_0, window_bounds = array<i64: 2, 16, 16, 128>}, {pipeline_mode = #tpu.pipeline_mode<synchronous>, transform_indices = @transform_1, window_bounds = array<i64: 9, 128, 128>}, {pipeline_mode = #tpu.pipeline_mode<synchronous>, transform_indices = @transform_2, window_bounds = array<i64: 1, 128>}, {pipeline_mode = #tpu.pipeline_mode<synchronous>, transform_indices = @transform_3, window_bounds = array<i64: 1, 128>}, {pipeline_mode = #tpu.pipeline_mode<synchronous>, transform_indices = @transform_4, window_bounds = array<i64: 9, 128, 128>}, {pipeline_mode = #tpu.pipeline_mode<synchronous>, transform_indices = @transform_5, window_bounds = array<i64: 1, 128>}, {pipeline_mode = #tpu.pipeline_mode<synchronous>, transform_indices = @transform_6, window_bounds = array<i64: 1, 128>}, {pipeline_mode = #tpu.pipeline_mode<synchronous>, transform_indices = @transform_7, window_bounds = array<i64: 128, 128>}, {pipeline_mode = #tpu.pipeline_mode<synchronous>, transform_indices = @transform_8, window_bounds = array<i64: 1, 128>}, {pipeline_mode = #tpu.pipeline_mode<synchronous>, transform_indices = @transform_9, window_bounds = array<i64: 1, 128>}, {pipeline_mode = #tpu.pipeline_mode<synchronous>, transform_indices = @transform_10, window_bounds = array<i64: 2, 8, 8, 128>}]} {
    %c0 = arith.constant 0 : index
    %c0_0 = arith.constant 0 : index
    %c0_1 = arith.constant 0 : index
    %c0_2 = arith.constant 0 : index
    %0 = tpu.strided_load %arg1[%c0, %c0_0, %c0_1, %c0_2] {strides = array<i32: 1, 2, 2, 1>} : memref<2x16x16x128xf32, #tpu.memory_space<vmem>>, vector<2x8x8x128xf32>
    %c0_3 = arith.constant 0 : index
    %c0_4 = arith.constant 0 : index
    %c1 = arith.constant 1 : index
    %c0_5 = arith.constant 0 : index
    %1 = tpu.strided_load %arg1[%c0_3, %c0_4, %c1, %c0_5] {strides = array<i32: 1, 2, 2, 1>} : memref<2x16x16x128xf32, #tpu.memory_space<vmem>>, vector<2x8x8x128xf32>
    %c0_6 = arith.constant 0 : index
    %c1_7 = arith.constant 1 : index
    %c0_8 = arith.constant 0 : index
    %c0_9 = arith.constant 0 : index
    %2 = tpu.strided_load %arg1[%c0_6, %c1_7, %c0_8, %c0_9] {strides = array<i32: 1, 2, 2, 1>} : memref<2x16x16x128xf32, #tpu.memory_space<vmem>>, vector<2x8x8x128xf32>
    %c0_10 = arith.constant 0 : index
    %c1_11 = arith.constant 1 : index
    %c1_12 = arith.constant 1 : index
    %c0_13 = arith.constant 0 : index
    %3 = tpu.strided_load %arg1[%c0_10, %c1_11, %c1_12, %c0_13] {strides = array<i32: 1, 2, 2, 1>} : memref<2x16x16x128xf32, #tpu.memory_space<vmem>>, vector<2x8x8x128xf32>
    %4 = arith.maximumf %0, %1 : vector<2x8x8x128xf32>
    %5 = arith.maximumf %2, %3 : vector<2x8x8x128xf32>
    %6 = arith.maximumf %4, %5 : vector<2x8x8x128xf32>
    %cst = arith.constant 0.000000e+00 : bf16
    %7 = vector.broadcast %cst : bf16 to vector<2x1x17x128xbf16>
    %c0_14 = arith.constant 0 : index
    %c0_15 = arith.constant 0 : index
    %c0_16 = arith.constant 0 : index
    %c0_17 = arith.constant 0 : index
    %8 = vector.load %arg12[%c0_14, %c0_15, %c0_16, %c0_17] : memref<2x10x17x128xbf16, #tpu.memory_space<vmem>>, vector<2x1x17x128xbf16>
    tpu.vector_store %arg12[%c0_14, %c0_15, %c0_16, %c0_17], %7 {strides = array<i32>} : memref<2x10x17x128xbf16, #tpu.memory_space<vmem>>, vector<2x1x17x128xbf16>,
    %c0_18 = arith.constant 0 : index
    %c9 = arith.constant 9 : index
    %c0_19 = arith.constant 0 : index
    %c0_20 = arith.constant 0 : index
    %9 = vector.load %arg12[%c0_18, %c9, %c0_19, %c0_20] : memref<2x10x17x128xbf16, #tpu.memory_space<vmem>>, vector<2x1x17x128xbf16>
    tpu.vector_store %arg12[%c0_18, %c9, %c0_19, %c0_20], %7 {strides = array<i32>} : memref<2x10x17x128xbf16, #tpu.memory_space<vmem>>, vector<2x1x17x128xbf16>,
    %cst_21 = arith.constant 0.000000e+00 : bf16
    %10 = vector.broadcast %cst_21 : bf16 to vector<2x8x8x128xbf16>
    %c0_22 = arith.constant 0 : index
    %c1_23 = arith.constant 1 : index
    %c0_24 = arith.constant 0 : index
    %c0_25 = arith.constant 0 : index
    %11 = vector.load %arg12[%c0_22, %c1_23, %c0_24, %c0_25] : memref<2x10x17x128xbf16, #tpu.memory_space<vmem>>, vector<2x8x8x128xbf16>
    tpu.vector_store %arg12[%c0_22, %c1_23, %c0_24, %c0_25], %10 {strides = array<i32>} : memref<2x10x17x128xbf16, #tpu.memory_space<vmem>>, vector<2x8x8x128xbf16>,
    %cst_26 = arith.constant 0.000000e+00 : bf16
    %12 = vector.broadcast %cst_26 : bf16 to vector<2x8x1x128xbf16>
    %c0_27 = arith.constant 0 : index
    %c1_28 = arith.constant 1 : index
    %c16 = arith.constant 16 : index
    %c0_29 = arith.constant 0 : index
    %13 = vector.load %arg12[%c0_27, %c1_28, %c16, %c0_29] : memref<2x10x17x128xbf16, #tpu.memory_space<vmem>>, vector<2x8x1x128xbf16>
    tpu.vector_store %arg12[%c0_27, %c1_28, %c16, %c0_29], %12 {strides = array<i32>} : memref<2x10x17x128xbf16, #tpu.memory_space<vmem>>, vector<2x8x1x128xbf16>,
    %14 = arith.truncf %6 : vector<2x8x8x128xf32> to vector<2x8x8x128xbf16>
    %c0_30 = arith.constant 0 : index
    %c1_31 = arith.constant 1 : index
    %c8 = arith.constant 8 : index
    %c0_32 = arith.constant 0 : index
    %15 = vector.load %arg12[%c0_30, %c1_31, %c8, %c0_32] : memref<2x10x17x128xbf16, #tpu.memory_space<vmem>>, vector<2x8x8x128xbf16>
    tpu.vector_store %arg12[%c0_30, %c1_31, %c8, %c0_32], %14 {strides = array<i32>} : memref<2x10x17x128xbf16, #tpu.memory_space<vmem>>, vector<2x8x8x128xbf16>,
    %cst_33 = arith.constant 0.000000e+00 : f32
    %16 = vector.broadcast %cst_33 : f32 to vector<128x128xf32>
    %c0_34 = arith.constant 0 : index
    %c0_35 = arith.constant 0 : index
    %c7 = arith.constant 7 : index
    %c0_36 = arith.constant 0 : index
    %17 = vector.load %arg12[%c0_34, %c0_35, %c7, %c0_36] : memref<2x10x17x128xbf16, #tpu.memory_space<vmem>>, vector<2x8x8x128xbf16>
    %18 = vector.shape_cast %17 : vector<2x8x8x128xbf16> to vector<128x128xbf16>
    %c0_37 = arith.constant 0 : index
    %c0_38 = arith.constant 0 : index
    %c0_39 = arith.constant 0 : index
    %19 = vector.load %arg2[%c0_37, %c0_38, %c0_39] : memref<9x128x128xbf16, #tpu.memory_space<vmem>>, vector<1x128x128xbf16>
    %20 = vector.shape_cast %19 : vector<1x128x128xbf16> to vector<128x128xbf16>
    %cst_40 = arith.constant dense<0.000000e+00> : vector<128x128xf32>
    %21 = tpu.matmul %18, %20, %cst_40 {dimension_numbers = #tpu.dot_dimension_numbers<[1], [0], [0], [1], [0, 0, 1, 1], [], []>} : vector<128x128xbf16>, vector<128x128xbf16>, vector<128x128xf32> -> vector<128x128xf32>
    %22 = arith.addf %16, %21 : vector<128x128xf32>
    %c0_41 = arith.constant 0 : index
    %c0_42 = arith.constant 0 : index
    %c8_43 = arith.constant 8 : index
    %c0_44 = arith.constant 0 : index
    %23 = vector.load %arg12[%c0_41, %c0_42, %c8_43, %c0_44] : memref<2x10x17x128xbf16, #tpu.memory_space<vmem>>, vector<2x8x8x128xbf16>
    %24 = vector.shape_cast %23 : vector<2x8x8x128xbf16> to vector<128x128xbf16>
    %c1_45 = arith.constant 1 : index
    %c0_46 = arith.constant 0 : index
    %c0_47 = arith.constant 0 : index
    %25 = vector.load %arg2[%c1_45, %c0_46, %c0_47] : memref<9x128x128xbf16, #tpu.memory_space<vmem>>, vector<1x128x128xbf16>
    %26 = vector.shape_cast %25 : vector<1x128x128xbf16> to vector<128x128xbf16>
    %cst_48 = arith.constant dense<0.000000e+00> : vector<128x128xf32>
    %27 = tpu.matmul %24, %26, %cst_48 {dimension_numbers = #tpu.dot_dimension_numbers<[1], [0], [0], [1], [0, 0, 1, 1], [], []>} : vector<128x128xbf16>, vector<128x128xbf16>, vector<128x128xf32> -> vector<128x128xf32>
    %28 = arith.addf %22, %27 : vector<128x128xf32>
    %c0_49 = arith.constant 0 : index
    %c0_50 = arith.constant 0 : index
    %c9_51 = arith.constant 9 : index
    %c0_52 = arith.constant 0 : index
    %29 = vector.load %arg12[%c0_49, %c0_50, %c9_51, %c0_52] : memref<2x10x17x128xbf16, #tpu.memory_space<vmem>>, vector<2x8x8x128xbf16>
    %30 = vector.shape_cast %29 : vector<2x8x8x128xbf16> to vector<128x128xbf16>
    %c2 = arith.constant 2 : index
    %c0_53 = arith.constant 0 : index
    %c0_54 = arith.constant 0 : index
    %31 = vector.load %arg2[%c2, %c0_53, %c0_54] : memref<9x128x128xbf16, #tpu.memory_space<vmem>>, vector<1x128x128xbf16>
    %32 = vector.shape_cast %31 : vector<1x128x128xbf16> to vector<128x128xbf16>
    %cst_55 = arith.constant dense<0.000000e+00> : vector<128x128xf32>
    %33 = tpu.matmul %30, %32, %cst_55 {dimension_numbers = #tpu.dot_dimension_numbers<[1], [0], [0], [1], [0, 0, 1, 1], [], []>} : vector<128x128xbf16>, vector<128x128xbf16>, vector<128x128xf32> -> vector<128x128xf32>
    %34 = arith.addf %28, %33 : vector<128x128xf32>
    %c0_56 = arith.constant 0 : index
    %c1_57 = arith.constant 1 : index
    %c7_58 = arith.constant 7 : index
    %c0_59 = arith.constant 0 : index
    %35 = vector.load %arg12[%c0_56, %c1_57, %c7_58, %c0_59] : memref<2x10x17x128xbf16, #tpu.memory_space<vmem>>, vector<2x8x8x128xbf16>
    %36 = vector.shape_cast %35 : vector<2x8x8x128xbf16> to vector<128x128xbf16>
    %c3 = arith.constant 3 : index
    %c0_60 = arith.constant 0 : index
    %c0_61 = arith.constant 0 : index
    %37 = vector.load %arg2[%c3, %c0_60, %c0_61] : memref<9x128x128xbf16, #tpu.memory_space<vmem>>, vector<1x128x128xbf16>
    %38 = vector.shape_cast %37 : vector<1x128x128xbf16> to vector<128x128xbf16>
    %cst_62 = arith.constant dense<0.000000e+00> : vector<128x128xf32>
    %39 = tpu.matmul %36, %38, %cst_62 {dimension_numbers = #tpu.dot_dimension_numbers<[1], [0], [0], [1], [0, 0, 1, 1], [], []>} : vector<128x128xbf16>, vector<128x128xbf16>, vector<128x128xf32> -> vector<128x128xf32>
    %40 = arith.addf %34, %39 : vector<128x128xf32>
    %c0_63 = arith.constant 0 : index
    %c1_64 = arith.constant 1 : index
    %c8_65 = arith.constant 8 : index
    %c0_66 = arith.constant 0 : index
    %41 = vector.load %arg12[%c0_63, %c1_64, %c8_65, %c0_66] : memref<2x10x17x128xbf16, #tpu.memory_space<vmem>>, vector<2x8x8x128xbf16>
    %42 = vector.shape_cast %41 : vector<2x8x8x128xbf16> to vector<128x128xbf16>
    %c4 = arith.constant 4 : index
    %c0_67 = arith.constant 0 : index
    %c0_68 = arith.constant 0 : index
    %43 = vector.load %arg2[%c4, %c0_67, %c0_68] : memref<9x128x128xbf16, #tpu.memory_space<vmem>>, vector<1x128x128xbf16>
    %44 = vector.shape_cast %43 : vector<1x128x128xbf16> to vector<128x128xbf16>
    %cst_69 = arith.constant dense<0.000000e+00> : vector<128x128xf32>
    %45 = tpu.matmul %42, %44, %cst_69 {dimension_numbers = #tpu.dot_dimension_numbers<[1], [0], [0], [1], [0, 0, 1, 1], [], []>} : vector<128x128xbf16>, vector<128x128xbf16>, vector<128x128xf32> -> vector<128x128xf32>
    %46 = arith.addf %40, %45 : vector<128x128xf32>
    %c0_70 = arith.constant 0 : index
    %c1_71 = arith.constant 1 : index
    %c9_72 = arith.constant 9 : index
    %c0_73 = arith.constant 0 : index
    %47 = vector.load %arg12[%c0_70, %c1_71, %c9_72, %c0_73] : memref<2x10x17x128xbf16, #tpu.memory_space<vmem>>, vector<2x8x8x128xbf16>
    %48 = vector.shape_cast %47 : vector<2x8x8x128xbf16> to vector<128x128xbf16>
    %c5 = arith.constant 5 : index
    %c0_74 = arith.constant 0 : index
    %c0_75 = arith.constant 0 : index
    %49 = vector.load %arg2[%c5, %c0_74, %c0_75] : memref<9x128x128xbf16, #tpu.memory_space<vmem>>, vector<1x128x128xbf16>
    %50 = vector.shape_cast %49 : vector<1x128x128xbf16> to vector<128x128xbf16>
    %cst_76 = arith.constant dense<0.000000e+00> : vector<128x128xf32>
    %51 = tpu.matmul %48, %50, %cst_76 {dimension_numbers = #tpu.dot_dimension_numbers<[1], [0], [0], [1], [0, 0, 1, 1], [], []>} : vector<128x128xbf16>, vector<128x128xbf16>, vector<128x128xf32> -> vector<128x128xf32>
    %52 = arith.addf %46, %51 : vector<128x128xf32>
    %c0_77 = arith.constant 0 : index
    %c2_78 = arith.constant 2 : index
    %c7_79 = arith.constant 7 : index
    %c0_80 = arith.constant 0 : index
    %53 = vector.load %arg12[%c0_77, %c2_78, %c7_79, %c0_80] : memref<2x10x17x128xbf16, #tpu.memory_space<vmem>>, vector<2x8x8x128xbf16>
    %54 = vector.shape_cast %53 : vector<2x8x8x128xbf16> to vector<128x128xbf16>
    %c6 = arith.constant 6 : index
    %c0_81 = arith.constant 0 : index
    %c0_82 = arith.constant 0 : index
    %55 = vector.load %arg2[%c6, %c0_81, %c0_82] : memref<9x128x128xbf16, #tpu.memory_space<vmem>>, vector<1x128x128xbf16>
    %56 = vector.shape_cast %55 : vector<1x128x128xbf16> to vector<128x128xbf16>
    %cst_83 = arith.constant dense<0.000000e+00> : vector<128x128xf32>
    %57 = tpu.matmul %54, %56, %cst_83 {dimension_numbers = #tpu.dot_dimension_numbers<[1], [0], [0], [1], [0, 0, 1, 1], [], []>} : vector<128x128xbf16>, vector<128x128xbf16>, vector<128x128xf32> -> vector<128x128xf32>
    %58 = arith.addf %52, %57 : vector<128x128xf32>
    %c0_84 = arith.constant 0 : index
    %c2_85 = arith.constant 2 : index
    %c8_86 = arith.constant 8 : index
    %c0_87 = arith.constant 0 : index
    %59 = vector.load %arg12[%c0_84, %c2_85, %c8_86, %c0_87] : memref<2x10x17x128xbf16, #tpu.memory_space<vmem>>, vector<2x8x8x128xbf16>
    %60 = vector.shape_cast %59 : vector<2x8x8x128xbf16> to vector<128x128xbf16>
    %c7_88 = arith.constant 7 : index
    %c0_89 = arith.constant 0 : index
    %c0_90 = arith.constant 0 : index
    %61 = vector.load %arg2[%c7_88, %c0_89, %c0_90] : memref<9x128x128xbf16, #tpu.memory_space<vmem>>, vector<1x128x128xbf16>
    %62 = vector.shape_cast %61 : vector<1x128x128xbf16> to vector<128x128xbf16>
    %cst_91 = arith.constant dense<0.000000e+00> : vector<128x128xf32>
    %63 = tpu.matmul %60, %62, %cst_91 {dimension_numbers = #tpu.dot_dimension_numbers<[1], [0], [0], [1], [0, 0, 1, 1], [], []>} : vector<128x128xbf16>, vector<128x128xbf16>, vector<128x128xf32> -> vector<128x128xf32>
    %64 = arith.addf %58, %63 : vector<128x128xf32>
    %c0_92 = arith.constant 0 : index
    %c2_93 = arith.constant 2 : index
    %c9_94 = arith.constant 9 : index
    %c0_95 = arith.constant 0 : index
    %65 = vector.load %arg12[%c0_92, %c2_93, %c9_94, %c0_95] : memref<2x10x17x128xbf16, #tpu.memory_space<vmem>>, vector<2x8x8x128xbf16>
    %66 = vector.shape_cast %65 : vector<2x8x8x128xbf16> to vector<128x128xbf16>
    %c8_96 = arith.constant 8 : index
    %c0_97 = arith.constant 0 : index
    %c0_98 = arith.constant 0 : index
    %67 = vector.load %arg2[%c8_96, %c0_97, %c0_98] : memref<9x128x128xbf16, #tpu.memory_space<vmem>>, vector<1x128x128xbf16>
    %68 = vector.shape_cast %67 : vector<1x128x128xbf16> to vector<128x128xbf16>
    %cst_99 = arith.constant dense<0.000000e+00> : vector<128x128xf32>
    %69 = tpu.matmul %66, %68, %cst_99 {dimension_numbers = #tpu.dot_dimension_numbers<[1], [0], [0], [1], [0, 0, 1, 1], [], []>} : vector<128x128xbf16>, vector<128x128xbf16>, vector<128x128xf32> -> vector<128x128xf32>
    %70 = arith.addf %64, %69 : vector<128x128xf32>
    %c0_100 = arith.constant 0 : index
    %c0_101 = arith.constant 0 : index
    %71 = vector.load %arg3[%c0_100, %c0_101] : memref<1x128xf32, #tpu.memory_space<vmem>>, vector<1x128xf32>
    %c0_102 = arith.constant 0 : index
    %c0_103 = arith.constant 0 : index
    %72 = vector.load %arg4[%c0_102, %c0_103] : memref<1x128xf32, #tpu.memory_space<vmem>>, vector<1x128xf32>
    %cst_104 = arith.constant dense<0.000000e+00> : vector<128xf32>
    %73 = vector.multi_reduction <add>, %70, %cst_104 [0] : vector<128x128xf32> to vector<128xf32>
    %74 = vector.shape_cast %73 : vector<128xf32> to vector<1x128xf32>
    %cst_105 = arith.constant 7.812500e-03 : f32
    %75 = vector.broadcast %cst_105 : f32 to vector<1x128xf32>
    %76 = arith.mulf %74, %75 : vector<1x128xf32>
    %77 = vector.broadcast %76 : vector<1x128xf32> to vector<128x128xf32>
    %78 = arith.subf %70, %77 : vector<128x128xf32>
    %79 = arith.mulf %78, %78 : vector<128x128xf32>
    %cst_106 = arith.constant dense<0.000000e+00> : vector<128xf32>
    %80 = vector.multi_reduction <add>, %79, %cst_106 [0] : vector<128x128xf32> to vector<128xf32>
    %81 = vector.shape_cast %80 : vector<128xf32> to vector<1x128xf32>
    %cst_107 = arith.constant 7.812500e-03 : f32
    %82 = vector.broadcast %cst_107 : f32 to vector<1x128xf32>
    %83 = arith.mulf %81, %82 : vector<1x128xf32>
    %cst_108 = arith.constant 9.99999974E-6 : f32
    %84 = vector.broadcast %cst_108 : f32 to vector<1x128xf32>
    %85 = arith.addf %83, %84 : vector<1x128xf32>
    %86 = math.rsqrt %85 : vector<1x128xf32>
    %87 = arith.mulf %86, %71 : vector<1x128xf32>
    %88 = vector.broadcast %87 : vector<1x128xf32> to vector<128x128xf32>
    %89 = arith.mulf %78, %88 : vector<128x128xf32>
    %90 = vector.broadcast %72 : vector<1x128xf32> to vector<128x128xf32>
    %91 = arith.addf %89, %90 : vector<128x128xf32>
    %cst_109 = arith.constant 0.000000e+00 : f32
    %92 = vector.broadcast %cst_109 : f32 to vector<128x128xf32>
    %93 = arith.maximumf %91, %92 : vector<128x128xf32>
    %94 = vector.shape_cast %93 : vector<128x128xf32> to vector<2x8x8x128xf32>
    %cst_110 = arith.constant 0.000000e+00 : bf16
    %95 = vector.broadcast %cst_110 : bf16 to vector<2x1x17x128xbf16>
    %c0_111 = arith.constant 0 : index
    %c0_112 = arith.constant 0 : index
    %c0_113 = arith.constant 0 : index
    %c0_114 = arith.constant 0 : index
    %96 = vector.load %arg13[%c0_111, %c0_112, %c0_113, %c0_114] : memref<2x10x17x128xbf16, #tpu.memory_space<vmem>>, vector<2x1x17x128xbf16>
    tpu.vector_store %arg13[%c0_111, %c0_112, %c0_113, %c0_114], %95 {strides = array<i32>} : memref<2x10x17x128xbf16, #tpu.memory_space<vmem>>, vector<2x1x17x128xbf16>,
    %c0_115 = arith.constant 0 : index
    %c9_116 = arith.constant 9 : index
    %c0_117 = arith.constant 0 : index
    %c0_118 = arith.constant 0 : index
    %97 = vector.load %arg13[%c0_115, %c9_116, %c0_117, %c0_118] : memref<2x10x17x128xbf16, #tpu.memory_space<vmem>>, vector<2x1x17x128xbf16>
    tpu.vector_store %arg13[%c0_115, %c9_116, %c0_117, %c0_118], %95 {strides = array<i32>} : memref<2x10x17x128xbf16, #tpu.memory_space<vmem>>, vector<2x1x17x128xbf16>,
    %cst_119 = arith.constant 0.000000e+00 : bf16
    %98 = vector.broadcast %cst_119 : bf16 to vector<2x8x8x128xbf16>
    %c0_120 = arith.constant 0 : index
    %c1_121 = arith.constant 1 : index
    %c0_122 = arith.constant 0 : index
    %c0_123 = arith.constant 0 : index
    %99 = vector.load %arg13[%c0_120, %c1_121, %c0_122, %c0_123] : memref<2x10x17x128xbf16, #tpu.memory_space<vmem>>, vector<2x8x8x128xbf16>
    tpu.vector_store %arg13[%c0_120, %c1_121, %c0_122, %c0_123], %98 {strides = array<i32>} : memref<2x10x17x128xbf16, #tpu.memory_space<vmem>>, vector<2x8x8x128xbf16>,
    %cst_124 = arith.constant 0.000000e+00 : bf16
    %100 = vector.broadcast %cst_124 : bf16 to vector<2x8x1x128xbf16>
    %c0_125 = arith.constant 0 : index
    %c1_126 = arith.constant 1 : index
    %c16_127 = arith.constant 16 : index
    %c0_128 = arith.constant 0 : index
    %101 = vector.load %arg13[%c0_125, %c1_126, %c16_127, %c0_128] : memref<2x10x17x128xbf16, #tpu.memory_space<vmem>>, vector<2x8x1x128xbf16>
    tpu.vector_store %arg13[%c0_125, %c1_126, %c16_127, %c0_128], %100 {strides = array<i32>} : memref<2x10x17x128xbf16, #tpu.memory_space<vmem>>, vector<2x8x1x128xbf16>,
    %102 = arith.truncf %94 : vector<2x8x8x128xf32> to vector<2x8x8x128xbf16>
    %c0_129 = arith.constant 0 : index
    %c1_130 = arith.constant 1 : index
    %c8_131 = arith.constant 8 : index
    %c0_132 = arith.constant 0 : index
    %103 = vector.load %arg13[%c0_129, %c1_130, %c8_131, %c0_132] : memref<2x10x17x128xbf16, #tpu.memory_space<vmem>>, vector<2x8x8x128xbf16>
    tpu.vector_store %arg13[%c0_129, %c1_130, %c8_131, %c0_132], %102 {strides = array<i32>} : memref<2x10x17x128xbf16, #tpu.memory_space<vmem>>, vector<2x8x8x128xbf16>,
    %cst_133 = arith.constant 0.000000e+00 : f32
    %104 = vector.broadcast %cst_133 : f32 to vector<128x128xf32>
    %c0_134 = arith.constant 0 : index
    %c0_135 = arith.constant 0 : index
    %c7_136 = arith.constant 7 : index
    %c0_137 = arith.constant 0 : index
    %105 = vector.load %arg13[%c0_134, %c0_135, %c7_136, %c0_137] : memref<2x10x17x128xbf16, #tpu.memory_space<vmem>>, vector<2x8x8x128xbf16>
    %106 = vector.shape_cast %105 : vector<2x8x8x128xbf16> to vector<128x128xbf16>
    %c0_138 = arith.constant 0 : index
    %c0_139 = arith.constant 0 : index
    %c0_140 = arith.constant 0 : index
    %107 = vector.load %arg5[%c0_138, %c0_139, %c0_140] : memref<9x128x128xbf16, #tpu.memory_space<vmem>>, vector<1x128x128xbf16>
    %108 = vector.shape_cast %107 : vector<1x128x128xbf16> to vector<128x128xbf16>
    %cst_141 = arith.constant dense<0.000000e+00> : vector<128x128xf32>
    %109 = tpu.matmul %106, %108, %cst_141 {dimension_numbers = #tpu.dot_dimension_numbers<[1], [0], [0], [1], [0, 0, 1, 1], [], []>} : vector<128x128xbf16>, vector<128x128xbf16>, vector<128x128xf32> -> vector<128x128xf32>
    %110 = arith.addf %104, %109 : vector<128x128xf32>
    %c0_142 = arith.constant 0 : index
    %c0_143 = arith.constant 0 : index
    %c8_144 = arith.constant 8 : index
    %c0_145 = arith.constant 0 : index
    %111 = vector.load %arg13[%c0_142, %c0_143, %c8_144, %c0_145] : memref<2x10x17x128xbf16, #tpu.memory_space<vmem>>, vector<2x8x8x128xbf16>
    %112 = vector.shape_cast %111 : vector<2x8x8x128xbf16> to vector<128x128xbf16>
    %c1_146 = arith.constant 1 : index
    %c0_147 = arith.constant 0 : index
    %c0_148 = arith.constant 0 : index
    %113 = vector.load %arg5[%c1_146, %c0_147, %c0_148] : memref<9x128x128xbf16, #tpu.memory_space<vmem>>, vector<1x128x128xbf16>
    %114 = vector.shape_cast %113 : vector<1x128x128xbf16> to vector<128x128xbf16>
    %cst_149 = arith.constant dense<0.000000e+00> : vector<128x128xf32>
    %115 = tpu.matmul %112, %114, %cst_149 {dimension_numbers = #tpu.dot_dimension_numbers<[1], [0], [0], [1], [0, 0, 1, 1], [], []>} : vector<128x128xbf16>, vector<128x128xbf16>, vector<128x128xf32> -> vector<128x128xf32>
    %116 = arith.addf %110, %115 : vector<128x128xf32>
    %c0_150 = arith.constant 0 : index
    %c0_151 = arith.constant 0 : index
    %c9_152 = arith.constant 9 : index
    %c0_153 = arith.constant 0 : index
    %117 = vector.load %arg13[%c0_150, %c0_151, %c9_152, %c0_153] : memref<2x10x17x128xbf16, #tpu.memory_space<vmem>>, vector<2x8x8x128xbf16>
    %118 = vector.shape_cast %117 : vector<2x8x8x128xbf16> to vector<128x128xbf16>
    %c2_154 = arith.constant 2 : index
    %c0_155 = arith.constant 0 : index
    %c0_156 = arith.constant 0 : index
    %119 = vector.load %arg5[%c2_154, %c0_155, %c0_156] : memref<9x128x128xbf16, #tpu.memory_space<vmem>>, vector<1x128x128xbf16>
    %120 = vector.shape_cast %119 : vector<1x128x128xbf16> to vector<128x128xbf16>
    %cst_157 = arith.constant dense<0.000000e+00> : vector<128x128xf32>
    %121 = tpu.matmul %118, %120, %cst_157 {dimension_numbers = #tpu.dot_dimension_numbers<[1], [0], [0], [1], [0, 0, 1, 1], [], []>} : vector<128x128xbf16>, vector<128x128xbf16>, vector<128x128xf32> -> vector<128x128xf32>
    %122 = arith.addf %116, %121 : vector<128x128xf32>
    %c0_158 = arith.constant 0 : index
    %c1_159 = arith.constant 1 : index
    %c7_160 = arith.constant 7 : index
    %c0_161 = arith.constant 0 : index
    %123 = vector.load %arg13[%c0_158, %c1_159, %c7_160, %c0_161] : memref<2x10x17x128xbf16, #tpu.memory_space<vmem>>, vector<2x8x8x128xbf16>
    %124 = vector.shape_cast %123 : vector<2x8x8x128xbf16> to vector<128x128xbf16>
    %c3_162 = arith.constant 3 : index
    %c0_163 = arith.constant 0 : index
    %c0_164 = arith.constant 0 : index
    %125 = vector.load %arg5[%c3_162, %c0_163, %c0_164] : memref<9x128x128xbf16, #tpu.memory_space<vmem>>, vector<1x128x128xbf16>
    %126 = vector.shape_cast %125 : vector<1x128x128xbf16> to vector<128x128xbf16>
    %cst_165 = arith.constant dense<0.000000e+00> : vector<128x128xf32>
    %127 = tpu.matmul %124, %126, %cst_165 {dimension_numbers = #tpu.dot_dimension_numbers<[1], [0], [0], [1], [0, 0, 1, 1], [], []>} : vector<128x128xbf16>, vector<128x128xbf16>, vector<128x128xf32> -> vector<128x128xf32>
    %128 = arith.addf %122, %127 : vector<128x128xf32>
    %c0_166 = arith.constant 0 : index
    %c1_167 = arith.constant 1 : index
    %c8_168 = arith.constant 8 : index
    %c0_169 = arith.constant 0 : index
    %129 = vector.load %arg13[%c0_166, %c1_167, %c8_168, %c0_169] : memref<2x10x17x128xbf16, #tpu.memory_space<vmem>>, vector<2x8x8x128xbf16>
    %130 = vector.shape_cast %129 : vector<2x8x8x128xbf16> to vector<128x128xbf16>
    %c4_170 = arith.constant 4 : index
    %c0_171 = arith.constant 0 : index
    %c0_172 = arith.constant 0 : index
    %131 = vector.load %arg5[%c4_170, %c0_171, %c0_172] : memref<9x128x128xbf16, #tpu.memory_space<vmem>>, vector<1x128x128xbf16>
    %132 = vector.shape_cast %131 : vector<1x128x128xbf16> to vector<128x128xbf16>
    %cst_173 = arith.constant dense<0.000000e+00> : vector<128x128xf32>
    %133 = tpu.matmul %130, %132, %cst_173 {dimension_numbers = #tpu.dot_dimension_numbers<[1], [0], [0], [1], [0, 0, 1, 1], [], []>} : vector<128x128xbf16>, vector<128x128xbf16>, vector<128x128xf32> -> vector<128x128xf32>
    %134 = arith.addf %128, %133 : vector<128x128xf32>
    %c0_174 = arith.constant 0 : index
    %c1_175 = arith.constant 1 : index
    %c9_176 = arith.constant 9 : index
    %c0_177 = arith.constant 0 : index
    %135 = vector.load %arg13[%c0_174, %c1_175, %c9_176, %c0_177] : memref<2x10x17x128xbf16, #tpu.memory_space<vmem>>, vector<2x8x8x128xbf16>
    %136 = vector.shape_cast %135 : vector<2x8x8x128xbf16> to vector<128x128xbf16>
    %c5_178 = arith.constant 5 : index
    %c0_179 = arith.constant 0 : index
    %c0_180 = arith.constant 0 : index
    %137 = vector.load %arg5[%c5_178, %c0_179, %c0_180] : memref<9x128x128xbf16, #tpu.memory_space<vmem>>, vector<1x128x128xbf16>
    %138 = vector.shape_cast %137 : vector<1x128x128xbf16> to vector<128x128xbf16>
    %cst_181 = arith.constant dense<0.000000e+00> : vector<128x128xf32>
    %139 = tpu.matmul %136, %138, %cst_181 {dimension_numbers = #tpu.dot_dimension_numbers<[1], [0], [0], [1], [0, 0, 1, 1], [], []>} : vector<128x128xbf16>, vector<128x128xbf16>, vector<128x128xf32> -> vector<128x128xf32>
    %140 = arith.addf %134, %139 : vector<128x128xf32>
    %c0_182 = arith.constant 0 : index
    %c2_183 = arith.constant 2 : index
    %c7_184 = arith.constant 7 : index
    %c0_185 = arith.constant 0 : index
    %141 = vector.load %arg13[%c0_182, %c2_183, %c7_184, %c0_185] : memref<2x10x17x128xbf16, #tpu.memory_space<vmem>>, vector<2x8x8x128xbf16>
    %142 = vector.shape_cast %141 : vector<2x8x8x128xbf16> to vector<128x128xbf16>
    %c6_186 = arith.constant 6 : index
    %c0_187 = arith.constant 0 : index
    %c0_188 = arith.constant 0 : index
    %143 = vector.load %arg5[%c6_186, %c0_187, %c0_188] : memref<9x128x128xbf16, #tpu.memory_space<vmem>>, vector<1x128x128xbf16>
    %144 = vector.shape_cast %143 : vector<1x128x128xbf16> to vector<128x128xbf16>
    %cst_189 = arith.constant dense<0.000000e+00> : vector<128x128xf32>
    %145 = tpu.matmul %142, %144, %cst_189 {dimension_numbers = #tpu.dot_dimension_numbers<[1], [0], [0], [1], [0, 0, 1, 1], [], []>} : vector<128x128xbf16>, vector<128x128xbf16>, vector<128x128xf32> -> vector<128x128xf32>
    %146 = arith.addf %140, %145 : vector<128x128xf32>
    %c0_190 = arith.constant 0 : index
    %c2_191 = arith.constant 2 : index
    %c8_192 = arith.constant 8 : index
    %c0_193 = arith.constant 0 : index
    %147 = vector.load %arg13[%c0_190, %c2_191, %c8_192, %c0_193] : memref<2x10x17x128xbf16, #tpu.memory_space<vmem>>, vector<2x8x8x128xbf16>
    %148 = vector.shape_cast %147 : vector<2x8x8x128xbf16> to vector<128x128xbf16>
    %c7_194 = arith.constant 7 : index
    %c0_195 = arith.constant 0 : index
    %c0_196 = arith.constant 0 : index
    %149 = vector.load %arg5[%c7_194, %c0_195, %c0_196] : memref<9x128x128xbf16, #tpu.memory_space<vmem>>, vector<1x128x128xbf16>
    %150 = vector.shape_cast %149 : vector<1x128x128xbf16> to vector<128x128xbf16>
    %cst_197 = arith.constant dense<0.000000e+00> : vector<128x128xf32>
    %151 = tpu.matmul %148, %150, %cst_197 {dimension_numbers = #tpu.dot_dimension_numbers<[1], [0], [0], [1], [0, 0, 1, 1], [], []>} : vector<128x128xbf16>, vector<128x128xbf16>, vector<128x128xf32> -> vector<128x128xf32>
    %152 = arith.addf %146, %151 : vector<128x128xf32>
    %c0_198 = arith.constant 0 : index
    %c2_199 = arith.constant 2 : index
    %c9_200 = arith.constant 9 : index
    %c0_201 = arith.constant 0 : index
    %153 = vector.load %arg13[%c0_198, %c2_199, %c9_200, %c0_201] : memref<2x10x17x128xbf16, #tpu.memory_space<vmem>>, vector<2x8x8x128xbf16>
    %154 = vector.shape_cast %153 : vector<2x8x8x128xbf16> to vector<128x128xbf16>
    %c8_202 = arith.constant 8 : index
    %c0_203 = arith.constant 0 : index
    %c0_204 = arith.constant 0 : index
    %155 = vector.load %arg5[%c8_202, %c0_203, %c0_204] : memref<9x128x128xbf16, #tpu.memory_space<vmem>>, vector<1x128x128xbf16>
    %156 = vector.shape_cast %155 : vector<1x128x128xbf16> to vector<128x128xbf16>
    %cst_205 = arith.constant dense<0.000000e+00> : vector<128x128xf32>
    %157 = tpu.matmul %154, %156, %cst_205 {dimension_numbers = #tpu.dot_dimension_numbers<[1], [0], [0], [1], [0, 0, 1, 1], [], []>} : vector<128x128xbf16>, vector<128x128xbf16>, vector<128x128xf32> -> vector<128x128xf32>
    %158 = arith.addf %152, %157 : vector<128x128xf32>
    %c0_206 = arith.constant 0 : index
    %c0_207 = arith.constant 0 : index
    %159 = vector.load %arg6[%c0_206, %c0_207] : memref<1x128xf32, #tpu.memory_space<vmem>>, vector<1x128xf32>
    %c0_208 = arith.constant 0 : index
    %c0_209 = arith.constant 0 : index
    %160 = vector.load %arg7[%c0_208, %c0_209] : memref<1x128xf32, #tpu.memory_space<vmem>>, vector<1x128xf32>
    %cst_210 = arith.constant dense<0.000000e+00> : vector<128xf32>
    %161 = vector.multi_reduction <add>, %158, %cst_210 [0] : vector<128x128xf32> to vector<128xf32>
    %162 = vector.shape_cast %161 : vector<128xf32> to vector<1x128xf32>
    %cst_211 = arith.constant 7.812500e-03 : f32
    %163 = vector.broadcast %cst_211 : f32 to vector<1x128xf32>
    %164 = arith.mulf %162, %163 : vector<1x128xf32>
    %165 = vector.broadcast %164 : vector<1x128xf32> to vector<128x128xf32>
    %166 = arith.subf %158, %165 : vector<128x128xf32>
    %167 = arith.mulf %166, %166 : vector<128x128xf32>
    %cst_212 = arith.constant dense<0.000000e+00> : vector<128xf32>
    %168 = vector.multi_reduction <add>, %167, %cst_212 [0] : vector<128x128xf32> to vector<128xf32>
    %169 = vector.shape_cast %168 : vector<128xf32> to vector<1x128xf32>
    %cst_213 = arith.constant 7.812500e-03 : f32
    %170 = vector.broadcast %cst_213 : f32 to vector<1x128xf32>
    %171 = arith.mulf %169, %170 : vector<1x128xf32>
    %cst_214 = arith.constant 9.99999974E-6 : f32
    %172 = vector.broadcast %cst_214 : f32 to vector<1x128xf32>
    %173 = arith.addf %171, %172 : vector<1x128xf32>
    %174 = math.rsqrt %173 : vector<1x128xf32>
    %175 = arith.mulf %174, %159 : vector<1x128xf32>
    %176 = vector.broadcast %175 : vector<1x128xf32> to vector<128x128xf32>
    %177 = arith.mulf %166, %176 : vector<128x128xf32>
    %178 = vector.broadcast %160 : vector<1x128xf32> to vector<128x128xf32>
    %179 = arith.addf %177, %178 : vector<128x128xf32>
    %cst_215 = arith.constant 0.000000e+00 : f32
    %180 = vector.broadcast %cst_215 : f32 to vector<128x128xf32>
    %181 = arith.maximumf %179, %180 : vector<128x128xf32>
    %c0_216 = arith.constant 0 : index
    %c1_217 = arith.constant 1 : index
    %c8_218 = arith.constant 8 : index
    %c0_219 = arith.constant 0 : index
    %182 = vector.load %arg12[%c0_216, %c1_217, %c8_218, %c0_219] : memref<2x10x17x128xbf16, #tpu.memory_space<vmem>>, vector<2x8x8x128xbf16>
    %183 = vector.shape_cast %182 : vector<2x8x8x128xbf16> to vector<128x128xbf16>
    %c0_220 = arith.constant 0 : index
    %c0_221 = arith.constant 0 : index
    %184 = vector.load %arg8[%c0_220, %c0_221] : memref<128x128xbf16, #tpu.memory_space<vmem>>, vector<128x128xbf16>
    %cst_222 = arith.constant dense<0.000000e+00> : vector<128x128xf32>
    %185 = tpu.matmul %183, %184, %cst_222 {dimension_numbers = #tpu.dot_dimension_numbers<[1], [0], [0], [1], [0, 0, 1, 1], [], []>} : vector<128x128xbf16>, vector<128x128xbf16>, vector<128x128xf32> -> vector<128x128xf32>
    %c0_223 = arith.constant 0 : index
    %c0_224 = arith.constant 0 : index
    %186 = vector.load %arg9[%c0_223, %c0_224] : memref<1x128xf32, #tpu.memory_space<vmem>>, vector<1x128xf32>
    %c0_225 = arith.constant 0 : index
    %c0_226 = arith.constant 0 : index
    %187 = vector.load %arg10[%c0_225, %c0_226] : memref<1x128xf32, #tpu.memory_space<vmem>>, vector<1x128xf32>
    %cst_227 = arith.constant dense<0.000000e+00> : vector<128xf32>
    %188 = vector.multi_reduction <add>, %185, %cst_227 [0] : vector<128x128xf32> to vector<128xf32>
    %189 = vector.shape_cast %188 : vector<128xf32> to vector<1x128xf32>
    %cst_228 = arith.constant 7.812500e-03 : f32
    %190 = vector.broadcast %cst_228 : f32 to vector<1x128xf32>
    %191 = arith.mulf %189, %190 : vector<1x128xf32>
    %192 = vector.broadcast %191 : vector<1x128xf32> to vector<128x128xf32>
    %193 = arith.subf %185, %192 : vector<128x128xf32>
    %194 = arith.mulf %193, %193 : vector<128x128xf32>
    %cst_229 = arith.constant dense<0.000000e+00> : vector<128xf32>
    %195 = vector.multi_reduction <add>, %194, %cst_229 [0] : vector<128x128xf32> to vector<128xf32>
    %196 = vector.shape_cast %195 : vector<128xf32> to vector<1x128xf32>
    %cst_230 = arith.constant 7.812500e-03 : f32
    %197 = vector.broadcast %cst_230 : f32 to vector<1x128xf32>
    %198 = arith.mulf %196, %197 : vector<1x128xf32>
    %cst_231 = arith.constant 9.99999974E-6 : f32
    %199 = vector.broadcast %cst_231 : f32 to vector<1x128xf32>
    %200 = arith.addf %198, %199 : vector<1x128xf32>
    %201 = math.rsqrt %200 : vector<1x128xf32>
    %202 = arith.mulf %201, %186 : vector<1x128xf32>
    %203 = vector.broadcast %202 : vector<1x128xf32> to vector<128x128xf32>
    %204 = arith.mulf %193, %203 : vector<128x128xf32>
    %205 = vector.broadcast %187 : vector<1x128xf32> to vector<128x128xf32>
    %206 = arith.addf %204, %205 : vector<128x128xf32>
    %207 = arith.addf %181, %206 : vector<128x128xf32>
    %208 = vector.shape_cast %207 : vector<128x128xf32> to vector<2x8x8x128xf32>
    %c0_232 = arith.constant 0 : index
    %c0_233 = arith.constant 0 : index
    %c0_234 = arith.constant 0 : index
    %c0_235 = arith.constant 0 : index
    %209 = vector.load %arg11[%c0_232, %c0_233, %c0_234, %c0_235] : memref<2x8x8x128xf32, #tpu.memory_space<vmem>>, vector<2x8x8x128xf32>
    tpu.vector_store %arg11[%c0_232, %c0_233, %c0_234, %c0_235], %208 {strides = array<i32>} : memref<2x8x8x128xf32, #tpu.memory_space<vmem>>, vector<2x8x8x128xf32>,
    return
  }
  func.func @transform_0(%arg0: i32) -> (i32, i32, i32, i32) {
    %c0_i32 = arith.constant 0 : i32
    %c0_i32_0 = arith.constant 0 : i32
    %c0_i32_1 = arith.constant 0 : i32
    %c0_i32_2 = arith.constant 0 : i32
    %c0_i32_3 = arith.constant 0 : i32
    return %c0_i32, %c0_i32_0, %c0_i32_1, %c0_i32_2 : i32, i32, i32, i32
  }
  func.func @transform_1(%arg0: i32) -> (i32, i32, i32) {
    %c0_i32 = arith.constant 0 : i32
    %c0_i32_0 = arith.constant 0 : i32
    %c0_i32_1 = arith.constant 0 : i32
    %c0_i32_2 = arith.constant 0 : i32
    return %c0_i32, %c0_i32_0, %c0_i32_1 : i32, i32, i32
  }
  func.func @transform_2(%arg0: i32) -> (i32, i32) {
    %c0_i32 = arith.constant 0 : i32
    %c0_i32_0 = arith.constant 0 : i32
    %c0_i32_1 = arith.constant 0 : i32
    return %c0_i32, %c0_i32_0 : i32, i32
  }
  func.func @transform_3(%arg0: i32) -> (i32, i32) {
    %c0_i32 = arith.constant 0 : i32
    %c0_i32_0 = arith.constant 0 : i32
    %c0_i32_1 = arith.constant 0 : i32
    return %c0_i32, %c0_i32_0 : i32, i32
  }
  func.func @transform_4(%arg0: i32) -> (i32, i32, i32) {
    %c0_i32 = arith.constant 0 : i32
    %c0_i32_0 = arith.constant 0 : i32
    %c0_i32_1 = arith.constant 0 : i32
    %c0_i32_2 = arith.constant 0 : i32
    return %c0_i32, %c0_i32_0, %c0_i32_1 : i32, i32, i32
  }
  func.func @transform_5(%arg0: i32) -> (i32, i32) {
    %c0_i32 = arith.constant 0 : i32
    %c0_i32_0 = arith.constant 0 : i32
    %c0_i32_1 = arith.constant 0 : i32
    return %c0_i32, %c0_i32_0 : i32, i32
  }
  func.func @transform_6(%arg0: i32) -> (i32, i32) {
    %c0_i32 = arith.constant 0 : i32
    %c0_i32_0 = arith.constant 0 : i32
    %c0_i32_1 = arith.constant 0 : i32
    return %c0_i32, %c0_i32_0 : i32, i32
  }
  func.func @transform_7(%arg0: i32) -> (i32, i32) {
    %c0_i32 = arith.constant 0 : i32
    %c0_i32_0 = arith.constant 0 : i32
    %c0_i32_1 = arith.constant 0 : i32
    return %c0_i32, %c0_i32_0 : i32, i32
  }
  func.func @transform_8(%arg0: i32) -> (i32, i32) {
    %c0_i32 = arith.constant 0 : i32
    %c0_i32_0 = arith.constant 0 : i32
    %c0_i32_1 = arith.constant 0 : i32
    return %c0_i32, %c0_i32_0 : i32, i32
  }
  func.func @transform_9(%arg0: i32) -> (i32, i32) {
    %c0_i32 = arith.constant 0 : i32
    %c0_i32_0 = arith.constant 0 : i32
    %c0_i32_1 = arith.constant 0 : i32
    return %c0_i32, %c0_i32_0 : i32, i32
  }
  func.func @transform_10(%arg0: i32) -> (i32, i32, i32, i32) {
    %c0_i32 = arith.constant 0 : i32
    %c0_i32_0 = arith.constant 0 : i32
    %c0_i32_1 = arith.constant 0 : i32
    %c0_i32_2 = arith.constant 0 : i32
    %c0_i32_3 = arith.constant 0 : i32
    return %c0_i32, %c0_i32_0, %c0_i32_1, %c0_i32_2 : i32, i32, i32, i32
  }
}

</mosaic_0001>

<llo_original>
// kernel: down_forward.1
$region0: #{down_forward.1}
  #allocation0 [shape = 'u32[]', space=smem, size = 0x4, offset = 0x4, fixed_abs, tag = 'smem constant byte address 0x4 - core index']
  #allocation1 [shape = 'u32[144,128]{1,0:T(1,128)}', space=vmem, size = 0x12000, scoped, tag = 'internal scratch']
  #allocation2 [shape = 'bf16[2,10,17,128]{3,2,1,0:T(8,128)(2,1)}', space=vmem, size = 0x1e000, scoped, tag = 'scratch operand']
  #allocation3 [shape = 'bf16[2,10,17,128]{3,2,1,0:T(8,128)(2,1)}', space=vmem, size = 0x1e000, scoped, tag = 'scratch operand']
  %s0 = inlined_call_operand.vmem [shape: f32[2,16,16,128], index: 0, kind: input, shape index: {}]
  %s1 = inlined_call_operand.vmem [shape: bf16[9,128,128], index: 1, kind: input, shape index: {}]
  %s2 = inlined_call_operand.vmem [shape: f32[1,128], index: 2, kind: input, shape index: {}]
  %s3 = inlined_call_operand.vmem [shape: f32[1,128], index: 3, kind: input, shape index: {}]
  %s4 = inlined_call_operand.vmem [shape: bf16[9,128,128], index: 4, kind: input, shape index: {}]
  %s5 = inlined_call_operand.vmem [shape: f32[1,128], index: 5, kind: input, shape index: {}]
  %s6 = inlined_call_operand.vmem [shape: f32[1,128], index: 6, kind: input, shape index: {}]
  %s7 = inlined_call_operand.vmem [shape: bf16[128,128], index: 7, kind: input, shape index: {}]
  %s8 = inlined_call_operand.vmem [shape: f32[1,128], index: 8, kind: input, shape index: {}]
  %s9 = inlined_call_operand.vmem [shape: f32[1,128], index: 9, kind: input, shape index: {}]
  %s10 = inlined_call_operand.vmem [shape: f32[2,8,8,128], index: 10, kind: output, shape index: {}]
  %s11 = sld [smem:[#allocation0]]
  $region50: #{down_forward.1} parent=0
    _
  %s13 = ssub.s32 1, %s11
  %s14 = scalar_select 0, %s13, %s11
  // Predicated region
  $region2: #{down_forward.1} parent=0 // pred_check
    _
  $region3: #{down_forward.1} parent=0 // pred_check_branch
    %16 = sbr.rel (0) target = $region5
  $region4: #{down_forward.1} parent=0 // pred_region
    _
  $region5: #{down_forward.1} parent=0 // pred_fallthru
    _
  // Predicated region
  $region6: #{down_forward.1} parent=0 // pred_check
    _
  $region7: #{down_forward.1} parent=0 // pred_check_branch
    %18 = sbr.rel (0) target = $region9
  $region8: #{down_forward.1} parent=0 // pred_region
    _
  $region9: #{down_forward.1} parent=0 // pred_fallthru
    _
  // Predicated region
  $region10: #{down_forward.1} parent=0 // pred_check
    _
  $region11: #{down_forward.1} parent=0 // pred_check_branch
    %20 = sbr.rel (0) target = $region13
  $region12: #{down_forward.1} parent=0 // pred_region
    _
  $region13: #{down_forward.1} parent=0 // pred_fallthru
    _
  // Predicated region
  $region14: #{down_forward.1} parent=0 // pred_check
    _
  $region15: #{down_forward.1} parent=0 // pred_check_branch
    %22 = sbr.rel (0) target = $region17
  $region16: #{down_forward.1} parent=0 // pred_region
    _
  $region17: #{down_forward.1} parent=0 // pred_fallthru
    _
  // Predicated region
  $region18: #{down_forward.1} parent=0 // pred_check
    _
  $region19: #{down_forward.1} parent=0 // pred_check_branch
    %24 = sbr.rel (0) target = $region21
  $region20: #{down_forward.1} parent=0 // pred_region
    _
  $region21: #{down_forward.1} parent=0 // pred_fallthru
    _
  // Predicated region
  $region22: #{down_forward.1} parent=0 // pred_check
    _
  $region23: #{down_forward.1} parent=0 // pred_check_branch
    %26 = sbr.rel (0) target = $region25
  $region24: #{down_forward.1} parent=0 // pred_region
    _
  $region25: #{down_forward.1} parent=0 // pred_fallthru
    _
  // Predicated region
  $region26: #{down_forward.1} parent=0 // pred_check
    _
  $region27: #{down_forward.1} parent=0 // pred_check_branch
    %28 = sbr.rel (0) target = $region29
  $region28: #{down_forward.1} parent=0 // pred_region
    _
  $region29: #{down_forward.1} parent=0 // pred_fallthru
    _
  // Predicated region
  $region30: #{down_forward.1} parent=0 // pred_check
    _
  $region31: #{down_forward.1} parent=0 // pred_check_branch
    %30 = sbr.rel (0) target = $region33
  $region32: #{down_forward.1} parent=0 // pred_region
    _
  $region33: #{down_forward.1} parent=0 // pred_fallthru
    _
  // Predicated region
  $region34: #{down_forward.1} parent=0 // pred_check
    _
  $region35: #{down_forward.1} parent=0 // pred_check_branch
    %32 = sbr.rel (0) target = $region37
  $region36: #{down_forward.1} parent=0 // pred_region
    _
  $region37: #{down_forward.1} parent=0 // pred_fallthru
    _
  // Predicated region
  $region38: #{down_forward.1} parent=0 // pred_check
    _
  $region39: #{down_forward.1} parent=0 // pred_check_branch
    %34 = sbr.rel (0) target = $region41
  $region40: #{down_forward.1} parent=0 // pred_region
    _
  $region41: #{down_forward.1} parent=0 // pred_fallthru
    _
  %v36 = vld [vmem:[%s0] ss:$2 sm:$0xff]
  %s37 = scalar_lea.vmem %s0, 32
  %v38 = vld [vmem:[%s37] ss:$2 sm:$0xff]
  %s39 = scalar_lea.vmem %s0, 64
  %v40 = vld [vmem:[%s39] ss:$2 sm:$0xff]
  %s41 = scalar_lea.vmem %s0, 96
  %v42 = vld [vmem:[%s41] ss:$2 sm:$0xff]
  %s43 = scalar_lea.vmem %s0, 128
  %v44 = vld [vmem:[%s43] ss:$2 sm:$0xff]
  %s45 = scalar_lea.vmem %s0, 160
  %v46 = vld [vmem:[%s45] ss:$2 sm:$0xff]
  %s47 = scalar_lea.vmem %s0, 192
  %v48 = vld [vmem:[%s47] ss:$2 sm:$0xff]
  %s49 = scalar_lea.vmem %s0, 224
  %v50 = vld [vmem:[%s49] ss:$2 sm:$0xff]
  %s51 = scalar_lea.vmem %s0, 256
  %v52 = vld [vmem:[%s51] ss:$2 sm:$0xff]
  %s53 = scalar_lea.vmem %s0, 288
  %v54 = vld [vmem:[%s53] ss:$2 sm:$0xff]
  %s55 = scalar_lea.vmem %s0, 320
  %v56 = vld [vmem:[%s55] ss:$2 sm:$0xff]
  %s57 = scalar_lea.vmem %s0, 352
  %v58 = vld [vmem:[%s57] ss:$2 sm:$0xff]
  %s59 = scalar_lea.vmem %s0, 384
  %v60 = vld [vmem:[%s59] ss:$2 sm:$0xff]
  %s61 = scalar_lea.vmem %s0, 416
  %v62 = vld [vmem:[%s61] ss:$2 sm:$0xff]
  %s63 = scalar_lea.vmem %s0, 448
  %v64 = vld [vmem:[%s63] ss:$2 sm:$0xff]
  %s65 = scalar_lea.vmem %s0, 480
  %v66 = vld [vmem:[%s65] ss:$2 sm:$0xff]
  %s67 = scalar_lea.vmem %s0, 1
  %v68 = vld [vmem:[%s67] ss:$2 sm:$0xff]
  %s69 = scalar_lea.vmem %s0, 33
  %v70 = vld [vmem:[%s69] ss:$2 sm:$0xff]
  %s71 = scalar_lea.vmem %s0, 65
  %v72 = vld [vmem:[%s71] ss:$2 sm:$0xff]
  %s73 = scalar_lea.vmem %s0, 97
  %v74 = vld [vmem:[%s73] ss:$2 sm:$0xff]
  %s75 = scalar_lea.vmem %s0, 129
  %v76 = vld [vmem:[%s75] ss:$2 sm:$0xff]
  %s77 = scalar_lea.vmem %s0, 161
  %v78 = vld [vmem:[%s77] ss:$2 sm:$0xff]
  %s79 = scalar_lea.vmem %s0, 193
  %v80 = vld [vmem:[%s79] ss:$2 sm:$0xff]
  %s81 = scalar_lea.vmem %s0, 225
  %v82 = vld [vmem:[%s81] ss:$2 sm:$0xff]
  %s83 = scalar_lea.vmem %s0, 257
  %v84 = vld [vmem:[%s83] ss:$2 sm:$0xff]
  %s85 = scalar_lea.vmem %s0, 289
  %v86 = vld [vmem:[%s85] ss:$2 sm:$0xff]
  %s87 = scalar_lea.vmem %s0, 321
  %v88 = vld [vmem:[%s87] ss:$2 sm:$0xff]
  %s89 = scalar_lea.vmem %s0, 353
  %v90 = vld [vmem:[%s89] ss:$2 sm:$0xff]
  %s91 = scalar_lea.vmem %s0, 385
  %v92 = vld [vmem:[%s91] ss:$2 sm:$0xff]
  %s93 = scalar_lea.vmem %s0, 417
  %v94 = vld [vmem:[%s93] ss:$2 sm:$0xff]
  %s95 = scalar_lea.vmem %s0, 449
  %v96 = vld [vmem:[%s95] ss:$2 sm:$0xff]
  %s97 = scalar_lea.vmem %s0, 481
  %v98 = vld [vmem:[%s97] ss:$2 sm:$0xff]
  %s99 = scalar_lea.vmem %s0, 16
  %v100 = vld [vmem:[%s99] ss:$2 sm:$0xff]
  %s101 = scalar_lea.vmem %s99, 32
  %v102 = vld [vmem:[%s101] ss:$2 sm:$0xff]
  %s103 = scalar_lea.vmem %s99, 64
  %v104 = vld [vmem:[%s103] ss:$2 sm:$0xff]
  %s105 = scalar_lea.vmem %s99, 96
  %v106 = vld [vmem:[%s105] ss:$2 sm:$0xff]
  %s107 = scalar_lea.vmem %s99, 128
  %v108 = vld [vmem:[%s107] ss:$2 sm:$0xff]
  %s109 = scalar_lea.vmem %s99, 160
  %v110 = vld [vmem:[%s109] ss:$2 sm:$0xff]
  %s111 = scalar_lea.vmem %s99, 192
  %v112 = vld [vmem:[%s111] ss:$2 sm:$0xff]
  %s113 = scalar_lea.vmem %s99, 224
  %v114 = vld [vmem:[%s113] ss:$2 sm:$0xff]
  %s115 = scalar_lea.vmem %s99, 256
  %v116 = vld [vmem:[%s115] ss:$2 sm:$0xff]
  %s117 = scalar_lea.vmem %s99, 288
  %v118 = vld [vmem:[%s117] ss:$2 sm:$0xff]
  %s119 = scalar_lea.vmem %s99, 320
  %v120 = vld [vmem:[%s119] ss:$2 sm:$0xff]
  %s121 = scalar_lea.vmem %s99, 352
  %v122 = vld [vmem:[%s121] ss:$2 sm:$0xff]
  %s123 = scalar_lea.vmem %s99, 384
  %v124 = vld [vmem:[%s123] ss:$2 sm:$0xff]
  %s125 = scalar_lea.vmem %s99, 416
  %v126 = vld [vmem:[%s125] ss:$2 sm:$0xff]
  %s127 = scalar_lea.vmem %s99, 448
  %v128 = vld [vmem:[%s127] ss:$2 sm:$0xff]
  %s129 = scalar_lea.vmem %s99, 480
  %v130 = vld [vmem:[%s129] ss:$2 sm:$0xff]
  %s131 = scalar_lea.vmem %s99, 1
  %v132 = vld [vmem:[%s131] ss:$2 sm:$0xff]
  %s133 = scalar_lea.vmem %s99, 33
  %v134 = vld [vmem:[%s133] ss:$2 sm:$0xff]
  %s135 = scalar_lea.vmem %s99, 65
  %v136 = vld [vmem:[%s135] ss:$2 sm:$0xff]
  %s137 = scalar_lea.vmem %s99, 97
  %v138 = vld [vmem:[%s137] ss:$2 sm:$0xff]
  %s139 = scalar_lea.vmem %s99, 129
  %v140 = vld [vmem:[%s139] ss:$2 sm:$0xff]
  %s141 = scalar_lea.vmem %s99, 161
  %v142 = vld [vmem:[%s141] ss:$2 sm:$0xff]
  %s143 = scalar_lea.vmem %s99, 193
  %v144 = vld [vmem:[%s143] ss:$2 sm:$0xff]
  %s145 = scalar_lea.vmem %s99, 225
  %v146 = vld [vmem:[%s145] ss:$2 sm:$0xff]
  %s147 = scalar_lea.vmem %s99, 257
  %v148 = vld [vmem:[%s147] ss:$2 sm:$0xff]
  %s149 = scalar_lea.vmem %s99, 289
  %v150 = vld [vmem:[%s149] ss:$2 sm:$0xff]
  %s151 = scalar_lea.vmem %s99, 321
  %v152 = vld [vmem:[%s151] ss:$2 sm:$0xff]
  %s153 = scalar_lea.vmem %s99, 353
  %v154 = vld [vmem:[%s153] ss:$2 sm:$0xff]
  %s155 = scalar_lea.vmem %s99, 385
  %v156 = vld [vmem:[%s155] ss:$2 sm:$0xff]
  %s157 = scalar_lea.vmem %s99, 417
  %v158 = vld [vmem:[%s157] ss:$2 sm:$0xff]
  %s159 = scalar_lea.vmem %s99, 449
  %v160 = vld [vmem:[%s159] ss:$2 sm:$0xff]
  %s161 = scalar_lea.vmem %s99, 481
  %v162 = vld [vmem:[%s161] ss:$2 sm:$0xff]
  %v163 = vmax.f32 %v36, %v68
  %v164 = vmax.f32 %v38, %v70
  %v165 = vmax.f32 %v40, %v72
  %v166 = vmax.f32 %v42, %v74
  %v167 = vmax.f32 %v44, %v76
  %v168 = vmax.f32 %v46, %v78
  %v169 = vmax.f32 %v48, %v80
  %v170 = vmax.f32 %v50, %v82
  %v171 = vmax.f32 %v52, %v84
  %v172 = vmax.f32 %v54, %v86
  %v173 = vmax.f32 %v56, %v88
  %v174 = vmax.f32 %v58, %v90
  %v175 = vmax.f32 %v60, %v92
  %v176 = vmax.f32 %v62, %v94
  %v177 = vmax.f32 %v64, %v96
  %v178 = vmax.f32 %v66, %v98
  %v179 = vmax.f32 %v100, %v132
  %v180 = vmax.f32 %v102, %v134
  %v181 = vmax.f32 %v104, %v136
  %v182 = vmax.f32 %v106, %v138
  %v183 = vmax.f32 %v108, %v140
  %v184 = vmax.f32 %v110, %v142
  %v185 = vmax.f32 %v112, %v144
  %v186 = vmax.f32 %v114, %v146
  %v187 = vmax.f32 %v116, %v148
  %v188 = vmax.f32 %v118, %v150
  %v189 = vmax.f32 %v120, %v152
  %v190 = vmax.f32 %v122, %v154
  %v191 = vmax.f32 %v124, %v156
  %v192 = vmax.f32 %v126, %v158
  %v193 = vmax.f32 %v128, %v160
  %v194 = vmax.f32 %v130, %v162
  %v195 = vmax.f32 %v163, %v179
  %v196 = vmax.f32 %v164, %v180
  %v197 = vmax.f32 %v165, %v181
  %v198 = vmax.f32 %v166, %v182
  %v199 = vmax.f32 %v167, %v183
  %v200 = vmax.f32 %v168, %v184
  %v201 = vmax.f32 %v169, %v185
  %v202 = vmax.f32 %v170, %v186
  %v203 = vmax.f32 %v171, %v187
  %v204 = vmax.f32 %v172, %v188
  %v205 = vmax.f32 %v173, %v189
  %v206 = vmax.f32 %v174, %v190
  %v207 = vmax.f32 %v175, %v191
  %v208 = vmax.f32 %v176, %v192
  %v209 = vmax.f32 %v177, %v193
  %v210 = vmax.f32 %v178, %v194
  %211 = vst [vmem:[#allocation2] sm:$0xf] 0
  %212 = vst [vmem:[#allocation2 + $0x4] sm:$0xf] 0
  %vm213 = vcmask 1040384
  %vm214 = vsmask.f32 256
  %vm215 = vmand %vm213, %vm214
  %v216 = vld [vmem:[#allocation2 + $0x8] sm:$0x1]
  %v217 = vsel %vm215, 0, %v216
  %218 = vst [vmem:[#allocation2 + $0x8] sm:$0x1] %v217
  %219 = vst [vmem:[#allocation2 + $0x78] sm:$0xf] 0
  %220 = vst [vmem:[#allocation2 + $0x7c] sm:$0xf] 0
  %v221 = vld [vmem:[#allocation2 + $0x80] sm:$0x1]
  %v222 = vsel %vm215, 0, %v221
  %223 = vst [vmem:[#allocation2 + $0x80] sm:$0x1] %v222
  %s224 = scalar_lea.vmem [#allocation2], 108
  %225 = vst [vmem:[%s224] sm:$0xf] 0
  %226 = vst [vmem:[%s224 + $0x4] sm:$0xf] 0
  %v227 = vld [vmem:[%s224 + $0x8] sm:$0x1]
  %v228 = vsel %vm215, 0, %v227
  %229 = vst [vmem:[%s224 + $0x8] sm:$0x1] %v228
  %230 = vst [vmem:[%s224 + $0x78] sm:$0xf] 0
  %231 = vst [vmem:[%s224 + $0x7c] sm:$0xf] 0
  %v232 = vld [vmem:[%s224 + $0x80] sm:$0x1]
  %v233 = vsel %vm215, 0, %v232
  %234 = vst [vmem:[%s224 + $0x80] sm:$0x1] %v233
  %s235 = scalar_lea.vmem [#allocation2], 12
  %236 = vst [vmem:[%s235] sm:$0xf] 0
  %237 = vst [vmem:[%s235 + $0xc] sm:$0xf] 0
  %238 = vst [vmem:[%s235 + $0x18] sm:$0xf] 0
  %239 = vst [vmem:[%s235 + $0x24] sm:$0xf] 0
  %240 = vst [vmem:[%s235 + $0x30] sm:$0xf] 0
  %241 = vst [vmem:[%s235 + $0x3c] sm:$0xf] 0
  %242 = vst [vmem:[%s235 + $0x48] sm:$0xf] 0
  %243 = vst [vmem:[%s235 + $0x54] sm:$0xf] 0
  %244 = vst [vmem:[%s235 + $0x78] sm:$0xf] 0
  %245 = vst [vmem:[%s235 + $0x84] sm:$0xf] 0
  %246 = vst [vmem:[%s235 + $0x90] sm:$0xf] 0
  %247 = vst [vmem:[%s235 + $0x9c] sm:$0xf] 0
  %248 = vst [vmem:[%s235 + $0xa8] sm:$0xf] 0
  %249 = vst [vmem:[%s235 + $0xb4] sm:$0xf] 0
  %250 = vst [vmem:[%s235 + $0xc0] sm:$0xf] 0
  %251 = vst [vmem:[%s235 + $0xcc] sm:$0xf] 0
  %v252 = vld [vmem:[%s235 + $0x8] sm:$0x1]
  %v253 = vsel %vm215, 0, %v252
  %254 = vst [vmem:[%s235 + $0x8] sm:$0x1] %v253
  %v255 = vld [vmem:[%s235 + $0x14] sm:$0x1]
  %v256 = vsel %vm215, 0, %v255
  %257 = vst [vmem:[%s235 + $0x14] sm:$0x1] %v256
  %v258 = vld [vmem:[%s235 + $0x20] sm:$0x1]
  %v259 = vsel %vm215, 0, %v258
  %260 = vst [vmem:[%s235 + $0x20] sm:$0x1] %v259
  %v261 = vld [vmem:[%s235 + $0x2c] sm:$0x1]
  %v262 = vsel %vm215, 0, %v261
  %263 = vst [vmem:[%s235 + $0x2c] sm:$0x1] %v262
  %v264 = vld [vmem:[%s235 + $0x38] sm:$0x1]
  %v265 = vsel %vm215, 0, %v264
  %266 = vst [vmem:[%s235 + $0x38] sm:$0x1] %v265
  %v267 = vld [vmem:[%s235 + $0x44] sm:$0x1]
  %v268 = vsel %vm215, 0, %v267
  %269 = vst [vmem:[%s235 + $0x44] sm:$0x1] %v268
  %v270 = vld [vmem:[%s235 + $0x50] sm:$0x1]
  %v271 = vsel %vm215, 0, %v270
  %272 = vst [vmem:[%s235 + $0x50] sm:$0x1] %v271
  %v273 = vld [vmem:[%s235 + $0x5c] sm:$0x1]
  %v274 = vsel %vm215, 0, %v273
  %275 = vst [vmem:[%s235 + $0x5c] sm:$0x1] %v274
  %v276 = vld [vmem:[%s235 + $0x80] sm:$0x1]
  %v277 = vsel %vm215, 0, %v276
  %278 = vst [vmem:[%s235 + $0x80] sm:$0x1] %v277
  %v279 = vld [vmem:[%s235 + $0x8c] sm:$0x1]
  %v280 = vsel %vm215, 0, %v279
  %281 = vst [vmem:[%s235 + $0x8c] sm:$0x1] %v280
  %v282 = vld [vmem:[%s235 + $0x98] sm:$0x1]
  %v283 = vsel %vm215, 0, %v282
  %284 = vst [vmem:[%s235 + $0x98] sm:$0x1] %v283
  %v285 = vld [vmem:[%s235 + $0xa4] sm:$0x1]
  %v286 = vsel %vm215, 0, %v285
  %287 = vst [vmem:[%s235 + $0xa4] sm:$0x1] %v286
  %v288 = vld [vmem:[%s235 + $0xb0] sm:$0x1]
  %v289 = vsel %vm215, 0, %v288
  %290 = vst [vmem:[%s235 + $0xb0] sm:$0x1] %v289
  %v291 = vld [vmem:[%s235 + $0xbc] sm:$0x1]
  %v292 = vsel %vm215, 0, %v291
  %293 = vst [vmem:[%s235 + $0xbc] sm:$0x1] %v292
  %v294 = vld [vmem:[%s235 + $0xc8] sm:$0x1]
  %v295 = vsel %vm215, 0, %v294
  %296 = vst [vmem:[%s235 + $0xc8] sm:$0x1] %v295
  %v297 = vld [vmem:[%s235 + $0xd4] sm:$0x1]
  %v298 = vsel %vm215, 0, %v297
  %299 = vst [vmem:[%s235 + $0xd4] sm:$0x1] %v298
  %v300 = vpack.c.bf16 %v195, %v195
  %v301 = vpack.c.bf16 %v196, %v196
  %v302 = vpack.c.bf16 %v197, %v197
  %v303 = vpack.c.bf16 %v198, %v198
  %v304 = vpack.c.bf16 %v199, %v199
  %v305 = vpack.c.bf16 %v200, %v200
  %v306 = vpack.c.bf16 %v201, %v201
  %v307 = vpack.c.bf16 %v202, %v202
  %v308 = vpack.c.bf16 %v203, %v203
  %v309 = vpack.c.bf16 %v204, %v204
  %v310 = vpack.c.bf16 %v205, %v205
  %v311 = vpack.c.bf16 %v206, %v206
  %v312 = vpack.c.bf16 %v207, %v207
  %v313 = vpack.c.bf16 %v208, %v208
  %v314 = vpack.c.bf16 %v209, %v209
  %v315 = vpack.c.bf16 %v210, %v210
  %316 = vst [vmem:[%s235 + $0x4] sm:$0xf] %v300
  %317 = vst [vmem:[%s235 + $0x10] sm:$0xf] %v301
  %318 = vst [vmem:[%s235 + $0x1c] sm:$0xf] %v302
  %319 = vst [vmem:[%s235 + $0x28] sm:$0xf] %v303
  %320 = vst [vmem:[%s235 + $0x34] sm:$0xf] %v304
  %321 = vst [vmem:[%s235 + $0x40] sm:$0xf] %v305
  %322 = vst [vmem:[%s235 + $0x4c] sm:$0xf] %v306
  %323 = vst [vmem:[%s235 + $0x58] sm:$0xf] %v307
  %324 = vst [vmem:[%s235 + $0x7c] sm:$0xf] %v308
  %325 = vst [vmem:[%s235 + $0x88] sm:$0xf] %v309
  %326 = vst [vmem:[%s235 + $0x94] sm:$0xf] %v310
  %327 = vst [vmem:[%s235 + $0xa0] sm:$0xf] %v311
  %328 = vst [vmem:[%s235 + $0xac] sm:$0xf] %v312
  %329 = vst [vmem:[%s235 + $0xb8] sm:$0xf] %v313
  %330 = vst [vmem:[%s235 + $0xc4] sm:$0xf] %v314
  %331 = vst [vmem:[%s235 + $0xd0] sm:$0xf] %v315
  %v332 = vld [vmem:[#allocation2] sm:$0x8]
  %v333 = vld [vmem:[#allocation2 + $0x4] sm:$0xf]
  %v334 = vld [vmem:[#allocation2 + $0xc] sm:$0x8]
  %v335 = vld [vmem:[#allocation2 + $0x10] sm:$0xf]
  %v336 = vld [vmem:[#allocation2 + $0x18] sm:$0x8]
  %v337 = vld [vmem:[#allocation2 + $0x1c] sm:$0xf]
  %v338 = vld [vmem:[#allocation2 + $0x24] sm:$0x8]
  %v339 = vld [vmem:[#allocation2 + $0x28] sm:$0xf]
  %v340 = vld [vmem:[#allocation2 + $0x30] sm:$0x8]
  %v341 = vld [vmem:[#allocation2 + $0x34] sm:$0xf]
  %v342 = vld [vmem:[#allocation2 + $0x3c] sm:$0x8]
  %v343 = vld [vmem:[#allocation2 + $0x40] sm:$0xf]
  %v344 = vld [vmem:[#allocation2 + $0x48] sm:$0x8]
  %v345 = vld [vmem:[#allocation2 + $0x4c] sm:$0xf]
  %v346 = vld [vmem:[#allocation2 + $0x54] sm:$0x8]
  %v347 = vld [vmem:[#allocation2 + $0x58] sm:$0xf]
  %v348 = vld [vmem:[#allocation2 + $0x78] sm:$0x8]
  %v349 = vld [vmem:[#allocation2 + $0x7c] sm:$0xf]
  %v350 = vld [vmem:[#allocation2 + $0x84] sm:$0x8]
  %v351 = vld [vmem:[#allocation2 + $0x88] sm:$0xf]
  %v352 = vld [vmem:[#allocation2 + $0x90] sm:$0x8]
  %v353 = vld [vmem:[#allocation2 + $0x94] sm:$0xf]
  %v354 = vld [vmem:[#allocation2 + $0x9c] sm:$0x8]
  %v355 = vld [vmem:[#allocation2 + $0xa0] sm:$0xf]
  %v356 = vld [vmem:[#allocation2 + $0xa8] sm:$0x8]
  %v357 = vld [vmem:[#allocation2 + $0xac] sm:$0xf]
  %v358 = vld [vmem:[#allocation2 + $0xb4] sm:$0x8]
  %v359 = vld [vmem:[#allocation2 + $0xb8] sm:$0xf]
  %v360 = vld [vmem:[#allocation2 + $0xc0] sm:$0x8]
  %v361 = vld [vmem:[#allocation2 + $0xc4] sm:$0xf]
  %v362 = vld [vmem:[#allocation2 + $0xcc] sm:$0x8]
  %v363 = vld [vmem:[#allocation2 + $0xd0] sm:$0xf]
  %vm364 = vsmask.f32 4368
  %vm365 = vmor %vm214, %vm364
  %v367 = vshrl.u32 %v332, 16
  %v369 = vrot.slane %v367, 7
  %v370 = vrot.slane %v369, 4
  %v372 = vshrl.u32 %v333, 16
  %v374 = vrot.slane %v372, 7
  %v375 = vshll.u32 %v333, 16
  %v377 = vor.u32 %v374, %v375
  %v378 = vsel %vm365, %v370, %v377
  %v380 = vshrl.u32 %v334, 16
  %v382 = vrot.slane %v380, 7
  %v383 = vrot.slane %v382, 4
  %v385 = vshrl.u32 %v335, 16
  %v387 = vrot.slane %v385, 7
  %v388 = vshll.u32 %v335, 16
  %v390 = vor.u32 %v387, %v388
  %v391 = vsel %vm365, %v383, %v390
  %v393 = vshrl.u32 %v336, 16
  %v395 = vrot.slane %v393, 7
  %v396 = vrot.slane %v395, 4
  %v398 = vshrl.u32 %v337, 16
  %v400 = vrot.slane %v398, 7
  %v401 = vshll.u32 %v337, 16
  %v403 = vor.u32 %v400, %v401
  %v404 = vsel %vm365, %v396, %v403
  %v406 = vshrl.u32 %v338, 16
  %v408 = vrot.slane %v406, 7
  %v409 = vrot.slane %v408, 4
  %v411 = vshrl.u32 %v339, 16
  %v413 = vrot.slane %v411, 7
  %v414 = vshll.u32 %v339, 16
  %v416 = vor.u32 %v413, %v414
  %v417 = vsel %vm365, %v409, %v416
  %v419 = vshrl.u32 %v340, 16
  %v421 = vrot.slane %v419, 7
  %v422 = vrot.slane %v421, 4
  %v424 = vshrl.u32 %v341, 16
  %v426 = vrot.slane %v424, 7
  %v427 = vshll.u32 %v341, 16
  %v429 = vor.u32 %v426, %v427
  %v430 = vsel %vm365, %v422, %v429
  %v432 = vshrl.u32 %v342, 16
  %v434 = vrot.slane %v432, 7
  %v435 = vrot.slane %v434, 4
  %v437 = vshrl.u32 %v343, 16
  %v439 = vrot.slane %v437, 7
  %v440 = vshll.u32 %v343, 16
  %v442 = vor.u32 %v439, %v440
  %v443 = vsel %vm365, %v435, %v442
  %v445 = vshrl.u32 %v344, 16
  %v447 = vrot.slane %v445, 7
  %v448 = vrot.slane %v447, 4
  %v450 = vshrl.u32 %v345, 16
  %v452 = vrot.slane %v450, 7
  %v453 = vshll.u32 %v345, 16
  %v455 = vor.u32 %v452, %v453
  %v456 = vsel %vm365, %v448, %v455
  %v458 = vshrl.u32 %v346, 16
  %v460 = vrot.slane %v458, 7
  %v461 = vrot.slane %v460, 4
  %v463 = vshrl.u32 %v347, 16
  %v465 = vrot.slane %v463, 7
  %v466 = vshll.u32 %v347, 16
  %v468 = vor.u32 %v465, %v466
  %v469 = vsel %vm365, %v461, %v468
  %v471 = vshrl.u32 %v348, 16
  %v473 = vrot.slane %v471, 7
  %v474 = vrot.slane %v473, 4
  %v476 = vshrl.u32 %v349, 16
  %v478 = vrot.slane %v476, 7
  %v479 = vshll.u32 %v349, 16
  %v481 = vor.u32 %v478, %v479
  %v482 = vsel %vm365, %v474, %v481
  %v484 = vshrl.u32 %v350, 16
  %v486 = vrot.slane %v484, 7
  %v487 = vrot.slane %v486, 4
  %v489 = vshrl.u32 %v351, 16
  %v491 = vrot.slane %v489, 7
  %v492 = vshll.u32 %v351, 16
  %v494 = vor.u32 %v491, %v492
  %v495 = vsel %vm365, %v487, %v494
  %v497 = vshrl.u32 %v352, 16
  %v499 = vrot.slane %v497, 7
  %v500 = vrot.slane %v499, 4
  %v502 = vshrl.u32 %v353, 16
  %v504 = vrot.slane %v502, 7
  %v505 = vshll.u32 %v353, 16
  %v507 = vor.u32 %v504, %v505
  %v508 = vsel %vm365, %v500, %v507
  %v510 = vshrl.u32 %v354, 16
  %v512 = vrot.slane %v510, 7
  %v513 = vrot.slane %v512, 4
  %v515 = vshrl.u32 %v355, 16
  %v517 = vrot.slane %v515, 7
  %v518 = vshll.u32 %v355, 16
  %v520 = vor.u32 %v517, %v518
  %v521 = vsel %vm365, %v513, %v520
  %v523 = vshrl.u32 %v356, 16
  %v525 = vrot.slane %v523, 7
  %v526 = vrot.slane %v525, 4
  %v528 = vshrl.u32 %v357, 16
  %v530 = vrot.slane %v528, 7
  %v531 = vshll.u32 %v357, 16
  %v533 = vor.u32 %v530, %v531
  %v534 = vsel %vm365, %v526, %v533
  %v536 = vshrl.u32 %v358, 16
  %v538 = vrot.slane %v536, 7
  %v539 = vrot.slane %v538, 4
  %v541 = vshrl.u32 %v359, 16
  %v543 = vrot.slane %v541, 7
  %v544 = vshll.u32 %v359, 16
  %v546 = vor.u32 %v543, %v544
  %v547 = vsel %vm365, %v539, %v546
  %v549 = vshrl.u32 %v360, 16
  %v551 = vrot.slane %v549, 7
  %v552 = vrot.slane %v551, 4
  %v554 = vshrl.u32 %v361, 16
  %v556 = vrot.slane %v554, 7
  %v557 = vshll.u32 %v361, 16
  %v559 = vor.u32 %v556, %v557
  %v560 = vsel %vm365, %v552, %v559
  %v562 = vshrl.u32 %v362, 16
  %v564 = vrot.slane %v562, 7
  %v565 = vrot.slane %v564, 4
  %v567 = vshrl.u32 %v363, 16
  %v569 = vrot.slane %v567, 7
  %v570 = vshll.u32 %v363, 16
  %v572 = vor.u32 %v569, %v570
  %v573 = vsel %vm365, %v565, %v572
  %v574 = vld [vmem:[%s1] sm:$0xf]
  %v575 = vld [vmem:[%s1 + $0x4] sm:$0xf]
  %v576 = vld [vmem:[%s1 + $0x8] sm:$0xf]
  %v577 = vld [vmem:[%s1 + $0xc] sm:$0xf]
  %v578 = vld [vmem:[%s1 + $0x10] sm:$0xf]
  %v579 = vld [vmem:[%s1 + $0x14] sm:$0xf]
  %v580 = vld [vmem:[%s1 + $0x18] sm:$0xf]
  %v581 = vld [vmem:[%s1 + $0x1c] sm:$0xf]
  %v582 = vld [vmem:[%s1 + $0x20] sm:$0xf]
  %v583 = vld [vmem:[%s1 + $0x24] sm:$0xf]
  %v584 = vld [vmem:[%s1 + $0x28] sm:$0xf]
  %v585 = vld [vmem:[%s1 + $0x2c] sm:$0xf]
  %v586 = vld [vmem:[%s1 + $0x30] sm:$0xf]
  %v587 = vld [vmem:[%s1 + $0x34] sm:$0xf]
  %v588 = vld [vmem:[%s1 + $0x38] sm:$0xf]
  %v589 = vld [vmem:[%s1 + $0x3c] sm:$0xf]
  %s590 = scalar_lea.vmem %s1, 64
  %v591 = vld [vmem:[%s590] sm:$0xf]
  %v592 = vld [vmem:[%s590 + $0x4] sm:$0xf]
  %v593 = vld [vmem:[%s590 + $0x8] sm:$0xf]
  %v594 = vld [vmem:[%s590 + $0xc] sm:$0xf]
  %v595 = vld [vmem:[%s590 + $0x10] sm:$0xf]
  %v596 = vld [vmem:[%s590 + $0x14] sm:$0xf]
  %v597 = vld [vmem:[%s590 + $0x18] sm:$0xf]
  %v598 = vld [vmem:[%s590 + $0x1c] sm:$0xf]
  %v599 = vld [vmem:[%s590 + $0x20] sm:$0xf]
  %v600 = vld [vmem:[%s590 + $0x24] sm:$0xf]
  %v601 = vld [vmem:[%s590 + $0x28] sm:$0xf]
  %v602 = vld [vmem:[%s590 + $0x2c] sm:$0xf]
  %v603 = vld [vmem:[%s590 + $0x30] sm:$0xf]
  %v604 = vld [vmem:[%s590 + $0x34] sm:$0xf]
  %v605 = vld [vmem:[%s590 + $0x38] sm:$0xf]
  %v606 = vld [vmem:[%s590 + $0x3c] sm:$0xf]
  %v623 = vunpack.c.l.b16 %v333
  %v624 = vunpack.c.l.b16 %v335
  %v625 = vunpack.c.l.b16 %v337
  %v626 = vunpack.c.l.b16 %v339
  %v627 = vunpack.c.l.b16 %v341
  %v628 = vunpack.c.l.b16 %v343
  %v629 = vunpack.c.l.b16 %v345
  %v630 = vunpack.c.l.b16 %v347
  %v631 = vunpack.c.l.b16 %v349
  %v632 = vunpack.c.l.b16 %v351
  %v633 = vunpack.c.l.b16 %v353
  %v634 = vunpack.c.l.b16 %v355
  %v635 = vunpack.c.l.b16 %v357
  %v636 = vunpack.c.l.b16 %v359
  %v637 = vunpack.c.l.b16 %v361
  %v638 = vunpack.c.l.b16 %v363
  %v639 = vpack.c.b16 %v624, %v623
  %v640 = vpack.c.b16 %v626, %v625
  %v641 = vpack.c.b16 %v628, %v627
  %v642 = vpack.c.b16 %v630, %v629
  %v643 = vpack.c.b16 %v632, %v631
  %v644 = vpack.c.b16 %v634, %v633
  %v645 = vpack.c.b16 %v636, %v635
  %v646 = vpack.c.b16 %v638, %v637
  %v671 = vunpack.c.l.b16 %v591
  %v672 = vunpack.c.l.b16 %v592
  %v673 = vunpack.c.l.b16 %v593
  %v674 = vunpack.c.l.b16 %v594
  %v675 = vunpack.c.l.b16 %v595
  %v676 = vunpack.c.l.b16 %v596
  %v677 = vunpack.c.l.b16 %v597
  %v678 = vunpack.c.l.b16 %v598
  %v679 = vunpack.c.l.b16 %v599
  %v680 = vunpack.c.l.b16 %v600
  %v681 = vunpack.c.l.b16 %v601
  %v682 = vunpack.c.l.b16 %v602
  %v683 = vunpack.c.l.b16 %v603
  %v684 = vunpack.c.l.b16 %v604
  %v685 = vunpack.c.l.b16 %v605
  %v686 = vunpack.c.l.b16 %v606
  %v687 = vpack.c.b16 %v672, %v671
  %v688 = vpack.c.b16 %v674, %v673
  %v689 = vpack.c.b16 %v676, %v675
  %v690 = vpack.c.b16 %v678, %v677
  %v691 = vpack.c.b16 %v680, %v679
  %v692 = vpack.c.b16 %v682, %v681
  %v693 = vpack.c.b16 %v684, %v683
  %v694 = vpack.c.b16 %v686, %v685
  %703 = vmatprep.subr.bf16.mxu0 0
  %704 = vmatpush1.bf16.msra.mxu0 %v687
  %705 = vmatprep.subr.bf16.mxu0 0
  %706 = vmatpush1.bf16.msra.mxu0 %v688
  %707 = vmatprep.subr.bf16.mxu0 0
  %708 = vmatpush1.bf16.msra.mxu0 %v689
  %709 = vmatprep.subr.bf16.mxu0 0
  %710 = vmatpush1.bf16.msra.mxu0 %v690
  %711 = vmatprep.subr.bf16.mxu0 0
  %712 = vmatpush1.bf16.msra.mxu0 %v691
  %713 = vmatprep.subr.bf16.mxu0 0
  %714 = vmatpush1.bf16.msra.mxu0 %v692
  %715 = vmatprep.subr.bf16.mxu0 0
  %716 = vmatpush1.bf16.msra.mxu0 %v693
  %717 = vmatprep.subr.bf16.mxu0 0
  %718 = vmatpush1.bf16.msra.mxu0 %v694
  %719 = vmatprep.subr.bf16.mxu0 0
  %720 = vmatpush1.bf16.msra.mxu0 0
  %721 = vmatprep.subr.bf16.mxu0 0
  %722 = vmatpush1.bf16.msra.mxu0 0
  %723 = vmatprep.subr.bf16.mxu0 0
  %724 = vmatpush1.bf16.msra.mxu0 0
  %725 = vmatprep.subr.bf16.mxu0 0
  %726 = vmatpush1.bf16.msra.mxu0 0
  %727 = vmatprep.subr.bf16.mxu0 0
  %728 = vmatpush1.bf16.msra.mxu0 0
  %729 = vmatprep.subr.bf16.mxu0 0
  %730 = vmatpush1.bf16.msra.mxu0 0
  %731 = vmatprep.subr.bf16.mxu0 0
  %732 = vmatpush1.bf16.msra.mxu0 0
  %733 = vmatprep.subr.bf16.mxu0 0
  %734 = vmatpush1.bf16.msra.mxu0 0
  %735 = vmatprep.mubr.bf16.mxu0 0
  %736 = vmatmul.mubr.bf16.gmra.mrb[0].mxu0 %v639
  %v737 = vpop.f32.mrb[0].mxu0
  %v738 = vadd.f32 0.0, %v737
  %v739 = vpop.f32.mrb[0].mxu0
  %v740 = vpop.f32.mrb[0].mxu0
  %v741 = vadd.f32 0.0, %v740
  %v742 = vpop.f32.mrb[0].mxu0
  %743 = vmatprep.mubr.bf16.mxu0 0
  %744 = vmatmul.mubr.bf16.gmra.mrb[0].mxu0 %v640
  %v745 = vpop.f32.mrb[0].mxu0
  %v746 = vadd.f32 0.0, %v745
  %v747 = vpop.f32.mrb[0].mxu0
  %v748 = vpop.f32.mrb[0].mxu0
  %v749 = vadd.f32 0.0, %v748
  %v750 = vpop.f32.mrb[0].mxu0
  %751 = vmatprep.mubr.bf16.mxu0 0
  %752 = vmatmul.mubr.bf16.gmra.mrb[0].mxu0 %v641
  %v753 = vpop.f32.mrb[0].mxu0
  %v754 = vadd.f32 0.0, %v753
  %v755 = vpop.f32.mrb[0].mxu0
  %v756 = vpop.f32.mrb[0].mxu0
  %v757 = vadd.f32 0.0, %v756
  %v758 = vpop.f32.mrb[0].mxu0
  %759 = vmatprep.mubr.bf16.mxu0 0
  %760 = vmatmul.mubr.bf16.gmra.mrb[0].mxu0 %v642
  %v761 = vpop.f32.mrb[0].mxu0
  %v762 = vadd.f32 0.0, %v761
  %v763 = vpop.f32.mrb[0].mxu0
  %v764 = vpop.f32.mrb[0].mxu0
  %v765 = vadd.f32 0.0, %v764
  %v766 = vpop.f32.mrb[0].mxu0
  %767 = vmatprep.mubr.bf16.mxu0 0
  %768 = vmatmul.mubr.bf16.gmra.mrb[0].mxu0 %v643
  %v769 = vpop.f32.mrb[0].mxu0
  %v770 = vadd.f32 0.0, %v769
  %v771 = vpop.f32.mrb[0].mxu0
  %v772 = vpop.f32.mrb[0].mxu0
  %v773 = vadd.f32 0.0, %v772
  %v774 = vpop.f32.mrb[0].mxu0
  %775 = vmatprep.mubr.bf16.mxu0 0
  %776 = vmatmul.mubr.bf16.gmra.mrb[0].mxu0 %v644
  %v777 = vpop.f32.mrb[0].mxu0
  %v778 = vadd.f32 0.0, %v777
  %v779 = vpop.f32.mrb[0].mxu0
  %v780 = vpop.f32.mrb[0].mxu0
  %v781 = vadd.f32 0.0, %v780
  %v782 = vpop.f32.mrb[0].mxu0
  %783 = vmatprep.mubr.bf16.mxu0 0
  %784 = vmatmul.mubr.bf16.gmra.mrb[0].mxu0 %v645
  %v785 = vpop.f32.mrb[0].mxu0
  %v786 = vadd.f32 0.0, %v785
  %v787 = vpop.f32.mrb[0].mxu0
  %v788 = vpop.f32.mrb[0].mxu0
  %v789 = vadd.f32 0.0, %v788
  %v790 = vpop.f32.mrb[0].mxu0
  %791 = vmatprep.mubr.bf16.mxu0 0
  %792 = vmatmul.mubr.bf16.gmra.mrb[0].mxu0 %v646
  %v793 = vpop.f32.mrb[0].mxu0
  %v794 = vadd.f32 0.0, %v793
  %v795 = vpop.f32.mrb[0].mxu0
  %v796 = vpop.f32.mrb[0].mxu0
  %v797 = vadd.f32 0.0, %v796
  %v798 = vpop.f32.mrb[0].mxu0
  %799 = vdwg.mxu0
  %v800 = vunpack.c.l.b16 %v378
  %v801 = vunpack.c.l.b16 %v391
  %v802 = vunpack.c.l.b16 %v404
  %v803 = vunpack.c.l.b16 %v417
  %v804 = vunpack.c.l.b16 %v430
  %v805 = vunpack.c.l.b16 %v443
  %v806 = vunpack.c.l.b16 %v456
  %v807 = vunpack.c.l.b16 %v469
  %v808 = vunpack.c.l.b16 %v482
  %v809 = vunpack.c.l.b16 %v495
  %v810 = vunpack.c.l.b16 %v508
  %v811 = vunpack.c.l.b16 %v521
  %v812 = vunpack.c.l.b16 %v534
  %v813 = vunpack.c.l.b16 %v547
  %v814 = vunpack.c.l.b16 %v560
  %v815 = vunpack.c.l.b16 %v573
  %v816 = vpack.c.b16 %v801, %v800
  %v817 = vpack.c.b16 %v803, %v802
  %v818 = vpack.c.b16 %v805, %v804
  %v819 = vpack.c.b16 %v807, %v806
  %v820 = vpack.c.b16 %v809, %v808
  %v821 = vpack.c.b16 %v811, %v810
  %v822 = vpack.c.b16 %v813, %v812
  %v823 = vpack.c.b16 %v815, %v814
  %v848 = vunpack.c.l.b16 %v574
  %v849 = vunpack.c.l.b16 %v575
  %v850 = vunpack.c.l.b16 %v576
  %v851 = vunpack.c.l.b16 %v577
  %v852 = vunpack.c.l.b16 %v578
  %v853 = vunpack.c.l.b16 %v579
  %v854 = vunpack.c.l.b16 %v580
  %v855 = vunpack.c.l.b16 %v581
  %v856 = vunpack.c.l.b16 %v582
  %v857 = vunpack.c.l.b16 %v583
  %v858 = vunpack.c.l.b16 %v584
  %v859 = vunpack.c.l.b16 %v585
  %v860 = vunpack.c.l.b16 %v586
  %v861 = vunpack.c.l.b16 %v587
  %v862 = vunpack.c.l.b16 %v588
  %v863 = vunpack.c.l.b16 %v589
  %v864 = vpack.c.b16 %v849, %v848
  %v865 = vpack.c.b16 %v851, %v850
  %v866 = vpack.c.b16 %v853, %v852
  %v867 = vpack.c.b16 %v855, %v854
  %v868 = vpack.c.b16 %v857, %v856
  %v869 = vpack.c.b16 %v859, %v858
  %v870 = vpack.c.b16 %v861, %v860
  %v871 = vpack.c.b16 %v863, %v862
  %880 = vmatprep.subr.bf16.mxu0 0
  %881 = vmatpush1.bf16.msra.mxu0 %v864
  %882 = vmatprep.subr.bf16.mxu0 0
  %883 = vmatpush1.bf16.msra.mxu0 %v865
  %884 = vmatprep.subr.bf16.mxu0 0
  %885 = vmatpush1.bf16.msra.mxu0 %v866
  %886 = vmatprep.subr.bf16.mxu0 0
  %887 = vmatpush1.bf16.msra.mxu0 %v867
  %888 = vmatprep.subr.bf16.mxu0 0
  %889 = vmatpush1.bf16.msra.mxu0 %v868
  %890 = vmatprep.subr.bf16.mxu0 0
  %891 = vmatpush1.bf16.msra.mxu0 %v869
  %892 = vmatprep.subr.bf16.mxu0 0
  %893 = vmatpush1.bf16.msra.mxu0 %v870
  %894 = vmatprep.subr.bf16.mxu0 0
  %895 = vmatpush1.bf16.msra.mxu0 %v871
  %896 = vmatprep.subr.bf16.mxu0 0
  %897 = vmatpush1.bf16.msra.mxu0 0
  %898 = vmatprep.subr.bf16.mxu0 0
  %899 = vmatpush1.bf16.msra.mxu0 0
  %900 = vmatprep.subr.bf16.mxu0 0
  %901 = vmatpush1.bf16.msra.mxu0 0
  %902 = vmatprep.subr.bf16.mxu0 0
  %903 = vmatpush1.bf16.msra.mxu0 0
  %904 = vmatprep.subr.bf16.mxu0 0
  %905 = vmatpush1.bf16.msra.mxu0 0
  %906 = vmatprep.subr.bf16.mxu0 0
  %907 = vmatpush1.bf16.msra.mxu0 0
  %908 = vmatprep.subr.bf16.mxu0 0
  %909 = vmatpush1.bf16.msra.mxu0 0
  %910 = vmatprep.subr.bf16.mxu0 0
  %911 = vmatpush1.bf16.msra.mxu0 0
  %912 = vmatprep.mubr.bf16.mxu0 0
  %913 = vmatmul.mubr.bf16.gmra.mrb[0].mxu0 %v816
  %v914 = vpop.f32.mrb[0].mxu0
  %v915 = vadd.f32 %v738, %v914
  %v916 = vpop.f32.mrb[0].mxu0
  %v917 = vpop.f32.mrb[0].mxu0
  %v918 = vadd.f32 %v741, %v917
  %v919 = vpop.f32.mrb[0].mxu0
  %920 = vmatprep.mubr.bf16.mxu0 0
  %921 = vmatmul.mubr.bf16.gmra.mrb[0].mxu0 %v817
  %v922 = vpop.f32.mrb[0].mxu0
  %v923 = vadd.f32 %v746, %v922
  %v924 = vpop.f32.mrb[0].mxu0
  %v925 = vpop.f32.mrb[0].mxu0
  %v926 = vadd.f32 %v749, %v925
  %v927 = vpop.f32.mrb[0].mxu0
  %928 = vmatprep.mubr.bf16.mxu0 0
  %929 = vmatmul.mubr.bf16.gmra.mrb[0].mxu0 %v818
  %v930 = vpop.f32.mrb[0].mxu0
  %v931 = vadd.f32 %v754, %v930
  %v932 = vpop.f32.mrb[0].mxu0
  %v933 = vpop.f32.mrb[0].mxu0
  %v934 = vadd.f32 %v757, %v933
  %v935 = vpop.f32.mrb[0].mxu0
  %936 = vmatprep.mubr.bf16.mxu0 0
  %937 = vmatmul.mubr.bf16.gmra.mrb[0].mxu0 %v819
  %v938 = vpop.f32.mrb[0].mxu0
  %v939 = vadd.f32 %v762, %v938
  %v940 = vpop.f32.mrb[0].mxu0
  %v941 = vpop.f32.mrb[0].mxu0
  %v942 = vadd.f32 %v765, %v941
  %v943 = vpop.f32.mrb[0].mxu0
  %944 = vmatprep.mubr.bf16.mxu0 0
  %945 = vmatmul.mubr.bf16.gmra.mrb[0].mxu0 %v820
  %v946 = vpop.f32.mrb[0].mxu0
  %v947 = vadd.f32 %v770, %v946
  %v948 = vpop.f32.mrb[0].mxu0
  %v949 = vpop.f32.mrb[0].mxu0
  %v950 = vadd.f32 %v773, %v949
  %v951 = vpop.f32.mrb[0].mxu0
  %952 = vmatprep.mubr.bf16.mxu0 0
  %953 = vmatmul.mubr.bf16.gmra.mrb[0].mxu0 %v821
  %v954 = vpop.f32.mrb[0].mxu0
  %v955 = vadd.f32 %v778, %v954
  %v956 = vpop.f32.mrb[0].mxu0
  %v957 = vpop.f32.mrb[0].mxu0
  %v958 = vadd.f32 %v781, %v957
  %v959 = vpop.f32.mrb[0].mxu0
  %960 = vmatprep.mubr.bf16.mxu0 0
  %961 = vmatmul.mubr.bf16.gmra.mrb[0].mxu0 %v822
  %v962 = vpop.f32.mrb[0].mxu0
  %v963 = vadd.f32 %v786, %v962
  %v964 = vpop.f32.mrb[0].mxu0
  %v965 = vpop.f32.mrb[0].mxu0
  %v966 = vadd.f32 %v789, %v965
  %v967 = vpop.f32.mrb[0].mxu0
  %968 = vmatprep.mubr.bf16.mxu0 0
  %969 = vmatmul.mubr.bf16.gmra.mrb[0].mxu0 %v823
  %v970 = vpop.f32.mrb[0].mxu0
  %v971 = vadd.f32 %v794, %v970
  %v972 = vpop.f32.mrb[0].mxu0
  %v973 = vpop.f32.mrb[0].mxu0
  %v974 = vadd.f32 %v797, %v973
  %v975 = vpop.f32.mrb[0].mxu0
  %976 = vdwg.mxu0
  %v977 = vld [vmem:[#allocation2 + $0x4] sm:$0xf]
  %v978 = vld [vmem:[#allocation2 + $0x8] sm:$0x1]
  %v979 = vld [vmem:[#allocation2 + $0x10] sm:$0xf]
  %v980 = vld [vmem:[#allocation2 + $0x14] sm:$0x1]
  %v981 = vld [vmem:[#allocation2 + $0x1c] sm:$0xf]
  %v982 = vld [vmem:[#allocation2 + $0x20] sm:$0x1]
  %v983 = vld [vmem:[#allocation2 + $0x28] sm:$0xf]
  %v984 = vld [vmem:[#allocation2 + $0x2c] sm:$0x1]
  %v985 = vld [vmem:[#allocation2 + $0x34] sm:$0xf]
  %v986 = vld [vmem:[#allocation2 + $0x38] sm:$0x1]
  %v987 = vld [vmem:[#allocation2 + $0x40] sm:$0xf]
  %v988 = vld [vmem:[#allocation2 + $0x44] sm:$0x1]
  %v989 = vld [vmem:[#allocation2 + $0x4c] sm:$0xf]
  %v990 = vld [vmem:[#allocation2 + $0x50] sm:$0x1]
  %v991 = vld [vmem:[#allocation2 + $0x58] sm:$0xf]
  %v992 = vld [vmem:[#allocation2 + $0x5c] sm:$0x1]
  %v993 = vld [vmem:[#allocation2 + $0x7c] sm:$0xf]
  %v994 = vld [vmem:[#allocation2 + $0x80] sm:$0x1]
  %v995 = vld [vmem:[#allocation2 + $0x88] sm:$0xf]
  %v996 = vld [vmem:[#allocation2 + $0x8c] sm:$0x1]
  %v997 = vld [vmem:[#allocation2 + $0x94] sm:$0xf]
  %v998 = vld [vmem:[#allocation2 + $0x98] sm:$0x1]
  %v999 = vld [vmem:[#allocation2 + $0xa0] sm:$0xf]
  %v1000 = vld [vmem:[#allocation2 + $0xa4] sm:$0x1]
  %v1001 = vld [vmem:[#allocation2 + $0xac] sm:$0xf]
  %v1002 = vld [vmem:[#allocation2 + $0xb0] sm:$0x1]
  %v1003 = vld [vmem:[#allocation2 + $0xb8] sm:$0xf]
  %v1004 = vld [vmem:[#allocation2 + $0xbc] sm:$0x1]
  %v1005 = vld [vmem:[#allocation2 + $0xc4] sm:$0xf]
  %v1006 = vld [vmem:[#allocation2 + $0xc8] sm:$0x1]
  %v1007 = vld [vmem:[#allocation2 + $0xd0] sm:$0xf]
  %v1008 = vld [vmem:[#allocation2 + $0xd4] sm:$0x1]
  %vm1009 = vsmask.f32 3328
  %vm1010 = vsmask.f32 7440
  %vm1011 = vmor %vm1009, %vm1010
  %v1013 = vshrl.u32 %v977, 16
  %v1015 = vrot.slane %v1013, 4
  %v1016 = vshll.u32 %v977, 16
  %v1018 = vrot.slane %v1016, 5
  %v1019 = vor.u32 %v1015, %v1018
  %v1020 = vrot.slane %v1019, 4
  %v1022 = vshll.u32 %v978, 16
  %v1024 = vrot.slane %v1022, 5
  %v1025 = vsel %vm1011, %v1020, %v1024
  %v1027 = vshrl.u32 %v979, 16
  %v1029 = vrot.slane %v1027, 4
  %v1030 = vshll.u32 %v979, 16
  %v1032 = vrot.slane %v1030, 5
  %v1033 = vor.u32 %v1029, %v1032
  %v1034 = vrot.slane %v1033, 4
  %v1036 = vshll.u32 %v980, 16
  %v1038 = vrot.slane %v1036, 5
  %v1039 = vsel %vm1011, %v1034, %v1038
  %v1041 = vshrl.u32 %v981, 16
  %v1043 = vrot.slane %v1041, 4
  %v1044 = vshll.u32 %v981, 16
  %v1046 = vrot.slane %v1044, 5
  %v1047 = vor.u32 %v1043, %v1046
  %v1048 = vrot.slane %v1047, 4
  %v1050 = vshll.u32 %v982, 16
  %v1052 = vrot.slane %v1050, 5
  %v1053 = vsel %vm1011, %v1048, %v1052
  %v1055 = vshrl.u32 %v983, 16
  %v1057 = vrot.slane %v1055, 4
  %v1058 = vshll.u32 %v983, 16
  %v1060 = vrot.slane %v1058, 5
  %v1061 = vor.u32 %v1057, %v1060
  %v1062 = vrot.slane %v1061, 4
  %v1064 = vshll.u32 %v984, 16
  %v1066 = vrot.slane %v1064, 5
  %v1067 = vsel %vm1011, %v1062, %v1066
  %v1069 = vshrl.u32 %v985, 16
  %v1071 = vrot.slane %v1069, 4
  %v1072 = vshll.u32 %v985, 16
  %v1074 = vrot.slane %v1072, 5
  %v1075 = vor.u32 %v1071, %v1074
  %v1076 = vrot.slane %v1075, 4
  %v1078 = vshll.u32 %v986, 16
  %v1080 = vrot.slane %v1078, 5
  %v1081 = vsel %vm1011, %v1076, %v1080
  %v1083 = vshrl.u32 %v987, 16
  %v1085 = vrot.slane %v1083, 4
  %v1086 = vshll.u32 %v987, 16
  %v1088 = vrot.slane %v1086, 5
  %v1089 = vor.u32 %v1085, %v1088
  %v1090 = vrot.slane %v1089, 4
  %v1092 = vshll.u32 %v988, 16
  %v1094 = vrot.slane %v1092, 5
  %v1095 = vsel %vm1011, %v1090, %v1094
  %v1097 = vshrl.u32 %v989, 16
  %v1099 = vrot.slane %v1097, 4
  %v1100 = vshll.u32 %v989, 16
  %v1102 = vrot.slane %v1100, 5
  %v1103 = vor.u32 %v1099, %v1102
  %v1104 = vrot.slane %v1103, 4
  %v1106 = vshll.u32 %v990, 16
  %v1108 = vrot.slane %v1106, 5
  %v1109 = vsel %vm1011, %v1104, %v1108
  %v1111 = vshrl.u32 %v991, 16
  %v1113 = vrot.slane %v1111, 4
  %v1114 = vshll.u32 %v991, 16
  %v1116 = vrot.slane %v1114, 5
  %v1117 = vor.u32 %v1113, %v1116
  %v1118 = vrot.slane %v1117, 4
  %v1120 = vshll.u32 %v992, 16
  %v1122 = vrot.slane %v1120, 5
  %v1123 = vsel %vm1011, %v1118, %v1122
  %v1125 = vshrl.u32 %v993, 16
  %v1127 = vrot.slane %v1125, 4
  %v1128 = vshll.u32 %v993, 16
  %v1130 = vrot.slane %v1128, 5
  %v1131 = vor.u32 %v1127, %v1130
  %v1132 = vrot.slane %v1131, 4
  %v1134 = vshll.u32 %v994, 16
  %v1136 = vrot.slane %v1134, 5
  %v1137 = vsel %vm1011, %v1132, %v1136
  %v1139 = vshrl.u32 %v995, 16
  %v1141 = vrot.slane %v1139, 4
  %v1142 = vshll.u32 %v995, 16
  %v1144 = vrot.slane %v1142, 5
  %v1145 = vor.u32 %v1141, %v1144
  %v1146 = vrot.slane %v1145, 4
  %v1148 = vshll.u32 %v996, 16
  %v1150 = vrot.slane %v1148, 5
  %v1151 = vsel %vm1011, %v1146, %v1150
  %v1153 = vshrl.u32 %v997, 16
  %v1155 = vrot.slane %v1153, 4
  %v1156 = vshll.u32 %v997, 16
  %v1158 = vrot.slane %v1156, 5
  %v1159 = vor.u32 %v1155, %v1158
  %v1160 = vrot.slane %v1159, 4
  %v1162 = vshll.u32 %v998, 16
  %v1164 = vrot.slane %v1162, 5
  %v1165 = vsel %vm1011, %v1160, %v1164
  %v1167 = vshrl.u32 %v999, 16
  %v1169 = vrot.slane %v1167, 4
  %v1170 = vshll.u32 %v999, 16
  %v1172 = vrot.slane %v1170, 5
  %v1173 = vor.u32 %v1169, %v1172
  %v1174 = vrot.slane %v1173, 4
  %v1176 = vshll.u32 %v1000, 16
  %v1178 = vrot.slane %v1176, 5
  %v1179 = vsel %vm1011, %v1174, %v1178
  %v1181 = vshrl.u32 %v1001, 16
  %v1183 = vrot.slane %v1181, 4
  %v1184 = vshll.u32 %v1001, 16
  %v1186 = vrot.slane %v1184, 5
  %v1187 = vor.u32 %v1183, %v1186
  %v1188 = vrot.slane %v1187, 4
  %v1190 = vshll.u32 %v1002, 16
  %v1192 = vrot.slane %v1190, 5
  %v1193 = vsel %vm1011, %v1188, %v1192
  %v1195 = vshrl.u32 %v1003, 16
  %v1197 = vrot.slane %v1195, 4
  %v1198 = vshll.u32 %v1003, 16
  %v1200 = vrot.slane %v1198, 5
  %v1201 = vor.u32 %v1197, %v1200
  %v1202 = vrot.slane %v1201, 4
  %v1204 = vshll.u32 %v1004, 16
  %v1206 = vrot.slane %v1204, 5
  %v1207 = vsel %vm1011, %v1202, %v1206
  %v1209 = vshrl.u32 %v1005, 16
  %v1211 = vrot.slane %v1209, 4
  %v1212 = vshll.u32 %v1005, 16
  %v1214 = vrot.slane %v1212, 5
  %v1215 = vor.u32 %v1211, %v1214
  %v1216 = vrot.slane %v1215, 4
  %v1218 = vshll.u32 %v1006, 16
  %v1220 = vrot.slane %v1218, 5
  %v1221 = vsel %vm1011, %v1216, %v1220
  %v1223 = vshrl.u32 %v1007, 16
  %v1225 = vrot.slane %v1223, 4
  %v1226 = vshll.u32 %v1007, 16
  %v1228 = vrot.slane %v1226, 5
  %v1229 = vor.u32 %v1225, %v1228
  %v1230 = vrot.slane %v1229, 4
  %v1232 = vshll.u32 %v1008, 16
  %v1234 = vrot.slane %v1232, 5
  %v1235 = vsel %vm1011, %v1230, %v1234
  %s1236 = scalar_lea.vmem %s1, 128
  %v1237 = vld [vmem:[%s1236] sm:$0xf]
  %v1238 = vld [vmem:[%s1236 + $0x4] sm:$0xf]
  %v1239 = vld [vmem:[%s1236 + $0x8] sm:$0xf]
  %v1240 = vld [vmem:[%s1236 + $0xc] sm:$0xf]
  %v1241 = vld [vmem:[%s1236 + $0x10] sm:$0xf]
  %v1242 = vld [vmem:[%s1236 + $0x14] sm:$0xf]
  %v1243 = vld [vmem:[%s1236 + $0x18] sm:$0xf]
  %v1244 = vld [vmem:[%s1236 + $0x1c] sm:$0xf]
  %v1245 = vld [vmem:[%s1236 + $0x20] sm:$0xf]
  %v1246 = vld [vmem:[%s1236 + $0x24] sm:$0xf]
  %v1247 = vld [vmem:[%s1236 + $0x28] sm:$0xf]
  %v1248 = vld [vmem:[%s1236 + $0x2c] sm:$0xf]
  %v1249 = vld [vmem:[%s1236 + $0x30] sm:$0xf]
  %v1250 = vld [vmem:[%s1236 + $0x34] sm:$0xf]
  %v1251 = vld [vmem:[%s1236 + $0x38] sm:$0xf]
  %v1252 = vld [vmem:[%s1236 + $0x3c] sm:$0xf]
  %v1253 = vunpack.c.l.b16 %v1025
  %v1254 = vunpack.c.l.b16 %v1039
  %v1255 = vunpack.c.l.b16 %v1053
  %v1256 = vunpack.c.l.b16 %v1067
  %v1257 = vunpack.c.l.b16 %v1081
  %v1258 = vunpack.c.l.b16 %v1095
  %v1259 = vunpack.c.l.b16 %v1109
  %v1260 = vunpack.c.l.b16 %v1123
  %v1261 = vunpack.c.l.b16 %v1137
  %v1262 = vunpack.c.l.b16 %v1151
  %v1263 = vunpack.c.l.b16 %v1165
  %v1264 = vunpack.c.l.b16 %v1179
  %v1265 = vunpack.c.l.b16 %v1193
  %v1266 = vunpack.c.l.b16 %v1207
  %v1267 = vunpack.c.l.b16 %v1221
  %v1268 = vunpack.c.l.b16 %v1235
  %v1269 = vpack.c.b16 %v1254, %v1253
  %v1270 = vpack.c.b16 %v1256, %v1255
  %v1271 = vpack.c.b16 %v1258, %v1257
  %v1272 = vpack.c.b16 %v1260, %v1259
  %v1273 = vpack.c.b16 %v1262, %v1261
  %v1274 = vpack.c.b16 %v1264, %v1263
  %v1275 = vpack.c.b16 %v1266, %v1265
  %v1276 = vpack.c.b16 %v1268, %v1267
  %v1301 = vunpack.c.l.b16 %v1237
  %v1302 = vunpack.c.l.b16 %v1238
  %v1303 = vunpack.c.l.b16 %v1239
  %v1304 = vunpack.c.l.b16 %v1240
  %v1305 = vunpack.c.l.b16 %v1241
  %v1306 = vunpack.c.l.b16 %v1242
  %v1307 = vunpack.c.l.b16 %v1243
  %v1308 = vunpack.c.l.b16 %v1244
  %v1309 = vunpack.c.l.b16 %v1245
  %v1310 = vunpack.c.l.b16 %v1246
  %v1311 = vunpack.c.l.b16 %v1247
  %v1312 = vunpack.c.l.b16 %v1248
  %v1313 = vunpack.c.l.b16 %v1249
  %v1314 = vunpack.c.l.b16 %v1250
  %v1315 = vunpack.c.l.b16 %v1251
  %v1316 = vunpack.c.l.b16 %v1252
  %v1317 = vpack.c.b16 %v1302, %v1301
  %v1318 = vpack.c.b16 %v1304, %v1303
  %v1319 = vpack.c.b16 %v1306, %v1305
  %v1320 = vpack.c.b16 %v1308, %v1307
  %v1321 = vpack.c.b16 %v1310, %v1309
  %v1322 = vpack.c.b16 %v1312, %v1311
  %v1323 = vpack.c.b16 %v1314, %v1313
  %v1324 = vpack.c.b16 %v1316, %v1315
  %1333 = vmatprep.subr.bf16.mxu0 0
  %1334 = vmatpush1.bf16.msra.mxu0 %v1317
  %1335 = vmatprep.subr.bf16.mxu0 0
  %1336 = vmatpush1.bf16.msra.mxu0 %v1318
  %1337 = vmatprep.subr.bf16.mxu0 0
  %1338 = vmatpush1.bf16.msra.mxu0 %v1319
  %1339 = vmatprep.subr.bf16.mxu0 0
  %1340 = vmatpush1.bf16.msra.mxu0 %v1320
  %1341 = vmatprep.subr.bf16.mxu0 0
  %1342 = vmatpush1.bf16.msra.mxu0 %v1321
  %1343 = vmatprep.subr.bf16.mxu0 0
  %1344 = vmatpush1.bf16.msra.mxu0 %v1322
  %1345 = vmatprep.subr.bf16.mxu0 0
  %1346 = vmatpush1.bf16.msra.mxu0 %v1323
  %1347 = vmatprep.subr.bf16.mxu0 0
  %1348 = vmatpush1.bf16.msra.mxu0 %v1324
  %1349 = vmatprep.subr.bf16.mxu0 0
  %1350 = vmatpush1.bf16.msra.mxu0 0
  %1351 = vmatprep.subr.bf16.mxu0 0
  %1352 = vmatpush1.bf16.msra.mxu0 0
  %1353 = vmatprep.subr.bf16.mxu0 0
  %1354 = vmatpush1.bf16.msra.mxu0 0
  %1355 = vmatprep.subr.bf16.mxu0 0
  %1356 = vmatpush1.bf16.msra.mxu0 0
  %1357 = vmatprep.subr.bf16.mxu0 0
  %1358 = vmatpush1.bf16.msra.mxu0 0
  %1359 = vmatprep.subr.bf16.mxu0 0
  %1360 = vmatpush1.bf16.msra.mxu0 0
  %1361 = vmatprep.subr.bf16.mxu0 0
  %1362 = vmatpush1.bf16.msra.mxu0 0
  %1363 = vmatprep.subr.bf16.mxu0 0
  %1364 = vmatpush1.bf16.msra.mxu0 0
  %1365 = vmatprep.mubr.bf16.mxu0 0
  %1366 = vmatmul.mubr.bf16.gmra.mrb[0].mxu0 %v1269
  %v1367 = vpop.f32.mrb[0].mxu0
  %v1368 = vadd.f32 0.0, %v1367
  %v1369 = vpop.f32.mrb[0].mxu0
  %v1370 = vpop.f32.mrb[0].mxu0
  %v1371 = vadd.f32 0.0, %v1370
  %v1372 = vpop.f32.mrb[0].mxu0
  %1373 = vmatprep.mubr.bf16.mxu0 0
  %1374 = vmatmul.mubr.bf16.gmra.mrb[0].mxu0 %v1270
  %v1375 = vpop.f32.mrb[0].mxu0
  %v1376 = vadd.f32 0.0, %v1375
  %v1377 = vpop.f32.mrb[0].mxu0
  %v1378 = vpop.f32.mrb[0].mxu0
  %v1379 = vadd.f32 0.0, %v1378
  %v1380 = vpop.f32.mrb[0].mxu0
  %1381 = vmatprep.mubr.bf16.mxu0 0
  %1382 = vmatmul.mubr.bf16.gmra.mrb[0].mxu0 %v1271
  %v1383 = vpop.f32.mrb[0].mxu0
  %v1384 = vadd.f32 0.0, %v1383
  %v1385 = vpop.f32.mrb[0].mxu0
  %v1386 = vpop.f32.mrb[0].mxu0
  %v1387 = vadd.f32 0.0, %v1386
  %v1388 = vpop.f32.mrb[0].mxu0
  %1389 = vmatprep.mubr.bf16.mxu0 0
  %1390 = vmatmul.mubr.bf16.gmra.mrb[0].mxu0 %v1272
  %v1391 = vpop.f32.mrb[0].mxu0
  %v1392 = vadd.f32 0.0, %v1391
  %v1393 = vpop.f32.mrb[0].mxu0
  %v1394 = vpop.f32.mrb[0].mxu0
  %v1395 = vadd.f32 0.0, %v1394
  %v1396 = vpop.f32.mrb[0].mxu0
  %1397 = vmatprep.mubr.bf16.mxu0 0
  %1398 = vmatmul.mubr.bf16.gmra.mrb[0].mxu0 %v1273
  %v1399 = vpop.f32.mrb[0].mxu0
  %v1400 = vadd.f32 0.0, %v1399
  %v1401 = vpop.f32.mrb[0].mxu0
  %v1402 = vpop.f32.mrb[0].mxu0
  %v1403 = vadd.f32 0.0, %v1402
  %v1404 = vpop.f32.mrb[0].mxu0
  %1405 = vmatprep.mubr.bf16.mxu0 0
  %1406 = vmatmul.mubr.bf16.gmra.mrb[0].mxu0 %v1274
  %v1407 = vpop.f32.mrb[0].mxu0
  %v1408 = vadd.f32 0.0, %v1407
  %v1409 = vpop.f32.mrb[0].mxu0
  %v1410 = vpop.f32.mrb[0].mxu0
  %v1411 = vadd.f32 0.0, %v1410
  %v1412 = vpop.f32.mrb[0].mxu0
  %1413 = vmatprep.mubr.bf16.mxu0 0
  %1414 = vmatmul.mubr.bf16.gmra.mrb[0].mxu0 %v1275
  %v1415 = vpop.f32.mrb[0].mxu0
  %v1416 = vadd.f32 0.0, %v1415
  %v1417 = vpop.f32.mrb[0].mxu0
  %v1418 = vpop.f32.mrb[0].mxu0
  %v1419 = vadd.f32 0.0, %v1418
  %v1420 = vpop.f32.mrb[0].mxu0
  %1421 = vmatprep.mubr.bf16.mxu0 0
  %1422 = vmatmul.mubr.bf16.gmra.mrb[0].mxu0 %v1276
  %v1423 = vpop.f32.mrb[0].mxu0
  %v1424 = vadd.f32 0.0, %v1423
  %v1425 = vpop.f32.mrb[0].mxu0
  %v1426 = vpop.f32.mrb[0].mxu0
  %v1427 = vadd.f32 0.0, %v1426
  %v1428 = vpop.f32.mrb[0].mxu0
  %1429 = vdwg.mxu0
  %v1430 = vadd.f32 %v915, %v1368
  %v1431 = vadd.f32 %v918, %v1371
  %v1432 = vadd.f32 %v923, %v1376
  %v1433 = vadd.f32 %v926, %v1379
  %v1434 = vadd.f32 %v931, %v1384
  %v1435 = vadd.f32 %v934, %v1387
  %v1436 = vadd.f32 %v939, %v1392
  %v1437 = vadd.f32 %v942, %v1395
  %v1438 = vadd.f32 %v947, %v1400
  %v1439 = vadd.f32 %v950, %v1403
  %v1440 = vadd.f32 %v955, %v1408
  %v1441 = vadd.f32 %v958, %v1411
  %v1442 = vadd.f32 %v963, %v1416
  %v1443 = vadd.f32 %v966, %v1419
  %v1444 = vadd.f32 %v971, %v1424
  %v1445 = vadd.f32 %v974, %v1427
  %v1446 = vld [vmem:[%s235] sm:$0x8]
  %v1447 = vld [vmem:[%s235 + $0x4] sm:$0xf]
  %v1448 = vld [vmem:[%s235 + $0xc] sm:$0x8]
  %v1449 = vld [vmem:[%s235 + $0x10] sm:$0xf]
  %v1450 = vld [vmem:[%s235 + $0x18] sm:$0x8]
  %v1451 = vld [vmem:[%s235 + $0x1c] sm:$0xf]
  %v1452 = vld [vmem:[%s235 + $0x24] sm:$0x8]
  %v1453 = vld [vmem:[%s235 + $0x28] sm:$0xf]
  %v1454 = vld [vmem:[%s235 + $0x30] sm:$0x8]
  %v1455 = vld [vmem:[%s235 + $0x34] sm:$0xf]
  %v1456 = vld [vmem:[%s235 + $0x3c] sm:$0x8]
  %v1457 = vld [vmem:[%s235 + $0x40] sm:$0xf]
  %v1458 = vld [vmem:[%s235 + $0x48] sm:$0x8]
  %v1459 = vld [vmem:[%s235 + $0x4c] sm:$0xf]
  %v1460 = vld [vmem:[%s235 + $0x54] sm:$0x8]
  %v1461 = vld [vmem:[%s235 + $0x58] sm:$0xf]
  %v1462 = vld [vmem:[%s235 + $0x78] sm:$0x8]
  %v1463 = vld [vmem:[%s235 + $0x7c] sm:$0xf]
  %v1464 = vld [vmem:[%s235 + $0x84] sm:$0x8]
  %v1465 = vld [vmem:[%s235 + $0x88] sm:$0xf]
  %v1466 = vld [vmem:[%s235 + $0x90] sm:$0x8]
  %v1467 = vld [vmem:[%s235 + $0x94] sm:$0xf]
  %v1468 = vld [vmem:[%s235 + $0x9c] sm:$0x8]
  %v1469 = vld [vmem:[%s235 + $0xa0] sm:$0xf]
  %v1470 = vld [vmem:[%s235 + $0xa8] sm:$0x8]
  %v1471 = vld [vmem:[%s235 + $0xac] sm:$0xf]
  %v1472 = vld [vmem:[%s235 + $0xb4] sm:$0x8]
  %v1473 = vld [vmem:[%s235 + $0xb8] sm:$0xf]
  %v1474 = vld [vmem:[%s235 + $0xc0] sm:$0x8]
  %v1475 = vld [vmem:[%s235 + $0xc4] sm:$0xf]
  %v1476 = vld [vmem:[%s235 + $0xcc] sm:$0x8]
  %v1477 = vld [vmem:[%s235 + $0xd0] sm:$0xf]
  %v1479 = vshrl.u32 %v1446, 16
  %v1481 = vrot.slane %v1479, 7
  %v1482 = vrot.slane %v1481, 4
  %v1484 = vshrl.u32 %v1447, 16
  %v1486 = vrot.slane %v1484, 7
  %v1487 = vshll.u32 %v1447, 16
  %v1489 = vor.u32 %v1486, %v1487
  %v1490 = vsel %vm365, %v1482, %v1489
  %v1492 = vshrl.u32 %v1448, 16
  %v1494 = vrot.slane %v1492, 7
  %v1495 = vrot.slane %v1494, 4
  %v1497 = vshrl.u32 %v1449, 16
  %v1499 = vrot.slane %v1497, 7
  %v1500 = vshll.u32 %v1449, 16
  %v1502 = vor.u32 %v1499, %v1500
  %v1503 = vsel %vm365, %v1495, %v1502
  %v1505 = vshrl.u32 %v1450, 16
  %v1507 = vrot.slane %v1505, 7
  %v1508 = vrot.slane %v1507, 4
  %v1510 = vshrl.u32 %v1451, 16
  %v1512 = vrot.slane %v1510, 7
  %v1513 = vshll.u32 %v1451, 16
  %v1515 = vor.u32 %v1512, %v1513
  %v1516 = vsel %vm365, %v1508, %v1515
  %v1518 = vshrl.u32 %v1452, 16
  %v1520 = vrot.slane %v1518, 7
  %v1521 = vrot.slane %v1520, 4
  %v1523 = vshrl.u32 %v1453, 16
  %v1525 = vrot.slane %v1523, 7
  %v1526 = vshll.u32 %v1453, 16
  %v1528 = vor.u32 %v1525, %v1526
  %v1529 = vsel %vm365, %v1521, %v1528
  %v1531 = vshrl.u32 %v1454, 16
  %v1533 = vrot.slane %v1531, 7
  %v1534 = vrot.slane %v1533, 4
  %v1536 = vshrl.u32 %v1455, 16
  %v1538 = vrot.slane %v1536, 7
  %v1539 = vshll.u32 %v1455, 16
  %v1541 = vor.u32 %v1538, %v1539
  %v1542 = vsel %vm365, %v1534, %v1541
  %v1544 = vshrl.u32 %v1456, 16
  %v1546 = vrot.slane %v1544, 7
  %v1547 = vrot.slane %v1546, 4
  %v1549 = vshrl.u32 %v1457, 16
  %v1551 = vrot.slane %v1549, 7
  %v1552 = vshll.u32 %v1457, 16
  %v1554 = vor.u32 %v1551, %v1552
  %v1555 = vsel %vm365, %v1547, %v1554
  %v1557 = vshrl.u32 %v1458, 16
  %v1559 = vrot.slane %v1557, 7
  %v1560 = vrot.slane %v1559, 4
  %v1562 = vshrl.u32 %v1459, 16
  %v1564 = vrot.slane %v1562, 7
  %v1565 = vshll.u32 %v1459, 16
  %v1567 = vor.u32 %v1564, %v1565
  %v1568 = vsel %vm365, %v1560, %v1567
  %v1570 = vshrl.u32 %v1460, 16
  %v1572 = vrot.slane %v1570, 7
  %v1573 = vrot.slane %v1572, 4
  %v1575 = vshrl.u32 %v1461, 16
  %v1577 = vrot.slane %v1575, 7
  %v1578 = vshll.u32 %v1461, 16
  %v1580 = vor.u32 %v1577, %v1578
  %v1581 = vsel %vm365, %v1573, %v1580
  %v1583 = vshrl.u32 %v1462, 16
  %v1585 = vrot.slane %v1583, 7
  %v1586 = vrot.slane %v1585, 4
  %v1588 = vshrl.u32 %v1463, 16
  %v1590 = vrot.slane %v1588, 7
  %v1591 = vshll.u32 %v1463, 16
  %v1593 = vor.u32 %v1590, %v1591
  %v1594 = vsel %vm365, %v1586, %v1593
  %v1596 = vshrl.u32 %v1464, 16
  %v1598 = vrot.slane %v1596, 7
  %v1599 = vrot.slane %v1598, 4
  %v1601 = vshrl.u32 %v1465, 16
  %v1603 = vrot.slane %v1601, 7
  %v1604 = vshll.u32 %v1465, 16
  %v1606 = vor.u32 %v1603, %v1604
  %v1607 = vsel %vm365, %v1599, %v1606
  %v1609 = vshrl.u32 %v1466, 16
  %v1611 = vrot.slane %v1609, 7
  %v1612 = vrot.slane %v1611, 4
  %v1614 = vshrl.u32 %v1467, 16
  %v1616 = vrot.slane %v1614, 7
  %v1617 = vshll.u32 %v1467, 16
  %v1619 = vor.u32 %v1616, %v1617
  %v1620 = vsel %vm365, %v1612, %v1619
  %v1622 = vshrl.u32 %v1468, 16
  %v1624 = vrot.slane %v1622, 7
  %v1625 = vrot.slane %v1624, 4
  %v1627 = vshrl.u32 %v1469, 16
  %v1629 = vrot.slane %v1627, 7
  %v1630 = vshll.u32 %v1469, 16
  %v1632 = vor.u32 %v1629, %v1630
  %v1633 = vsel %vm365, %v1625, %v1632
  %v1635 = vshrl.u32 %v1470, 16
  %v1637 = vrot.slane %v1635, 7
  %v1638 = vrot.slane %v1637, 4
  %v1640 = vshrl.u32 %v1471, 16
  %v1642 = vrot.slane %v1640, 7
  %v1643 = vshll.u32 %v1471, 16
  %v1645 = vor.u32 %v1642, %v1643
  %v1646 = vsel %vm365, %v1638, %v1645
  %v1648 = vshrl.u32 %v1472, 16
  %v1650 = vrot.slane %v1648, 7
  %v1651 = vrot.slane %v1650, 4
  %v1653 = vshrl.u32 %v1473, 16
  %v1655 = vrot.slane %v1653, 7
  %v1656 = vshll.u32 %v1473, 16
  %v1658 = vor.u32 %v1655, %v1656
  %v1659 = vsel %vm365, %v1651, %v1658
  %v1661 = vshrl.u32 %v1474, 16
  %v1663 = vrot.slane %v1661, 7
  %v1664 = vrot.slane %v1663, 4
  %v1666 = vshrl.u32 %v1475, 16
  %v1668 = vrot.slane %v1666, 7
  %v1669 = vshll.u32 %v1475, 16
  %v1671 = vor.u32 %v1668, %v1669
  %v1672 = vsel %vm365, %v1664, %v1671
  %v1674 = vshrl.u32 %v1476, 16
  %v1676 = vrot.slane %v1674, 7
  %v1677 = vrot.slane %v1676, 4
  %v1679 = vshrl.u32 %v1477, 16
  %v1681 = vrot.slane %v1679, 7
  %v1682 = vshll.u32 %v1477, 16
  %v1684 = vor.u32 %v1681, %v1682
  %v1685 = vsel %vm365, %v1677, %v1684
  %s1686 = scalar_lea.vmem %s1, 192
  %v1687 = vld [vmem:[%s1686] sm:$0xf]
  %v1688 = vld [vmem:[%s1686 + $0x4] sm:$0xf]
  %v1689 = vld [vmem:[%s1686 + $0x8] sm:$0xf]
  %v1690 = vld [vmem:[%s1686 + $0xc] sm:$0xf]
  %v1691 = vld [vmem:[%s1686 + $0x10] sm:$0xf]
  %v1692 = vld [vmem:[%s1686 + $0x14] sm:$0xf]
  %v1693 = vld [vmem:[%s1686 + $0x18] sm:$0xf]
  %v1694 = vld [vmem:[%s1686 + $0x1c] sm:$0xf]
  %v1695 = vld [vmem:[%s1686 + $0x20] sm:$0xf]
  %v1696 = vld [vmem:[%s1686 + $0x24] sm:$0xf]
  %v1697 = vld [vmem:[%s1686 + $0x28] sm:$0xf]
  %v1698 = vld [vmem:[%s1686 + $0x2c] sm:$0xf]
  %v1699 = vld [vmem:[%s1686 + $0x30] sm:$0xf]
  %v1700 = vld [vmem:[%s1686 + $0x34] sm:$0xf]
  %v1701 = vld [vmem:[%s1686 + $0x38] sm:$0xf]
  %v1702 = vld [vmem:[%s1686 + $0x3c] sm:$0xf]
  %v1703 = vunpack.c.l.b16 %v1490
  %v1704 = vunpack.c.l.b16 %v1503
  %v1705 = vunpack.c.l.b16 %v1516
  %v1706 = vunpack.c.l.b16 %v1529
  %v1707 = vunpack.c.l.b16 %v1542
  %v1708 = vunpack.c.l.b16 %v1555
  %v1709 = vunpack.c.l.b16 %v1568
  %v1710 = vunpack.c.l.b16 %v1581
  %v1711 = vunpack.c.l.b16 %v1594
  %v1712 = vunpack.c.l.b16 %v1607
  %v1713 = vunpack.c.l.b16 %v1620
  %v1714 = vunpack.c.l.b16 %v1633
  %v1715 = vunpack.c.l.b16 %v1646
  %v1716 = vunpack.c.l.b16 %v1659
  %v1717 = vunpack.c.l.b16 %v1672
  %v1718 = vunpack.c.l.b16 %v1685
  %v1719 = vpack.c.b16 %v1704, %v1703
  %v1720 = vpack.c.b16 %v1706, %v1705
  %v1721 = vpack.c.b16 %v1708, %v1707
  %v1722 = vpack.c.b16 %v1710, %v1709
  %v1723 = vpack.c.b16 %v1712, %v1711
  %v1724 = vpack.c.b16 %v1714, %v1713
  %v1725 = vpack.c.b16 %v1716, %v1715
  %v1726 = vpack.c.b16 %v1718, %v1717
  %v1751 = vunpack.c.l.b16 %v1687
  %v1752 = vunpack.c.l.b16 %v1688
  %v1753 = vunpack.c.l.b16 %v1689
  %v1754 = vunpack.c.l.b16 %v1690
  %v1755 = vunpack.c.l.b16 %v1691
  %v1756 = vunpack.c.l.b16 %v1692
  %v1757 = vunpack.c.l.b16 %v1693
  %v1758 = vunpack.c.l.b16 %v1694
  %v1759 = vunpack.c.l.b16 %v1695
  %v1760 = vunpack.c.l.b16 %v1696
  %v1761 = vunpack.c.l.b16 %v1697
  %v1762 = vunpack.c.l.b16 %v1698
  %v1763 = vunpack.c.l.b16 %v1699
  %v1764 = vunpack.c.l.b16 %v1700
  %v1765 = vunpack.c.l.b16 %v1701
  %v1766 = vunpack.c.l.b16 %v1702
  %v1767 = vpack.c.b16 %v1752, %v1751
  %v1768 = vpack.c.b16 %v1754, %v1753
  %v1769 = vpack.c.b16 %v1756, %v1755
  %v1770 = vpack.c.b16 %v1758, %v1757
  %v1771 = vpack.c.b16 %v1760, %v1759
  %v1772 = vpack.c.b16 %v1762, %v1761
  %v1773 = vpack.c.b16 %v1764, %v1763
  %v1774 = vpack.c.b16 %v1766, %v1765
  %1783 = vmatprep.subr.bf16.mxu0 0
  %1784 = vmatpush1.bf16.msra.mxu0 %v1767
  %1785 = vmatprep.subr.bf16.mxu0 0
  %1786 = vmatpush1.bf16.msra.mxu0 %v1768
  %1787 = vmatprep.subr.bf16.mxu0 0
  %1788 = vmatpush1.bf16.msra.mxu0 %v1769
  %1789 = vmatprep.subr.bf16.mxu0 0
  %1790 = vmatpush1.bf16.msra.mxu0 %v1770
  %1791 = vmatprep.subr.bf16.mxu0 0
  %1792 = vmatpush1.bf16.msra.mxu0 %v1771
  %1793 = vmatprep.subr.bf16.mxu0 0
  %1794 = vmatpush1.bf16.msra.mxu0 %v1772
  %1795 = vmatprep.subr.bf16.mxu0 0
  %1796 = vmatpush1.bf16.msra.mxu0 %v1773
  %1797 = vmatprep.subr.bf16.mxu0 0
  %1798 = vmatpush1.bf16.msra.mxu0 %v1774
  %1799 = vmatprep.subr.bf16.mxu0 0
  %1800 = vmatpush1.bf16.msra.mxu0 0
  %1801 = vmatprep.subr.bf16.mxu0 0
  %1802 = vmatpush1.bf16.msra.mxu0 0
  %1803 = vmatprep.subr.bf16.mxu0 0
  %1804 = vmatpush1.bf16.msra.mxu0 0
  %1805 = vmatprep.subr.bf16.mxu0 0
  %1806 = vmatpush1.bf16.msra.mxu0 0
  %1807 = vmatprep.subr.bf16.mxu0 0
  %1808 = vmatpush1.bf16.msra.mxu0 0
  %1809 = vmatprep.subr.bf16.mxu0 0
  %1810 = vmatpush1.bf16.msra.mxu0 0
  %1811 = vmatprep.subr.bf16.mxu0 0
  %1812 = vmatpush1.bf16.msra.mxu0 0
  %1813 = vmatprep.subr.bf16.mxu0 0
  %1814 = vmatpush1.bf16.msra.mxu0 0
  %1815 = vmatprep.mubr.bf16.mxu0 0
  %1816 = vmatmul.mubr.bf16.gmra.mrb[0].mxu0 %v1719
  %v1817 = vpop.f32.mrb[0].mxu0
  %v1818 = vadd.f32 0.0, %v1817
  %v1819 = vpop.f32.mrb[0].mxu0
  %v1820 = vpop.f32.mrb[0].mxu0
  %v1821 = vadd.f32 0.0, %v1820
  %v1822 = vpop.f32.mrb[0].mxu0
  %1823 = vmatprep.mubr.bf16.mxu0 0
  %1824 = vmatmul.mubr.bf16.gmra.mrb[0].mxu0 %v1720
  %v1825 = vpop.f32.mrb[0].mxu0
  %v1826 = vadd.f32 0.0, %v1825
  %v1827 = vpop.f32.mrb[0].mxu0
  %v1828 = vpop.f32.mrb[0].mxu0
  %v1829 = vadd.f32 0.0, %v1828
  %v1830 = vpop.f32.mrb[0].mxu0
  %1831 = vmatprep.mubr.bf16.mxu0 0
  %1832 = vmatmul.mubr.bf16.gmra.mrb[0].mxu0 %v1721
  %v1833 = vpop.f32.mrb[0].mxu0
  %v1834 = vadd.f32 0.0, %v1833
  %v1835 = vpop.f32.mrb[0].mxu0
  %v1836 = vpop.f32.mrb[0].mxu0
  %v1837 = vadd.f32 0.0, %v1836
  %v1838 = vpop.f32.mrb[0].mxu0
  %1839 = vmatprep.mubr.bf16.mxu0 0
  %1840 = vmatmul.mubr.bf16.gmra.mrb[0].mxu0 %v1722
  %v1841 = vpop.f32.mrb[0].mxu0
  %v1842 = vadd.f32 0.0, %v1841
  %v1843 = vpop.f32.mrb[0].mxu0
  %v1844 = vpop.f32.mrb[0].mxu0
  %v1845 = vadd.f32 0.0, %v1844
  %v1846 = vpop.f32.mrb[0].mxu0
  %1847 = vmatprep.mubr.bf16.mxu0 0
  %1848 = vmatmul.mubr.bf16.gmra.mrb[0].mxu0 %v1723
  %v1849 = vpop.f32.mrb[0].mxu0
  %v1850 = vadd.f32 0.0, %v1849
  %v1851 = vpop.f32.mrb[0].mxu0
  %v1852 = vpop.f32.mrb[0].mxu0
  %v1853 = vadd.f32 0.0, %v1852
  %v1854 = vpop.f32.mrb[0].mxu0
  %1855 = vmatprep.mubr.bf16.mxu0 0
  %1856 = vmatmul.mubr.bf16.gmra.mrb[0].mxu0 %v1724
  %v1857 = vpop.f32.mrb[0].mxu0
  %v1858 = vadd.f32 0.0, %v1857
  %v1859 = vpop.f32.mrb[0].mxu0
  %v1860 = vpop.f32.mrb[0].mxu0
  %v1861 = vadd.f32 0.0, %v1860
  %v1862 = vpop.f32.mrb[0].mxu0
  %1863 = vmatprep.mubr.bf16.mxu0 0
  %1864 = vmatmul.mubr.bf16.gmra.mrb[0].mxu0 %v1725
  %v1865 = vpop.f32.mrb[0].mxu0
  %v1866 = vadd.f32 0.0, %v1865
  %v1867 = vpop.f32.mrb[0].mxu0
  %v1868 = vpop.f32.mrb[0].mxu0
  %v1869 = vadd.f32 0.0, %v1868
  %v1870 = vpop.f32.mrb[0].mxu0
  %1871 = vmatprep.mubr.bf16.mxu0 0
  %1872 = vmatmul.mubr.bf16.gmra.mrb[0].mxu0 %v1726
  %v1873 = vpop.f32.mrb[0].mxu0
  %v1874 = vadd.f32 0.0, %v1873
  %v1875 = vpop.f32.mrb[0].mxu0
  %v1876 = vpop.f32.mrb[0].mxu0
  %v1877 = vadd.f32 0.0, %v1876
  %v1878 = vpop.f32.mrb[0].mxu0
  %1879 = vdwg.mxu0
  %v1880 = vadd.f32 %v1430, %v1818
  %v1881 = vadd.f32 %v1431, %v1821
  %v1882 = vadd.f32 %v1432, %v1826
  %v1883 = vadd.f32 %v1433, %v1829
  %v1884 = vadd.f32 %v1434, %v1834
  %v1885 = vadd.f32 %v1435, %v1837
  %v1886 = vadd.f32 %v1436, %v1842
  %v1887 = vadd.f32 %v1437, %v1845
  %v1888 = vadd.f32 %v1438, %v1850
  %v1889 = vadd.f32 %v1439, %v1853
  %v1890 = vadd.f32 %v1440, %v1858
  %v1891 = vadd.f32 %v1441, %v1861
  %v1892 = vadd.f32 %v1442, %v1866
  %v1893 = vadd.f32 %v1443, %v1869
  %v1894 = vadd.f32 %v1444, %v1874
  %v1895 = vadd.f32 %v1445, %v1877
  %s1896 = scalar_lea.vmem %s1, 256
  %v1897 = vld [vmem:[%s1896] sm:$0xf]
  %v1898 = vld [vmem:[%s1896 + $0x4] sm:$0xf]
  %v1899 = vld [vmem:[%s1896 + $0x8] sm:$0xf]
  %v1900 = vld [vmem:[%s1896 + $0xc] sm:$0xf]
  %v1901 = vld [vmem:[%s1896 + $0x10] sm:$0xf]
  %v1902 = vld [vmem:[%s1896 + $0x14] sm:$0xf]
  %v1903 = vld [vmem:[%s1896 + $0x18] sm:$0xf]
  %v1904 = vld [vmem:[%s1896 + $0x1c] sm:$0xf]
  %v1905 = vld [vmem:[%s1896 + $0x20] sm:$0xf]
  %v1906 = vld [vmem:[%s1896 + $0x24] sm:$0xf]
  %v1907 = vld [vmem:[%s1896 + $0x28] sm:$0xf]
  %v1908 = vld [vmem:[%s1896 + $0x2c] sm:$0xf]
  %v1909 = vld [vmem:[%s1896 + $0x30] sm:$0xf]
  %v1910 = vld [vmem:[%s1896 + $0x34] sm:$0xf]
  %v1911 = vld [vmem:[%s1896 + $0x38] sm:$0xf]
  %v1912 = vld [vmem:[%s1896 + $0x3c] sm:$0xf]
  %v1929 = vunpack.c.l.b16 %v1447
  %v1930 = vunpack.c.l.b16 %v1449
  %v1931 = vunpack.c.l.b16 %v1451
  %v1932 = vunpack.c.l.b16 %v1453
  %v1933 = vunpack.c.l.b16 %v1455
  %v1934 = vunpack.c.l.b16 %v1457
  %v1935 = vunpack.c.l.b16 %v1459
  %v1936 = vunpack.c.l.b16 %v1461
  %v1937 = vunpack.c.l.b16 %v1463
  %v1938 = vunpack.c.l.b16 %v1465
  %v1939 = vunpack.c.l.b16 %v1467
  %v1940 = vunpack.c.l.b16 %v1469
  %v1941 = vunpack.c.l.b16 %v1471
  %v1942 = vunpack.c.l.b16 %v1473
  %v1943 = vunpack.c.l.b16 %v1475
  %v1944 = vunpack.c.l.b16 %v1477
  %v1945 = vpack.c.b16 %v1930, %v1929
  %v1946 = vpack.c.b16 %v1932, %v1931
  %v1947 = vpack.c.b16 %v1934, %v1933
  %v1948 = vpack.c.b16 %v1936, %v1935
  %v1949 = vpack.c.b16 %v1938, %v1937
  %v1950 = vpack.c.b16 %v1940, %v1939
  %v1951 = vpack.c.b16 %v1942, %v1941
  %v1952 = vpack.c.b16 %v1944, %v1943
  %v1977 = vunpack.c.l.b16 %v1897
  %v1978 = vunpack.c.l.b16 %v1898
  %v1979 = vunpack.c.l.b16 %v1899
  %v1980 = vunpack.c.l.b16 %v1900
  %v1981 = vunpack.c.l.b16 %v1901
  %v1982 = vunpack.c.l.b16 %v1902
  %v1983 = vunpack.c.l.b16 %v1903
  %v1984 = vunpack.c.l.b16 %v1904
  %v1985 = vunpack.c.l.b16 %v1905
  %v1986 = vunpack.c.l.b16 %v1906
  %v1987 = vunpack.c.l.b16 %v1907
  %v1988 = vunpack.c.l.b16 %v1908
  %v1989 = vunpack.c.l.b16 %v1909
  %v1990 = vunpack.c.l.b16 %v1910
  %v1991 = vunpack.c.l.b16 %v1911
  %v1992 = vunpack.c.l.b16 %v1912
  %v1993 = vpack.c.b16 %v1978, %v1977
  %v1994 = vpack.c.b16 %v1980, %v1979
  %v1995 = vpack.c.b16 %v1982, %v1981
  %v1996 = vpack.c.b16 %v1984, %v1983
  %v1997 = vpack.c.b16 %v1986, %v1985
  %v1998 = vpack.c.b16 %v1988, %v1987
  %v1999 = vpack.c.b16 %v1990, %v1989
  %v2000 = vpack.c.b16 %v1992, %v1991
  %2009 = vmatprep.subr.bf16.mxu0 0
  %2010 = vmatpush1.bf16.msra.mxu0 %v1993
  %2011 = vmatprep.subr.bf16.mxu0 0
  %2012 = vmatpush1.bf16.msra.mxu0 %v1994
  %2013 = vmatprep.subr.bf16.mxu0 0
  %2014 = vmatpush1.bf16.msra.mxu0 %v1995
  %2015 = vmatprep.subr.bf16.mxu0 0
  %2016 = vmatpush1.bf16.msra.mxu0 %v1996
  %2017 = vmatprep.subr.bf16.mxu0 0
  %2018 = vmatpush1.bf16.msra.mxu0 %v1997
  %2019 = vmatprep.subr.bf16.mxu0 0
  %2020 = vmatpush1.bf16.msra.mxu0 %v1998
  %2021 = vmatprep.subr.bf16.mxu0 0
  %2022 = vmatpush1.bf16.msra.mxu0 %v1999
  %2023 = vmatprep.subr.bf16.mxu0 0
  %2024 = vmatpush1.bf16.msra.mxu0 %v2000
  %2025 = vmatprep.subr.bf16.mxu0 0
  %2026 = vmatpush1.bf16.msra.mxu0 0
  %2027 = vmatprep.subr.bf16.mxu0 0
  %2028 = vmatpush1.bf16.msra.mxu0 0
  %2029 = vmatprep.subr.bf16.mxu0 0
  %2030 = vmatpush1.bf16.msra.mxu0 0
  %2031 = vmatprep.subr.bf16.mxu0 0
  %2032 = vmatpush1.bf16.msra.mxu0 0
  %2033 = vmatprep.subr.bf16.mxu0 0
  %2034 = vmatpush1.bf16.msra.mxu0 0
  %2035 = vmatprep.subr.bf16.mxu0 0
  %2036 = vmatpush1.bf16.msra.mxu0 0
  %2037 = vmatprep.subr.bf16.mxu0 0
  %2038 = vmatpush1.bf16.msra.mxu0 0
  %2039 = vmatprep.subr.bf16.mxu0 0
  %2040 = vmatpush1.bf16.msra.mxu0 0
  %2041 = vmatprep.mubr.bf16.mxu0 0
  %2042 = vmatmul.mubr.bf16.gmra.mrb[0].mxu0 %v1945
  %v2043 = vpop.f32.mrb[0].mxu0
  %v2044 = vadd.f32 0.0, %v2043
  %v2045 = vpop.f32.mrb[0].mxu0
  %v2046 = vpop.f32.mrb[0].mxu0
  %v2047 = vadd.f32 0.0, %v2046
  %v2048 = vpop.f32.mrb[0].mxu0
  %2049 = vmatprep.mubr.bf16.mxu0 0
  %2050 = vmatmul.mubr.bf16.gmra.mrb[0].mxu0 %v1946
  %v2051 = vpop.f32.mrb[0].mxu0
  %v2052 = vadd.f32 0.0, %v2051
  %v2053 = vpop.f32.mrb[0].mxu0
  %v2054 = vpop.f32.mrb[0].mxu0
  %v2055 = vadd.f32 0.0, %v2054
  %v2056 = vpop.f32.mrb[0].mxu0
  %2057 = vmatprep.mubr.bf16.mxu0 0
  %2058 = vmatmul.mubr.bf16.gmra.mrb[0].mxu0 %v1947
  %v2059 = vpop.f32.mrb[0].mxu0
  %v2060 = vadd.f32 0.0, %v2059
  %v2061 = vpop.f32.mrb[0].mxu0
  %v2062 = vpop.f32.mrb[0].mxu0
  %v2063 = vadd.f32 0.0, %v2062
  %v2064 = vpop.f32.mrb[0].mxu0
  %2065 = vmatprep.mubr.bf16.mxu0 0
  %2066 = vmatmul.mubr.bf16.gmra.mrb[0].mxu0 %v1948
  %v2067 = vpop.f32.mrb[0].mxu0
  %v2068 = vadd.f32 0.0, %v2067
  %v2069 = vpop.f32.mrb[0].mxu0
  %v2070 = vpop.f32.mrb[0].mxu0
  %v2071 = vadd.f32 0.0, %v2070
  %v2072 = vpop.f32.mrb[0].mxu0
  %2073 = vmatprep.mubr.bf16.mxu0 0
  %2074 = vmatmul.mubr.bf16.gmra.mrb[0].mxu0 %v1949
  %v2075 = vpop.f32.mrb[0].mxu0
  %v2076 = vadd.f32 0.0, %v2075
  %v2077 = vpop.f32.mrb[0].mxu0
  %v2078 = vpop.f32.mrb[0].mxu0
  %v2079 = vadd.f32 0.0, %v2078
  %v2080 = vpop.f32.mrb[0].mxu0
  %2081 = vmatprep.mubr.bf16.mxu0 0
  %2082 = vmatmul.mubr.bf16.gmra.mrb[0].mxu0 %v1950
  %v2083 = vpop.f32.mrb[0].mxu0
  %v2084 = vadd.f32 0.0, %v2083
  %v2085 = vpop.f32.mrb[0].mxu0
  %v2086 = vpop.f32.mrb[0].mxu0
  %v2087 = vadd.f32 0.0, %v2086
  %v2088 = vpop.f32.mrb[0].mxu0
  %2089 = vmatprep.mubr.bf16.mxu0 0
  %2090 = vmatmul.mubr.bf16.gmra.mrb[0].mxu0 %v1951
  %v2091 = vpop.f32.mrb[0].mxu0
  %v2092 = vadd.f32 0.0, %v2091
  %v2093 = vpop.f32.mrb[0].mxu0
  %v2094 = vpop.f32.mrb[0].mxu0
  %v2095 = vadd.f32 0.0, %v2094
  %v2096 = vpop.f32.mrb[0].mxu0
  %2097 = vmatprep.mubr.bf16.mxu0 0
  %2098 = vmatmul.mubr.bf16.gmra.mrb[0].mxu0 %v1952
  %v2099 = vpop.f32.mrb[0].mxu0
  %v2100 = vadd.f32 0.0, %v2099
  %v2101 = vpop.f32.mrb[0].mxu0
  %v2102 = vpop.f32.mrb[0].mxu0
  %v2103 = vadd.f32 0.0, %v2102
  %v2104 = vpop.f32.mrb[0].mxu0
  %2105 = vdwg.mxu0
  %v2106 = vadd.f32 %v1880, %v2044
  %v2107 = vadd.f32 %v1881, %v2047
  %v2108 = vadd.f32 %v1882, %v2052
  %v2109 = vadd.f32 %v1883, %v2055
  %v2110 = vadd.f32 %v1884, %v2060
  %v2111 = vadd.f32 %v1885, %v2063
  %v2112 = vadd.f32 %v1886, %v2068
  %v2113 = vadd.f32 %v1887, %v2071
  %v2114 = vadd.f32 %v1888, %v2076
  %v2115 = vadd.f32 %v1889, %v2079
  %v2116 = vadd.f32 %v1890, %v2084
  %v2117 = vadd.f32 %v1891, %v2087
  %v2118 = vadd.f32 %v1892, %v2092
  %v2119 = vadd.f32 %v1893, %v2095
  %v2120 = vadd.f32 %v1894, %v2100
  %v2121 = vadd.f32 %v1895, %v2103
  %v2122 = vld [vmem:[%s235 + $0x4] sm:$0xf]
  %v2123 = vld [vmem:[%s235 + $0x8] sm:$0x1]
  %v2124 = vld [vmem:[%s235 + $0x10] sm:$0xf]
  %v2125 = vld [vmem:[%s235 + $0x14] sm:$0x1]
  %v2126 = vld [vmem:[%s235 + $0x1c] sm:$0xf]
  %v2127 = vld [vmem:[%s235 + $0x20] sm:$0x1]
  %v2128 = vld [vmem:[%s235 + $0x28] sm:$0xf]
  %v2129 = vld [vmem:[%s235 + $0x2c] sm:$0x1]
  %v2130 = vld [vmem:[%s235 + $0x34] sm:$0xf]
  %v2131 = vld [vmem:[%s235 + $0x38] sm:$0x1]
  %v2132 = vld [vmem:[%s235 + $0x40] sm:$0xf]
  %v2133 = vld [vmem:[%s235 + $0x44] sm:$0x1]
  %v2134 = vld [vmem:[%s235 + $0x4c] sm:$0xf]
  %v2135 = vld [vmem:[%s235 + $0x50] sm:$0x1]
  %v2136 = vld [vmem:[%s235 + $0x58] sm:$0xf]
  %v2137 = vld [vmem:[%s235 + $0x5c] sm:$0x1]
  %v2138 = vld [vmem:[%s235 + $0x7c] sm:$0xf]
  %v2139 = vld [vmem:[%s235 + $0x80] sm:$0x1]
  %v2140 = vld [vmem:[%s235 + $0x88] sm:$0xf]
  %v2141 = vld [vmem:[%s235 + $0x8c] sm:$0x1]
  %v2142 = vld [vmem:[%s235 + $0x94] sm:$0xf]
  %v2143 = vld [vmem:[%s235 + $0x98] sm:$0x1]
  %v2144 = vld [vmem:[%s235 + $0xa0] sm:$0xf]
  %v2145 = vld [vmem:[%s235 + $0xa4] sm:$0x1]
  %v2146 = vld [vmem:[%s235 + $0xac] sm:$0xf]
  %v2147 = vld [vmem:[%s235 + $0xb0] sm:$0x1]
  %v2148 = vld [vmem:[%s235 + $0xb8] sm:$0xf]
  %v2149 = vld [vmem:[%s235 + $0xbc] sm:$0x1]
  %v2150 = vld [vmem:[%s235 + $0xc4] sm:$0xf]
  %v2151 = vld [vmem:[%s235 + $0xc8] sm:$0x1]
  %v2152 = vld [vmem:[%s235 + $0xd0] sm:$0xf]
  %v2153 = vld [vmem:[%s235 + $0xd4] sm:$0x1]
  %v2155 = vshrl.u32 %v2122, 16
  %v2157 = vrot.slane %v2155, 4
  %v2158 = vshll.u32 %v2122, 16
  %v2160 = vrot.slane %v2158, 5
  %v2161 = vor.u32 %v2157, %v2160
  %v2162 = vrot.slane %v2161, 4
  %v2164 = vshll.u32 %v2123, 16
  %v2166 = vrot.slane %v2164, 5
  %v2167 = vsel %vm1011, %v2162, %v2166
  %v2169 = vshrl.u32 %v2124, 16
  %v2171 = vrot.slane %v2169, 4
  %v2172 = vshll.u32 %v2124, 16
  %v2174 = vrot.slane %v2172, 5
  %v2175 = vor.u32 %v2171, %v2174
  %v2176 = vrot.slane %v2175, 4
  %v2178 = vshll.u32 %v2125, 16
  %v2180 = vrot.slane %v2178, 5
  %v2181 = vsel %vm1011, %v2176, %v2180
  %v2183 = vshrl.u32 %v2126, 16
  %v2185 = vrot.slane %v2183, 4
  %v2186 = vshll.u32 %v2126, 16
  %v2188 = vrot.slane %v2186, 5
  %v2189 = vor.u32 %v2185, %v2188
  %v2190 = vrot.slane %v2189, 4
  %v2192 = vshll.u32 %v2127, 16
  %v2194 = vrot.slane %v2192, 5
  %v2195 = vsel %vm1011, %v2190, %v2194
  %v2197 = vshrl.u32 %v2128, 16
  %v2199 = vrot.slane %v2197, 4
  %v2200 = vshll.u32 %v2128, 16
  %v2202 = vrot.slane %v2200, 5
  %v2203 = vor.u32 %v2199, %v2202
  %v2204 = vrot.slane %v2203, 4
  %v2206 = vshll.u32 %v2129, 16
  %v2208 = vrot.slane %v2206, 5
  %v2209 = vsel %vm1011, %v2204, %v2208
  %v2211 = vshrl.u32 %v2130, 16
  %v2213 = vrot.slane %v2211, 4
  %v2214 = vshll.u32 %v2130, 16
  %v2216 = vrot.slane %v2214, 5
  %v2217 = vor.u32 %v2213, %v2216
  %v2218 = vrot.slane %v2217, 4
  %v2220 = vshll.u32 %v2131, 16
  %v2222 = vrot.slane %v2220, 5
  %v2223 = vsel %vm1011, %v2218, %v2222
  %v2225 = vshrl.u32 %v2132, 16
  %v2227 = vrot.slane %v2225, 4
  %v2228 = vshll.u32 %v2132, 16
  %v2230 = vrot.slane %v2228, 5
  %v2231 = vor.u32 %v2227, %v2230
  %v2232 = vrot.slane %v2231, 4
  %v2234 = vshll.u32 %v2133, 16
  %v2236 = vrot.slane %v2234, 5
  %v2237 = vsel %vm1011, %v2232, %v2236
  %v2239 = vshrl.u32 %v2134, 16
  %v2241 = vrot.slane %v2239, 4
  %v2242 = vshll.u32 %v2134, 16
  %v2244 = vrot.slane %v2242, 5
  %v2245 = vor.u32 %v2241, %v2244
  %v2246 = vrot.slane %v2245, 4
  %v2248 = vshll.u32 %v2135, 16
  %v2250 = vrot.slane %v2248, 5
  %v2251 = vsel %vm1011, %v2246, %v2250
  %v2253 = vshrl.u32 %v2136, 16
  %v2255 = vrot.slane %v2253, 4
  %v2256 = vshll.u32 %v2136, 16
  %v2258 = vrot.slane %v2256, 5
  %v2259 = vor.u32 %v2255, %v2258
  %v2260 = vrot.slane %v2259, 4
  %v2262 = vshll.u32 %v2137, 16
  %v2264 = vrot.slane %v2262, 5
  %v2265 = vsel %vm1011, %v2260, %v2264
  %v2267 = vshrl.u32 %v2138, 16
  %v2269 = vrot.slane %v2267, 4
  %v2270 = vshll.u32 %v2138, 16
  %v2272 = vrot.slane %v2270, 5
  %v2273 = vor.u32 %v2269, %v2272
  %v2274 = vrot.slane %v2273, 4
  %v2276 = vshll.u32 %v2139, 16
  %v2278 = vrot.slane %v2276, 5
  %v2279 = vsel %vm1011, %v2274, %v2278
  %v2281 = vshrl.u32 %v2140, 16
  %v2283 = vrot.slane %v2281, 4
  %v2284 = vshll.u32 %v2140, 16
  %v2286 = vrot.slane %v2284, 5
  %v2287 = vor.u32 %v2283, %v2286
  %v2288 = vrot.slane %v2287, 4
  %v2290 = vshll.u32 %v2141, 16
  %v2292 = vrot.slane %v2290, 5
  %v2293 = vsel %vm1011, %v2288, %v2292
  %v2295 = vshrl.u32 %v2142, 16
  %v2297 = vrot.slane %v2295, 4
  %v2298 = vshll.u32 %v2142, 16
  %v2300 = vrot.slane %v2298, 5
  %v2301 = vor.u32 %v2297, %v2300
  %v2302 = vrot.slane %v2301, 4
  %v2304 = vshll.u32 %v2143, 16
  %v2306 = vrot.slane %v2304, 5
  %v2307 = vsel %vm1011, %v2302, %v2306
  %v2309 = vshrl.u32 %v2144, 16
  %v2311 = vrot.slane %v2309, 4
  %v2312 = vshll.u32 %v2144, 16
  %v2314 = vrot.slane %v2312, 5
  %v2315 = vor.u32 %v2311, %v2314
  %v2316 = vrot.slane %v2315, 4
  %v2318 = vshll.u32 %v2145, 16
  %v2320 = vrot.slane %v2318, 5
  %v2321 = vsel %vm1011, %v2316, %v2320
  %v2323 = vshrl.u32 %v2146, 16
  %v2325 = vrot.slane %v2323, 4
  %v2326 = vshll.u32 %v2146, 16
  %v2328 = vrot.slane %v2326, 5
  %v2329 = vor.u32 %v2325, %v2328
  %v2330 = vrot.slane %v2329, 4
  %v2332 = vshll.u32 %v2147, 16
  %v2334 = vrot.slane %v2332, 5
  %v2335 = vsel %vm1011, %v2330, %v2334
  %v2337 = vshrl.u32 %v2148, 16
  %v2339 = vrot.slane %v2337, 4
  %v2340 = vshll.u32 %v2148, 16
  %v2342 = vrot.slane %v2340, 5
  %v2343 = vor.u32 %v2339, %v2342
  %v2344 = vrot.slane %v2343, 4
  %v2346 = vshll.u32 %v2149, 16
  %v2348 = vrot.slane %v2346, 5
  %v2349 = vsel %vm1011, %v2344, %v2348
  %v2351 = vshrl.u32 %v2150, 16
  %v2353 = vrot.slane %v2351, 4
  %v2354 = vshll.u32 %v2150, 16
  %v2356 = vrot.slane %v2354, 5
  %v2357 = vor.u32 %v2353, %v2356
  %v2358 = vrot.slane %v2357, 4
  %v2360 = vshll.u32 %v2151, 16
  %v2362 = vrot.slane %v2360, 5
  %v2363 = vsel %vm1011, %v2358, %v2362
  %v2365 = vshrl.u32 %v2152, 16
  %v2367 = vrot.slane %v2365, 4
  %v2368 = vshll.u32 %v2152, 16
  %v2370 = vrot.slane %v2368, 5
  %v2371 = vor.u32 %v2367, %v2370
  %v2372 = vrot.slane %v2371, 4
  %v2374 = vshll.u32 %v2153, 16
  %v2376 = vrot.slane %v2374, 5
  %v2377 = vsel %vm1011, %v2372, %v2376
  %s2378 = scalar_lea.vmem %s1, 320
  %v2379 = vld [vmem:[%s2378] sm:$0xf]
  %v2380 = vld [vmem:[%s2378 + $0x4] sm:$0xf]
  %v2381 = vld [vmem:[%s2378 + $0x8] sm:$0xf]
  %v2382 = vld [vmem:[%s2378 + $0xc] sm:$0xf]
  %v2383 = vld [vmem:[%s2378 + $0x10] sm:$0xf]
  %v2384 = vld [vmem:[%s2378 + $0x14] sm:$0xf]
  %v2385 = vld [vmem:[%s2378 + $0x18] sm:$0xf]
  %v2386 = vld [vmem:[%s2378 + $0x1c] sm:$0xf]
  %v2387 = vld [vmem:[%s2378 + $0x20] sm:$0xf]
  %v2388 = vld [vmem:[%s2378 + $0x24] sm:$0xf]
  %v2389 = vld [vmem:[%s2378 + $0x28] sm:$0xf]
  %v2390 = vld [vmem:[%s2378 + $0x2c] sm:$0xf]
  %v2391 = vld [vmem:[%s2378 + $0x30] sm:$0xf]
  %v2392 = vld [vmem:[%s2378 + $0x34] sm:$0xf]
  %v2393 = vld [vmem:[%s2378 + $0x38] sm:$0xf]
  %v2394 = vld [vmem:[%s2378 + $0x3c] sm:$0xf]
  %v2395 = vunpack.c.l.b16 %v2167
  %v2396 = vunpack.c.l.b16 %v2181
  %v2397 = vunpack.c.l.b16 %v2195
  %v2398 = vunpack.c.l.b16 %v2209
  %v2399 = vunpack.c.l.b16 %v2223
  %v2400 = vunpack.c.l.b16 %v2237
  %v2401 = vunpack.c.l.b16 %v2251
  %v2402 = vunpack.c.l.b16 %v2265
  %v2403 = vunpack.c.l.b16 %v2279
  %v2404 = vunpack.c.l.b16 %v2293
  %v2405 = vunpack.c.l.b16 %v2307
  %v2406 = vunpack.c.l.b16 %v2321
  %v2407 = vunpack.c.l.b16 %v2335
  %v2408 = vunpack.c.l.b16 %v2349
  %v2409 = vunpack.c.l.b16 %v2363
  %v2410 = vunpack.c.l.b16 %v2377
  %v2411 = vpack.c.b16 %v2396, %v2395
  %v2412 = vpack.c.b16 %v2398, %v2397
  %v2413 = vpack.c.b16 %v2400, %v2399
  %v2414 = vpack.c.b16 %v2402, %v2401
  %v2415 = vpack.c.b16 %v2404, %v2403
  %v2416 = vpack.c.b16 %v2406, %v2405
  %v2417 = vpack.c.b16 %v2408, %v2407
  %v2418 = vpack.c.b16 %v2410, %v2409
  %v2443 = vunpack.c.l.b16 %v2379
  %v2444 = vunpack.c.l.b16 %v2380
  %v2445 = vunpack.c.l.b16 %v2381
  %v2446 = vunpack.c.l.b16 %v2382
  %v2447 = vunpack.c.l.b16 %v2383
  %v2448 = vunpack.c.l.b16 %v2384
  %v2449 = vunpack.c.l.b16 %v2385
  %v2450 = vunpack.c.l.b16 %v2386
  %v2451 = vunpack.c.l.b16 %v2387
  %v2452 = vunpack.c.l.b16 %v2388
  %v2453 = vunpack.c.l.b16 %v2389
  %v2454 = vunpack.c.l.b16 %v2390
  %v2455 = vunpack.c.l.b16 %v2391
  %v2456 = vunpack.c.l.b16 %v2392
  %v2457 = vunpack.c.l.b16 %v2393
  %v2458 = vunpack.c.l.b16 %v2394
  %v2459 = vpack.c.b16 %v2444, %v2443
  %v2460 = vpack.c.b16 %v2446, %v2445
  %v2461 = vpack.c.b16 %v2448, %v2447
  %v2462 = vpack.c.b16 %v2450, %v2449
  %v2463 = vpack.c.b16 %v2452, %v2451
  %v2464 = vpack.c.b16 %v2454, %v2453
  %v2465 = vpack.c.b16 %v2456, %v2455
  %v2466 = vpack.c.b16 %v2458, %v2457
  %2475 = vmatprep.subr.bf16.mxu0 0
  %2476 = vmatpush1.bf16.msra.mxu0 %v2459
  %2477 = vmatprep.subr.bf16.mxu0 0
  %2478 = vmatpush1.bf16.msra.mxu0 %v2460
  %2479 = vmatprep.subr.bf16.mxu0 0
  %2480 = vmatpush1.bf16.msra.mxu0 %v2461
  %2481 = vmatprep.subr.bf16.mxu0 0
  %2482 = vmatpush1.bf16.msra.mxu0 %v2462
  %2483 = vmatprep.subr.bf16.mxu0 0
  %2484 = vmatpush1.bf16.msra.mxu0 %v2463
  %2485 = vmatprep.subr.bf16.mxu0 0
  %2486 = vmatpush1.bf16.msra.mxu0 %v2464
  %2487 = vmatprep.subr.bf16.mxu0 0
  %2488 = vmatpush1.bf16.msra.mxu0 %v2465
  %2489 = vmatprep.subr.bf16.mxu0 0
  %2490 = vmatpush1.bf16.msra.mxu0 %v2466
  %2491 = vmatprep.subr.bf16.mxu0 0
  %2492 = vmatpush1.bf16.msra.mxu0 0
  %2493 = vmatprep.subr.bf16.mxu0 0
  %2494 = vmatpush1.bf16.msra.mxu0 0
  %2495 = vmatprep.subr.bf16.mxu0 0
  %2496 = vmatpush1.bf16.msra.mxu0 0
  %2497 = vmatprep.subr.bf16.mxu0 0
  %2498 = vmatpush1.bf16.msra.mxu0 0
  %2499 = vmatprep.subr.bf16.mxu0 0
  %2500 = vmatpush1.bf16.msra.mxu0 0
  %2501 = vmatprep.subr.bf16.mxu0 0
  %2502 = vmatpush1.bf16.msra.mxu0 0
  %2503 = vmatprep.subr.bf16.mxu0 0
  %2504 = vmatpush1.bf16.msra.mxu0 0
  %2505 = vmatprep.subr.bf16.mxu0 0
  %2506 = vmatpush1.bf16.msra.mxu0 0
  %2507 = vmatprep.mubr.bf16.mxu0 0
  %2508 = vmatmul.mubr.bf16.gmra.mrb[0].mxu0 %v2411
  %v2509 = vpop.f32.mrb[0].mxu0
  %v2510 = vadd.f32 0.0, %v2509
  %v2511 = vpop.f32.mrb[0].mxu0
  %v2512 = vpop.f32.mrb[0].mxu0
  %v2513 = vadd.f32 0.0, %v2512
  %v2514 = vpop.f32.mrb[0].mxu0
  %2515 = vmatprep.mubr.bf16.mxu0 0
  %2516 = vmatmul.mubr.bf16.gmra.mrb[0].mxu0 %v2412
  %v2517 = vpop.f32.mrb[0].mxu0
  %v2518 = vadd.f32 0.0, %v2517
  %v2519 = vpop.f32.mrb[0].mxu0
  %v2520 = vpop.f32.mrb[0].mxu0
  %v2521 = vadd.f32 0.0, %v2520
  %v2522 = vpop.f32.mrb[0].mxu0
  %2523 = vmatprep.mubr.bf16.mxu0 0
  %2524 = vmatmul.mubr.bf16.gmra.mrb[0].mxu0 %v2413
  %v2525 = vpop.f32.mrb[0].mxu0
  %v2526 = vadd.f32 0.0, %v2525
  %v2527 = vpop.f32.mrb[0].mxu0
  %v2528 = vpop.f32.mrb[0].mxu0
  %v2529 = vadd.f32 0.0, %v2528
  %v2530 = vpop.f32.mrb[0].mxu0
  %2531 = vmatprep.mubr.bf16.mxu0 0
  %2532 = vmatmul.mubr.bf16.gmra.mrb[0].mxu0 %v2414
  %v2533 = vpop.f32.mrb[0].mxu0
  %v2534 = vadd.f32 0.0, %v2533
  %v2535 = vpop.f32.mrb[0].mxu0
  %v2536 = vpop.f32.mrb[0].mxu0
  %v2537 = vadd.f32 0.0, %v2536
  %v2538 = vpop.f32.mrb[0].mxu0
  %2539 = vmatprep.mubr.bf16.mxu0 0
  %2540 = vmatmul.mubr.bf16.gmra.mrb[0].mxu0 %v2415
  %v2541 = vpop.f32.mrb[0].mxu0
  %v2542 = vadd.f32 0.0, %v2541
  %v2543 = vpop.f32.mrb[0].mxu0
  %v2544 = vpop.f32.mrb[0].mxu0
  %v2545 = vadd.f32 0.0, %v2544
  %v2546 = vpop.f32.mrb[0].mxu0
  %2547 = vmatprep.mubr.bf16.mxu0 0
  %2548 = vmatmul.mubr.bf16.gmra.mrb[0].mxu0 %v2416
  %v2549 = vpop.f32.mrb[0].mxu0
  %v2550 = vadd.f32 0.0, %v2549
  %v2551 = vpop.f32.mrb[0].mxu0
  %v2552 = vpop.f32.mrb[0].mxu0
  %v2553 = vadd.f32 0.0, %v2552
  %v2554 = vpop.f32.mrb[0].mxu0
  %2555 = vmatprep.mubr.bf16.mxu0 0
  %2556 = vmatmul.mubr.bf16.gmra.mrb[0].mxu0 %v2417
  %v2557 = vpop.f32.mrb[0].mxu0
  %v2558 = vadd.f32 0.0, %v2557
  %v2559 = vpop.f32.mrb[0].mxu0
  %v2560 = vpop.f32.mrb[0].mxu0
  %v2561 = vadd.f32 0.0, %v2560
  %v2562 = vpop.f32.mrb[0].mxu0
  %2563 = vmatprep.mubr.bf16.mxu0 0
  %2564 = vmatmul.mubr.bf16.gmra.mrb[0].mxu0 %v2418
  %v2565 = vpop.f32.mrb[0].mxu0
  %v2566 = vadd.f32 0.0, %v2565
  %v2567 = vpop.f32.mrb[0].mxu0
  %v2568 = vpop.f32.mrb[0].mxu0
  %v2569 = vadd.f32 0.0, %v2568
  %v2570 = vpop.f32.mrb[0].mxu0
  %2571 = vdwg.mxu0
  %v2572 = vadd.f32 %v2106, %v2510
  %v2573 = vadd.f32 %v2107, %v2513
  %v2574 = vadd.f32 %v2108, %v2518
  %v2575 = vadd.f32 %v2109, %v2521
  %v2576 = vadd.f32 %v2110, %v2526
  %v2577 = vadd.f32 %v2111, %v2529
  %v2578 = vadd.f32 %v2112, %v2534
  %v2579 = vadd.f32 %v2113, %v2537
  %v2580 = vadd.f32 %v2114, %v2542
  %v2581 = vadd.f32 %v2115, %v2545
  %v2582 = vadd.f32 %v2116, %v2550
  %v2583 = vadd.f32 %v2117, %v2553
  %v2584 = vadd.f32 %v2118, %v2558
  %v2585 = vadd.f32 %v2119, %v2561
  %v2586 = vadd.f32 %v2120, %v2566
  %v2587 = vadd.f32 %v2121, %v2569
  %s2588 = scalar_lea.vmem [#allocation2], 24
  %v2589 = vld [vmem:[%s2588] sm:$0x8]
  %v2590 = vld [vmem:[%s2588 + $0x4] sm:$0xf]
  %v2591 = vld [vmem:[%s2588 + $0xc] sm:$0x8]
  %v2592 = vld [vmem:[%s2588 + $0x10] sm:$0xf]
  %v2593 = vld [vmem:[%s2588 + $0x18] sm:$0x8]
  %v2594 = vld [vmem:[%s2588 + $0x1c] sm:$0xf]
  %v2595 = vld [vmem:[%s2588 + $0x24] sm:$0x8]
  %v2596 = vld [vmem:[%s2588 + $0x28] sm:$0xf]
  %v2597 = vld [vmem:[%s2588 + $0x30] sm:$0x8]
  %v2598 = vld [vmem:[%s2588 + $0x34] sm:$0xf]
  %v2599 = vld [vmem:[%s2588 + $0x3c] sm:$0x8]
  %v2600 = vld [vmem:[%s2588 + $0x40] sm:$0xf]
  %v2601 = vld [vmem:[%s2588 + $0x48] sm:$0x8]
  %v2602 = vld [vmem:[%s2588 + $0x4c] sm:$0xf]
  %v2603 = vld [vmem:[%s2588 + $0x54] sm:$0x8]
  %v2604 = vld [vmem:[%s2588 + $0x58] sm:$0xf]
  %v2605 = vld [vmem:[%s2588 + $0x78] sm:$0x8]
  %v2606 = vld [vmem:[%s2588 + $0x7c] sm:$0xf]
  %v2607 = vld [vmem:[%s2588 + $0x84] sm:$0x8]
  %v2608 = vld [vmem:[%s2588 + $0x88] sm:$0xf]
  %v2609 = vld [vmem:[%s2588 + $0x90] sm:$0x8]
  %v2610 = vld [vmem:[%s2588 + $0x94] sm:$0xf]
  %v2611 = vld [vmem:[%s2588 + $0x9c] sm:$0x8]
  %v2612 = vld [vmem:[%s2588 + $0xa0] sm:$0xf]
  %v2613 = vld [vmem:[%s2588 + $0xa8] sm:$0x8]
  %v2614 = vld [vmem:[%s2588 + $0xac] sm:$0xf]
  %v2615 = vld [vmem:[%s2588 + $0xb4] sm:$0x8]
  %v2616 = vld [vmem:[%s2588 + $0xb8] sm:$0xf]
  %v2617 = vld [vmem:[%s2588 + $0xc0] sm:$0x8]
  %v2618 = vld [vmem:[%s2588 + $0xc4] sm:$0xf]
  %v2619 = vld [vmem:[%s2588 + $0xcc] sm:$0x8]
  %v2620 = vld [vmem:[%s2588 + $0xd0] sm:$0xf]
  %v2622 = vshrl.u32 %v2589, 16
  %v2624 = vrot.slane %v2622, 7
  %v2625 = vrot.slane %v2624, 4
  %v2627 = vshrl.u32 %v2590, 16
  %v2629 = vrot.slane %v2627, 7
  %v2630 = vshll.u32 %v2590, 16
  %v2632 = vor.u32 %v2629, %v2630
  %v2633 = vsel %vm365, %v2625, %v2632
  %v2635 = vshrl.u32 %v2591, 16
  %v2637 = vrot.slane %v2635, 7
  %v2638 = vrot.slane %v2637, 4
  %v2640 = vshrl.u32 %v2592, 16
  %v2642 = vrot.slane %v2640, 7
  %v2643 = vshll.u32 %v2592, 16
  %v2645 = vor.u32 %v2642, %v2643
  %v2646 = vsel %vm365, %v2638, %v2645
  %v2648 = vshrl.u32 %v2593, 16
  %v2650 = vrot.slane %v2648, 7
  %v2651 = vrot.slane %v2650, 4
  %v2653 = vshrl.u32 %v2594, 16
  %v2655 = vrot.slane %v2653, 7
  %v2656 = vshll.u32 %v2594, 16
  %v2658 = vor.u32 %v2655, %v2656
  %v2659 = vsel %vm365, %v2651, %v2658
  %v2661 = vshrl.u32 %v2595, 16
  %v2663 = vrot.slane %v2661, 7
  %v2664 = vrot.slane %v2663, 4
  %v2666 = vshrl.u32 %v2596, 16
  %v2668 = vrot.slane %v2666, 7
  %v2669 = vshll.u32 %v2596, 16
  %v2671 = vor.u32 %v2668, %v2669
  %v2672 = vsel %vm365, %v2664, %v2671
  %v2674 = vshrl.u32 %v2597, 16
  %v2676 = vrot.slane %v2674, 7
  %v2677 = vrot.slane %v2676, 4
  %v2679 = vshrl.u32 %v2598, 16
  %v2681 = vrot.slane %v2679, 7
  %v2682 = vshll.u32 %v2598, 16
  %v2684 = vor.u32 %v2681, %v2682
  %v2685 = vsel %vm365, %v2677, %v2684
  %v2687 = vshrl.u32 %v2599, 16
  %v2689 = vrot.slane %v2687, 7
  %v2690 = vrot.slane %v2689, 4
  %v2692 = vshrl.u32 %v2600, 16
  %v2694 = vrot.slane %v2692, 7
  %v2695 = vshll.u32 %v2600, 16
  %v2697 = vor.u32 %v2694, %v2695
  %v2698 = vsel %vm365, %v2690, %v2697
  %v2700 = vshrl.u32 %v2601, 16
  %v2702 = vrot.slane %v2700, 7
  %v2703 = vrot.slane %v2702, 4
  %v2705 = vshrl.u32 %v2602, 16
  %v2707 = vrot.slane %v2705, 7
  %v2708 = vshll.u32 %v2602, 16
  %v2710 = vor.u32 %v2707, %v2708
  %v2711 = vsel %vm365, %v2703, %v2710
  %v2713 = vshrl.u32 %v2603, 16
  %v2715 = vrot.slane %v2713, 7
  %v2716 = vrot.slane %v2715, 4
  %v2718 = vshrl.u32 %v2604, 16
  %v2720 = vrot.slane %v2718, 7
  %v2721 = vshll.u32 %v2604, 16
  %v2723 = vor.u32 %v2720, %v2721
  %v2724 = vsel %vm365, %v2716, %v2723
  %v2726 = vshrl.u32 %v2605, 16
  %v2728 = vrot.slane %v2726, 7
  %v2729 = vrot.slane %v2728, 4
  %v2731 = vshrl.u32 %v2606, 16
  %v2733 = vrot.slane %v2731, 7
  %v2734 = vshll.u32 %v2606, 16
  %v2736 = vor.u32 %v2733, %v2734
  %v2737 = vsel %vm365, %v2729, %v2736
  %v2739 = vshrl.u32 %v2607, 16
  %v2741 = vrot.slane %v2739, 7
  %v2742 = vrot.slane %v2741, 4
  %v2744 = vshrl.u32 %v2608, 16
  %v2746 = vrot.slane %v2744, 7
  %v2747 = vshll.u32 %v2608, 16
  %v2749 = vor.u32 %v2746, %v2747
  %v2750 = vsel %vm365, %v2742, %v2749
  %v2752 = vshrl.u32 %v2609, 16
  %v2754 = vrot.slane %v2752, 7
  %v2755 = vrot.slane %v2754, 4
  %v2757 = vshrl.u32 %v2610, 16
  %v2759 = vrot.slane %v2757, 7
  %v2760 = vshll.u32 %v2610, 16
  %v2762 = vor.u32 %v2759, %v2760
  %v2763 = vsel %vm365, %v2755, %v2762
  %v2765 = vshrl.u32 %v2611, 16
  %v2767 = vrot.slane %v2765, 7
  %v2768 = vrot.slane %v2767, 4
  %v2770 = vshrl.u32 %v2612, 16
  %v2772 = vrot.slane %v2770, 7
  %v2773 = vshll.u32 %v2612, 16
  %v2775 = vor.u32 %v2772, %v2773
  %v2776 = vsel %vm365, %v2768, %v2775
  %v2778 = vshrl.u32 %v2613, 16
  %v2780 = vrot.slane %v2778, 7
  %v2781 = vrot.slane %v2780, 4
  %v2783 = vshrl.u32 %v2614, 16
  %v2785 = vrot.slane %v2783, 7
  %v2786 = vshll.u32 %v2614, 16
  %v2788 = vor.u32 %v2785, %v2786
  %v2789 = vsel %vm365, %v2781, %v2788
  %v2791 = vshrl.u32 %v2615, 16
  %v2793 = vrot.slane %v2791, 7
  %v2794 = vrot.slane %v2793, 4
  %v2796 = vshrl.u32 %v2616, 16
  %v2798 = vrot.slane %v2796, 7
  %v2799 = vshll.u32 %v2616, 16
  %v2801 = vor.u32 %v2798, %v2799
  %v2802 = vsel %vm365, %v2794, %v2801
  %v2804 = vshrl.u32 %v2617, 16
  %v2806 = vrot.slane %v2804, 7
  %v2807 = vrot.slane %v2806, 4
  %v2809 = vshrl.u32 %v2618, 16
  %v2811 = vrot.slane %v2809, 7
  %v2812 = vshll.u32 %v2618, 16
  %v2814 = vor.u32 %v2811, %v2812
  %v2815 = vsel %vm365, %v2807, %v2814
  %v2817 = vshrl.u32 %v2619, 16
  %v2819 = vrot.slane %v2817, 7
  %v2820 = vrot.slane %v2819, 4
  %v2822 = vshrl.u32 %v2620, 16
  %v2824 = vrot.slane %v2822, 7
  %v2825 = vshll.u32 %v2620, 16
  %v2827 = vor.u32 %v2824, %v2825
  %v2828 = vsel %vm365, %v2820, %v2827
  %s2829 = scalar_lea.vmem %s1, 384
  %v2830 = vld [vmem:[%s2829] sm:$0xf]
  %v2831 = vld [vmem:[%s2829 + $0x4] sm:$0xf]
  %v2832 = vld [vmem:[%s2829 + $0x8] sm:$0xf]
  %v2833 = vld [vmem:[%s2829 + $0xc] sm:$0xf]
  %v2834 = vld [vmem:[%s2829 + $0x10] sm:$0xf]
  %v2835 = vld [vmem:[%s2829 + $0x14] sm:$0xf]
  %v2836 = vld [vmem:[%s2829 + $0x18] sm:$0xf]
  %v2837 = vld [vmem:[%s2829 + $0x1c] sm:$0xf]
  %v2838 = vld [vmem:[%s2829 + $0x20] sm:$0xf]
  %v2839 = vld [vmem:[%s2829 + $0x24] sm:$0xf]
  %v2840 = vld [vmem:[%s2829 + $0x28] sm:$0xf]
  %v2841 = vld [vmem:[%s2829 + $0x2c] sm:$0xf]
  %v2842 = vld [vmem:[%s2829 + $0x30] sm:$0xf]
  %v2843 = vld [vmem:[%s2829 + $0x34] sm:$0xf]
  %v2844 = vld [vmem:[%s2829 + $0x38] sm:$0xf]
  %v2845 = vld [vmem:[%s2829 + $0x3c] sm:$0xf]
  %v2846 = vunpack.c.l.b16 %v2633
  %v2847 = vunpack.c.l.b16 %v2646
  %v2848 = vunpack.c.l.b16 %v2659
  %v2849 = vunpack.c.l.b16 %v2672
  %v2850 = vunpack.c.l.b16 %v2685
  %v2851 = vunpack.c.l.b16 %v2698
  %v2852 = vunpack.c.l.b16 %v2711
  %v2853 = vunpack.c.l.b16 %v2724
  %v2854 = vunpack.c.l.b16 %v2737
  %v2855 = vunpack.c.l.b16 %v2750
  %v2856 = vunpack.c.l.b16 %v2763
  %v2857 = vunpack.c.l.b16 %v2776
  %v2858 = vunpack.c.l.b16 %v2789
  %v2859 = vunpack.c.l.b16 %v2802
  %v2860 = vunpack.c.l.b16 %v2815
  %v2861 = vunpack.c.l.b16 %v2828
  %v2862 = vpack.c.b16 %v2847, %v2846
  %v2863 = vpack.c.b16 %v2849, %v2848
  %v2864 = vpack.c.b16 %v2851, %v2850
  %v2865 = vpack.c.b16 %v2853, %v2852
  %v2866 = vpack.c.b16 %v2855, %v2854
  %v2867 = vpack.c.b16 %v2857, %v2856
  %v2868 = vpack.c.b16 %v2859, %v2858
  %v2869 = vpack.c.b16 %v2861, %v2860
  %v2894 = vunpack.c.l.b16 %v2830
  %v2895 = vunpack.c.l.b16 %v2831
  %v2896 = vunpack.c.l.b16 %v2832
  %v2897 = vunpack.c.l.b16 %v2833
  %v2898 = vunpack.c.l.b16 %v2834
  %v2899 = vunpack.c.l.b16 %v2835
  %v2900 = vunpack.c.l.b16 %v2836
  %v2901 = vunpack.c.l.b16 %v2837
  %v2902 = vunpack.c.l.b16 %v2838
  %v2903 = vunpack.c.l.b16 %v2839
  %v2904 = vunpack.c.l.b16 %v2840
  %v2905 = vunpack.c.l.b16 %v2841
  %v2906 = vunpack.c.l.b16 %v2842
  %v2907 = vunpack.c.l.b16 %v2843
  %v2908 = vunpack.c.l.b16 %v2844
  %v2909 = vunpack.c.l.b16 %v2845
  %v2910 = vpack.c.b16 %v2895, %v2894
  %v2911 = vpack.c.b16 %v2897, %v2896
  %v2912 = vpack.c.b16 %v2899, %v2898
  %v2913 = vpack.c.b16 %v2901, %v2900
  %v2914 = vpack.c.b16 %v2903, %v2902
  %v2915 = vpack.c.b16 %v2905, %v2904
  %v2916 = vpack.c.b16 %v2907, %v2906
  %v2917 = vpack.c.b16 %v2909, %v2908
  %2926 = vmatprep.subr.bf16.mxu0 0
  %2927 = vmatpush1.bf16.msra.mxu0 %v2910
  %2928 = vmatprep.subr.bf16.mxu0 0
  %2929 = vmatpush1.bf16.msra.mxu0 %v2911
  %2930 = vmatprep.subr.bf16.mxu0 0
  %2931 = vmatpush1.bf16.msra.mxu0 %v2912
  %2932 = vmatprep.subr.bf16.mxu0 0
  %2933 = vmatpush1.bf16.msra.mxu0 %v2913
  %2934 = vmatprep.subr.bf16.mxu0 0
  %2935 = vmatpush1.bf16.msra.mxu0 %v2914
  %2936 = vmatprep.subr.bf16.mxu0 0
  %2937 = vmatpush1.bf16.msra.mxu0 %v2915
  %2938 = vmatprep.subr.bf16.mxu0 0
  %2939 = vmatpush1.bf16.msra.mxu0 %v2916
  %2940 = vmatprep.subr.bf16.mxu0 0
  %2941 = vmatpush1.bf16.msra.mxu0 %v2917
  %2942 = vmatprep.subr.bf16.mxu0 0
  %2943 = vmatpush1.bf16.msra.mxu0 0
  %2944 = vmatprep.subr.bf16.mxu0 0
  %2945 = vmatpush1.bf16.msra.mxu0 0
  %2946 = vmatprep.subr.bf16.mxu0 0
  %2947 = vmatpush1.bf16.msra.mxu0 0
  %2948 = vmatprep.subr.bf16.mxu0 0
  %2949 = vmatpush1.bf16.msra.mxu0 0
  %2950 = vmatprep.subr.bf16.mxu0 0
  %2951 = vmatpush1.bf16.msra.mxu0 0
  %2952 = vmatprep.subr.bf16.mxu0 0
  %2953 = vmatpush1.bf16.msra.mxu0 0
  %2954 = vmatprep.subr.bf16.mxu0 0
  %2955 = vmatpush1.bf16.msra.mxu0 0
  %2956 = vmatprep.subr.bf16.mxu0 0
  %2957 = vmatpush1.bf16.msra.mxu0 0
  %2958 = vmatprep.mubr.bf16.mxu0 0
  %2959 = vmatmul.mubr.bf16.gmra.mrb[0].mxu0 %v2862
  %v2960 = vpop.f32.mrb[0].mxu0
  %v2961 = vadd.f32 0.0, %v2960
  %v2962 = vpop.f32.mrb[0].mxu0
  %v2963 = vpop.f32.mrb[0].mxu0
  %v2964 = vadd.f32 0.0, %v2963
  %v2965 = vpop.f32.mrb[0].mxu0
  %2966 = vmatprep.mubr.bf16.mxu0 0
  %2967 = vmatmul.mubr.bf16.gmra.mrb[0].mxu0 %v2863
  %v2968 = vpop.f32.mrb[0].mxu0
  %v2969 = vadd.f32 0.0, %v2968
  %v2970 = vpop.f32.mrb[0].mxu0
  %v2971 = vpop.f32.mrb[0].mxu0
  %v2972 = vadd.f32 0.0, %v2971
  %v2973 = vpop.f32.mrb[0].mxu0
  %2974 = vmatprep.mubr.bf16.mxu0 0
  %2975 = vmatmul.mubr.bf16.gmra.mrb[0].mxu0 %v2864
  %v2976 = vpop.f32.mrb[0].mxu0
  %v2977 = vadd.f32 0.0, %v2976
  %v2978 = vpop.f32.mrb[0].mxu0
  %v2979 = vpop.f32.mrb[0].mxu0
  %v2980 = vadd.f32 0.0, %v2979
  %v2981 = vpop.f32.mrb[0].mxu0
  %2982 = vmatprep.mubr.bf16.mxu0 0
  %2983 = vmatmul.mubr.bf16.gmra.mrb[0].mxu0 %v2865
  %v2984 = vpop.f32.mrb[0].mxu0
  %v2985 = vadd.f32 0.0, %v2984
  %v2986 = vpop.f32.mrb[0].mxu0
  %v2987 = vpop.f32.mrb[0].mxu0
  %v2988 = vadd.f32 0.0, %v2987
  %v2989 = vpop.f32.mrb[0].mxu0
  %2990 = vmatprep.mubr.bf16.mxu0 0
  %2991 = vmatmul.mubr.bf16.gmra.mrb[0].mxu0 %v2866
  %v2992 = vpop.f32.mrb[0].mxu0
  %v2993 = vadd.f32 0.0, %v2992
  %v2994 = vpop.f32.mrb[0].mxu0
  %v2995 = vpop.f32.mrb[0].mxu0
  %v2996 = vadd.f32 0.0, %v2995
  %v2997 = vpop.f32.mrb[0].mxu0
  %2998 = vmatprep.mubr.bf16.mxu0 0
  %2999 = vmatmul.mubr.bf16.gmra.mrb[0].mxu0 %v2867
  %v3000 = vpop.f32.mrb[0].mxu0
  %v3001 = vadd.f32 0.0, %v3000
  %v3002 = vpop.f32.mrb[0].mxu0
  %v3003 = vpop.f32.mrb[0].mxu0
  %v3004 = vadd.f32 0.0, %v3003
  %v3005 = vpop.f32.mrb[0].mxu0
  %3006 = vmatprep.mubr.bf16.mxu0 0
  %3007 = vmatmul.mubr.bf16.gmra.mrb[0].mxu0 %v2868
  %v3008 = vpop.f32.mrb[0].mxu0
  %v3009 = vadd.f32 0.0, %v3008
  %v3010 = vpop.f32.mrb[0].mxu0
  %v3011 = vpop.f32.mrb[0].mxu0
  %v3012 = vadd.f32 0.0, %v3011
  %v3013 = vpop.f32.mrb[0].mxu0
  %3014 = vmatprep.mubr.bf16.mxu0 0
  %3015 = vmatmul.mubr.bf16.gmra.mrb[0].mxu0 %v2869
  %v3016 = vpop.f32.mrb[0].mxu0
  %v3017 = vadd.f32 0.0, %v3016
  %v3018 = vpop.f32.mrb[0].mxu0
  %v3019 = vpop.f32.mrb[0].mxu0
  %v3020 = vadd.f32 0.0, %v3019
  %v3021 = vpop.f32.mrb[0].mxu0
  %3022 = vdwg.mxu0
  %v3023 = vadd.f32 %v2572, %v2961
  %v3024 = vadd.f32 %v2573, %v2964
  %v3025 = vadd.f32 %v2574, %v2969
  %v3026 = vadd.f32 %v2575, %v2972
  %v3027 = vadd.f32 %v2576, %v2977
  %v3028 = vadd.f32 %v2577, %v2980
  %v3029 = vadd.f32 %v2578, %v2985
  %v3030 = vadd.f32 %v2579, %v2988
  %v3031 = vadd.f32 %v2580, %v2993
  %v3032 = vadd.f32 %v2581, %v2996
  %v3033 = vadd.f32 %v2582, %v3001
  %v3034 = vadd.f32 %v2583, %v3004
  %v3035 = vadd.f32 %v2584, %v3009
  %v3036 = vadd.f32 %v2585, %v3012
  %v3037 = vadd.f32 %v2586, %v3017
  %v3038 = vadd.f32 %v2587, %v3020
  %s3039 = scalar_lea.vmem %s1, 448
  %v3040 = vld [vmem:[%s3039] sm:$0xf]
  %v3041 = vld [vmem:[%s3039 + $0x4] sm:$0xf]
  %v3042 = vld [vmem:[%s3039 + $0x8] sm:$0xf]
  %v3043 = vld [vmem:[%s3039 + $0xc] sm:$0xf]
  %v3044 = vld [vmem:[%s3039 + $0x10] sm:$0xf]
  %v3045 = vld [vmem:[%s3039 + $0x14] sm:$0xf]
  %v3046 = vld [vmem:[%s3039 + $0x18] sm:$0xf]
  %v3047 = vld [vmem:[%s3039 + $0x1c] sm:$0xf]
  %v3048 = vld [vmem:[%s3039 + $0x20] sm:$0xf]
  %v3049 = vld [vmem:[%s3039 + $0x24] sm:$0xf]
  %v3050 = vld [vmem:[%s3039 + $0x28] sm:$0xf]
  %v3051 = vld [vmem:[%s3039 + $0x2c] sm:$0xf]
  %v3052 = vld [vmem:[%s3039 + $0x30] sm:$0xf]
  %v3053 = vld [vmem:[%s3039 + $0x34] sm:$0xf]
  %v3054 = vld [vmem:[%s3039 + $0x38] sm:$0xf]
  %v3055 = vld [vmem:[%s3039 + $0x3c] sm:$0xf]
  %v3072 = vunpack.c.l.b16 %v2590
  %v3073 = vunpack.c.l.b16 %v2592
  %v3074 = vunpack.c.l.b16 %v2594
  %v3075 = vunpack.c.l.b16 %v2596
  %v3076 = vunpack.c.l.b16 %v2598
  %v3077 = vunpack.c.l.b16 %v2600
  %v3078 = vunpack.c.l.b16 %v2602
  %v3079 = vunpack.c.l.b16 %v2604
  %v3080 = vunpack.c.l.b16 %v2606
  %v3081 = vunpack.c.l.b16 %v2608
  %v3082 = vunpack.c.l.b16 %v2610
  %v3083 = vunpack.c.l.b16 %v2612
  %v3084 = vunpack.c.l.b16 %v2614
  %v3085 = vunpack.c.l.b16 %v2616
  %v3086 = vunpack.c.l.b16 %v2618
  %v3087 = vunpack.c.l.b16 %v2620
  %v3088 = vpack.c.b16 %v3073, %v3072
  %v3089 = vpack.c.b16 %v3075, %v3074
  %v3090 = vpack.c.b16 %v3077, %v3076
  %v3091 = vpack.c.b16 %v3079, %v3078
  %v3092 = vpack.c.b16 %v3081, %v3080
  %v3093 = vpack.c.b16 %v3083, %v3082
  %v3094 = vpack.c.b16 %v3085, %v3084
  %v3095 = vpack.c.b16 %v3087, %v3086
  %v3120 = vunpack.c.l.b16 %v3040
  %v3121 = vunpack.c.l.b16 %v3041
  %v3122 = vunpack.c.l.b16 %v3042
  %v3123 = vunpack.c.l.b16 %v3043
  %v3124 = vunpack.c.l.b16 %v3044
  %v3125 = vunpack.c.l.b16 %v3045
  %v3126 = vunpack.c.l.b16 %v3046
  %v3127 = vunpack.c.l.b16 %v3047
  %v3128 = vunpack.c.l.b16 %v3048
  %v3129 = vunpack.c.l.b16 %v3049
  %v3130 = vunpack.c.l.b16 %v3050
  %v3131 = vunpack.c.l.b16 %v3051
  %v3132 = vunpack.c.l.b16 %v3052
  %v3133 = vunpack.c.l.b16 %v3053
  %v3134 = vunpack.c.l.b16 %v3054
  %v3135 = vunpack.c.l.b16 %v3055
  %v3136 = vpack.c.b16 %v3121, %v3120
  %v3137 = vpack.c.b16 %v3123, %v3122
  %v3138 = vpack.c.b16 %v3125, %v3124
  %v3139 = vpack.c.b16 %v3127, %v3126
  %v3140 = vpack.c.b16 %v3129, %v3128
  %v3141 = vpack.c.b16 %v3131, %v3130
  %v3142 = vpack.c.b16 %v3133, %v3132
  %v3143 = vpack.c.b16 %v3135, %v3134
  %3152 = vmatprep.subr.bf16.mxu0 0
  %3153 = vmatpush1.bf16.msra.mxu0 %v3136
  %3154 = vmatprep.subr.bf16.mxu0 0
  %3155 = vmatpush1.bf16.msra.mxu0 %v3137
  %3156 = vmatprep.subr.bf16.mxu0 0
  %3157 = vmatpush1.bf16.msra.mxu0 %v3138
  %3158 = vmatprep.subr.bf16.mxu0 0
  %3159 = vmatpush1.bf16.msra.mxu0 %v3139
  %3160 = vmatprep.subr.bf16.mxu0 0
  %3161 = vmatpush1.bf16.msra.mxu0 %v3140
  %3162 = vmatprep.subr.bf16.mxu0 0
  %3163 = vmatpush1.bf16.msra.mxu0 %v3141
  %3164 = vmatprep.subr.bf16.mxu0 0
  %3165 = vmatpush1.bf16.msra.mxu0 %v3142
  %3166 = vmatprep.subr.bf16.mxu0 0
  %3167 = vmatpush1.bf16.msra.mxu0 %v3143
  %3168 = vmatprep.subr.bf16.mxu0 0
  %3169 = vmatpush1.bf16.msra.mxu0 0
  %3170 = vmatprep.subr.bf16.mxu0 0
  %3171 = vmatpush1.bf16.msra.mxu0 0
  %3172 = vmatprep.subr.bf16.mxu0 0
  %3173 = vmatpush1.bf16.msra.mxu0 0
  %3174 = vmatprep.subr.bf16.mxu0 0
  %3175 = vmatpush1.bf16.msra.mxu0 0
  %3176 = vmatprep.subr.bf16.mxu0 0
  %3177 = vmatpush1.bf16.msra.mxu0 0
  %3178 = vmatprep.subr.bf16.mxu0 0
  %3179 = vmatpush1.bf16.msra.mxu0 0
  %3180 = vmatprep.subr.bf16.mxu0 0
  %3181 = vmatpush1.bf16.msra.mxu0 0
  %3182 = vmatprep.subr.bf16.mxu0 0
  %3183 = vmatpush1.bf16.msra.mxu0 0
  %3184 = vmatprep.mubr.bf16.mxu0 0
  %3185 = vmatmul.mubr.bf16.gmra.mrb[0].mxu0 %v3088
  %v3186 = vpop.f32.mrb[0].mxu0
  %v3187 = vadd.f32 0.0, %v3186
  %v3188 = vpop.f32.mrb[0].mxu0
  %v3189 = vpop.f32.mrb[0].mxu0
  %v3190 = vadd.f32 0.0, %v3189
  %v3191 = vpop.f32.mrb[0].mxu0
  %3192 = vmatprep.mubr.bf16.mxu0 0
  %3193 = vmatmul.mubr.bf16.gmra.mrb[0].mxu0 %v3089
  %v3194 = vpop.f32.mrb[0].mxu0
  %v3195 = vadd.f32 0.0, %v3194
  %v3196 = vpop.f32.mrb[0].mxu0
  %v3197 = vpop.f32.mrb[0].mxu0
  %v3198 = vadd.f32 0.0, %v3197
  %v3199 = vpop.f32.mrb[0].mxu0
  %3200 = vmatprep.mubr.bf16.mxu0 0
  %3201 = vmatmul.mubr.bf16.gmra.mrb[0].mxu0 %v3090
  %v3202 = vpop.f32.mrb[0].mxu0
  %v3203 = vadd.f32 0.0, %v3202
  %v3204 = vpop.f32.mrb[0].mxu0
  %v3205 = vpop.f32.mrb[0].mxu0
  %v3206 = vadd.f32 0.0, %v3205
  %v3207 = vpop.f32.mrb[0].mxu0
  %3208 = vmatprep.mubr.bf16.mxu0 0
  %3209 = vmatmul.mubr.bf16.gmra.mrb[0].mxu0 %v3091
  %v3210 = vpop.f32.mrb[0].mxu0
  %v3211 = vadd.f32 0.0, %v3210
  %v3212 = vpop.f32.mrb[0].mxu0
  %v3213 = vpop.f32.mrb[0].mxu0
  %v3214 = vadd.f32 0.0, %v3213
  %v3215 = vpop.f32.mrb[0].mxu0
  %3216 = vmatprep.mubr.bf16.mxu0 0
  %3217 = vmatmul.mubr.bf16.gmra.mrb[0].mxu0 %v3092
  %v3218 = vpop.f32.mrb[0].mxu0
  %v3219 = vadd.f32 0.0, %v3218
  %v3220 = vpop.f32.mrb[0].mxu0
  %v3221 = vpop.f32.mrb[0].mxu0
  %v3222 = vadd.f32 0.0, %v3221
  %v3223 = vpop.f32.mrb[0].mxu0
  %3224 = vmatprep.mubr.bf16.mxu0 0
  %3225 = vmatmul.mubr.bf16.gmra.mrb[0].mxu0 %v3093
  %v3226 = vpop.f32.mrb[0].mxu0
  %v3227 = vadd.f32 0.0, %v3226
  %v3228 = vpop.f32.mrb[0].mxu0
  %v3229 = vpop.f32.mrb[0].mxu0
  %v3230 = vadd.f32 0.0, %v3229
  %v3231 = vpop.f32.mrb[0].mxu0
  %3232 = vmatprep.mubr.bf16.mxu0 0
  %3233 = vmatmul.mubr.bf16.gmra.mrb[0].mxu0 %v3094
  %v3234 = vpop.f32.mrb[0].mxu0
  %v3235 = vadd.f32 0.0, %v3234
  %v3236 = vpop.f32.mrb[0].mxu0
  %v3237 = vpop.f32.mrb[0].mxu0
  %v3238 = vadd.f32 0.0, %v3237
  %v3239 = vpop.f32.mrb[0].mxu0
  %3240 = vmatprep.mubr.bf16.mxu0 0
  %3241 = vmatmul.mubr.bf16.gmra.mrb[0].mxu0 %v3095
  %v3242 = vpop.f32.mrb[0].mxu0
  %v3243 = vadd.f32 0.0, %v3242
  %v3244 = vpop.f32.mrb[0].mxu0
  %v3245 = vpop.f32.mrb[0].mxu0
  %v3246 = vadd.f32 0.0, %v3245
  %v3247 = vpop.f32.mrb[0].mxu0
  %3248 = vdwg.mxu0
  %v3249 = vadd.f32 %v3023, %v3187
  %v3250 = vadd.f32 %v3024, %v3190
  %v3251 = vadd.f32 %v3025, %v3195
  %v3252 = vadd.f32 %v3026, %v3198
  %v3253 = vadd.f32 %v3027, %v3203
  %v3254 = vadd.f32 %v3028, %v3206
  %v3255 = vadd.f32 %v3029, %v3211
  %v3256 = vadd.f32 %v3030, %v3214
  %v3257 = vadd.f32 %v3031, %v3219
  %v3258 = vadd.f32 %v3032, %v3222
  %v3259 = vadd.f32 %v3033, %v3227
  %v3260 = vadd.f32 %v3034, %v3230
  %v3261 = vadd.f32 %v3035, %v3235
  %v3262 = vadd.f32 %v3036, %v3238
  %v3263 = vadd.f32 %v3037, %v3243
  %v3264 = vadd.f32 %v3038, %v3246
  %v3265 = vld [vmem:[%s2588 + $0x4] sm:$0xf]
  %v3266 = vld [vmem:[%s2588 + $0x8] sm:$0x1]
  %v3267 = vld [vmem:[%s2588 + $0x10] sm:$0xf]
  %v3268 = vld [vmem:[%s2588 + $0x14] sm:$0x1]
  %v3269 = vld [vmem:[%s2588 + $0x1c] sm:$0xf]
  %v3270 = vld [vmem:[%s2588 + $0x20] sm:$0x1]
  %v3271 = vld [vmem:[%s2588 + $0x28] sm:$0xf]
  %v3272 = vld [vmem:[%s2588 + $0x2c] sm:$0x1]
  %v3273 = vld [vmem:[%s2588 + $0x34] sm:$0xf]
  %v3274 = vld [vmem:[%s2588 + $0x38] sm:$0x1]
  %v3275 = vld [vmem:[%s2588 + $0x40] sm:$0xf]
  %v3276 = vld [vmem:[%s2588 + $0x44] sm:$0x1]
  %v3277 = vld [vmem:[%s2588 + $0x4c] sm:$0xf]
  %v3278 = vld [vmem:[%s2588 + $0x50] sm:$0x1]
  %v3279 = vld [vmem:[%s2588 + $0x58] sm:$0xf]
  %v3280 = vld [vmem:[%s2588 + $0x5c] sm:$0x1]
  %v3281 = vld [vmem:[%s2588 + $0x7c] sm:$0xf]
  %v3282 = vld [vmem:[%s2588 + $0x80] sm:$0x1]
  %v3283 = vld [vmem:[%s2588 + $0x88] sm:$0xf]
  %v3284 = vld [vmem:[%s2588 + $0x8c] sm:$0x1]
  %v3285 = vld [vmem:[%s2588 + $0x94] sm:$0xf]
  %v3286 = vld [vmem:[%s2588 + $0x98] sm:$0x1]
  %v3287 = vld [vmem:[%s2588 + $0xa0] sm:$0xf]
  %v3288 = vld [vmem:[%s2588 + $0xa4] sm:$0x1]
  %v3289 = vld [vmem:[%s2588 + $0xac] sm:$0xf]
  %v3290 = vld [vmem:[%s2588 + $0xb0] sm:$0x1]
  %v3291 = vld [vmem:[%s2588 + $0xb8] sm:$0xf]
  %v3292 = vld [vmem:[%s2588 + $0xbc] sm:$0x1]
  %v3293 = vld [vmem:[%s2588 + $0xc4] sm:$0xf]
  %v3294 = vld [vmem:[%s2588 + $0xc8] sm:$0x1]
  %v3295 = vld [vmem:[%s2588 + $0xd0] sm:$0xf]
  %v3296 = vld [vmem:[%s2588 + $0xd4] sm:$0x1]
  %v3298 = vshrl.u32 %v3265, 16
  %v3300 = vrot.slane %v3298, 4
  %v3301 = vshll.u32 %v3265, 16
  %v3303 = vrot.slane %v3301, 5
  %v3304 = vor.u32 %v3300, %v3303
  %v3305 = vrot.slane %v3304, 4
  %v3307 = vshll.u32 %v3266, 16
  %v3309 = vrot.slane %v3307, 5
  %v3310 = vsel %vm1011, %v3305, %v3309
  %v3312 = vshrl.u32 %v3267, 16
  %v3314 = vrot.slane %v3312, 4
  %v3315 = vshll.u32 %v3267, 16
  %v3317 = vrot.slane %v3315, 5
  %v3318 = vor.u32 %v3314, %v3317
  %v3319 = vrot.slane %v3318, 4
  %v3321 = vshll.u32 %v3268, 16
  %v3323 = vrot.slane %v3321, 5
  %v3324 = vsel %vm1011, %v3319, %v3323
  %v3326 = vshrl.u32 %v3269, 16
  %v3328 = vrot.slane %v3326, 4
  %v3329 = vshll.u32 %v3269, 16
  %v3331 = vrot.slane %v3329, 5
  %v3332 = vor.u32 %v3328, %v3331
  %v3333 = vrot.slane %v3332, 4
  %v3335 = vshll.u32 %v3270, 16
  %v3337 = vrot.slane %v3335, 5
  %v3338 = vsel %vm1011, %v3333, %v3337
  %v3340 = vshrl.u32 %v3271, 16
  %v3342 = vrot.slane %v3340, 4
  %v3343 = vshll.u32 %v3271, 16
  %v3345 = vrot.slane %v3343, 5
  %v3346 = vor.u32 %v3342, %v3345
  %v3347 = vrot.slane %v3346, 4
  %v3349 = vshll.u32 %v3272, 16
  %v3351 = vrot.slane %v3349, 5
  %v3352 = vsel %vm1011, %v3347, %v3351
  %v3354 = vshrl.u32 %v3273, 16
  %v3356 = vrot.slane %v3354, 4
  %v3357 = vshll.u32 %v3273, 16
  %v3359 = vrot.slane %v3357, 5
  %v3360 = vor.u32 %v3356, %v3359
  %v3361 = vrot.slane %v3360, 4
  %v3363 = vshll.u32 %v3274, 16
  %v3365 = vrot.slane %v3363, 5
  %v3366 = vsel %vm1011, %v3361, %v3365
  %v3368 = vshrl.u32 %v3275, 16
  %v3370 = vrot.slane %v3368, 4
  %v3371 = vshll.u32 %v3275, 16
  %v3373 = vrot.slane %v3371, 5
  %v3374 = vor.u32 %v3370, %v3373
  %v3375 = vrot.slane %v3374, 4
  %v3377 = vshll.u32 %v3276, 16
  %v3379 = vrot.slane %v3377, 5
  %v3380 = vsel %vm1011, %v3375, %v3379
  %v3382 = vshrl.u32 %v3277, 16
  %v3384 = vrot.slane %v3382, 4
  %v3385 = vshll.u32 %v3277, 16
  %v3387 = vrot.slane %v3385, 5
  %v3388 = vor.u32 %v3384, %v3387
  %v3389 = vrot.slane %v3388, 4
  %v3391 = vshll.u32 %v3278, 16
  %v3393 = vrot.slane %v3391, 5
  %v3394 = vsel %vm1011, %v3389, %v3393
  %v3396 = vshrl.u32 %v3279, 16
  %v3398 = vrot.slane %v3396, 4
  %v3399 = vshll.u32 %v3279, 16
  %v3401 = vrot.slane %v3399, 5
  %v3402 = vor.u32 %v3398, %v3401
  %v3403 = vrot.slane %v3402, 4
  %v3405 = vshll.u32 %v3280, 16
  %v3407 = vrot.slane %v3405, 5
  %v3408 = vsel %vm1011, %v3403, %v3407
  %v3410 = vshrl.u32 %v3281, 16
  %v3412 = vrot.slane %v3410, 4
  %v3413 = vshll.u32 %v3281, 16
  %v3415 = vrot.slane %v3413, 5
  %v3416 = vor.u32 %v3412, %v3415
  %v3417 = vrot.slane %v3416, 4
  %v3419 = vshll.u32 %v3282, 16
  %v3421 = vrot.slane %v3419, 5
  %v3422 = vsel %vm1011, %v3417, %v3421
  %v3424 = vshrl.u32 %v3283, 16
  %v3426 = vrot.slane %v3424, 4
  %v3427 = vshll.u32 %v3283, 16
  %v3429 = vrot.slane %v3427, 5
  %v3430 = vor.u32 %v3426, %v3429
  %v3431 = vrot.slane %v3430, 4
  %v3433 = vshll.u32 %v3284, 16
  %v3435 = vrot.slane %v3433, 5
  %v3436 = vsel %vm1011, %v3431, %v3435
  %v3438 = vshrl.u32 %v3285, 16
  %v3440 = vrot.slane %v3438, 4
  %v3441 = vshll.u32 %v3285, 16
  %v3443 = vrot.slane %v3441, 5
  %v3444 = vor.u32 %v3440, %v3443
  %v3445 = vrot.slane %v3444, 4
  %v3447 = vshll.u32 %v3286, 16
  %v3449 = vrot.slane %v3447, 5
  %v3450 = vsel %vm1011, %v3445, %v3449
  %v3452 = vshrl.u32 %v3287, 16
  %v3454 = vrot.slane %v3452, 4
  %v3455 = vshll.u32 %v3287, 16
  %v3457 = vrot.slane %v3455, 5
  %v3458 = vor.u32 %v3454, %v3457
  %v3459 = vrot.slane %v3458, 4
  %v3461 = vshll.u32 %v3288, 16
  %v3463 = vrot.slane %v3461, 5
  %v3464 = vsel %vm1011, %v3459, %v3463
  %v3466 = vshrl.u32 %v3289, 16
  %v3468 = vrot.slane %v3466, 4
  %v3469 = vshll.u32 %v3289, 16
  %v3471 = vrot.slane %v3469, 5
  %v3472 = vor.u32 %v3468, %v3471
  %v3473 = vrot.slane %v3472, 4
  %v3475 = vshll.u32 %v3290, 16
  %v3477 = vrot.slane %v3475, 5
  %v3478 = vsel %vm1011, %v3473, %v3477
  %v3480 = vshrl.u32 %v3291, 16
  %v3482 = vrot.slane %v3480, 4
  %v3483 = vshll.u32 %v3291, 16
  %v3485 = vrot.slane %v3483, 5
  %v3486 = vor.u32 %v3482, %v3485
  %v3487 = vrot.slane %v3486, 4
  %v3489 = vshll.u32 %v3292, 16
  %v3491 = vrot.slane %v3489, 5
  %v3492 = vsel %vm1011, %v3487, %v3491
  %v3494 = vshrl.u32 %v3293, 16
  %v3496 = vrot.slane %v3494, 4
  %v3497 = vshll.u32 %v3293, 16
  %v3499 = vrot.slane %v3497, 5
  %v3500 = vor.u32 %v3496, %v3499
  %v3501 = vrot.slane %v3500, 4
  %v3503 = vshll.u32 %v3294, 16
  %v3505 = vrot.slane %v3503, 5
  %v3506 = vsel %vm1011, %v3501, %v3505
  %v3508 = vshrl.u32 %v3295, 16
  %v3510 = vrot.slane %v3508, 4
  %v3511 = vshll.u32 %v3295, 16
  %v3513 = vrot.slane %v3511, 5
  %v3514 = vor.u32 %v3510, %v3513
  %v3515 = vrot.slane %v3514, 4
  %v3517 = vshll.u32 %v3296, 16
  %v3519 = vrot.slane %v3517, 5
  %v3520 = vsel %vm1011, %v3515, %v3519
  %s3521 = scalar_lea.vmem %s1, 512
  %v3522 = vld [vmem:[%s3521] sm:$0xf]
  %v3523 = vld [vmem:[%s3521 + $0x4] sm:$0xf]
  %v3524 = vld [vmem:[%s3521 + $0x8] sm:$0xf]
  %v3525 = vld [vmem:[%s3521 + $0xc] sm:$0xf]
  %v3526 = vld [vmem:[%s3521 + $0x10] sm:$0xf]
  %v3527 = vld [vmem:[%s3521 + $0x14] sm:$0xf]
  %v3528 = vld [vmem:[%s3521 + $0x18] sm:$0xf]
  %v3529 = vld [vmem:[%s3521 + $0x1c] sm:$0xf]
  %v3530 = vld [vmem:[%s3521 + $0x20] sm:$0xf]
  %v3531 = vld [vmem:[%s3521 + $0x24] sm:$0xf]
  %v3532 = vld [vmem:[%s3521 + $0x28] sm:$0xf]
  %v3533 = vld [vmem:[%s3521 + $0x2c] sm:$0xf]
  %v3534 = vld [vmem:[%s3521 + $0x30] sm:$0xf]
  %v3535 = vld [vmem:[%s3521 + $0x34] sm:$0xf]
  %v3536 = vld [vmem:[%s3521 + $0x38] sm:$0xf]
  %v3537 = vld [vmem:[%s3521 + $0x3c] sm:$0xf]
  %v3538 = vunpack.c.l.b16 %v3310
  %v3539 = vunpack.c.l.b16 %v3324
  %v3540 = vunpack.c.l.b16 %v3338
  %v3541 = vunpack.c.l.b16 %v3352
  %v3542 = vunpack.c.l.b16 %v3366
  %v3543 = vunpack.c.l.b16 %v3380
  %v3544 = vunpack.c.l.b16 %v3394
  %v3545 = vunpack.c.l.b16 %v3408
  %v3546 = vunpack.c.l.b16 %v3422
  %v3547 = vunpack.c.l.b16 %v3436
  %v3548 = vunpack.c.l.b16 %v3450
  %v3549 = vunpack.c.l.b16 %v3464
  %v3550 = vunpack.c.l.b16 %v3478
  %v3551 = vunpack.c.l.b16 %v3492
  %v3552 = vunpack.c.l.b16 %v3506
  %v3553 = vunpack.c.l.b16 %v3520
  %v3554 = vpack.c.b16 %v3539, %v3538
  %v3555 = vpack.c.b16 %v3541, %v3540
  %v3556 = vpack.c.b16 %v3543, %v3542
  %v3557 = vpack.c.b16 %v3545, %v3544
  %v3558 = vpack.c.b16 %v3547, %v3546
  %v3559 = vpack.c.b16 %v3549, %v3548
  %v3560 = vpack.c.b16 %v3551, %v3550
  %v3561 = vpack.c.b16 %v3553, %v3552
  %v3586 = vunpack.c.l.b16 %v3522
  %v3587 = vunpack.c.l.b16 %v3523
  %v3588 = vunpack.c.l.b16 %v3524
  %v3589 = vunpack.c.l.b16 %v3525
  %v3590 = vunpack.c.l.b16 %v3526
  %v3591 = vunpack.c.l.b16 %v3527
  %v3592 = vunpack.c.l.b16 %v3528
  %v3593 = vunpack.c.l.b16 %v3529
  %v3594 = vunpack.c.l.b16 %v3530
  %v3595 = vunpack.c.l.b16 %v3531
  %v3596 = vunpack.c.l.b16 %v3532
  %v3597 = vunpack.c.l.b16 %v3533
  %v3598 = vunpack.c.l.b16 %v3534
  %v3599 = vunpack.c.l.b16 %v3535
  %v3600 = vunpack.c.l.b16 %v3536
  %v3601 = vunpack.c.l.b16 %v3537
  %v3602 = vpack.c.b16 %v3587, %v3586
  %v3603 = vpack.c.b16 %v3589, %v3588
  %v3604 = vpack.c.b16 %v3591, %v3590
  %v3605 = vpack.c.b16 %v3593, %v3592
  %v3606 = vpack.c.b16 %v3595, %v3594
  %v3607 = vpack.c.b16 %v3597, %v3596
  %v3608 = vpack.c.b16 %v3599, %v3598
  %v3609 = vpack.c.b16 %v3601, %v3600
  %3618 = vmatprep.subr.bf16.mxu0 0
  %3619 = vmatpush1.bf16.msra.mxu0 %v3602
  %3620 = vmatprep.subr.bf16.mxu0 0
  %3621 = vmatpush1.bf16.msra.mxu0 %v3603
  %3622 = vmatprep.subr.bf16.mxu0 0
  %3623 = vmatpush1.bf16.msra.mxu0 %v3604
  %3624 = vmatprep.subr.bf16.mxu0 0
  %3625 = vmatpush1.bf16.msra.mxu0 %v3605
  %3626 = vmatprep.subr.bf16.mxu0 0
  %3627 = vmatpush1.bf16.msra.mxu0 %v3606
  %3628 = vmatprep.subr.bf16.mxu0 0
  %3629 = vmatpush1.bf16.msra.mxu0 %v3607
  %3630 = vmatprep.subr.bf16.mxu0 0
  %3631 = vmatpush1.bf16.msra.mxu0 %v3608
  %3632 = vmatprep.subr.bf16.mxu0 0
  %3633 = vmatpush1.bf16.msra.mxu0 %v3609
  %3634 = vmatprep.subr.bf16.mxu0 0
  %3635 = vmatpush1.bf16.msra.mxu0 0
  %3636 = vmatprep.subr.bf16.mxu0 0
  %3637 = vmatpush1.bf16.msra.mxu0 0
  %3638 = vmatprep.subr.bf16.mxu0 0
  %3639 = vmatpush1.bf16.msra.mxu0 0
  %3640 = vmatprep.subr.bf16.mxu0 0
  %3641 = vmatpush1.bf16.msra.mxu0 0
  %3642 = vmatprep.subr.bf16.mxu0 0
  %3643 = vmatpush1.bf16.msra.mxu0 0
  %3644 = vmatprep.subr.bf16.mxu0 0
  %3645 = vmatpush1.bf16.msra.mxu0 0
  %3646 = vmatprep.subr.bf16.mxu0 0
  %3647 = vmatpush1.bf16.msra.mxu0 0
  %3648 = vmatprep.subr.bf16.mxu0 0
  %3649 = vmatpush1.bf16.msra.mxu0 0
  %3650 = vmatprep.mubr.bf16.mxu0 0
  %3651 = vmatmul.mubr.bf16.gmra.mrb[0].mxu0 %v3554
  %v3652 = vpop.f32.mrb[0].mxu0
  %v3653 = vadd.f32 0.0, %v3652
  %v3654 = vpop.f32.mrb[0].mxu0
  %v3655 = vpop.f32.mrb[0].mxu0
  %v3656 = vadd.f32 0.0, %v3655
  %v3657 = vpop.f32.mrb[0].mxu0
  %3658 = vmatprep.mubr.bf16.mxu0 0
  %3659 = vmatmul.mubr.bf16.gmra.mrb[0].mxu0 %v3555
  %v3660 = vpop.f32.mrb[0].mxu0
  %v3661 = vadd.f32 0.0, %v3660
  %v3662 = vpop.f32.mrb[0].mxu0
  %v3663 = vpop.f32.mrb[0].mxu0
  %v3664 = vadd.f32 0.0, %v3663
  %v3665 = vpop.f32.mrb[0].mxu0
  %3666 = vmatprep.mubr.bf16.mxu0 0
  %3667 = vmatmul.mubr.bf16.gmra.mrb[0].mxu0 %v3556
  %v3668 = vpop.f32.mrb[0].mxu0
  %v3669 = vadd.f32 0.0, %v3668
  %v3670 = vpop.f32.mrb[0].mxu0
  %v3671 = vpop.f32.mrb[0].mxu0
  %v3672 = vadd.f32 0.0, %v3671
  %v3673 = vpop.f32.mrb[0].mxu0
  %3674 = vmatprep.mubr.bf16.mxu0 0
  %3675 = vmatmul.mubr.bf16.gmra.mrb[0].mxu0 %v3557
  %v3676 = vpop.f32.mrb[0].mxu0
  %v3677 = vadd.f32 0.0, %v3676
  %v3678 = vpop.f32.mrb[0].mxu0
  %v3679 = vpop.f32.mrb[0].mxu0
  %v3680 = vadd.f32 0.0, %v3679
  %v3681 = vpop.f32.mrb[0].mxu0
  %3682 = vmatprep.mubr.bf16.mxu0 0
  %3683 = vmatmul.mubr.bf16.gmra.mrb[0].mxu0 %v3558
  %v3684 = vpop.f32.mrb[0].mxu0
  %v3685 = vadd.f32 0.0, %v3684
  %v3686 = vpop.f32.mrb[0].mxu0
  %v3687 = vpop.f32.mrb[0].mxu0
  %v3688 = vadd.f32 0.0, %v3687
  %v3689 = vpop.f32.mrb[0].mxu0
  %3690 = vmatprep.mubr.bf16.mxu0 0
  %3691 = vmatmul.mubr.bf16.gmra.mrb[0].mxu0 %v3559
  %v3692 = vpop.f32.mrb[0].mxu0
  %v3693 = vadd.f32 0.0, %v3692
  %v3694 = vpop.f32.mrb[0].mxu0
  %v3695 = vpop.f32.mrb[0].mxu0
  %v3696 = vadd.f32 0.0, %v3695
  %v3697 = vpop.f32.mrb[0].mxu0
  %3698 = vmatprep.mubr.bf16.mxu0 0
  %3699 = vmatmul.mubr.bf16.gmra.mrb[0].mxu0 %v3560
  %v3700 = vpop.f32.mrb[0].mxu0
  %v3701 = vadd.f32 0.0, %v3700
  %v3702 = vpop.f32.mrb[0].mxu0
  %v3703 = vpop.f32.mrb[0].mxu0
  %v3704 = vadd.f32 0.0, %v3703
  %v3705 = vpop.f32.mrb[0].mxu0
  %3706 = vmatprep.mubr.bf16.mxu0 0
  %3707 = vmatmul.mubr.bf16.gmra.mrb[0].mxu0 %v3561
  %v3708 = vpop.f32.mrb[0].mxu0
  %v3709 = vadd.f32 0.0, %v3708
  %v3710 = vpop.f32.mrb[0].mxu0
  %v3711 = vpop.f32.mrb[0].mxu0
  %v3712 = vadd.f32 0.0, %v3711
  %v3713 = vpop.f32.mrb[0].mxu0
  %3714 = vdwg.mxu0
  %v3715 = vadd.f32 %v3249, %v3653
  %v3716 = vadd.f32 %v3250, %v3656
  %v3717 = vadd.f32 %v3251, %v3661
  %v3718 = vadd.f32 %v3252, %v3664
  %v3719 = vadd.f32 %v3253, %v3669
  %v3720 = vadd.f32 %v3254, %v3672
  %v3721 = vadd.f32 %v3255, %v3677
  %v3722 = vadd.f32 %v3256, %v3680
  %v3723 = vadd.f32 %v3257, %v3685
  %v3724 = vadd.f32 %v3258, %v3688
  %v3725 = vadd.f32 %v3259, %v3693
  %v3726 = vadd.f32 %v3260, %v3696
  %v3727 = vadd.f32 %v3261, %v3701
  %v3728 = vadd.f32 %v3262, %v3704
  %v3729 = vadd.f32 %v3263, %v3709
  %v3730 = vadd.f32 %v3264, %v3712
  %v3731 = vld [vmem:[%s2] sm:$0x1]
  %v3732 = vld [vmem:[%s3] sm:$0x1]
  %v3733 = vadd.f32 %v3715, %v3716
  %v3734 = vadd.f32 %v3733, %v3717
  %v3735 = vadd.f32 %v3734, %v3718
  %v3736 = vadd.f32 %v3735, %v3719
  %v3737 = vadd.f32 %v3736, %v3720
  %v3738 = vadd.f32 %v3737, %v3721
  %v3739 = vadd.f32 %v3738, %v3722
  %v3740 = vadd.f32 %v3739, %v3723
  %v3741 = vadd.f32 %v3740, %v3724
  %v3742 = vadd.f32 %v3741, %v3725
  %v3743 = vadd.f32 %v3742, %v3726
  %v3744 = vadd.f32 %v3743, %v3727
  %v3745 = vadd.f32 %v3744, %v3728
  %v3746 = vadd.f32 %v3745, %v3729
  %v3747 = vadd.f32 %v3746, %v3730
  %v3748 = vrot.slane %v3747, 4
  %v3749 = vadd.f32 %v3747, %v3748
  %v3750 = vrot.slane %v3749, 2
  %v3751 = vadd.f32 %v3749, %v3750
  %v3752 = vrot.slane %v3751, 1
  %v3753 = vadd.f32 %v3751, %v3752
  %v3754 = vmul.f32 %v3753, 0.0078125
  %v3755 = vsub.f32 %v3715, %v3754
  %v3756 = vsub.f32 %v3716, %v3754
  %v3757 = vsub.f32 %v3717, %v3754
  %v3758 = vsub.f32 %v3718, %v3754
  %v3759 = vsub.f32 %v3719, %v3754
  %v3760 = vsub.f32 %v3720, %v3754
  %v3761 = vsub.f32 %v3721, %v3754
  %v3762 = vsub.f32 %v3722, %v3754
  %v3763 = vsub.f32 %v3723, %v3754
  %v3764 = vsub.f32 %v3724, %v3754
  %v3765 = vsub.f32 %v3725, %v3754
  %v3766 = vsub.f32 %v3726, %v3754
  %v3767 = vsub.f32 %v3727, %v3754
  %v3768 = vsub.f32 %v3728, %v3754
  %v3769 = vsub.f32 %v3729, %v3754
  %v3770 = vsub.f32 %v3730, %v3754
  %v3771 = vmul.f32 %v3755, %v3755
  %v3772 = vmul.f32 %v3756, %v3756
  %v3773 = vmul.f32 %v3757, %v3757
  %v3774 = vmul.f32 %v3758, %v3758
  %v3775 = vmul.f32 %v3759, %v3759
  %v3776 = vmul.f32 %v3760, %v3760
  %v3777 = vmul.f32 %v3761, %v3761
  %v3778 = vmul.f32 %v3762, %v3762
  %v3779 = vmul.f32 %v3763, %v3763
  %v3780 = vmul.f32 %v3764, %v3764
  %v3781 = vmul.f32 %v3765, %v3765
  %v3782 = vmul.f32 %v3766, %v3766
  %v3783 = vmul.f32 %v3767, %v3767
  %v3784 = vmul.f32 %v3768, %v3768
  %v3785 = vmul.f32 %v3769, %v3769
  %v3786 = vmul.f32 %v3770, %v3770
  %v3787 = vadd.f32 %v3771, %v3772
  %v3788 = vadd.f32 %v3787, %v3773
  %v3789 = vadd.f32 %v3788, %v3774
  %v3790 = vadd.f32 %v3789, %v3775
  %v3791 = vadd.f32 %v3790, %v3776
  %v3792 = vadd.f32 %v3791, %v3777
  %v3793 = vadd.f32 %v3792, %v3778
  %v3794 = vadd.f32 %v3793, %v3779
  %v3795 = vadd.f32 %v3794, %v3780
  %v3796 = vadd.f32 %v3795, %v3781
  %v3797 = vadd.f32 %v3796, %v3782
  %v3798 = vadd.f32 %v3797, %v3783
  %v3799 = vadd.f32 %v3798, %v3784
  %v3800 = vadd.f32 %v3799, %v3785
  %v3801 = vadd.f32 %v3800, %v3786
  %v3802 = vrot.slane %v3801, 4
  %v3803 = vadd.f32 %v3801, %v3802
  %v3804 = vrot.slane %v3803, 2
  %v3805 = vadd.f32 %v3803, %v3804
  %v3806 = vrot.slane %v3805, 1
  %v3807 = vadd.f32 %v3805, %v3806
  %v3808 = vmul.f32 %v3807, 0.0078125
  %v3809 = vadd.f32 %v3808, 1e-05
  %v3810 = vrsqrt.pop %v3809
  %v3811 = vmul.f32 %v3810, %v3731
  %v3812 = vlaneseq
  %v3813 = vshrl.u32 %v3812, 7
  %v3814 = vsub.s32 0, %v3813
  %v3815 = vrot.slane %v3811, %v3814
  %v3816 = vmul.f32 %v3755, %v3815
  %v3817 = vmul.f32 %v3756, %v3815
  %v3818 = vmul.f32 %v3757, %v3815
  %v3819 = vmul.f32 %v3758, %v3815
  %v3820 = vmul.f32 %v3759, %v3815
  %v3821 = vmul.f32 %v3760, %v3815
  %v3822 = vmul.f32 %v3761, %v3815
  %v3823 = vmul.f32 %v3762, %v3815
  %v3824 = vmul.f32 %v3763, %v3815
  %v3825 = vmul.f32 %v3764, %v3815
  %v3826 = vmul.f32 %v3765, %v3815
  %v3827 = vmul.f32 %v3766, %v3815
  %v3828 = vmul.f32 %v3767, %v3815
  %v3829 = vmul.f32 %v3768, %v3815
  %v3830 = vmul.f32 %v3769, %v3815
  %v3831 = vmul.f32 %v3770, %v3815
  %v3833 = vlaneseq
  %v3834 = vshrl.u32 %v3833, 7
  %v3835 = vsub.s32 0, %v3834
  %v3836 = vrot.slane %v3732, %v3835
  %v3838 = vadd.f32 %v3816, %v3836
  %v3839 = vadd.f32 %v3817, %v3836
  %v3840 = vadd.f32 %v3818, %v3836
  %v3841 = vadd.f32 %v3819, %v3836
  %v3842 = vadd.f32 %v3820, %v3836
  %v3843 = vadd.f32 %v3821, %v3836
  %v3844 = vadd.f32 %v3822, %v3836
  %v3845 = vadd.f32 %v3823, %v3836
  %v3846 = vadd.f32 %v3824, %v3836
  %v3847 = vadd.f32 %v3825, %v3836
  %v3848 = vadd.f32 %v3826, %v3836
  %v3849 = vadd.f32 %v3827, %v3836
  %v3850 = vadd.f32 %v3828, %v3836
  %v3851 = vadd.f32 %v3829, %v3836
  %v3852 = vadd.f32 %v3830, %v3836
  %v3853 = vadd.f32 %v3831, %v3836
  %v3854 = vmax.f32 %v3838, 0.0
  %v3855 = vmax.f32 %v3839, 0.0
  %v3856 = vmax.f32 %v3840, 0.0
  %v3857 = vmax.f32 %v3841, 0.0
  %v3858 = vmax.f32 %v3842, 0.0
  %v3859 = vmax.f32 %v3843, 0.0
  %v3860 = vmax.f32 %v3844, 0.0
  %v3861 = vmax.f32 %v3845, 0.0
  %v3862 = vmax.f32 %v3846, 0.0
  %v3863 = vmax.f32 %v3847, 0.0
  %v3864 = vmax.f32 %v3848, 0.0
  %v3865 = vmax.f32 %v3849, 0.0
  %v3866 = vmax.f32 %v3850, 0.0
  %v3867 = vmax.f32 %v3851, 0.0
  %v3868 = vmax.f32 %v3852, 0.0
  %v3869 = vmax.f32 %v3853, 0.0
  %3870 = vst [vmem:[#allocation3] sm:$0xf] 0
  %3871 = vst [vmem:[#allocation3 + $0x4] sm:$0xf] 0
  %v3872 = vld [vmem:[#allocation3 + $0x8] sm:$0x1]
  %v3873 = vsel %vm215, 0, %v3872
  %3874 = vst [vmem:[#allocation3 + $0x8] sm:$0x1] %v3873
  %3875 = vst [vmem:[#allocation3 + $0x78] sm:$0xf] 0
  %3876 = vst [vmem:[#allocation3 + $0x7c] sm:$0xf] 0
  %v3877 = vld [vmem:[#allocation3 + $0x80] sm:$0x1]
  %v3878 = vsel %vm215, 0, %v3877
  %3879 = vst [vmem:[#allocation3 + $0x80] sm:$0x1] %v3878
  %s3880 = scalar_lea.vmem [#allocation3], 108
  %3881 = vst [vmem:[%s3880] sm:$0xf] 0
  %3882 = vst [vmem:[%s3880 + $0x4] sm:$0xf] 0
  %v3883 = vld [vmem:[%s3880 + $0x8] sm:$0x1]
  %v3884 = vsel %vm215, 0, %v3883
  %3885 = vst [vmem:[%s3880 + $0x8] sm:$0x1] %v3884
  %3886 = vst [vmem:[%s3880 + $0x78] sm:$0xf] 0
  %3887 = vst [vmem:[%s3880 + $0x7c] sm:$0xf] 0
  %v3888 = vld [vmem:[%s3880 + $0x80] sm:$0x1]
  %v3889 = vsel %vm215, 0, %v3888
  %3890 = vst [vmem:[%s3880 + $0x80] sm:$0x1] %v3889
  %s3891 = scalar_lea.vmem [#allocation3], 12
  %3892 = vst [vmem:[%s3891] sm:$0xf] 0
  %3893 = vst [vmem:[%s3891 + $0xc] sm:$0xf] 0
  %3894 = vst [vmem:[%s3891 + $0x18] sm:$0xf] 0
  %3895 = vst [vmem:[%s3891 + $0x24] sm:$0xf] 0
  %3896 = vst [vmem:[%s3891 + $0x30] sm:$0xf] 0
  %3897 = vst [vmem:[%s3891 + $0x3c] sm:$0xf] 0
  %3898 = vst [vmem:[%s3891 + $0x48] sm:$0xf] 0
  %3899 = vst [vmem:[%s3891 + $0x54] sm:$0xf] 0
  %3900 = vst [vmem:[%s3891 + $0x78] sm:$0xf] 0
  %3901 = vst [vmem:[%s3891 + $0x84] sm:$0xf] 0
  %3902 = vst [vmem:[%s3891 + $0x90] sm:$0xf] 0
  %3903 = vst [vmem:[%s3891 + $0x9c] sm:$0xf] 0
  %3904 = vst [vmem:[%s3891 + $0xa8] sm:$0xf] 0
  %3905 = vst [vmem:[%s3891 + $0xb4] sm:$0xf] 0
  %3906 = vst [vmem:[%s3891 + $0xc0] sm:$0xf] 0
  %3907 = vst [vmem:[%s3891 + $0xcc] sm:$0xf] 0
  %v3908 = vld [vmem:[%s3891 + $0x8] sm:$0x1]
  %v3909 = vsel %vm215, 0, %v3908
  %3910 = vst [vmem:[%s3891 + $0x8] sm:$0x1] %v3909
  %v3911 = vld [vmem:[%s3891 + $0x14] sm:$0x1]
  %v3912 = vsel %vm215, 0, %v3911
  %3913 = vst [vmem:[%s3891 + $0x14] sm:$0x1] %v3912
  %v3914 = vld [vmem:[%s3891 + $0x20] sm:$0x1]
  %v3915 = vsel %vm215, 0, %v3914
  %3916 = vst [vmem:[%s3891 + $0x20] sm:$0x1] %v3915
  %v3917 = vld [vmem:[%s3891 + $0x2c] sm:$0x1]
  %v3918 = vsel %vm215, 0, %v3917
  %3919 = vst [vmem:[%s3891 + $0x2c] sm:$0x1] %v3918
  %v3920 = vld [vmem:[%s3891 + $0x38] sm:$0x1]
  %v3921 = vsel %vm215, 0, %v3920
  %3922 = vst [vmem:[%s3891 + $0x38] sm:$0x1] %v3921
  %v3923 = vld [vmem:[%s3891 + $0x44] sm:$0x1]
  %v3924 = vsel %vm215, 0, %v3923
  %3925 = vst [vmem:[%s3891 + $0x44] sm:$0x1] %v3924
  %v3926 = vld [vmem:[%s3891 + $0x50] sm:$0x1]
  %v3927 = vsel %vm215, 0, %v3926
  %3928 = vst [vmem:[%s3891 + $0x50] sm:$0x1] %v3927
  %v3929 = vld [vmem:[%s3891 + $0x5c] sm:$0x1]
  %v3930 = vsel %vm215, 0, %v3929
  %3931 = vst [vmem:[%s3891 + $0x5c] sm:$0x1] %v3930
  %v3932 = vld [vmem:[%s3891 + $0x80] sm:$0x1]
  %v3933 = vsel %vm215, 0, %v3932
  %3934 = vst [vmem:[%s3891 + $0x80] sm:$0x1] %v3933
  %v3935 = vld [vmem:[%s3891 + $0x8c] sm:$0x1]
  %v3936 = vsel %vm215, 0, %v3935
  %3937 = vst [vmem:[%s3891 + $0x8c] sm:$0x1] %v3936
  %v3938 = vld [vmem:[%s3891 + $0x98] sm:$0x1]
  %v3939 = vsel %vm215, 0, %v3938
  %3940 = vst [vmem:[%s3891 + $0x98] sm:$0x1] %v3939
  %v3941 = vld [vmem:[%s3891 + $0xa4] sm:$0x1]
  %v3942 = vsel %vm215, 0, %v3941
  %3943 = vst [vmem:[%s3891 + $0xa4] sm:$0x1] %v3942
  %v3944 = vld [vmem:[%s3891 + $0xb0] sm:$0x1]
  %v3945 = vsel %vm215, 0, %v3944
  %3946 = vst [vmem:[%s3891 + $0xb0] sm:$0x1] %v3945
  %v3947 = vld [vmem:[%s3891 + $0xbc] sm:$0x1]
  %v3948 = vsel %vm215, 0, %v3947
  %3949 = vst [vmem:[%s3891 + $0xbc] sm:$0x1] %v3948
  %v3950 = vld [vmem:[%s3891 + $0xc8] sm:$0x1]
  %v3951 = vsel %vm215, 0, %v3950
  %3952 = vst [vmem:[%s3891 + $0xc8] sm:$0x1] %v3951
  %v3953 = vld [vmem:[%s3891 + $0xd4] sm:$0x1]
  %v3954 = vsel %vm215, 0, %v3953
  %3955 = vst [vmem:[%s3891 + $0xd4] sm:$0x1] %v3954
  %v3956 = vpack.c.bf16 %v3854, %v3854
  %v3957 = vpack.c.bf16 %v3855, %v3855
  %v3958 = vpack.c.bf16 %v3856, %v3856
  %v3959 = vpack.c.bf16 %v3857, %v3857
  %v3960 = vpack.c.bf16 %v3858, %v3858
  %v3961 = vpack.c.bf16 %v3859, %v3859
  %v3962 = vpack.c.bf16 %v3860, %v3860
  %v3963 = vpack.c.bf16 %v3861, %v3861
  %v3964 = vpack.c.bf16 %v3862, %v3862
  %v3965 = vpack.c.bf16 %v3863, %v3863
  %v3966 = vpack.c.bf16 %v3864, %v3864
  %v3967 = vpack.c.bf16 %v3865, %v3865
  %v3968 = vpack.c.bf16 %v3866, %v3866
  %v3969 = vpack.c.bf16 %v3867, %v3867
  %v3970 = vpack.c.bf16 %v3868, %v3868
  %v3971 = vpack.c.bf16 %v3869, %v3869
  %3972 = vst [vmem:[%s3891 + $0x4] sm:$0xf] %v3956
  %3973 = vst [vmem:[%s3891 + $0x10] sm:$0xf] %v3957
  %3974 = vst [vmem:[%s3891 + $0x1c] sm:$0xf] %v3958
  %3975 = vst [vmem:[%s3891 + $0x28] sm:$0xf] %v3959
  %3976 = vst [vmem:[%s3891 + $0x34] sm:$0xf] %v3960
  %3977 = vst [vmem:[%s3891 + $0x40] sm:$0xf] %v3961
  %3978 = vst [vmem:[%s3891 + $0x4c] sm:$0xf] %v3962
  %3979 = vst [vmem:[%s3891 + $0x58] sm:$0xf] %v3963
  %3980 = vst [vmem:[%s3891 + $0x7c] sm:$0xf] %v3964
  %3981 = vst [vmem:[%s3891 + $0x88] sm:$0xf] %v3965
  %3982 = vst [vmem:[%s3891 + $0x94] sm:$0xf] %v3966
  %3983 = vst [vmem:[%s3891 + $0xa0] sm:$0xf] %v3967
  %3984 = vst [vmem:[%s3891 + $0xac] sm:$0xf] %v3968
  %3985 = vst [vmem:[%s3891 + $0xb8] sm:$0xf] %v3969
  %3986 = vst [vmem:[%s3891 + $0xc4] sm:$0xf] %v3970
  %3987 = vst [vmem:[%s3891 + $0xd0] sm:$0xf] %v3971
  %v3988 = vld [vmem:[#allocation3] sm:$0x8]
  %v3989 = vld [vmem:[#allocation3 + $0x4] sm:$0xf]
  %v3990 = vld [vmem:[#allocation3 + $0xc] sm:$0x8]
  %v3991 = vld [vmem:[#allocation3 + $0x10] sm:$0xf]
  %v3992 = vld [vmem:[#allocation3 + $0x18] sm:$0x8]
  %v3993 = vld [vmem:[#allocation3 + $0x1c] sm:$0xf]
  %v3994 = vld [vmem:[#allocation3 + $0x24] sm:$0x8]
  %v3995 = vld [vmem:[#allocation3 + $0x28] sm:$0xf]
  %v3996 = vld [vmem:[#allocation3 + $0x30] sm:$0x8]
  %v3997 = vld [vmem:[#allocation3 + $0x34] sm:$0xf]
  %v3998 = vld [vmem:[#allocation3 + $0x3c] sm:$0x8]
  %v3999 = vld [vmem:[#allocation3 + $0x40] sm:$0xf]
  %v4000 = vld [vmem:[#allocation3 + $0x48] sm:$0x8]
  %v4001 = vld [vmem:[#allocation3 + $0x4c] sm:$0xf]
  %v4002 = vld [vmem:[#allocation3 + $0x54] sm:$0x8]
  %v4003 = vld [vmem:[#allocation3 + $0x58] sm:$0xf]
  %v4004 = vld [vmem:[#allocation3 + $0x78] sm:$0x8]
  %v4005 = vld [vmem:[#allocation3 + $0x7c] sm:$0xf]
  %v4006 = vld [vmem:[#allocation3 + $0x84] sm:$0x8]
  %v4007 = vld [vmem:[#allocation3 + $0x88] sm:$0xf]
  %v4008 = vld [vmem:[#allocation3 + $0x90] sm:$0x8]
  %v4009 = vld [vmem:[#allocation3 + $0x94] sm:$0xf]
  %v4010 = vld [vmem:[#allocation3 + $0x9c] sm:$0x8]
  %v4011 = vld [vmem:[#allocation3 + $0xa0] sm:$0xf]
  %v4012 = vld [vmem:[#allocation3 + $0xa8] sm:$0x8]
  %v4013 = vld [vmem:[#allocation3 + $0xac] sm:$0xf]
  %v4014 = vld [vmem:[#allocation3 + $0xb4] sm:$0x8]
  %v4015 = vld [vmem:[#allocation3 + $0xb8] sm:$0xf]
  %v4016 = vld [vmem:[#allocation3 + $0xc0] sm:$0x8]
  %v4017 = vld [vmem:[#allocation3 + $0xc4] sm:$0xf]
  %v4018 = vld [vmem:[#allocation3 + $0xcc] sm:$0x8]
  %v4019 = vld [vmem:[#allocation3 + $0xd0] sm:$0xf]
  %v4021 = vshrl.u32 %v3988, 16
  %v4023 = vrot.slane %v4021, 7
  %v4024 = vrot.slane %v4023, 4
  %v4026 = vshrl.u32 %v3989, 16
  %v4028 = vrot.slane %v4026, 7
  %v4029 = vshll.u32 %v3989, 16
  %v4031 = vor.u32 %v4028, %v4029
  %v4032 = vsel %vm365, %v4024, %v4031
  %v4034 = vshrl.u32 %v3990, 16
  %v4036 = vrot.slane %v4034, 7
  %v4037 = vrot.slane %v4036, 4
  %v4039 = vshrl.u32 %v3991, 16
  %v4041 = vrot.slane %v4039, 7
  %v4042 = vshll.u32 %v3991, 16
  %v4044 = vor.u32 %v4041, %v4042
  %v4045 = vsel %vm365, %v4037, %v4044
  %v4047 = vshrl.u32 %v3992, 16
  %v4049 = vrot.slane %v4047, 7
  %v4050 = vrot.slane %v4049, 4
  %v4052 = vshrl.u32 %v3993, 16
  %v4054 = vrot.slane %v4052, 7
  %v4055 = vshll.u32 %v3993, 16
  %v4057 = vor.u32 %v4054, %v4055
  %v4058 = vsel %vm365, %v4050, %v4057
  %v4060 = vshrl.u32 %v3994, 16
  %v4062 = vrot.slane %v4060, 7
  %v4063 = vrot.slane %v4062, 4
  %v4065 = vshrl.u32 %v3995, 16
  %v4067 = vrot.slane %v4065, 7
  %v4068 = vshll.u32 %v3995, 16
  %v4070 = vor.u32 %v4067, %v4068
  %v4071 = vsel %vm365, %v4063, %v4070
  %v4073 = vshrl.u32 %v3996, 16
  %v4075 = vrot.slane %v4073, 7
  %v4076 = vrot.slane %v4075, 4
  %v4078 = vshrl.u32 %v3997, 16
  %v4080 = vrot.slane %v4078, 7
  %v4081 = vshll.u32 %v3997, 16
  %v4083 = vor.u32 %v4080, %v4081
  %v4084 = vsel %vm365, %v4076, %v4083
  %v4086 = vshrl.u32 %v3998, 16
  %v4088 = vrot.slane %v4086, 7
  %v4089 = vrot.slane %v4088, 4
  %v4091 = vshrl.u32 %v3999, 16
  %v4093 = vrot.slane %v4091, 7
  %v4094 = vshll.u32 %v3999, 16
  %v4096 = vor.u32 %v4093, %v4094
  %v4097 = vsel %vm365, %v4089, %v4096
  %v4099 = vshrl.u32 %v4000, 16
  %v4101 = vrot.slane %v4099, 7
  %v4102 = vrot.slane %v4101, 4
  %v4104 = vshrl.u32 %v4001, 16
  %v4106 = vrot.slane %v4104, 7
  %v4107 = vshll.u32 %v4001, 16
  %v4109 = vor.u32 %v4106, %v4107
  %v4110 = vsel %vm365, %v4102, %v4109
  %v4112 = vshrl.u32 %v4002, 16
  %v4114 = vrot.slane %v4112, 7
  %v4115 = vrot.slane %v4114, 4
  %v4117 = vshrl.u32 %v4003, 16
  %v4119 = vrot.slane %v4117, 7
  %v4120 = vshll.u32 %v4003, 16
  %v4122 = vor.u32 %v4119, %v4120
  %v4123 = vsel %vm365, %v4115, %v4122
  %v4125 = vshrl.u32 %v4004, 16
  %v4127 = vrot.slane %v4125, 7
  %v4128 = vrot.slane %v4127, 4
  %v4130 = vshrl.u32 %v4005, 16
  %v4132 = vrot.slane %v4130, 7
  %v4133 = vshll.u32 %v4005, 16
  %v4135 = vor.u32 %v4132, %v4133
  %v4136 = vsel %vm365, %v4128, %v4135
  %v4138 = vshrl.u32 %v4006, 16
  %v4140 = vrot.slane %v4138, 7
  %v4141 = vrot.slane %v4140, 4
  %v4143 = vshrl.u32 %v4007, 16
  %v4145 = vrot.slane %v4143, 7
  %v4146 = vshll.u32 %v4007, 16
  %v4148 = vor.u32 %v4145, %v4146
  %v4149 = vsel %vm365, %v4141, %v4148
  %v4151 = vshrl.u32 %v4008, 16
  %v4153 = vrot.slane %v4151, 7
  %v4154 = vrot.slane %v4153, 4
  %v4156 = vshrl.u32 %v4009, 16
  %v4158 = vrot.slane %v4156, 7
  %v4159 = vshll.u32 %v4009, 16
  %v4161 = vor.u32 %v4158, %v4159
  %v4162 = vsel %vm365, %v4154, %v4161
  %v4164 = vshrl.u32 %v4010, 16
  %v4166 = vrot.slane %v4164, 7
  %v4167 = vrot.slane %v4166, 4
  %v4169 = vshrl.u32 %v4011, 16
  %v4171 = vrot.slane %v4169, 7
  %v4172 = vshll.u32 %v4011, 16
  %v4174 = vor.u32 %v4171, %v4172
  %v4175 = vsel %vm365, %v4167, %v4174
  %v4177 = vshrl.u32 %v4012, 16
  %v4179 = vrot.slane %v4177, 7
  %v4180 = vrot.slane %v4179, 4
  %v4182 = vshrl.u32 %v4013, 16
  %v4184 = vrot.slane %v4182, 7
  %v4185 = vshll.u32 %v4013, 16
  %v4187 = vor.u32 %v4184, %v4185
  %v4188 = vsel %vm365, %v4180, %v4187
  %v4190 = vshrl.u32 %v4014, 16
  %v4192 = vrot.slane %v4190, 7
  %v4193 = vrot.slane %v4192, 4
  %v4195 = vshrl.u32 %v4015, 16
  %v4197 = vrot.slane %v4195, 7
  %v4198 = vshll.u32 %v4015, 16
  %v4200 = vor.u32 %v4197, %v4198
  %v4201 = vsel %vm365, %v4193, %v4200
  %v4203 = vshrl.u32 %v4016, 16
  %v4205 = vrot.slane %v4203, 7
  %v4206 = vrot.slane %v4205, 4
  %v4208 = vshrl.u32 %v4017, 16
  %v4210 = vrot.slane %v4208, 7
  %v4211 = vshll.u32 %v4017, 16
  %v4213 = vor.u32 %v4210, %v4211
  %v4214 = vsel %vm365, %v4206, %v4213
  %v4216 = vshrl.u32 %v4018, 16
  %v4218 = vrot.slane %v4216, 7
  %v4219 = vrot.slane %v4218, 4
  %v4221 = vshrl.u32 %v4019, 16
  %v4223 = vrot.slane %v4221, 7
  %v4224 = vshll.u32 %v4019, 16
  %v4226 = vor.u32 %v4223, %v4224
  %v4227 = vsel %vm365, %v4219, %v4226
  %v4228 = vld [vmem:[%s4] sm:$0xf]
  %v4229 = vld [vmem:[%s4 + $0x4] sm:$0xf]
  %v4230 = vld [vmem:[%s4 + $0x8] sm:$0xf]
  %v4231 = vld [vmem:[%s4 + $0xc] sm:$0xf]
  %v4232 = vld [vmem:[%s4 + $0x10] sm:$0xf]
  %v4233 = vld [vmem:[%s4 + $0x14] sm:$0xf]
  %v4234 = vld [vmem:[%s4 + $0x18] sm:$0xf]
  %v4235 = vld [vmem:[%s4 + $0x1c] sm:$0xf]
  %v4236 = vld [vmem:[%s4 + $0x20] sm:$0xf]
  %v4237 = vld [vmem:[%s4 + $0x24] sm:$0xf]
  %v4238 = vld [vmem:[%s4 + $0x28] sm:$0xf]
  %v4239 = vld [vmem:[%s4 + $0x2c] sm:$0xf]
  %v4240 = vld [vmem:[%s4 + $0x30] sm:$0xf]
  %v4241 = vld [vmem:[%s4 + $0x34] sm:$0xf]
  %v4242 = vld [vmem:[%s4 + $0x38] sm:$0xf]
  %v4243 = vld [vmem:[%s4 + $0x3c] sm:$0xf]
  %s4244 = scalar_lea.vmem %s4, 64
  %v4245 = vld [vmem:[%s4244] sm:$0xf]
  %v4246 = vld [vmem:[%s4244 + $0x4] sm:$0xf]
  %v4247 = vld [vmem:[%s4244 + $0x8] sm:$0xf]
  %v4248 = vld [vmem:[%s4244 + $0xc] sm:$0xf]
  %v4249 = vld [vmem:[%s4244 + $0x10] sm:$0xf]
  %v4250 = vld [vmem:[%s4244 + $0x14] sm:$0xf]
  %v4251 = vld [vmem:[%s4244 + $0x18] sm:$0xf]
  %v4252 = vld [vmem:[%s4244 + $0x1c] sm:$0xf]
  %v4253 = vld [vmem:[%s4244 + $0x20] sm:$0xf]
  %v4254 = vld [vmem:[%s4244 + $0x24] sm:$0xf]
  %v4255 = vld [vmem:[%s4244 + $0x28] sm:$0xf]
  %v4256 = vld [vmem:[%s4244 + $0x2c] sm:$0xf]
  %v4257 = vld [vmem:[%s4244 + $0x30] sm:$0xf]
  %v4258 = vld [vmem:[%s4244 + $0x34] sm:$0xf]
  %v4259 = vld [vmem:[%s4244 + $0x38] sm:$0xf]
  %v4260 = vld [vmem:[%s4244 + $0x3c] sm:$0xf]
  %v4277 = vunpack.c.l.b16 %v3989
  %v4278 = vunpack.c.l.b16 %v3991
  %v4279 = vunpack.c.l.b16 %v3993
  %v4280 = vunpack.c.l.b16 %v3995
  %v4281 = vunpack.c.l.b16 %v3997
  %v4282 = vunpack.c.l.b16 %v3999
  %v4283 = vunpack.c.l.b16 %v4001
  %v4284 = vunpack.c.l.b16 %v4003
  %v4285 = vunpack.c.l.b16 %v4005
  %v4286 = vunpack.c.l.b16 %v4007
  %v4287 = vunpack.c.l.b16 %v4009
  %v4288 = vunpack.c.l.b16 %v4011
  %v4289 = vunpack.c.l.b16 %v4013
  %v4290 = vunpack.c.l.b16 %v4015
  %v4291 = vunpack.c.l.b16 %v4017
  %v4292 = vunpack.c.l.b16 %v4019
  %v4293 = vpack.c.b16 %v4278, %v4277
  %v4294 = vpack.c.b16 %v4280, %v4279
  %v4295 = vpack.c.b16 %v4282, %v4281
  %v4296 = vpack.c.b16 %v4284, %v4283
  %v4297 = vpack.c.b16 %v4286, %v4285
  %v4298 = vpack.c.b16 %v4288, %v4287
  %v4299 = vpack.c.b16 %v4290, %v4289
  %v4300 = vpack.c.b16 %v4292, %v4291
  %v4325 = vunpack.c.l.b16 %v4245
  %v4326 = vunpack.c.l.b16 %v4246
  %v4327 = vunpack.c.l.b16 %v4247
  %v4328 = vunpack.c.l.b16 %v4248
  %v4329 = vunpack.c.l.b16 %v4249
  %v4330 = vunpack.c.l.b16 %v4250
  %v4331 = vunpack.c.l.b16 %v4251
  %v4332 = vunpack.c.l.b16 %v4252
  %v4333 = vunpack.c.l.b16 %v4253
  %v4334 = vunpack.c.l.b16 %v4254
  %v4335 = vunpack.c.l.b16 %v4255
  %v4336 = vunpack.c.l.b16 %v4256
  %v4337 = vunpack.c.l.b16 %v4257
  %v4338 = vunpack.c.l.b16 %v4258
  %v4339 = vunpack.c.l.b16 %v4259
  %v4340 = vunpack.c.l.b16 %v4260
  %v4341 = vpack.c.b16 %v4326, %v4325
  %v4342 = vpack.c.b16 %v4328, %v4327
  %v4343 = vpack.c.b16 %v4330, %v4329
  %v4344 = vpack.c.b16 %v4332, %v4331
  %v4345 = vpack.c.b16 %v4334, %v4333
  %v4346 = vpack.c.b16 %v4336, %v4335
  %v4347 = vpack.c.b16 %v4338, %v4337
  %v4348 = vpack.c.b16 %v4340, %v4339
  %4357 = vmatprep.subr.bf16.mxu0 0
  %4358 = vmatpush1.bf16.msra.mxu0 %v4341
  %4359 = vmatprep.subr.bf16.mxu0 0
  %4360 = vmatpush1.bf16.msra.mxu0 %v4342
  %4361 = vmatprep.subr.bf16.mxu0 0
  %4362 = vmatpush1.bf16.msra.mxu0 %v4343
  %4363 = vmatprep.subr.bf16.mxu0 0
  %4364 = vmatpush1.bf16.msra.mxu0 %v4344
  %4365 = vmatprep.subr.bf16.mxu0 0
  %4366 = vmatpush1.bf16.msra.mxu0 %v4345
  %4367 = vmatprep.subr.bf16.mxu0 0
  %4368 = vmatpush1.bf16.msra.mxu0 %v4346
  %4369 = vmatprep.subr.bf16.mxu0 0
  %4370 = vmatpush1.bf16.msra.mxu0 %v4347
  %4371 = vmatprep.subr.bf16.mxu0 0
  %4372 = vmatpush1.bf16.msra.mxu0 %v4348
  %4373 = vmatprep.subr.bf16.mxu0 0
  %4374 = vmatpush1.bf16.msra.mxu0 0
  %4375 = vmatprep.subr.bf16.mxu0 0
  %4376 = vmatpush1.bf16.msra.mxu0 0
  %4377 = vmatprep.subr.bf16.mxu0 0
  %4378 = vmatpush1.bf16.msra.mxu0 0
  %4379 = vmatprep.subr.bf16.mxu0 0
  %4380 = vmatpush1.bf16.msra.mxu0 0
  %4381 = vmatprep.subr.bf16.mxu0 0
  %4382 = vmatpush1.bf16.msra.mxu0 0
  %4383 = vmatprep.subr.bf16.mxu0 0
  %4384 = vmatpush1.bf16.msra.mxu0 0
  %4385 = vmatprep.subr.bf16.mxu0 0
  %4386 = vmatpush1.bf16.msra.mxu0 0
  %4387 = vmatprep.subr.bf16.mxu0 0
  %4388 = vmatpush1.bf16.msra.mxu0 0
  %4389 = vmatprep.mubr.bf16.mxu0 0
  %4390 = vmatmul.mubr.bf16.gmra.mrb[0].mxu0 %v4293
  %v4391 = vpop.f32.mrb[0].mxu0
  %v4392 = vadd.f32 0.0, %v4391
  %v4393 = vpop.f32.mrb[0].mxu0
  %v4394 = vpop.f32.mrb[0].mxu0
  %v4395 = vadd.f32 0.0, %v4394
  %v4396 = vpop.f32.mrb[0].mxu0
  %4397 = vmatprep.mubr.bf16.mxu0 0
  %4398 = vmatmul.mubr.bf16.gmra.mrb[0].mxu0 %v4294
  %v4399 = vpop.f32.mrb[0].mxu0
  %v4400 = vadd.f32 0.0, %v4399
  %v4401 = vpop.f32.mrb[0].mxu0
  %v4402 = vpop.f32.mrb[0].mxu0
  %v4403 = vadd.f32 0.0, %v4402
  %v4404 = vpop.f32.mrb[0].mxu0
  %4405 = vmatprep.mubr.bf16.mxu0 0
  %4406 = vmatmul.mubr.bf16.gmra.mrb[0].mxu0 %v4295
  %v4407 = vpop.f32.mrb[0].mxu0
  %v4408 = vadd.f32 0.0, %v4407
  %v4409 = vpop.f32.mrb[0].mxu0
  %v4410 = vpop.f32.mrb[0].mxu0
  %v4411 = vadd.f32 0.0, %v4410
  %v4412 = vpop.f32.mrb[0].mxu0
  %4413 = vmatprep.mubr.bf16.mxu0 0
  %4414 = vmatmul.mubr.bf16.gmra.mrb[0].mxu0 %v4296
  %v4415 = vpop.f32.mrb[0].mxu0
  %v4416 = vadd.f32 0.0, %v4415
  %v4417 = vpop.f32.mrb[0].mxu0
  %v4418 = vpop.f32.mrb[0].mxu0
  %v4419 = vadd.f32 0.0, %v4418
  %v4420 = vpop.f32.mrb[0].mxu0
  %4421 = vmatprep.mubr.bf16.mxu0 0
  %4422 = vmatmul.mubr.bf16.gmra.mrb[0].mxu0 %v4297
  %v4423 = vpop.f32.mrb[0].mxu0
  %v4424 = vadd.f32 0.0, %v4423
  %v4425 = vpop.f32.mrb[0].mxu0
  %v4426 = vpop.f32.mrb[0].mxu0
  %v4427 = vadd.f32 0.0, %v4426
  %v4428 = vpop.f32.mrb[0].mxu0
  %4429 = vmatprep.mubr.bf16.mxu0 0
  %4430 = vmatmul.mubr.bf16.gmra.mrb[0].mxu0 %v4298
  %v4431 = vpop.f32.mrb[0].mxu0
  %v4432 = vadd.f32 0.0, %v4431
  %v4433 = vpop.f32.mrb[0].mxu0
  %v4434 = vpop.f32.mrb[0].mxu0
  %v4435 = vadd.f32 0.0, %v4434
  %v4436 = vpop.f32.mrb[0].mxu0
  %4437 = vmatprep.mubr.bf16.mxu0 0
  %4438 = vmatmul.mubr.bf16.gmra.mrb[0].mxu0 %v4299
  %v4439 = vpop.f32.mrb[0].mxu0
  %v4440 = vadd.f32 0.0, %v4439
  %v4441 = vpop.f32.mrb[0].mxu0
  %v4442 = vpop.f32.mrb[0].mxu0
  %v4443 = vadd.f32 0.0, %v4442
  %v4444 = vpop.f32.mrb[0].mxu0
  %4445 = vmatprep.mubr.bf16.mxu0 0
  %4446 = vmatmul.mubr.bf16.gmra.mrb[0].mxu0 %v4300
  %v4447 = vpop.f32.mrb[0].mxu0
  %v4448 = vadd.f32 0.0, %v4447
  %v4449 = vpop.f32.mrb[0].mxu0
  %v4450 = vpop.f32.mrb[0].mxu0
  %v4451 = vadd.f32 0.0, %v4450
  %v4452 = vpop.f32.mrb[0].mxu0
  %4453 = vdwg.mxu0
  %v4454 = vunpack.c.l.b16 %v4032
  %v4455 = vunpack.c.l.b16 %v4045
  %v4456 = vunpack.c.l.b16 %v4058
  %v4457 = vunpack.c.l.b16 %v4071
  %v4458 = vunpack.c.l.b16 %v4084
  %v4459 = vunpack.c.l.b16 %v4097
  %v4460 = vunpack.c.l.b16 %v4110
  %v4461 = vunpack.c.l.b16 %v4123
  %v4462 = vunpack.c.l.b16 %v4136
  %v4463 = vunpack.c.l.b16 %v4149
  %v4464 = vunpack.c.l.b16 %v4162
  %v4465 = vunpack.c.l.b16 %v4175
  %v4466 = vunpack.c.l.b16 %v4188
  %v4467 = vunpack.c.l.b16 %v4201
  %v4468 = vunpack.c.l.b16 %v4214
  %v4469 = vunpack.c.l.b16 %v4227
  %v4470 = vpack.c.b16 %v4455, %v4454
  %v4471 = vpack.c.b16 %v4457, %v4456
  %v4472 = vpack.c.b16 %v4459, %v4458
  %v4473 = vpack.c.b16 %v4461, %v4460
  %v4474 = vpack.c.b16 %v4463, %v4462
  %v4475 = vpack.c.b16 %v4465, %v4464
  %v4476 = vpack.c.b16 %v4467, %v4466
  %v4477 = vpack.c.b16 %v4469, %v4468
  %v4502 = vunpack.c.l.b16 %v4228
  %v4503 = vunpack.c.l.b16 %v4229
  %v4504 = vunpack.c.l.b16 %v4230
  %v4505 = vunpack.c.l.b16 %v4231
  %v4506 = vunpack.c.l.b16 %v4232
  %v4507 = vunpack.c.l.b16 %v4233
  %v4508 = vunpack.c.l.b16 %v4234
  %v4509 = vunpack.c.l.b16 %v4235
  %v4510 = vunpack.c.l.b16 %v4236
  %v4511 = vunpack.c.l.b16 %v4237
  %v4512 = vunpack.c.l.b16 %v4238
  %v4513 = vunpack.c.l.b16 %v4239
  %v4514 = vunpack.c.l.b16 %v4240
  %v4515 = vunpack.c.l.b16 %v4241
  %v4516 = vunpack.c.l.b16 %v4242
  %v4517 = vunpack.c.l.b16 %v4243
  %v4518 = vpack.c.b16 %v4503, %v4502
  %v4519 = vpack.c.b16 %v4505, %v4504
  %v4520 = vpack.c.b16 %v4507, %v4506
  %v4521 = vpack.c.b16 %v4509, %v4508
  %v4522 = vpack.c.b16 %v4511, %v4510
  %v4523 = vpack.c.b16 %v4513, %v4512
  %v4524 = vpack.c.b16 %v4515, %v4514
  %v4525 = vpack.c.b16 %v4517, %v4516
  %4534 = vmatprep.subr.bf16.mxu0 0
  %4535 = vmatpush1.bf16.msra.mxu0 %v4518
  %4536 = vmatprep.subr.bf16.mxu0 0
  %4537 = vmatpush1.bf16.msra.mxu0 %v4519
  %4538 = vmatprep.subr.bf16.mxu0 0
  %4539 = vmatpush1.bf16.msra.mxu0 %v4520
  %4540 = vmatprep.subr.bf16.mxu0 0
  %4541 = vmatpush1.bf16.msra.mxu0 %v4521
  %4542 = vmatprep.subr.bf16.mxu0 0
  %4543 = vmatpush1.bf16.msra.mxu0 %v4522
  %4544 = vmatprep.subr.bf16.mxu0 0
  %4545 = vmatpush1.bf16.msra.mxu0 %v4523
  %4546 = vmatprep.subr.bf16.mxu0 0
  %4547 = vmatpush1.bf16.msra.mxu0 %v4524
  %4548 = vmatprep.subr.bf16.mxu0 0
  %4549 = vmatpush1.bf16.msra.mxu0 %v4525
  %4550 = vmatprep.subr.bf16.mxu0 0
  %4551 = vmatpush1.bf16.msra.mxu0 0
  %4552 = vmatprep.subr.bf16.mxu0 0
  %4553 = vmatpush1.bf16.msra.mxu0 0
  %4554 = vmatprep.subr.bf16.mxu0 0
  %4555 = vmatpush1.bf16.msra.mxu0 0
  %4556 = vmatprep.subr.bf16.mxu0 0
  %4557 = vmatpush1.bf16.msra.mxu0 0
  %4558 = vmatprep.subr.bf16.mxu0 0
  %4559 = vmatpush1.bf16.msra.mxu0 0
  %4560 = vmatprep.subr.bf16.mxu0 0
  %4561 = vmatpush1.bf16.msra.mxu0 0
  %4562 = vmatprep.subr.bf16.mxu0 0
  %4563 = vmatpush1.bf16.msra.mxu0 0
  %4564 = vmatprep.subr.bf16.mxu0 0
  %4565 = vmatpush1.bf16.msra.mxu0 0
  %4566 = vmatprep.mubr.bf16.mxu0 0
  %4567 = vmatmul.mubr.bf16.gmra.mrb[0].mxu0 %v4470
  %v4568 = vpop.f32.mrb[0].mxu0
  %v4569 = vadd.f32 %v4392, %v4568
  %v4570 = vpop.f32.mrb[0].mxu0
  %v4571 = vpop.f32.mrb[0].mxu0
  %v4572 = vadd.f32 %v4395, %v4571
  %v4573 = vpop.f32.mrb[0].mxu0
  %4574 = vmatprep.mubr.bf16.mxu0 0
  %4575 = vmatmul.mubr.bf16.gmra.mrb[0].mxu0 %v4471
  %v4576 = vpop.f32.mrb[0].mxu0
  %v4577 = vadd.f32 %v4400, %v4576
  %v4578 = vpop.f32.mrb[0].mxu0
  %v4579 = vpop.f32.mrb[0].mxu0
  %v4580 = vadd.f32 %v4403, %v4579
  %v4581 = vpop.f32.mrb[0].mxu0
  %4582 = vmatprep.mubr.bf16.mxu0 0
  %4583 = vmatmul.mubr.bf16.gmra.mrb[0].mxu0 %v4472
  %v4584 = vpop.f32.mrb[0].mxu0
  %v4585 = vadd.f32 %v4408, %v4584
  %v4586 = vpop.f32.mrb[0].mxu0
  %v4587 = vpop.f32.mrb[0].mxu0
  %v4588 = vadd.f32 %v4411, %v4587
  %v4589 = vpop.f32.mrb[0].mxu0
  %4590 = vmatprep.mubr.bf16.mxu0 0
  %4591 = vmatmul.mubr.bf16.gmra.mrb[0].mxu0 %v4473
  %v4592 = vpop.f32.mrb[0].mxu0
  %v4593 = vadd.f32 %v4416, %v4592
  %v4594 = vpop.f32.mrb[0].mxu0
  %v4595 = vpop.f32.mrb[0].mxu0
  %v4596 = vadd.f32 %v4419, %v4595
  %v4597 = vpop.f32.mrb[0].mxu0
  %4598 = vmatprep.mubr.bf16.mxu0 0
  %4599 = vmatmul.mubr.bf16.gmra.mrb[0].mxu0 %v4474
  %v4600 = vpop.f32.mrb[0].mxu0
  %v4601 = vadd.f32 %v4424, %v4600
  %v4602 = vpop.f32.mrb[0].mxu0
  %v4603 = vpop.f32.mrb[0].mxu0
  %v4604 = vadd.f32 %v4427, %v4603
  %v4605 = vpop.f32.mrb[0].mxu0
  %4606 = vmatprep.mubr.bf16.mxu0 0
  %4607 = vmatmul.mubr.bf16.gmra.mrb[0].mxu0 %v4475
  %v4608 = vpop.f32.mrb[0].mxu0
  %v4609 = vadd.f32 %v4432, %v4608
  %v4610 = vpop.f32.mrb[0].mxu0
  %v4611 = vpop.f32.mrb[0].mxu0
  %v4612 = vadd.f32 %v4435, %v4611
  %v4613 = vpop.f32.mrb[0].mxu0
  %4614 = vmatprep.mubr.bf16.mxu0 0
  %4615 = vmatmul.mubr.bf16.gmra.mrb[0].mxu0 %v4476
  %v4616 = vpop.f32.mrb[0].mxu0
  %v4617 = vadd.f32 %v4440, %v4616
  %v4618 = vpop.f32.mrb[0].mxu0
  %v4619 = vpop.f32.mrb[0].mxu0
  %v4620 = vadd.f32 %v4443, %v4619
  %v4621 = vpop.f32.mrb[0].mxu0
  %4622 = vmatprep.mubr.bf16.mxu0 0
  %4623 = vmatmul.mubr.bf16.gmra.mrb[0].mxu0 %v4477
  %v4624 = vpop.f32.mrb[0].mxu0
  %v4625 = vadd.f32 %v4448, %v4624
  %v4626 = vpop.f32.mrb[0].mxu0
  %v4627 = vpop.f32.mrb[0].mxu0
  %v4628 = vadd.f32 %v4451, %v4627
  %v4629 = vpop.f32.mrb[0].mxu0
  %4630 = vdwg.mxu0
  %v4631 = vld [vmem:[#allocation3 + $0x4] sm:$0xf]
  %v4632 = vld [vmem:[#allocation3 + $0x8] sm:$0x1]
  %v4633 = vld [vmem:[#allocation3 + $0x10] sm:$0xf]
  %v4634 = vld [vmem:[#allocation3 + $0x14] sm:$0x1]
  %v4635 = vld [vmem:[#allocation3 + $0x1c] sm:$0xf]
  %v4636 = vld [vmem:[#allocation3 + $0x20] sm:$0x1]
  %v4637 = vld [vmem:[#allocation3 + $0x28] sm:$0xf]
  %v4638 = vld [vmem:[#allocation3 + $0x2c] sm:$0x1]
  %v4639 = vld [vmem:[#allocation3 + $0x34] sm:$0xf]
  %v4640 = vld [vmem:[#allocation3 + $0x38] sm:$0x1]
  %v4641 = vld [vmem:[#allocation3 + $0x40] sm:$0xf]
  %v4642 = vld [vmem:[#allocation3 + $0x44] sm:$0x1]
  %v4643 = vld [vmem:[#allocation3 + $0x4c] sm:$0xf]
  %v4644 = vld [vmem:[#allocation3 + $0x50] sm:$0x1]
  %v4645 = vld [vmem:[#allocation3 + $0x58] sm:$0xf]
  %v4646 = vld [vmem:[#allocation3 + $0x5c] sm:$0x1]
  %v4647 = vld [vmem:[#allocation3 + $0x7c] sm:$0xf]
  %v4648 = vld [vmem:[#allocation3 + $0x80] sm:$0x1]
  %v4649 = vld [vmem:[#allocation3 + $0x88] sm:$0xf]
  %v4650 = vld [vmem:[#allocation3 + $0x8c] sm:$0x1]
  %v4651 = vld [vmem:[#allocation3 + $0x94] sm:$0xf]
  %v4652 = vld [vmem:[#allocation3 + $0x98] sm:$0x1]
  %v4653 = vld [vmem:[#allocation3 + $0xa0] sm:$0xf]
  %v4654 = vld [vmem:[#allocation3 + $0xa4] sm:$0x1]
  %v4655 = vld [vmem:[#allocation3 + $0xac] sm:$0xf]
  %v4656 = vld [vmem:[#allocation3 + $0xb0] sm:$0x1]
  %v4657 = vld [vmem:[#allocation3 + $0xb8] sm:$0xf]
  %v4658 = vld [vmem:[#allocation3 + $0xbc] sm:$0x1]
  %v4659 = vld [vmem:[#allocation3 + $0xc4] sm:$0xf]
  %v4660 = vld [vmem:[#allocation3 + $0xc8] sm:$0x1]
  %v4661 = vld [vmem:[#allocation3 + $0xd0] sm:$0xf]
  %v4662 = vld [vmem:[#allocation3 + $0xd4] sm:$0x1]
  %v4664 = vshrl.u32 %v4631, 16
  %v4666 = vrot.slane %v4664, 4
  %v4667 = vshll.u32 %v4631, 16
  %v4669 = vrot.slane %v4667, 5
  %v4670 = vor.u32 %v4666, %v4669
  %v4671 = vrot.slane %v4670, 4
  %v4673 = vshll.u32 %v4632, 16
  %v4675 = vrot.slane %v4673, 5
  %v4676 = vsel %vm1011, %v4671, %v4675
  %v4678 = vshrl.u32 %v4633, 16
  %v4680 = vrot.slane %v4678, 4
  %v4681 = vshll.u32 %v4633, 16
  %v4683 = vrot.slane %v4681, 5
  %v4684 = vor.u32 %v4680, %v4683
  %v4685 = vrot.slane %v4684, 4
  %v4687 = vshll.u32 %v4634, 16
  %v4689 = vrot.slane %v4687, 5
  %v4690 = vsel %vm1011, %v4685, %v4689
  %v4692 = vshrl.u32 %v4635, 16
  %v4694 = vrot.slane %v4692, 4
  %v4695 = vshll.u32 %v4635, 16
  %v4697 = vrot.slane %v4695, 5
  %v4698 = vor.u32 %v4694, %v4697
  %v4699 = vrot.slane %v4698, 4
  %v4701 = vshll.u32 %v4636, 16
  %v4703 = vrot.slane %v4701, 5
  %v4704 = vsel %vm1011, %v4699, %v4703
  %v4706 = vshrl.u32 %v4637, 16
  %v4708 = vrot.slane %v4706, 4
  %v4709 = vshll.u32 %v4637, 16
  %v4711 = vrot.slane %v4709, 5
  %v4712 = vor.u32 %v4708, %v4711
  %v4713 = vrot.slane %v4712, 4
  %v4715 = vshll.u32 %v4638, 16
  %v4717 = vrot.slane %v4715, 5
  %v4718 = vsel %vm1011, %v4713, %v4717
  %v4720 = vshrl.u32 %v4639, 16
  %v4722 = vrot.slane %v4720, 4
  %v4723 = vshll.u32 %v4639, 16
  %v4725 = vrot.slane %v4723, 5
  %v4726 = vor.u32 %v4722, %v4725
  %v4727 = vrot.slane %v4726, 4
  %v4729 = vshll.u32 %v4640, 16
  %v4731 = vrot.slane %v4729, 5
  %v4732 = vsel %vm1011, %v4727, %v4731
  %v4734 = vshrl.u32 %v4641, 16
  %v4736 = vrot.slane %v4734, 4
  %v4737 = vshll.u32 %v4641, 16
  %v4739 = vrot.slane %v4737, 5
  %v4740 = vor.u32 %v4736, %v4739
  %v4741 = vrot.slane %v4740, 4
  %v4743 = vshll.u32 %v4642, 16
  %v4745 = vrot.slane %v4743, 5
  %v4746 = vsel %vm1011, %v4741, %v4745
  %v4748 = vshrl.u32 %v4643, 16
  %v4750 = vrot.slane %v4748, 4
  %v4751 = vshll.u32 %v4643, 16
  %v4753 = vrot.slane %v4751, 5
  %v4754 = vor.u32 %v4750, %v4753
  %v4755 = vrot.slane %v4754, 4
  %v4757 = vshll.u32 %v4644, 16
  %v4759 = vrot.slane %v4757, 5
  %v4760 = vsel %vm1011, %v4755, %v4759
  %v4762 = vshrl.u32 %v4645, 16
  %v4764 = vrot.slane %v4762, 4
  %v4765 = vshll.u32 %v4645, 16
  %v4767 = vrot.slane %v4765, 5
  %v4768 = vor.u32 %v4764, %v4767
  %v4769 = vrot.slane %v4768, 4
  %v4771 = vshll.u32 %v4646, 16
  %v4773 = vrot.slane %v4771, 5
  %v4774 = vsel %vm1011, %v4769, %v4773
  %v4776 = vshrl.u32 %v4647, 16
  %v4778 = vrot.slane %v4776, 4
  %v4779 = vshll.u32 %v4647, 16
  %v4781 = vrot.slane %v4779, 5
  %v4782 = vor.u32 %v4778, %v4781
  %v4783 = vrot.slane %v4782, 4
  %v4785 = vshll.u32 %v4648, 16
  %v4787 = vrot.slane %v4785, 5
  %v4788 = vsel %vm1011, %v4783, %v4787
  %v4790 = vshrl.u32 %v4649, 16
  %v4792 = vrot.slane %v4790, 4
  %v4793 = vshll.u32 %v4649, 16
  %v4795 = vrot.slane %v4793, 5
  %v4796 = vor.u32 %v4792, %v4795
  %v4797 = vrot.slane %v4796, 4
  %v4799 = vshll.u32 %v4650, 16
  %v4801 = vrot.slane %v4799, 5
  %v4802 = vsel %vm1011, %v4797, %v4801
  %v4804 = vshrl.u32 %v4651, 16
  %v4806 = vrot.slane %v4804, 4
  %v4807 = vshll.u32 %v4651, 16
  %v4809 = vrot.slane %v4807, 5
  %v4810 = vor.u32 %v4806, %v4809
  %v4811 = vrot.slane %v4810, 4
  %v4813 = vshll.u32 %v4652, 16
  %v4815 = vrot.slane %v4813, 5
  %v4816 = vsel %vm1011, %v4811, %v4815
  %v4818 = vshrl.u32 %v4653, 16
  %v4820 = vrot.slane %v4818, 4
  %v4821 = vshll.u32 %v4653, 16
  %v4823 = vrot.slane %v4821, 5
  %v4824 = vor.u32 %v4820, %v4823
  %v4825 = vrot.slane %v4824, 4
  %v4827 = vshll.u32 %v4654, 16
  %v4829 = vrot.slane %v4827, 5
  %v4830 = vsel %vm1011, %v4825, %v4829
  %v4832 = vshrl.u32 %v4655, 16
  %v4834 = vrot.slane %v4832, 4
  %v4835 = vshll.u32 %v4655, 16
  %v4837 = vrot.slane %v4835, 5
  %v4838 = vor.u32 %v4834, %v4837
  %v4839 = vrot.slane %v4838, 4
  %v4841 = vshll.u32 %v4656, 16
  %v4843 = vrot.slane %v4841, 5
  %v4844 = vsel %vm1011, %v4839, %v4843
  %v4846 = vshrl.u32 %v4657, 16
  %v4848 = vrot.slane %v4846, 4
  %v4849 = vshll.u32 %v4657, 16
  %v4851 = vrot.slane %v4849, 5
  %v4852 = vor.u32 %v4848, %v4851
  %v4853 = vrot.slane %v4852, 4
  %v4855 = vshll.u32 %v4658, 16
  %v4857 = vrot.slane %v4855, 5
  %v4858 = vsel %vm1011, %v4853, %v4857
  %v4860 = vshrl.u32 %v4659, 16
  %v4862 = vrot.slane %v4860, 4
  %v4863 = vshll.u32 %v4659, 16
  %v4865 = vrot.slane %v4863, 5
  %v4866 = vor.u32 %v4862, %v4865
  %v4867 = vrot.slane %v4866, 4
  %v4869 = vshll.u32 %v4660, 16
  %v4871 = vrot.slane %v4869, 5
  %v4872 = vsel %vm1011, %v4867, %v4871
  %v4874 = vshrl.u32 %v4661, 16
  %v4876 = vrot.slane %v4874, 4
  %v4877 = vshll.u32 %v4661, 16
  %v4879 = vrot.slane %v4877, 5
  %v4880 = vor.u32 %v4876, %v4879
  %v4881 = vrot.slane %v4880, 4
  %v4883 = vshll.u32 %v4662, 16
  %v4885 = vrot.slane %v4883, 5
  %v4886 = vsel %vm1011, %v4881, %v4885
  %s4887 = scalar_lea.vmem %s4, 128
  %v4888 = vld [vmem:[%s4887] sm:$0xf]
  %v4889 = vld [vmem:[%s4887 + $0x4] sm:$0xf]
  %v4890 = vld [vmem:[%s4887 + $0x8] sm:$0xf]
  %v4891 = vld [vmem:[%s4887 + $0xc] sm:$0xf]
  %v4892 = vld [vmem:[%s4887 + $0x10] sm:$0xf]
  %v4893 = vld [vmem:[%s4887 + $0x14] sm:$0xf]
  %v4894 = vld [vmem:[%s4887 + $0x18] sm:$0xf]
  %v4895 = vld [vmem:[%s4887 + $0x1c] sm:$0xf]
  %v4896 = vld [vmem:[%s4887 + $0x20] sm:$0xf]
  %v4897 = vld [vmem:[%s4887 + $0x24] sm:$0xf]
  %v4898 = vld [vmem:[%s4887 + $0x28] sm:$0xf]
  %v4899 = vld [vmem:[%s4887 + $0x2c] sm:$0xf]
  %v4900 = vld [vmem:[%s4887 + $0x30] sm:$0xf]
  %v4901 = vld [vmem:[%s4887 + $0x34] sm:$0xf]
  %v4902 = vld [vmem:[%s4887 + $0x38] sm:$0xf]
  %v4903 = vld [vmem:[%s4887 + $0x3c] sm:$0xf]
  %v4904 = vunpack.c.l.b16 %v4676
  %v4905 = vunpack.c.l.b16 %v4690
  %v4906 = vunpack.c.l.b16 %v4704
  %v4907 = vunpack.c.l.b16 %v4718
  %v4908 = vunpack.c.l.b16 %v4732
  %v4909 = vunpack.c.l.b16 %v4746
  %v4910 = vunpack.c.l.b16 %v4760
  %v4911 = vunpack.c.l.b16 %v4774
  %v4912 = vunpack.c.l.b16 %v4788
  %v4913 = vunpack.c.l.b16 %v4802
  %v4914 = vunpack.c.l.b16 %v4816
  %v4915 = vunpack.c.l.b16 %v4830
  %v4916 = vunpack.c.l.b16 %v4844
  %v4917 = vunpack.c.l.b16 %v4858
  %v4918 = vunpack.c.l.b16 %v4872
  %v4919 = vunpack.c.l.b16 %v4886
  %v4920 = vpack.c.b16 %v4905, %v4904
  %v4921 = vpack.c.b16 %v4907, %v4906
  %v4922 = vpack.c.b16 %v4909, %v4908
  %v4923 = vpack.c.b16 %v4911, %v4910
  %v4924 = vpack.c.b16 %v4913, %v4912
  %v4925 = vpack.c.b16 %v4915, %v4914
  %v4926 = vpack.c.b16 %v4917, %v4916
  %v4927 = vpack.c.b16 %v4919, %v4918
  %v4952 = vunpack.c.l.b16 %v4888
  %v4953 = vunpack.c.l.b16 %v4889
  %v4954 = vunpack.c.l.b16 %v4890
  %v4955 = vunpack.c.l.b16 %v4891
  %v4956 = vunpack.c.l.b16 %v4892
  %v4957 = vunpack.c.l.b16 %v4893
  %v4958 = vunpack.c.l.b16 %v4894
  %v4959 = vunpack.c.l.b16 %v4895
  %v4960 = vunpack.c.l.b16 %v4896
  %v4961 = vunpack.c.l.b16 %v4897
  %v4962 = vunpack.c.l.b16 %v4898
  %v4963 = vunpack.c.l.b16 %v4899
  %v4964 = vunpack.c.l.b16 %v4900
  %v4965 = vunpack.c.l.b16 %v4901
  %v4966 = vunpack.c.l.b16 %v4902
  %v4967 = vunpack.c.l.b16 %v4903
  %v4968 = vpack.c.b16 %v4953, %v4952
  %v4969 = vpack.c.b16 %v4955, %v4954
  %v4970 = vpack.c.b16 %v4957, %v4956
  %v4971 = vpack.c.b16 %v4959, %v4958
  %v4972 = vpack.c.b16 %v4961, %v4960
  %v4973 = vpack.c.b16 %v4963, %v4962
  %v4974 = vpack.c.b16 %v4965, %v4964
  %v4975 = vpack.c.b16 %v4967, %v4966
  %4984 = vmatprep.subr.bf16.mxu0 0
  %4985 = vmatpush1.bf16.msra.mxu0 %v4968
  %4986 = vmatprep.subr.bf16.mxu0 0
  %4987 = vmatpush1.bf16.msra.mxu0 %v4969
  %4988 = vmatprep.subr.bf16.mxu0 0
  %4989 = vmatpush1.bf16.msra.mxu0 %v4970
  %4990 = vmatprep.subr.bf16.mxu0 0
  %4991 = vmatpush1.bf16.msra.mxu0 %v4971
  %4992 = vmatprep.subr.bf16.mxu0 0
  %4993 = vmatpush1.bf16.msra.mxu0 %v4972
  %4994 = vmatprep.subr.bf16.mxu0 0
  %4995 = vmatpush1.bf16.msra.mxu0 %v4973
  %4996 = vmatprep.subr.bf16.mxu0 0
  %4997 = vmatpush1.bf16.msra.mxu0 %v4974
  %4998 = vmatprep.subr.bf16.mxu0 0
  %4999 = vmatpush1.bf16.msra.mxu0 %v4975
  %5000 = vmatprep.subr.bf16.mxu0 0
  %5001 = vmatpush1.bf16.msra.mxu0 0
  %5002 = vmatprep.subr.bf16.mxu0 0
  %5003 = vmatpush1.bf16.msra.mxu0 0
  %5004 = vmatprep.subr.bf16.mxu0 0
  %5005 = vmatpush1.bf16.msra.mxu0 0
  %5006 = vmatprep.subr.bf16.mxu0 0
  %5007 = vmatpush1.bf16.msra.mxu0 0
  %5008 = vmatprep.subr.bf16.mxu0 0
  %5009 = vmatpush1.bf16.msra.mxu0 0
  %5010 = vmatprep.subr.bf16.mxu0 0
  %5011 = vmatpush1.bf16.msra.mxu0 0
  %5012 = vmatprep.subr.bf16.mxu0 0
  %5013 = vmatpush1.bf16.msra.mxu0 0
  %5014 = vmatprep.subr.bf16.mxu0 0
  %5015 = vmatpush1.bf16.msra.mxu0 0
  %5016 = vmatprep.mubr.bf16.mxu0 0
  %5017 = vmatmul.mubr.bf16.gmra.mrb[0].mxu0 %v4920
  %v5018 = vpop.f32.mrb[0].mxu0
  %v5019 = vadd.f32 0.0, %v5018
  %v5020 = vpop.f32.mrb[0].mxu0
  %v5021 = vpop.f32.mrb[0].mxu0
  %v5022 = vadd.f32 0.0, %v5021
  %v5023 = vpop.f32.mrb[0].mxu0
  %5024 = vmatprep.mubr.bf16.mxu0 0
  %5025 = vmatmul.mubr.bf16.gmra.mrb[0].mxu0 %v4921
  %v5026 = vpop.f32.mrb[0].mxu0
  %v5027 = vadd.f32 0.0, %v5026
  %v5028 = vpop.f32.mrb[0].mxu0
  %v5029 = vpop.f32.mrb[0].mxu0
  %v5030 = vadd.f32 0.0, %v5029
  %v5031 = vpop.f32.mrb[0].mxu0
  %5032 = vmatprep.mubr.bf16.mxu0 0
  %5033 = vmatmul.mubr.bf16.gmra.mrb[0].mxu0 %v4922
  %v5034 = vpop.f32.mrb[0].mxu0
  %v5035 = vadd.f32 0.0, %v5034
  %v5036 = vpop.f32.mrb[0].mxu0
  %v5037 = vpop.f32.mrb[0].mxu0
  %v5038 = vadd.f32 0.0, %v5037
  %v5039 = vpop.f32.mrb[0].mxu0
  %5040 = vmatprep.mubr.bf16.mxu0 0
  %5041 = vmatmul.mubr.bf16.gmra.mrb[0].mxu0 %v4923
  %v5042 = vpop.f32.mrb[0].mxu0
  %v5043 = vadd.f32 0.0, %v5042
  %v5044 = vpop.f32.mrb[0].mxu0
  %v5045 = vpop.f32.mrb[0].mxu0
  %v5046 = vadd.f32 0.0, %v5045
  %v5047 = vpop.f32.mrb[0].mxu0
  %5048 = vmatprep.mubr.bf16.mxu0 0
  %5049 = vmatmul.mubr.bf16.gmra.mrb[0].mxu0 %v4924
  %v5050 = vpop.f32.mrb[0].mxu0
  %v5051 = vadd.f32 0.0, %v5050
  %v5052 = vpop.f32.mrb[0].mxu0
  %v5053 = vpop.f32.mrb[0].mxu0
  %v5054 = vadd.f32 0.0, %v5053
  %v5055 = vpop.f32.mrb[0].mxu0
  %5056 = vmatprep.mubr.bf16.mxu0 0
  %5057 = vmatmul.mubr.bf16.gmra.mrb[0].mxu0 %v4925
  %v5058 = vpop.f32.mrb[0].mxu0
  %v5059 = vadd.f32 0.0, %v5058
  %v5060 = vpop.f32.mrb[0].mxu0
  %v5061 = vpop.f32.mrb[0].mxu0
  %v5062 = vadd.f32 0.0, %v5061
  %v5063 = vpop.f32.mrb[0].mxu0
  %5064 = vmatprep.mubr.bf16.mxu0 0
  %5065 = vmatmul.mubr.bf16.gmra.mrb[0].mxu0 %v4926
  %v5066 = vpop.f32.mrb[0].mxu0
  %v5067 = vadd.f32 0.0, %v5066
  %v5068 = vpop.f32.mrb[0].mxu0
  %v5069 = vpop.f32.mrb[0].mxu0
  %v5070 = vadd.f32 0.0, %v5069
  %v5071 = vpop.f32.mrb[0].mxu0
  %5072 = vmatprep.mubr.bf16.mxu0 0
  %5073 = vmatmul.mubr.bf16.gmra.mrb[0].mxu0 %v4927
  %v5074 = vpop.f32.mrb[0].mxu0
  %v5075 = vadd.f32 0.0, %v5074
  %v5076 = vpop.f32.mrb[0].mxu0
  %v5077 = vpop.f32.mrb[0].mxu0
  %v5078 = vadd.f32 0.0, %v5077
  %v5079 = vpop.f32.mrb[0].mxu0
  %5080 = vdwg.mxu0
  %v5081 = vadd.f32 %v4569, %v5019
  %v5082 = vadd.f32 %v4572, %v5022
  %v5083 = vadd.f32 %v4577, %v5027
  %v5084 = vadd.f32 %v4580, %v5030
  %v5085 = vadd.f32 %v4585, %v5035
  %v5086 = vadd.f32 %v4588, %v5038
  %v5087 = vadd.f32 %v4593, %v5043
  %v5088 = vadd.f32 %v4596, %v5046
  %v5089 = vadd.f32 %v4601, %v5051
  %v5090 = vadd.f32 %v4604, %v5054
  %v5091 = vadd.f32 %v4609, %v5059
  %v5092 = vadd.f32 %v4612, %v5062
  %v5093 = vadd.f32 %v4617, %v5067
  %v5094 = vadd.f32 %v4620, %v5070
  %v5095 = vadd.f32 %v4625, %v5075
  %v5096 = vadd.f32 %v4628, %v5078
  %v5097 = vld [vmem:[%s3891] sm:$0x8]
  %v5098 = vld [vmem:[%s3891 + $0x4] sm:$0xf]
  %v5099 = vld [vmem:[%s3891 + $0xc] sm:$0x8]
  %v5100 = vld [vmem:[%s3891 + $0x10] sm:$0xf]
  %v5101 = vld [vmem:[%s3891 + $0x18] sm:$0x8]
  %v5102 = vld [vmem:[%s3891 + $0x1c] sm:$0xf]
  %v5103 = vld [vmem:[%s3891 + $0x24] sm:$0x8]
  %v5104 = vld [vmem:[%s3891 + $0x28] sm:$0xf]
  %v5105 = vld [vmem:[%s3891 + $0x30] sm:$0x8]
  %v5106 = vld [vmem:[%s3891 + $0x34] sm:$0xf]
  %v5107 = vld [vmem:[%s3891 + $0x3c] sm:$0x8]
  %v5108 = vld [vmem:[%s3891 + $0x40] sm:$0xf]
  %v5109 = vld [vmem:[%s3891 + $0x48] sm:$0x8]
  %v5110 = vld [vmem:[%s3891 + $0x4c] sm:$0xf]
  %v5111 = vld [vmem:[%s3891 + $0x54] sm:$0x8]
  %v5112 = vld [vmem:[%s3891 + $0x58] sm:$0xf]
  %v5113 = vld [vmem:[%s3891 + $0x78] sm:$0x8]
  %v5114 = vld [vmem:[%s3891 + $0x7c] sm:$0xf]
  %v5115 = vld [vmem:[%s3891 + $0x84] sm:$0x8]
  %v5116 = vld [vmem:[%s3891 + $0x88] sm:$0xf]
  %v5117 = vld [vmem:[%s3891 + $0x90] sm:$0x8]
  %v5118 = vld [vmem:[%s3891 + $0x94] sm:$0xf]
  %v5119 = vld [vmem:[%s3891 + $0x9c] sm:$0x8]
  %v5120 = vld [vmem:[%s3891 + $0xa0] sm:$0xf]
  %v5121 = vld [vmem:[%s3891 + $0xa8] sm:$0x8]
  %v5122 = vld [vmem:[%s3891 + $0xac] sm:$0xf]
  %v5123 = vld [vmem:[%s3891 + $0xb4] sm:$0x8]
  %v5124 = vld [vmem:[%s3891 + $0xb8] sm:$0xf]
  %v5125 = vld [vmem:[%s3891 + $0xc0] sm:$0x8]
  %v5126 = vld [vmem:[%s3891 + $0xc4] sm:$0xf]
  %v5127 = vld [vmem:[%s3891 + $0xcc] sm:$0x8]
  %v5128 = vld [vmem:[%s3891 + $0xd0] sm:$0xf]
  %v5130 = vshrl.u32 %v5097, 16
  %v5132 = vrot.slane %v5130, 7
  %v5133 = vrot.slane %v5132, 4
  %v5135 = vshrl.u32 %v5098, 16
  %v5137 = vrot.slane %v5135, 7
  %v5138 = vshll.u32 %v5098, 16
  %v5140 = vor.u32 %v5137, %v5138
  %v5141 = vsel %vm365, %v5133, %v5140
  %v5143 = vshrl.u32 %v5099, 16
  %v5145 = vrot.slane %v5143, 7
  %v5146 = vrot.slane %v5145, 4
  %v5148 = vshrl.u32 %v5100, 16
  %v5150 = vrot.slane %v5148, 7
  %v5151 = vshll.u32 %v5100, 16
  %v5153 = vor.u32 %v5150, %v5151
  %v5154 = vsel %vm365, %v5146, %v5153
  %v5156 = vshrl.u32 %v5101, 16
  %v5158 = vrot.slane %v5156, 7
  %v5159 = vrot.slane %v5158, 4
  %v5161 = vshrl.u32 %v5102, 16
  %v5163 = vrot.slane %v5161, 7
  %v5164 = vshll.u32 %v5102, 16
  %v5166 = vor.u32 %v5163, %v5164
  %v5167 = vsel %vm365, %v5159, %v5166
  %v5169 = vshrl.u32 %v5103, 16
  %v5171 = vrot.slane %v5169, 7
  %v5172 = vrot.slane %v5171, 4
  %v5174 = vshrl.u32 %v5104, 16
  %v5176 = vrot.slane %v5174, 7
  %v5177 = vshll.u32 %v5104, 16
  %v5179 = vor.u32 %v5176, %v5177
  %v5180 = vsel %vm365, %v5172, %v5179
  %v5182 = vshrl.u32 %v5105, 16
  %v5184 = vrot.slane %v5182, 7
  %v5185 = vrot.slane %v5184, 4
  %v5187 = vshrl.u32 %v5106, 16
  %v5189 = vrot.slane %v5187, 7
  %v5190 = vshll.u32 %v5106, 16
  %v5192 = vor.u32 %v5189, %v5190
  %v5193 = vsel %vm365, %v5185, %v5192
  %v5195 = vshrl.u32 %v5107, 16
  %v5197 = vrot.slane %v5195, 7
  %v5198 = vrot.slane %v5197, 4
  %v5200 = vshrl.u32 %v5108, 16
  %v5202 = vrot.slane %v5200, 7
  %v5203 = vshll.u32 %v5108, 16
  %v5205 = vor.u32 %v5202, %v5203
  %v5206 = vsel %vm365, %v5198, %v5205
  %v5208 = vshrl.u32 %v5109, 16
  %v5210 = vrot.slane %v5208, 7
  %v5211 = vrot.slane %v5210, 4
  %v5213 = vshrl.u32 %v5110, 16
  %v5215 = vrot.slane %v5213, 7
  %v5216 = vshll.u32 %v5110, 16
  %v5218 = vor.u32 %v5215, %v5216
  %v5219 = vsel %vm365, %v5211, %v5218
  %v5221 = vshrl.u32 %v5111, 16
  %v5223 = vrot.slane %v5221, 7
  %v5224 = vrot.slane %v5223, 4
  %v5226 = vshrl.u32 %v5112, 16
  %v5228 = vrot.slane %v5226, 7
  %v5229 = vshll.u32 %v5112, 16
  %v5231 = vor.u32 %v5228, %v5229
  %v5232 = vsel %vm365, %v5224, %v5231
  %v5234 = vshrl.u32 %v5113, 16
  %v5236 = vrot.slane %v5234, 7
  %v5237 = vrot.slane %v5236, 4
  %v5239 = vshrl.u32 %v5114, 16
  %v5241 = vrot.slane %v5239, 7
  %v5242 = vshll.u32 %v5114, 16
  %v5244 = vor.u32 %v5241, %v5242
  %v5245 = vsel %vm365, %v5237, %v5244
  %v5247 = vshrl.u32 %v5115, 16
  %v5249 = vrot.slane %v5247, 7
  %v5250 = vrot.slane %v5249, 4
  %v5252 = vshrl.u32 %v5116, 16
  %v5254 = vrot.slane %v5252, 7
  %v5255 = vshll.u32 %v5116, 16
  %v5257 = vor.u32 %v5254, %v5255
  %v5258 = vsel %vm365, %v5250, %v5257
  %v5260 = vshrl.u32 %v5117, 16
  %v5262 = vrot.slane %v5260, 7
  %v5263 = vrot.slane %v5262, 4
  %v5265 = vshrl.u32 %v5118, 16
  %v5267 = vrot.slane %v5265, 7
  %v5268 = vshll.u32 %v5118, 16
  %v5270 = vor.u32 %v5267, %v5268
  %v5271 = vsel %vm365, %v5263, %v5270
  %v5273 = vshrl.u32 %v5119, 16
  %v5275 = vrot.slane %v5273, 7
  %v5276 = vrot.slane %v5275, 4
  %v5278 = vshrl.u32 %v5120, 16
  %v5280 = vrot.slane %v5278, 7
  %v5281 = vshll.u32 %v5120, 16
  %v5283 = vor.u32 %v5280, %v5281
  %v5284 = vsel %vm365, %v5276, %v5283
  %v5286 = vshrl.u32 %v5121, 16
  %v5288 = vrot.slane %v5286, 7
  %v5289 = vrot.slane %v5288, 4
  %v5291 = vshrl.u32 %v5122, 16
  %v5293 = vrot.slane %v5291, 7
  %v5294 = vshll.u32 %v5122, 16
  %v5296 = vor.u32 %v5293, %v5294
  %v5297 = vsel %vm365, %v5289, %v5296
  %v5299 = vshrl.u32 %v5123, 16
  %v5301 = vrot.slane %v5299, 7
  %v5302 = vrot.slane %v5301, 4
  %v5304 = vshrl.u32 %v5124, 16
  %v5306 = vrot.slane %v5304, 7
  %v5307 = vshll.u32 %v5124, 16
  %v5309 = vor.u32 %v5306, %v5307
  %v5310 = vsel %vm365, %v5302, %v5309
  %v5312 = vshrl.u32 %v5125, 16
  %v5314 = vrot.slane %v5312, 7
  %v5315 = vrot.slane %v5314, 4
  %v5317 = vshrl.u32 %v5126, 16
  %v5319 = vrot.slane %v5317, 7
  %v5320 = vshll.u32 %v5126, 16
  %v5322 = vor.u32 %v5319, %v5320
  %v5323 = vsel %vm365, %v5315, %v5322
  %v5325 = vshrl.u32 %v5127, 16
  %v5327 = vrot.slane %v5325, 7
  %v5328 = vrot.slane %v5327, 4
  %v5330 = vshrl.u32 %v5128, 16
  %v5332 = vrot.slane %v5330, 7
  %v5333 = vshll.u32 %v5128, 16
  %v5335 = vor.u32 %v5332, %v5333
  %v5336 = vsel %vm365, %v5328, %v5335
  %s5337 = scalar_lea.vmem %s4, 192
  %v5338 = vld [vmem:[%s5337] sm:$0xf]
  %v5339 = vld [vmem:[%s5337 + $0x4] sm:$0xf]
  %v5340 = vld [vmem:[%s5337 + $0x8] sm:$0xf]
  %v5341 = vld [vmem:[%s5337 + $0xc] sm:$0xf]
  %v5342 = vld [vmem:[%s5337 + $0x10] sm:$0xf]
  %v5343 = vld [vmem:[%s5337 + $0x14] sm:$0xf]
  %v5344 = vld [vmem:[%s5337 + $0x18] sm:$0xf]
  %v5345 = vld [vmem:[%s5337 + $0x1c] sm:$0xf]
  %v5346 = vld [vmem:[%s5337 + $0x20] sm:$0xf]
  %v5347 = vld [vmem:[%s5337 + $0x24] sm:$0xf]
  %v5348 = vld [vmem:[%s5337 + $0x28] sm:$0xf]
  %v5349 = vld [vmem:[%s5337 + $0x2c] sm:$0xf]
  %v5350 = vld [vmem:[%s5337 + $0x30] sm:$0xf]
  %v5351 = vld [vmem:[%s5337 + $0x34] sm:$0xf]
  %v5352 = vld [vmem:[%s5337 + $0x38] sm:$0xf]
  %v5353 = vld [vmem:[%s5337 + $0x3c] sm:$0xf]
  %v5354 = vunpack.c.l.b16 %v5141
  %v5355 = vunpack.c.l.b16 %v5154
  %v5356 = vunpack.c.l.b16 %v5167
  %v5357 = vunpack.c.l.b16 %v5180
  %v5358 = vunpack.c.l.b16 %v5193
  %v5359 = vunpack.c.l.b16 %v5206
  %v5360 = vunpack.c.l.b16 %v5219
  %v5361 = vunpack.c.l.b16 %v5232
  %v5362 = vunpack.c.l.b16 %v5245
  %v5363 = vunpack.c.l.b16 %v5258
  %v5364 = vunpack.c.l.b16 %v5271
  %v5365 = vunpack.c.l.b16 %v5284
  %v5366 = vunpack.c.l.b16 %v5297
  %v5367 = vunpack.c.l.b16 %v5310
  %v5368 = vunpack.c.l.b16 %v5323
  %v5369 = vunpack.c.l.b16 %v5336
  %v5370 = vpack.c.b16 %v5355, %v5354
  %v5371 = vpack.c.b16 %v5357, %v5356
  %v5372 = vpack.c.b16 %v5359, %v5358
  %v5373 = vpack.c.b16 %v5361, %v5360
  %v5374 = vpack.c.b16 %v5363, %v5362
  %v5375 = vpack.c.b16 %v5365, %v5364
  %v5376 = vpack.c.b16 %v5367, %v5366
  %v5377 = vpack.c.b16 %v5369, %v5368
  %v5402 = vunpack.c.l.b16 %v5338
  %v5403 = vunpack.c.l.b16 %v5339
  %v5404 = vunpack.c.l.b16 %v5340
  %v5405 = vunpack.c.l.b16 %v5341
  %v5406 = vunpack.c.l.b16 %v5342
  %v5407 = vunpack.c.l.b16 %v5343
  %v5408 = vunpack.c.l.b16 %v5344
  %v5409 = vunpack.c.l.b16 %v5345
  %v5410 = vunpack.c.l.b16 %v5346
  %v5411 = vunpack.c.l.b16 %v5347
  %v5412 = vunpack.c.l.b16 %v5348
  %v5413 = vunpack.c.l.b16 %v5349
  %v5414 = vunpack.c.l.b16 %v5350
  %v5415 = vunpack.c.l.b16 %v5351
  %v5416 = vunpack.c.l.b16 %v5352
  %v5417 = vunpack.c.l.b16 %v5353
  %v5418 = vpack.c.b16 %v5403, %v5402
  %v5419 = vpack.c.b16 %v5405, %v5404
  %v5420 = vpack.c.b16 %v5407, %v5406
  %v5421 = vpack.c.b16 %v5409, %v5408
  %v5422 = vpack.c.b16 %v5411, %v5410
  %v5423 = vpack.c.b16 %v5413, %v5412
  %v5424 = vpack.c.b16 %v5415, %v5414
  %v5425 = vpack.c.b16 %v5417, %v5416
  %5434 = vmatprep.subr.bf16.mxu0 0
  %5435 = vmatpush1.bf16.msra.mxu0 %v5418
  %5436 = vmatprep.subr.bf16.mxu0 0
  %5437 = vmatpush1.bf16.msra.mxu0 %v5419
  %5438 = vmatprep.subr.bf16.mxu0 0
  %5439 = vmatpush1.bf16.msra.mxu0 %v5420
  %5440 = vmatprep.subr.bf16.mxu0 0
  %5441 = vmatpush1.bf16.msra.mxu0 %v5421
  %5442 = vmatprep.subr.bf16.mxu0 0
  %5443 = vmatpush1.bf16.msra.mxu0 %v5422
  %5444 = vmatprep.subr.bf16.mxu0 0
  %5445 = vmatpush1.bf16.msra.mxu0 %v5423
  %5446 = vmatprep.subr.bf16.mxu0 0
  %5447 = vmatpush1.bf16.msra.mxu0 %v5424
  %5448 = vmatprep.subr.bf16.mxu0 0
  %5449 = vmatpush1.bf16.msra.mxu0 %v5425
  %5450 = vmatprep.subr.bf16.mxu0 0
  %5451 = vmatpush1.bf16.msra.mxu0 0
  %5452 = vmatprep.subr.bf16.mxu0 0
  %5453 = vmatpush1.bf16.msra.mxu0 0
  %5454 = vmatprep.subr.bf16.mxu0 0
  %5455 = vmatpush1.bf16.msra.mxu0 0
  %5456 = vmatprep.subr.bf16.mxu0 0
  %5457 = vmatpush1.bf16.msra.mxu0 0
  %5458 = vmatprep.subr.bf16.mxu0 0
  %5459 = vmatpush1.bf16.msra.mxu0 0
  %5460 = vmatprep.subr.bf16.mxu0 0
  %5461 = vmatpush1.bf16.msra.mxu0 0
  %5462 = vmatprep.subr.bf16.mxu0 0
  %5463 = vmatpush1.bf16.msra.mxu0 0
  %5464 = vmatprep.subr.bf16.mxu0 0
  %5465 = vmatpush1.bf16.msra.mxu0 0
  %5466 = vmatprep.mubr.bf16.mxu0 0
  %5467 = vmatmul.mubr.bf16.gmra.mrb[0].mxu0 %v5370
  %v5468 = vpop.f32.mrb[0].mxu0
  %v5469 = vadd.f32 0.0, %v5468
  %v5470 = vpop.f32.mrb[0].mxu0
  %v5471 = vpop.f32.mrb[0].mxu0
  %v5472 = vadd.f32 0.0, %v5471
  %v5473 = vpop.f32.mrb[0].mxu0
  %5474 = vmatprep.mubr.bf16.mxu0 0
  %5475 = vmatmul.mubr.bf16.gmra.mrb[0].mxu0 %v5371
  %v5476 = vpop.f32.mrb[0].mxu0
  %v5477 = vadd.f32 0.0, %v5476
  %v5478 = vpop.f32.mrb[0].mxu0
  %v5479 = vpop.f32.mrb[0].mxu0
  %v5480 = vadd.f32 0.0, %v5479
  %v5481 = vpop.f32.mrb[0].mxu0
  %5482 = vmatprep.mubr.bf16.mxu0 0
  %5483 = vmatmul.mubr.bf16.gmra.mrb[0].mxu0 %v5372
  %v5484 = vpop.f32.mrb[0].mxu0
  %v5485 = vadd.f32 0.0, %v5484
  %v5486 = vpop.f32.mrb[0].mxu0
  %v5487 = vpop.f32.mrb[0].mxu0
  %v5488 = vadd.f32 0.0, %v5487
  %v5489 = vpop.f32.mrb[0].mxu0
  %5490 = vmatprep.mubr.bf16.mxu0 0
  %5491 = vmatmul.mubr.bf16.gmra.mrb[0].mxu0 %v5373
  %v5492 = vpop.f32.mrb[0].mxu0
  %v5493 = vadd.f32 0.0, %v5492
  %v5494 = vpop.f32.mrb[0].mxu0
  %v5495 = vpop.f32.mrb[0].mxu0
  %v5496 = vadd.f32 0.0, %v5495
  %v5497 = vpop.f32.mrb[0].mxu0
  %5498 = vmatprep.mubr.bf16.mxu0 0
  %5499 = vmatmul.mubr.bf16.gmra.mrb[0].mxu0 %v5374
  %v5500 = vpop.f32.mrb[0].mxu0
  %v5501 = vadd.f32 0.0, %v5500
  %v5502 = vpop.f32.mrb[0].mxu0
  %v5503 = vpop.f32.mrb[0].mxu0
  %v5504 = vadd.f32 0.0, %v5503
  %v5505 = vpop.f32.mrb[0].mxu0
  %5506 = vmatprep.mubr.bf16.mxu0 0
  %5507 = vmatmul.mubr.bf16.gmra.mrb[0].mxu0 %v5375
  %v5508 = vpop.f32.mrb[0].mxu0
  %v5509 = vadd.f32 0.0, %v5508
  %v5510 = vpop.f32.mrb[0].mxu0
  %v5511 = vpop.f32.mrb[0].mxu0
  %v5512 = vadd.f32 0.0, %v5511
  %v5513 = vpop.f32.mrb[0].mxu0
  %5514 = vmatprep.mubr.bf16.mxu0 0
  %5515 = vmatmul.mubr.bf16.gmra.mrb[0].mxu0 %v5376
  %v5516 = vpop.f32.mrb[0].mxu0
  %v5517 = vadd.f32 0.0, %v5516
  %v5518 = vpop.f32.mrb[0].mxu0
  %v5519 = vpop.f32.mrb[0].mxu0
  %v5520 = vadd.f32 0.0, %v5519
  %v5521 = vpop.f32.mrb[0].mxu0
  %5522 = vmatprep.mubr.bf16.mxu0 0
  %5523 = vmatmul.mubr.bf16.gmra.mrb[0].mxu0 %v5377
  %v5524 = vpop.f32.mrb[0].mxu0
  %v5525 = vadd.f32 0.0, %v5524
  %v5526 = vpop.f32.mrb[0].mxu0
  %v5527 = vpop.f32.mrb[0].mxu0
  %v5528 = vadd.f32 0.0, %v5527
  %v5529 = vpop.f32.mrb[0].mxu0
  %5530 = vdwg.mxu0
  %v5531 = vadd.f32 %v5081, %v5469
  %v5532 = vadd.f32 %v5082, %v5472
  %v5533 = vadd.f32 %v5083, %v5477
  %v5534 = vadd.f32 %v5084, %v5480
  %v5535 = vadd.f32 %v5085, %v5485
  %v5536 = vadd.f32 %v5086, %v5488
  %v5537 = vadd.f32 %v5087, %v5493
  %v5538 = vadd.f32 %v5088, %v5496
  %v5539 = vadd.f32 %v5089, %v5501
  %v5540 = vadd.f32 %v5090, %v5504
  %v5541 = vadd.f32 %v5091, %v5509
  %v5542 = vadd.f32 %v5092, %v5512
  %v5543 = vadd.f32 %v5093, %v5517
  %v5544 = vadd.f32 %v5094, %v5520
  %v5545 = vadd.f32 %v5095, %v5525
  %v5546 = vadd.f32 %v5096, %v5528
  %s5547 = scalar_lea.vmem %s4, 256
  %v5548 = vld [vmem:[%s5547] sm:$0xf]
  %v5549 = vld [vmem:[%s5547 + $0x4] sm:$0xf]
  %v5550 = vld [vmem:[%s5547 + $0x8] sm:$0xf]
  %v5551 = vld [vmem:[%s5547 + $0xc] sm:$0xf]
  %v5552 = vld [vmem:[%s5547 + $0x10] sm:$0xf]
  %v5553 = vld [vmem:[%s5547 + $0x14] sm:$0xf]
  %v5554 = vld [vmem:[%s5547 + $0x18] sm:$0xf]
  %v5555 = vld [vmem:[%s5547 + $0x1c] sm:$0xf]
  %v5556 = vld [vmem:[%s5547 + $0x20] sm:$0xf]
  %v5557 = vld [vmem:[%s5547 + $0x24] sm:$0xf]
  %v5558 = vld [vmem:[%s5547 + $0x28] sm:$0xf]
  %v5559 = vld [vmem:[%s5547 + $0x2c] sm:$0xf]
  %v5560 = vld [vmem:[%s5547 + $0x30] sm:$0xf]
  %v5561 = vld [vmem:[%s5547 + $0x34] sm:$0xf]
  %v5562 = vld [vmem:[%s5547 + $0x38] sm:$0xf]
  %v5563 = vld [vmem:[%s5547 + $0x3c] sm:$0xf]
  %v5580 = vunpack.c.l.b16 %v5098
  %v5581 = vunpack.c.l.b16 %v5100
  %v5582 = vunpack.c.l.b16 %v5102
  %v5583 = vunpack.c.l.b16 %v5104
  %v5584 = vunpack.c.l.b16 %v5106
  %v5585 = vunpack.c.l.b16 %v5108
  %v5586 = vunpack.c.l.b16 %v5110
  %v5587 = vunpack.c.l.b16 %v5112
  %v5588 = vunpack.c.l.b16 %v5114
  %v5589 = vunpack.c.l.b16 %v5116
  %v5590 = vunpack.c.l.b16 %v5118
  %v5591 = vunpack.c.l.b16 %v5120
  %v5592 = vunpack.c.l.b16 %v5122
  %v5593 = vunpack.c.l.b16 %v5124
  %v5594 = vunpack.c.l.b16 %v5126
  %v5595 = vunpack.c.l.b16 %v5128
  %v5596 = vpack.c.b16 %v5581, %v5580
  %v5597 = vpack.c.b16 %v5583, %v5582
  %v5598 = vpack.c.b16 %v5585, %v5584
  %v5599 = vpack.c.b16 %v5587, %v5586
  %v5600 = vpack.c.b16 %v5589, %v5588
  %v5601 = vpack.c.b16 %v5591, %v5590
  %v5602 = vpack.c.b16 %v5593, %v5592
  %v5603 = vpack.c.b16 %v5595, %v5594
  %v5628 = vunpack.c.l.b16 %v5548
  %v5629 = vunpack.c.l.b16 %v5549
  %v5630 = vunpack.c.l.b16 %v5550
  %v5631 = vunpack.c.l.b16 %v5551
  %v5632 = vunpack.c.l.b16 %v5552
  %v5633 = vunpack.c.l.b16 %v5553
  %v5634 = vunpack.c.l.b16 %v5554
  %v5635 = vunpack.c.l.b16 %v5555
  %v5636 = vunpack.c.l.b16 %v5556
  %v5637 = vunpack.c.l.b16 %v5557
  %v5638 = vunpack.c.l.b16 %v5558
  %v5639 = vunpack.c.l.b16 %v5559
  %v5640 = vunpack.c.l.b16 %v5560
  %v5641 = vunpack.c.l.b16 %v5561
  %v5642 = vunpack.c.l.b16 %v5562
  %v5643 = vunpack.c.l.b16 %v5563
  %v5644 = vpack.c.b16 %v5629, %v5628
  %v5645 = vpack.c.b16 %v5631, %v5630
  %v5646 = vpack.c.b16 %v5633, %v5632
  %v5647 = vpack.c.b16 %v5635, %v5634
  %v5648 = vpack.c.b16 %v5637, %v5636
  %v5649 = vpack.c.b16 %v5639, %v5638
  %v5650 = vpack.c.b16 %v5641, %v5640
  %v5651 = vpack.c.b16 %v5643, %v5642
  %5660 = vmatprep.subr.bf16.mxu0 0
  %5661 = vmatpush1.bf16.msra.mxu0 %v5644
  %5662 = vmatprep.subr.bf16.mxu0 0
  %5663 = vmatpush1.bf16.msra.mxu0 %v5645
  %5664 = vmatprep.subr.bf16.mxu0 0
  %5665 = vmatpush1.bf16.msra.mxu0 %v5646
  %5666 = vmatprep.subr.bf16.mxu0 0
  %5667 = vmatpush1.bf16.msra.mxu0 %v5647
  %5668 = vmatprep.subr.bf16.mxu0 0
  %5669 = vmatpush1.bf16.msra.mxu0 %v5648
  %5670 = vmatprep.subr.bf16.mxu0 0
  %5671 = vmatpush1.bf16.msra.mxu0 %v5649
  %5672 = vmatprep.subr.bf16.mxu0 0
  %5673 = vmatpush1.bf16.msra.mxu0 %v5650
  %5674 = vmatprep.subr.bf16.mxu0 0
  %5675 = vmatpush1.bf16.msra.mxu0 %v5651
  %5676 = vmatprep.subr.bf16.mxu0 0
  %5677 = vmatpush1.bf16.msra.mxu0 0
  %5678 = vmatprep.subr.bf16.mxu0 0
  %5679 = vmatpush1.bf16.msra.mxu0 0
  %5680 = vmatprep.subr.bf16.mxu0 0
  %5681 = vmatpush1.bf16.msra.mxu0 0
  %5682 = vmatprep.subr.bf16.mxu0 0
  %5683 = vmatpush1.bf16.msra.mxu0 0
  %5684 = vmatprep.subr.bf16.mxu0 0
  %5685 = vmatpush1.bf16.msra.mxu0 0
  %5686 = vmatprep.subr.bf16.mxu0 0
  %5687 = vmatpush1.bf16.msra.mxu0 0
  %5688 = vmatprep.subr.bf16.mxu0 0
  %5689 = vmatpush1.bf16.msra.mxu0 0
  %5690 = vmatprep.subr.bf16.mxu0 0
  %5691 = vmatpush1.bf16.msra.mxu0 0
  %5692 = vmatprep.mubr.bf16.mxu0 0
  %5693 = vmatmul.mubr.bf16.gmra.mrb[0].mxu0 %v5596
  %v5694 = vpop.f32.mrb[0].mxu0
  %v5695 = vadd.f32 0.0, %v5694
  %v5696 = vpop.f32.mrb[0].mxu0
  %v5697 = vpop.f32.mrb[0].mxu0
  %v5698 = vadd.f32 0.0, %v5697
  %v5699 = vpop.f32.mrb[0].mxu0
  %5700 = vmatprep.mubr.bf16.mxu0 0
  %5701 = vmatmul.mubr.bf16.gmra.mrb[0].mxu0 %v5597
  %v5702 = vpop.f32.mrb[0].mxu0
  %v5703 = vadd.f32 0.0, %v5702
  %v5704 = vpop.f32.mrb[0].mxu0
  %v5705 = vpop.f32.mrb[0].mxu0
  %v5706 = vadd.f32 0.0, %v5705
  %v5707 = vpop.f32.mrb[0].mxu0
  %5708 = vmatprep.mubr.bf16.mxu0 0
  %5709 = vmatmul.mubr.bf16.gmra.mrb[0].mxu0 %v5598
  %v5710 = vpop.f32.mrb[0].mxu0
  %v5711 = vadd.f32 0.0, %v5710
  %v5712 = vpop.f32.mrb[0].mxu0
  %v5713 = vpop.f32.mrb[0].mxu0
  %v5714 = vadd.f32 0.0, %v5713
  %v5715 = vpop.f32.mrb[0].mxu0
  %5716 = vmatprep.mubr.bf16.mxu0 0
  %5717 = vmatmul.mubr.bf16.gmra.mrb[0].mxu0 %v5599
  %v5718 = vpop.f32.mrb[0].mxu0
  %v5719 = vadd.f32 0.0, %v5718
  %v5720 = vpop.f32.mrb[0].mxu0
  %v5721 = vpop.f32.mrb[0].mxu0
  %v5722 = vadd.f32 0.0, %v5721
  %v5723 = vpop.f32.mrb[0].mxu0
  %5724 = vmatprep.mubr.bf16.mxu0 0
  %5725 = vmatmul.mubr.bf16.gmra.mrb[0].mxu0 %v5600
  %v5726 = vpop.f32.mrb[0].mxu0
  %v5727 = vadd.f32 0.0, %v5726
  %v5728 = vpop.f32.mrb[0].mxu0
  %v5729 = vpop.f32.mrb[0].mxu0
  %v5730 = vadd.f32 0.0, %v5729
  %v5731 = vpop.f32.mrb[0].mxu0
  %5732 = vmatprep.mubr.bf16.mxu0 0
  %5733 = vmatmul.mubr.bf16.gmra.mrb[0].mxu0 %v5601
  %v5734 = vpop.f32.mrb[0].mxu0
  %v5735 = vadd.f32 0.0, %v5734
  %v5736 = vpop.f32.mrb[0].mxu0
  %v5737 = vpop.f32.mrb[0].mxu0
  %v5738 = vadd.f32 0.0, %v5737
  %v5739 = vpop.f32.mrb[0].mxu0
  %5740 = vmatprep.mubr.bf16.mxu0 0
  %5741 = vmatmul.mubr.bf16.gmra.mrb[0].mxu0 %v5602
  %v5742 = vpop.f32.mrb[0].mxu0
  %v5743 = vadd.f32 0.0, %v5742
  %v5744 = vpop.f32.mrb[0].mxu0
  %v5745 = vpop.f32.mrb[0].mxu0
  %v5746 = vadd.f32 0.0, %v5745
  %v5747 = vpop.f32.mrb[0].mxu0
  %5748 = vmatprep.mubr.bf16.mxu0 0
  %5749 = vmatmul.mubr.bf16.gmra.mrb[0].mxu0 %v5603
  %v5750 = vpop.f32.mrb[0].mxu0
  %v5751 = vadd.f32 0.0, %v5750
  %v5752 = vpop.f32.mrb[0].mxu0
  %v5753 = vpop.f32.mrb[0].mxu0
  %v5754 = vadd.f32 0.0, %v5753
  %v5755 = vpop.f32.mrb[0].mxu0
  %5756 = vdwg.mxu0
  %v5757 = vadd.f32 %v5531, %v5695
  %v5758 = vadd.f32 %v5532, %v5698
  %v5759 = vadd.f32 %v5533, %v5703
  %v5760 = vadd.f32 %v5534, %v5706
  %v5761 = vadd.f32 %v5535, %v5711
  %v5762 = vadd.f32 %v5536, %v5714
  %v5763 = vadd.f32 %v5537, %v5719
  %v5764 = vadd.f32 %v5538, %v5722
  %v5765 = vadd.f32 %v5539, %v5727
  %v5766 = vadd.f32 %v5540, %v5730
  %v5767 = vadd.f32 %v5541, %v5735
  %v5768 = vadd.f32 %v5542, %v5738
  %v5769 = vadd.f32 %v5543, %v5743
  %v5770 = vadd.f32 %v5544, %v5746
  %v5771 = vadd.f32 %v5545, %v5751
  %v5772 = vadd.f32 %v5546, %v5754
  %v5773 = vld [vmem:[%s3891 + $0x4] sm:$0xf]
  %v5774 = vld [vmem:[%s3891 + $0x8] sm:$0x1]
  %v5775 = vld [vmem:[%s3891 + $0x10] sm:$0xf]
  %v5776 = vld [vmem:[%s3891 + $0x14] sm:$0x1]
  %v5777 = vld [vmem:[%s3891 + $0x1c] sm:$0xf]
  %v5778 = vld [vmem:[%s3891 + $0x20] sm:$0x1]
  %v5779 = vld [vmem:[%s3891 + $0x28] sm:$0xf]
  %v5780 = vld [vmem:[%s3891 + $0x2c] sm:$0x1]
  %v5781 = vld [vmem:[%s3891 + $0x34] sm:$0xf]
  %v5782 = vld [vmem:[%s3891 + $0x38] sm:$0x1]
  %v5783 = vld [vmem:[%s3891 + $0x40] sm:$0xf]
  %v5784 = vld [vmem:[%s3891 + $0x44] sm:$0x1]
  %v5785 = vld [vmem:[%s3891 + $0x4c] sm:$0xf]
  %v5786 = vld [vmem:[%s3891 + $0x50] sm:$0x1]
  %v5787 = vld [vmem:[%s3891 + $0x58] sm:$0xf]
  %v5788 = vld [vmem:[%s3891 + $0x5c] sm:$0x1]
  %v5789 = vld [vmem:[%s3891 + $0x7c] sm:$0xf]
  %v5790 = vld [vmem:[%s3891 + $0x80] sm:$0x1]
  %v5791 = vld [vmem:[%s3891 + $0x88] sm:$0xf]
  %v5792 = vld [vmem:[%s3891 + $0x8c] sm:$0x1]
  %v5793 = vld [vmem:[%s3891 + $0x94] sm:$0xf]
  %v5794 = vld [vmem:[%s3891 + $0x98] sm:$0x1]
  %v5795 = vld [vmem:[%s3891 + $0xa0] sm:$0xf]
  %v5796 = vld [vmem:[%s3891 + $0xa4] sm:$0x1]
  %v5797 = vld [vmem:[%s3891 + $0xac] sm:$0xf]
  %v5798 = vld [vmem:[%s3891 + $0xb0] sm:$0x1]
  %v5799 = vld [vmem:[%s3891 + $0xb8] sm:$0xf]
  %v5800 = vld [vmem:[%s3891 + $0xbc] sm:$0x1]
  %v5801 = vld [vmem:[%s3891 + $0xc4] sm:$0xf]
  %v5802 = vld [vmem:[%s3891 + $0xc8] sm:$0x1]
  %v5803 = vld [vmem:[%s3891 + $0xd0] sm:$0xf]
  %v5804 = vld [vmem:[%s3891 + $0xd4] sm:$0x1]
  %v5806 = vshrl.u32 %v5773, 16
  %v5808 = vrot.slane %v5806, 4
  %v5809 = vshll.u32 %v5773, 16
  %v5811 = vrot.slane %v5809, 5
  %v5812 = vor.u32 %v5808, %v5811
  %v5813 = vrot.slane %v5812, 4
  %v5815 = vshll.u32 %v5774, 16
  %v5817 = vrot.slane %v5815, 5
  %v5818 = vsel %vm1011, %v5813, %v5817
  %v5820 = vshrl.u32 %v5775, 16
  %v5822 = vrot.slane %v5820, 4
  %v5823 = vshll.u32 %v5775, 16
  %v5825 = vrot.slane %v5823, 5
  %v5826 = vor.u32 %v5822, %v5825
  %v5827 = vrot.slane %v5826, 4
  %v5829 = vshll.u32 %v5776, 16
  %v5831 = vrot.slane %v5829, 5
  %v5832 = vsel %vm1011, %v5827, %v5831
  %v5834 = vshrl.u32 %v5777, 16
  %v5836 = vrot.slane %v5834, 4
  %v5837 = vshll.u32 %v5777, 16
  %v5839 = vrot.slane %v5837, 5
  %v5840 = vor.u32 %v5836, %v5839
  %v5841 = vrot.slane %v5840, 4
  %v5843 = vshll.u32 %v5778, 16
  %v5845 = vrot.slane %v5843, 5
  %v5846 = vsel %vm1011, %v5841, %v5845
  %v5848 = vshrl.u32 %v5779, 16
  %v5850 = vrot.slane %v5848, 4
  %v5851 = vshll.u32 %v5779, 16
  %v5853 = vrot.slane %v5851, 5
  %v5854 = vor.u32 %v5850, %v5853
  %v5855 = vrot.slane %v5854, 4
  %v5857 = vshll.u32 %v5780, 16
  %v5859 = vrot.slane %v5857, 5
  %v5860 = vsel %vm1011, %v5855, %v5859
  %v5862 = vshrl.u32 %v5781, 16
  %v5864 = vrot.slane %v5862, 4
  %v5865 = vshll.u32 %v5781, 16
  %v5867 = vrot.slane %v5865, 5
  %v5868 = vor.u32 %v5864, %v5867
  %v5869 = vrot.slane %v5868, 4
  %v5871 = vshll.u32 %v5782, 16
  %v5873 = vrot.slane %v5871, 5
  %v5874 = vsel %vm1011, %v5869, %v5873
  %v5876 = vshrl.u32 %v5783, 16
  %v5878 = vrot.slane %v5876, 4
  %v5879 = vshll.u32 %v5783, 16
  %v5881 = vrot.slane %v5879, 5
  %v5882 = vor.u32 %v5878, %v5881
  %v5883 = vrot.slane %v5882, 4
  %v5885 = vshll.u32 %v5784, 16
  %v5887 = vrot.slane %v5885, 5
  %v5888 = vsel %vm1011, %v5883, %v5887
  %v5890 = vshrl.u32 %v5785, 16
  %v5892 = vrot.slane %v5890, 4
  %v5893 = vshll.u32 %v5785, 16
  %v5895 = vrot.slane %v5893, 5
  %v5896 = vor.u32 %v5892, %v5895
  %v5897 = vrot.slane %v5896, 4
  %v5899 = vshll.u32 %v5786, 16
  %v5901 = vrot.slane %v5899, 5
  %v5902 = vsel %vm1011, %v5897, %v5901
  %v5904 = vshrl.u32 %v5787, 16
  %v5906 = vrot.slane %v5904, 4
  %v5907 = vshll.u32 %v5787, 16
  %v5909 = vrot.slane %v5907, 5
  %v5910 = vor.u32 %v5906, %v5909
  %v5911 = vrot.slane %v5910, 4
  %v5913 = vshll.u32 %v5788, 16
  %v5915 = vrot.slane %v5913, 5
  %v5916 = vsel %vm1011, %v5911, %v5915
  %v5918 = vshrl.u32 %v5789, 16
  %v5920 = vrot.slane %v5918, 4
  %v5921 = vshll.u32 %v5789, 16
  %v5923 = vrot.slane %v5921, 5
  %v5924 = vor.u32 %v5920, %v5923
  %v5925 = vrot.slane %v5924, 4
  %v5927 = vshll.u32 %v5790, 16
  %v5929 = vrot.slane %v5927, 5
  %v5930 = vsel %vm1011, %v5925, %v5929
  %v5932 = vshrl.u32 %v5791, 16
  %v5934 = vrot.slane %v5932, 4
  %v5935 = vshll.u32 %v5791, 16
  %v5937 = vrot.slane %v5935, 5
  %v5938 = vor.u32 %v5934, %v5937
  %v5939 = vrot.slane %v5938, 4
  %v5941 = vshll.u32 %v5792, 16
  %v5943 = vrot.slane %v5941, 5
  %v5944 = vsel %vm1011, %v5939, %v5943
  %v5946 = vshrl.u32 %v5793, 16
  %v5948 = vrot.slane %v5946, 4
  %v5949 = vshll.u32 %v5793, 16
  %v5951 = vrot.slane %v5949, 5
  %v5952 = vor.u32 %v5948, %v5951
  %v5953 = vrot.slane %v5952, 4
  %v5955 = vshll.u32 %v5794, 16
  %v5957 = vrot.slane %v5955, 5
  %v5958 = vsel %vm1011, %v5953, %v5957
  %v5960 = vshrl.u32 %v5795, 16
  %v5962 = vrot.slane %v5960, 4
  %v5963 = vshll.u32 %v5795, 16
  %v5965 = vrot.slane %v5963, 5
  %v5966 = vor.u32 %v5962, %v5965
  %v5967 = vrot.slane %v5966, 4
  %v5969 = vshll.u32 %v5796, 16
  %v5971 = vrot.slane %v5969, 5
  %v5972 = vsel %vm1011, %v5967, %v5971
  %v5974 = vshrl.u32 %v5797, 16
  %v5976 = vrot.slane %v5974, 4
  %v5977 = vshll.u32 %v5797, 16
  %v5979 = vrot.slane %v5977, 5
  %v5980 = vor.u32 %v5976, %v5979
  %v5981 = vrot.slane %v5980, 4
  %v5983 = vshll.u32 %v5798, 16
  %v5985 = vrot.slane %v5983, 5
  %v5986 = vsel %vm1011, %v5981, %v5985
  %v5988 = vshrl.u32 %v5799, 16
  %v5990 = vrot.slane %v5988, 4
  %v5991 = vshll.u32 %v5799, 16
  %v5993 = vrot.slane %v5991, 5
  %v5994 = vor.u32 %v5990, %v5993
  %v5995 = vrot.slane %v5994, 4
  %v5997 = vshll.u32 %v5800, 16
  %v5999 = vrot.slane %v5997, 5
  %v6000 = vsel %vm1011, %v5995, %v5999
  %v6002 = vshrl.u32 %v5801, 16
  %v6004 = vrot.slane %v6002, 4
  %v6005 = vshll.u32 %v5801, 16
  %v6007 = vrot.slane %v6005, 5
  %v6008 = vor.u32 %v6004, %v6007
  %v6009 = vrot.slane %v6008, 4
  %v6011 = vshll.u32 %v5802, 16
  %v6013 = vrot.slane %v6011, 5
  %v6014 = vsel %vm1011, %v6009, %v6013
  %v6016 = vshrl.u32 %v5803, 16
  %v6018 = vrot.slane %v6016, 4
  %v6019 = vshll.u32 %v5803, 16
  %v6021 = vrot.slane %v6019, 5
  %v6022 = vor.u32 %v6018, %v6021
  %v6023 = vrot.slane %v6022, 4
  %v6025 = vshll.u32 %v5804, 16
  %v6027 = vrot.slane %v6025, 5
  %v6028 = vsel %vm1011, %v6023, %v6027
  %s6029 = scalar_lea.vmem %s4, 320
  %v6030 = vld [vmem:[%s6029] sm:$0xf]
  %v6031 = vld [vmem:[%s6029 + $0x4] sm:$0xf]
  %v6032 = vld [vmem:[%s6029 + $0x8] sm:$0xf]
  %v6033 = vld [vmem:[%s6029 + $0xc] sm:$0xf]
  %v6034 = vld [vmem:[%s6029 + $0x10] sm:$0xf]
  %v6035 = vld [vmem:[%s6029 + $0x14] sm:$0xf]
  %v6036 = vld [vmem:[%s6029 + $0x18] sm:$0xf]
  %v6037 = vld [vmem:[%s6029 + $0x1c] sm:$0xf]
  %v6038 = vld [vmem:[%s6029 + $0x20] sm:$0xf]
  %v6039 = vld [vmem:[%s6029 + $0x24] sm:$0xf]
  %v6040 = vld [vmem:[%s6029 + $0x28] sm:$0xf]
  %v6041 = vld [vmem:[%s6029 + $0x2c] sm:$0xf]
  %v6042 = vld [vmem:[%s6029 + $0x30] sm:$0xf]
  %v6043 = vld [vmem:[%s6029 + $0x34] sm:$0xf]
  %v6044 = vld [vmem:[%s6029 + $0x38] sm:$0xf]
  %v6045 = vld [vmem:[%s6029 + $0x3c] sm:$0xf]
  %v6046 = vunpack.c.l.b16 %v5818
  %v6047 = vunpack.c.l.b16 %v5832
  %v6048 = vunpack.c.l.b16 %v5846
  %v6049 = vunpack.c.l.b16 %v5860
  %v6050 = vunpack.c.l.b16 %v5874
  %v6051 = vunpack.c.l.b16 %v5888
  %v6052 = vunpack.c.l.b16 %v5902
  %v6053 = vunpack.c.l.b16 %v5916
  %v6054 = vunpack.c.l.b16 %v5930
  %v6055 = vunpack.c.l.b16 %v5944
  %v6056 = vunpack.c.l.b16 %v5958
  %v6057 = vunpack.c.l.b16 %v5972
  %v6058 = vunpack.c.l.b16 %v5986
  %v6059 = vunpack.c.l.b16 %v6000
  %v6060 = vunpack.c.l.b16 %v6014
  %v6061 = vunpack.c.l.b16 %v6028
  %v6062 = vpack.c.b16 %v6047, %v6046
  %v6063 = vpack.c.b16 %v6049, %v6048
  %v6064 = vpack.c.b16 %v6051, %v6050
  %v6065 = vpack.c.b16 %v6053, %v6052
  %v6066 = vpack.c.b16 %v6055, %v6054
  %v6067 = vpack.c.b16 %v6057, %v6056
  %v6068 = vpack.c.b16 %v6059, %v6058
  %v6069 = vpack.c.b16 %v6061, %v6060
  %v6094 = vunpack.c.l.b16 %v6030
  %v6095 = vunpack.c.l.b16 %v6031
  %v6096 = vunpack.c.l.b16 %v6032
  %v6097 = vunpack.c.l.b16 %v6033
  %v6098 = vunpack.c.l.b16 %v6034
  %v6099 = vunpack.c.l.b16 %v6035
  %v6100 = vunpack.c.l.b16 %v6036
  %v6101 = vunpack.c.l.b16 %v6037
  %v6102 = vunpack.c.l.b16 %v6038
  %v6103 = vunpack.c.l.b16 %v6039
  %v6104 = vunpack.c.l.b16 %v6040
  %v6105 = vunpack.c.l.b16 %v6041
  %v6106 = vunpack.c.l.b16 %v6042
  %v6107 = vunpack.c.l.b16 %v6043
  %v6108 = vunpack.c.l.b16 %v6044
  %v6109 = vunpack.c.l.b16 %v6045
  %v6110 = vpack.c.b16 %v6095, %v6094
  %v6111 = vpack.c.b16 %v6097, %v6096
  %v6112 = vpack.c.b16 %v6099, %v6098
  %v6113 = vpack.c.b16 %v6101, %v6100
  %v6114 = vpack.c.b16 %v6103, %v6102
  %v6115 = vpack.c.b16 %v6105, %v6104
  %v6116 = vpack.c.b16 %v6107, %v6106
  %v6117 = vpack.c.b16 %v6109, %v6108
  %6126 = vmatprep.subr.bf16.mxu0 0
  %6127 = vmatpush1.bf16.msra.mxu0 %v6110
  %6128 = vmatprep.subr.bf16.mxu0 0
  %6129 = vmatpush1.bf16.msra.mxu0 %v6111
  %6130 = vmatprep.subr.bf16.mxu0 0
  %6131 = vmatpush1.bf16.msra.mxu0 %v6112
  %6132 = vmatprep.subr.bf16.mxu0 0
  %6133 = vmatpush1.bf16.msra.mxu0 %v6113
  %6134 = vmatprep.subr.bf16.mxu0 0
  %6135 = vmatpush1.bf16.msra.mxu0 %v6114
  %6136 = vmatprep.subr.bf16.mxu0 0
  %6137 = vmatpush1.bf16.msra.mxu0 %v6115
  %6138 = vmatprep.subr.bf16.mxu0 0
  %6139 = vmatpush1.bf16.msra.mxu0 %v6116
  %6140 = vmatprep.subr.bf16.mxu0 0
  %6141 = vmatpush1.bf16.msra.mxu0 %v6117
  %6142 = vmatprep.subr.bf16.mxu0 0
  %6143 = vmatpush1.bf16.msra.mxu0 0
  %6144 = vmatprep.subr.bf16.mxu0 0
  %6145 = vmatpush1.bf16.msra.mxu0 0
  %6146 = vmatprep.subr.bf16.mxu0 0
  %6147 = vmatpush1.bf16.msra.mxu0 0
  %6148 = vmatprep.subr.bf16.mxu0 0
  %6149 = vmatpush1.bf16.msra.mxu0 0
  %6150 = vmatprep.subr.bf16.mxu0 0
  %6151 = vmatpush1.bf16.msra.mxu0 0
  %6152 = vmatprep.subr.bf16.mxu0 0
  %6153 = vmatpush1.bf16.msra.mxu0 0
  %6154 = vmatprep.subr.bf16.mxu0 0
  %6155 = vmatpush1.bf16.msra.mxu0 0
  %6156 = vmatprep.subr.bf16.mxu0 0
  %6157 = vmatpush1.bf16.msra.mxu0 0
  %6158 = vmatprep.mubr.bf16.mxu0 0
  %6159 = vmatmul.mubr.bf16.gmra.mrb[0].mxu0 %v6062
  %v6160 = vpop.f32.mrb[0].mxu0
  %v6161 = vadd.f32 0.0, %v6160
  %v6162 = vpop.f32.mrb[0].mxu0
  %v6163 = vpop.f32.mrb[0].mxu0
  %v6164 = vadd.f32 0.0, %v6163
  %v6165 = vpop.f32.mrb[0].mxu0
  %6166 = vmatprep.mubr.bf16.mxu0 0
  %6167 = vmatmul.mubr.bf16.gmra.mrb[0].mxu0 %v6063
  %v6168 = vpop.f32.mrb[0].mxu0
  %v6169 = vadd.f32 0.0, %v6168
  %v6170 = vpop.f32.mrb[0].mxu0
  %v6171 = vpop.f32.mrb[0].mxu0
  %v6172 = vadd.f32 0.0, %v6171
  %v6173 = vpop.f32.mrb[0].mxu0
  %6174 = vmatprep.mubr.bf16.mxu0 0
  %6175 = vmatmul.mubr.bf16.gmra.mrb[0].mxu0 %v6064
  %v6176 = vpop.f32.mrb[0].mxu0
  %v6177 = vadd.f32 0.0, %v6176
  %v6178 = vpop.f32.mrb[0].mxu0
  %v6179 = vpop.f32.mrb[0].mxu0
  %v6180 = vadd.f32 0.0, %v6179
  %v6181 = vpop.f32.mrb[0].mxu0
  %6182 = vmatprep.mubr.bf16.mxu0 0
  %6183 = vmatmul.mubr.bf16.gmra.mrb[0].mxu0 %v6065
  %v6184 = vpop.f32.mrb[0].mxu0
  %v6185 = vadd.f32 0.0, %v6184
  %v6186 = vpop.f32.mrb[0].mxu0
  %v6187 = vpop.f32.mrb[0].mxu0
  %v6188 = vadd.f32 0.0, %v6187
  %v6189 = vpop.f32.mrb[0].mxu0
  %6190 = vmatprep.mubr.bf16.mxu0 0
  %6191 = vmatmul.mubr.bf16.gmra.mrb[0].mxu0 %v6066
  %v6192 = vpop.f32.mrb[0].mxu0
  %v6193 = vadd.f32 0.0, %v6192
  %v6194 = vpop.f32.mrb[0].mxu0
  %v6195 = vpop.f32.mrb[0].mxu0
  %v6196 = vadd.f32 0.0, %v6195
  %v6197 = vpop.f32.mrb[0].mxu0
  %6198 = vmatprep.mubr.bf16.mxu0 0
  %6199 = vmatmul.mubr.bf16.gmra.mrb[0].mxu0 %v6067
  %v6200 = vpop.f32.mrb[0].mxu0
  %v6201 = vadd.f32 0.0, %v6200
  %v6202 = vpop.f32.mrb[0].mxu0
  %v6203 = vpop.f32.mrb[0].mxu0
  %v6204 = vadd.f32 0.0, %v6203
  %v6205 = vpop.f32.mrb[0].mxu0
  %6206 = vmatprep.mubr.bf16.mxu0 0
  %6207 = vmatmul.mubr.bf16.gmra.mrb[0].mxu0 %v6068
  %v6208 = vpop.f32.mrb[0].mxu0
  %v6209 = vadd.f32 0.0, %v6208
  %v6210 = vpop.f32.mrb[0].mxu0
  %v6211 = vpop.f32.mrb[0].mxu0
  %v6212 = vadd.f32 0.0, %v6211
  %v6213 = vpop.f32.mrb[0].mxu0
  %6214 = vmatprep.mubr.bf16.mxu0 0
  %6215 = vmatmul.mubr.bf16.gmra.mrb[0].mxu0 %v6069
  %v6216 = vpop.f32.mrb[0].mxu0
  %v6217 = vadd.f32 0.0, %v6216
  %v6218 = vpop.f32.mrb[0].mxu0
  %v6219 = vpop.f32.mrb[0].mxu0
  %v6220 = vadd.f32 0.0, %v6219
  %v6221 = vpop.f32.mrb[0].mxu0
  %6222 = vdwg.mxu0
  %v6223 = vadd.f32 %v5757, %v6161
  %v6224 = vadd.f32 %v5758, %v6164
  %v6225 = vadd.f32 %v5759, %v6169
  %v6226 = vadd.f32 %v5760, %v6172
  %v6227 = vadd.f32 %v5761, %v6177
  %v6228 = vadd.f32 %v5762, %v6180
  %v6229 = vadd.f32 %v5763, %v6185
  %v6230 = vadd.f32 %v5764, %v6188
  %v6231 = vadd.f32 %v5765, %v6193
  %v6232 = vadd.f32 %v5766, %v6196
  %v6233 = vadd.f32 %v5767, %v6201
  %v6234 = vadd.f32 %v5768, %v6204
  %v6235 = vadd.f32 %v5769, %v6209
  %v6236 = vadd.f32 %v5770, %v6212
  %v6237 = vadd.f32 %v5771, %v6217
  %v6238 = vadd.f32 %v5772, %v6220
  %s6239 = scalar_lea.vmem [#allocation3], 24
  %v6240 = vld [vmem:[%s6239] sm:$0x8]
  %v6241 = vld [vmem:[%s6239 + $0x4] sm:$0xf]
  %v6242 = vld [vmem:[%s6239 + $0xc] sm:$0x8]
  %v6243 = vld [vmem:[%s6239 + $0x10] sm:$0xf]
  %v6244 = vld [vmem:[%s6239 + $0x18] sm:$0x8]
  %v6245 = vld [vmem:[%s6239 + $0x1c] sm:$0xf]
  %v6246 = vld [vmem:[%s6239 + $0x24] sm:$0x8]
  %v6247 = vld [vmem:[%s6239 + $0x28] sm:$0xf]
  %v6248 = vld [vmem:[%s6239 + $0x30] sm:$0x8]
  %v6249 = vld [vmem:[%s6239 + $0x34] sm:$0xf]
  %v6250 = vld [vmem:[%s6239 + $0x3c] sm:$0x8]
  %v6251 = vld [vmem:[%s6239 + $0x40] sm:$0xf]
  %v6252 = vld [vmem:[%s6239 + $0x48] sm:$0x8]
  %v6253 = vld [vmem:[%s6239 + $0x4c] sm:$0xf]
  %v6254 = vld [vmem:[%s6239 + $0x54] sm:$0x8]
  %v6255 = vld [vmem:[%s6239 + $0x58] sm:$0xf]
  %v6256 = vld [vmem:[%s6239 + $0x78] sm:$0x8]
  %v6257 = vld [vmem:[%s6239 + $0x7c] sm:$0xf]
  %v6258 = vld [vmem:[%s6239 + $0x84] sm:$0x8]
  %v6259 = vld [vmem:[%s6239 + $0x88] sm:$0xf]
  %v6260 = vld [vmem:[%s6239 + $0x90] sm:$0x8]
  %v6261 = vld [vmem:[%s6239 + $0x94] sm:$0xf]
  %v6262 = vld [vmem:[%s6239 + $0x9c] sm:$0x8]
  %v6263 = vld [vmem:[%s6239 + $0xa0] sm:$0xf]
  %v6264 = vld [vmem:[%s6239 + $0xa8] sm:$0x8]
  %v6265 = vld [vmem:[%s6239 + $0xac] sm:$0xf]
  %v6266 = vld [vmem:[%s6239 + $0xb4] sm:$0x8]
  %v6267 = vld [vmem:[%s6239 + $0xb8] sm:$0xf]
  %v6268 = vld [vmem:[%s6239 + $0xc0] sm:$0x8]
  %v6269 = vld [vmem:[%s6239 + $0xc4] sm:$0xf]
  %v6270 = vld [vmem:[%s6239 + $0xcc] sm:$0x8]
  %v6271 = vld [vmem:[%s6239 + $0xd0] sm:$0xf]
  %v6273 = vshrl.u32 %v6240, 16
  %v6275 = vrot.slane %v6273, 7
  %v6276 = vrot.slane %v6275, 4
  %v6278 = vshrl.u32 %v6241, 16
  %v6280 = vrot.slane %v6278, 7
  %v6281 = vshll.u32 %v6241, 16
  %v6283 = vor.u32 %v6280, %v6281
  %v6284 = vsel %vm365, %v6276, %v6283
  %v6286 = vshrl.u32 %v6242, 16
  %v6288 = vrot.slane %v6286, 7
  %v6289 = vrot.slane %v6288, 4
  %v6291 = vshrl.u32 %v6243, 16
  %v6293 = vrot.slane %v6291, 7
  %v6294 = vshll.u32 %v6243, 16
  %v6296 = vor.u32 %v6293, %v6294
  %v6297 = vsel %vm365, %v6289, %v6296
  %v6299 = vshrl.u32 %v6244, 16
  %v6301 = vrot.slane %v6299, 7
  %v6302 = vrot.slane %v6301, 4
  %v6304 = vshrl.u32 %v6245, 16
  %v6306 = vrot.slane %v6304, 7
  %v6307 = vshll.u32 %v6245, 16
  %v6309 = vor.u32 %v6306, %v6307
  %v6310 = vsel %vm365, %v6302, %v6309
  %v6312 = vshrl.u32 %v6246, 16
  %v6314 = vrot.slane %v6312, 7
  %v6315 = vrot.slane %v6314, 4
  %v6317 = vshrl.u32 %v6247, 16
  %v6319 = vrot.slane %v6317, 7
  %v6320 = vshll.u32 %v6247, 16
  %v6322 = vor.u32 %v6319, %v6320
  %v6323 = vsel %vm365, %v6315, %v6322
  %v6325 = vshrl.u32 %v6248, 16
  %v6327 = vrot.slane %v6325, 7
  %v6328 = vrot.slane %v6327, 4
  %v6330 = vshrl.u32 %v6249, 16
  %v6332 = vrot.slane %v6330, 7
  %v6333 = vshll.u32 %v6249, 16
  %v6335 = vor.u32 %v6332, %v6333
  %v6336 = vsel %vm365, %v6328, %v6335
  %v6338 = vshrl.u32 %v6250, 16
  %v6340 = vrot.slane %v6338, 7
  %v6341 = vrot.slane %v6340, 4
  %v6343 = vshrl.u32 %v6251, 16
  %v6345 = vrot.slane %v6343, 7
  %v6346 = vshll.u32 %v6251, 16
  %v6348 = vor.u32 %v6345, %v6346
  %v6349 = vsel %vm365, %v6341, %v6348
  %v6351 = vshrl.u32 %v6252, 16
  %v6353 = vrot.slane %v6351, 7
  %v6354 = vrot.slane %v6353, 4
  %v6356 = vshrl.u32 %v6253, 16
  %v6358 = vrot.slane %v6356, 7
  %v6359 = vshll.u32 %v6253, 16
  %v6361 = vor.u32 %v6358, %v6359
  %v6362 = vsel %vm365, %v6354, %v6361
  %v6364 = vshrl.u32 %v6254, 16
  %v6366 = vrot.slane %v6364, 7
  %v6367 = vrot.slane %v6366, 4
  %v6369 = vshrl.u32 %v6255, 16
  %v6371 = vrot.slane %v6369, 7
  %v6372 = vshll.u32 %v6255, 16
  %v6374 = vor.u32 %v6371, %v6372
  %v6375 = vsel %vm365, %v6367, %v6374
  %v6377 = vshrl.u32 %v6256, 16
  %v6379 = vrot.slane %v6377, 7
  %v6380 = vrot.slane %v6379, 4
  %v6382 = vshrl.u32 %v6257, 16
  %v6384 = vrot.slane %v6382, 7
  %v6385 = vshll.u32 %v6257, 16
  %v6387 = vor.u32 %v6384, %v6385
  %v6388 = vsel %vm365, %v6380, %v6387
  %v6390 = vshrl.u32 %v6258, 16
  %v6392 = vrot.slane %v6390, 7
  %v6393 = vrot.slane %v6392, 4
  %v6395 = vshrl.u32 %v6259, 16
  %v6397 = vrot.slane %v6395, 7
  %v6398 = vshll.u32 %v6259, 16
  %v6400 = vor.u32 %v6397, %v6398
  %v6401 = vsel %vm365, %v6393, %v6400
  %v6403 = vshrl.u32 %v6260, 16
  %v6405 = vrot.slane %v6403, 7
  %v6406 = vrot.slane %v6405, 4
  %v6408 = vshrl.u32 %v6261, 16
  %v6410 = vrot.slane %v6408, 7
  %v6411 = vshll.u32 %v6261, 16
  %v6413 = vor.u32 %v6410, %v6411
  %v6414 = vsel %vm365, %v6406, %v6413
  %v6416 = vshrl.u32 %v6262, 16
  %v6418 = vrot.slane %v6416, 7
  %v6419 = vrot.slane %v6418, 4
  %v6421 = vshrl.u32 %v6263, 16
  %v6423 = vrot.slane %v6421, 7
  %v6424 = vshll.u32 %v6263, 16
  %v6426 = vor.u32 %v6423, %v6424
  %v6427 = vsel %vm365, %v6419, %v6426
  %v6429 = vshrl.u32 %v6264, 16
  %v6431 = vrot.slane %v6429, 7
  %v6432 = vrot.slane %v6431, 4
  %v6434 = vshrl.u32 %v6265, 16
  %v6436 = vrot.slane %v6434, 7
  %v6437 = vshll.u32 %v6265, 16
  %v6439 = vor.u32 %v6436, %v6437
  %v6440 = vsel %vm365, %v6432, %v6439
  %v6442 = vshrl.u32 %v6266, 16
  %v6444 = vrot.slane %v6442, 7
  %v6445 = vrot.slane %v6444, 4
  %v6447 = vshrl.u32 %v6267, 16
  %v6449 = vrot.slane %v6447, 7
  %v6450 = vshll.u32 %v6267, 16
  %v6452 = vor.u32 %v6449, %v6450
  %v6453 = vsel %vm365, %v6445, %v6452
  %v6455 = vshrl.u32 %v6268, 16
  %v6457 = vrot.slane %v6455, 7
  %v6458 = vrot.slane %v6457, 4
  %v6460 = vshrl.u32 %v6269, 16
  %v6462 = vrot.slane %v6460, 7
  %v6463 = vshll.u32 %v6269, 16
  %v6465 = vor.u32 %v6462, %v6463
  %v6466 = vsel %vm365, %v6458, %v6465
  %v6468 = vshrl.u32 %v6270, 16
  %v6470 = vrot.slane %v6468, 7
  %v6471 = vrot.slane %v6470, 4
  %v6473 = vshrl.u32 %v6271, 16
  %v6475 = vrot.slane %v6473, 7
  %v6476 = vshll.u32 %v6271, 16
  %v6478 = vor.u32 %v6475, %v6476
  %v6479 = vsel %vm365, %v6471, %v6478
  %s6480 = scalar_lea.vmem %s4, 384
  %v6481 = vld [vmem:[%s6480] sm:$0xf]
  %v6482 = vld [vmem:[%s6480 + $0x4] sm:$0xf]
  %v6483 = vld [vmem:[%s6480 + $0x8] sm:$0xf]
  %v6484 = vld [vmem:[%s6480 + $0xc] sm:$0xf]
  %v6485 = vld [vmem:[%s6480 + $0x10] sm:$0xf]
  %v6486 = vld [vmem:[%s6480 + $0x14] sm:$0xf]
  %v6487 = vld [vmem:[%s6480 + $0x18] sm:$0xf]
  %v6488 = vld [vmem:[%s6480 + $0x1c] sm:$0xf]
  %v6489 = vld [vmem:[%s6480 + $0x20] sm:$0xf]
  %v6490 = vld [vmem:[%s6480 + $0x24] sm:$0xf]
  %v6491 = vld [vmem:[%s6480 + $0x28] sm:$0xf]
  %v6492 = vld [vmem:[%s6480 + $0x2c] sm:$0xf]
  %v6493 = vld [vmem:[%s6480 + $0x30] sm:$0xf]
  %v6494 = vld [vmem:[%s6480 + $0x34] sm:$0xf]
  %v6495 = vld [vmem:[%s6480 + $0x38] sm:$0xf]
  %v6496 = vld [vmem:[%s6480 + $0x3c] sm:$0xf]
  %v6497 = vunpack.c.l.b16 %v6284
  %v6498 = vunpack.c.l.b16 %v6297
  %v6499 = vunpack.c.l.b16 %v6310
  %v6500 = vunpack.c.l.b16 %v6323
  %v6501 = vunpack.c.l.b16 %v6336
  %v6502 = vunpack.c.l.b16 %v6349
  %v6503 = vunpack.c.l.b16 %v6362
  %v6504 = vunpack.c.l.b16 %v6375
  %v6505 = vunpack.c.l.b16 %v6388
  %v6506 = vunpack.c.l.b16 %v6401
  %v6507 = vunpack.c.l.b16 %v6414
  %v6508 = vunpack.c.l.b16 %v6427
  %v6509 = vunpack.c.l.b16 %v6440
  %v6510 = vunpack.c.l.b16 %v6453
  %v6511 = vunpack.c.l.b16 %v6466
  %v6512 = vunpack.c.l.b16 %v6479
  %v6513 = vpack.c.b16 %v6498, %v6497
  %v6514 = vpack.c.b16 %v6500, %v6499
  %v6515 = vpack.c.b16 %v6502, %v6501
  %v6516 = vpack.c.b16 %v6504, %v6503
  %v6517 = vpack.c.b16 %v6506, %v6505
  %v6518 = vpack.c.b16 %v6508, %v6507
  %v6519 = vpack.c.b16 %v6510, %v6509
  %v6520 = vpack.c.b16 %v6512, %v6511
  %v6545 = vunpack.c.l.b16 %v6481
  %v6546 = vunpack.c.l.b16 %v6482
  %v6547 = vunpack.c.l.b16 %v6483
  %v6548 = vunpack.c.l.b16 %v6484
  %v6549 = vunpack.c.l.b16 %v6485
  %v6550 = vunpack.c.l.b16 %v6486
  %v6551 = vunpack.c.l.b16 %v6487
  %v6552 = vunpack.c.l.b16 %v6488
  %v6553 = vunpack.c.l.b16 %v6489
  %v6554 = vunpack.c.l.b16 %v6490
  %v6555 = vunpack.c.l.b16 %v6491
  %v6556 = vunpack.c.l.b16 %v6492
  %v6557 = vunpack.c.l.b16 %v6493
  %v6558 = vunpack.c.l.b16 %v6494
  %v6559 = vunpack.c.l.b16 %v6495
  %v6560 = vunpack.c.l.b16 %v6496
  %v6561 = vpack.c.b16 %v6546, %v6545
  %v6562 = vpack.c.b16 %v6548, %v6547
  %v6563 = vpack.c.b16 %v6550, %v6549
  %v6564 = vpack.c.b16 %v6552, %v6551
  %v6565 = vpack.c.b16 %v6554, %v6553
  %v6566 = vpack.c.b16 %v6556, %v6555
  %v6567 = vpack.c.b16 %v6558, %v6557
  %v6568 = vpack.c.b16 %v6560, %v6559
  %6577 = vmatprep.subr.bf16.mxu0 0
  %6578 = vmatpush1.bf16.msra.mxu0 %v6561
  %6579 = vmatprep.subr.bf16.mxu0 0
  %6580 = vmatpush1.bf16.msra.mxu0 %v6562
  %6581 = vmatprep.subr.bf16.mxu0 0
  %6582 = vmatpush1.bf16.msra.mxu0 %v6563
  %6583 = vmatprep.subr.bf16.mxu0 0
  %6584 = vmatpush1.bf16.msra.mxu0 %v6564
  %6585 = vmatprep.subr.bf16.mxu0 0
  %6586 = vmatpush1.bf16.msra.mxu0 %v6565
  %6587 = vmatprep.subr.bf16.mxu0 0
  %6588 = vmatpush1.bf16.msra.mxu0 %v6566
  %6589 = vmatprep.subr.bf16.mxu0 0
  %6590 = vmatpush1.bf16.msra.mxu0 %v6567
  %6591 = vmatprep.subr.bf16.mxu0 0
  %6592 = vmatpush1.bf16.msra.mxu0 %v6568
  %6593 = vmatprep.subr.bf16.mxu0 0
  %6594 = vmatpush1.bf16.msra.mxu0 0
  %6595 = vmatprep.subr.bf16.mxu0 0
  %6596 = vmatpush1.bf16.msra.mxu0 0
  %6597 = vmatprep.subr.bf16.mxu0 0
  %6598 = vmatpush1.bf16.msra.mxu0 0
  %6599 = vmatprep.subr.bf16.mxu0 0
  %6600 = vmatpush1.bf16.msra.mxu0 0
  %6601 = vmatprep.subr.bf16.mxu0 0
  %6602 = vmatpush1.bf16.msra.mxu0 0
  %6603 = vmatprep.subr.bf16.mxu0 0
  %6604 = vmatpush1.bf16.msra.mxu0 0
  %6605 = vmatprep.subr.bf16.mxu0 0
  %6606 = vmatpush1.bf16.msra.mxu0 0
  %6607 = vmatprep.subr.bf16.mxu0 0
  %6608 = vmatpush1.bf16.msra.mxu0 0
  %6609 = vmatprep.mubr.bf16.mxu0 0
  %6610 = vmatmul.mubr.bf16.gmra.mrb[0].mxu0 %v6513
  %v6611 = vpop.f32.mrb[0].mxu0
  %v6612 = vadd.f32 0.0, %v6611
  %v6613 = vpop.f32.mrb[0].mxu0
  %v6614 = vpop.f32.mrb[0].mxu0
  %v6615 = vadd.f32 0.0, %v6614
  %v6616 = vpop.f32.mrb[0].mxu0
  %6617 = vmatprep.mubr.bf16.mxu0 0
  %6618 = vmatmul.mubr.bf16.gmra.mrb[0].mxu0 %v6514
  %v6619 = vpop.f32.mrb[0].mxu0
  %v6620 = vadd.f32 0.0, %v6619
  %v6621 = vpop.f32.mrb[0].mxu0
  %v6622 = vpop.f32.mrb[0].mxu0
  %v6623 = vadd.f32 0.0, %v6622
  %v6624 = vpop.f32.mrb[0].mxu0
  %6625 = vmatprep.mubr.bf16.mxu0 0
  %6626 = vmatmul.mubr.bf16.gmra.mrb[0].mxu0 %v6515
  %v6627 = vpop.f32.mrb[0].mxu0
  %v6628 = vadd.f32 0.0, %v6627
  %v6629 = vpop.f32.mrb[0].mxu0
  %v6630 = vpop.f32.mrb[0].mxu0
  %v6631 = vadd.f32 0.0, %v6630
  %v6632 = vpop.f32.mrb[0].mxu0
  %6633 = vmatprep.mubr.bf16.mxu0 0
  %6634 = vmatmul.mubr.bf16.gmra.mrb[0].mxu0 %v6516
  %v6635 = vpop.f32.mrb[0].mxu0
  %v6636 = vadd.f32 0.0, %v6635
  %v6637 = vpop.f32.mrb[0].mxu0
  %v6638 = vpop.f32.mrb[0].mxu0
  %v6639 = vadd.f32 0.0, %v6638
  %v6640 = vpop.f32.mrb[0].mxu0
  %6641 = vmatprep.mubr.bf16.mxu0 0
  %6642 = vmatmul.mubr.bf16.gmra.mrb[0].mxu0 %v6517
  %v6643 = vpop.f32.mrb[0].mxu0
  %v6644 = vadd.f32 0.0, %v6643
  %v6645 = vpop.f32.mrb[0].mxu0
  %v6646 = vpop.f32.mrb[0].mxu0
  %v6647 = vadd.f32 0.0, %v6646
  %v6648 = vpop.f32.mrb[0].mxu0
  %6649 = vmatprep.mubr.bf16.mxu0 0
  %6650 = vmatmul.mubr.bf16.gmra.mrb[0].mxu0 %v6518
  %v6651 = vpop.f32.mrb[0].mxu0
  %v6652 = vadd.f32 0.0, %v6651
  %v6653 = vpop.f32.mrb[0].mxu0
  %v6654 = vpop.f32.mrb[0].mxu0
  %v6655 = vadd.f32 0.0, %v6654
  %v6656 = vpop.f32.mrb[0].mxu0
  %6657 = vmatprep.mubr.bf16.mxu0 0
  %6658 = vmatmul.mubr.bf16.gmra.mrb[0].mxu0 %v6519
  %v6659 = vpop.f32.mrb[0].mxu0
  %v6660 = vadd.f32 0.0, %v6659
  %v6661 = vpop.f32.mrb[0].mxu0
  %v6662 = vpop.f32.mrb[0].mxu0
  %v6663 = vadd.f32 0.0, %v6662
  %v6664 = vpop.f32.mrb[0].mxu0
  %6665 = vmatprep.mubr.bf16.mxu0 0
  %6666 = vmatmul.mubr.bf16.gmra.mrb[0].mxu0 %v6520
  %v6667 = vpop.f32.mrb[0].mxu0
  %v6668 = vadd.f32 0.0, %v6667
  %v6669 = vpop.f32.mrb[0].mxu0
  %v6670 = vpop.f32.mrb[0].mxu0
  %v6671 = vadd.f32 0.0, %v6670
  %v6672 = vpop.f32.mrb[0].mxu0
  %6673 = vdwg.mxu0
  %v6674 = vadd.f32 %v6223, %v6612
  %v6675 = vadd.f32 %v6224, %v6615
  %v6676 = vadd.f32 %v6225, %v6620
  %v6677 = vadd.f32 %v6226, %v6623
  %v6678 = vadd.f32 %v6227, %v6628
  %v6679 = vadd.f32 %v6228, %v6631
  %v6680 = vadd.f32 %v6229, %v6636
  %v6681 = vadd.f32 %v6230, %v6639
  %v6682 = vadd.f32 %v6231, %v6644
  %v6683 = vadd.f32 %v6232, %v6647
  %v6684 = vadd.f32 %v6233, %v6652
  %v6685 = vadd.f32 %v6234, %v6655
  %v6686 = vadd.f32 %v6235, %v6660
  %v6687 = vadd.f32 %v6236, %v6663
  %v6688 = vadd.f32 %v6237, %v6668
  %v6689 = vadd.f32 %v6238, %v6671
  %s6690 = scalar_lea.vmem %s4, 448
  %v6691 = vld [vmem:[%s6690] sm:$0xf]
  %v6692 = vld [vmem:[%s6690 + $0x4] sm:$0xf]
  %v6693 = vld [vmem:[%s6690 + $0x8] sm:$0xf]
  %v6694 = vld [vmem:[%s6690 + $0xc] sm:$0xf]
  %v6695 = vld [vmem:[%s6690 + $0x10] sm:$0xf]
  %v6696 = vld [vmem:[%s6690 + $0x14] sm:$0xf]
  %v6697 = vld [vmem:[%s6690 + $0x18] sm:$0xf]
  %v6698 = vld [vmem:[%s6690 + $0x1c] sm:$0xf]
  %v6699 = vld [vmem:[%s6690 + $0x20] sm:$0xf]
  %v6700 = vld [vmem:[%s6690 + $0x24] sm:$0xf]
  %v6701 = vld [vmem:[%s6690 + $0x28] sm:$0xf]
  %v6702 = vld [vmem:[%s6690 + $0x2c] sm:$0xf]
  %v6703 = vld [vmem:[%s6690 + $0x30] sm:$0xf]
  %v6704 = vld [vmem:[%s6690 + $0x34] sm:$0xf]
  %v6705 = vld [vmem:[%s6690 + $0x38] sm:$0xf]
  %v6706 = vld [vmem:[%s6690 + $0x3c] sm:$0xf]
  %v6723 = vunpack.c.l.b16 %v6241
  %v6724 = vunpack.c.l.b16 %v6243
  %v6725 = vunpack.c.l.b16 %v6245
  %v6726 = vunpack.c.l.b16 %v6247
  %v6727 = vunpack.c.l.b16 %v6249
  %v6728 = vunpack.c.l.b16 %v6251
  %v6729 = vunpack.c.l.b16 %v6253
  %v6730 = vunpack.c.l.b16 %v6255
  %v6731 = vunpack.c.l.b16 %v6257
  %v6732 = vunpack.c.l.b16 %v6259
  %v6733 = vunpack.c.l.b16 %v6261
  %v6734 = vunpack.c.l.b16 %v6263
  %v6735 = vunpack.c.l.b16 %v6265
  %v6736 = vunpack.c.l.b16 %v6267
  %v6737 = vunpack.c.l.b16 %v6269
  %v6738 = vunpack.c.l.b16 %v6271
  %v6739 = vpack.c.b16 %v6724, %v6723
  %v6740 = vpack.c.b16 %v6726, %v6725
  %v6741 = vpack.c.b16 %v6728, %v6727
  %v6742 = vpack.c.b16 %v6730, %v6729
  %v6743 = vpack.c.b16 %v6732, %v6731
  %v6744 = vpack.c.b16 %v6734, %v6733
  %v6745 = vpack.c.b16 %v6736, %v6735
  %v6746 = vpack.c.b16 %v6738, %v6737
  %v6771 = vunpack.c.l.b16 %v6691
  %v6772 = vunpack.c.l.b16 %v6692
  %v6773 = vunpack.c.l.b16 %v6693
  %v6774 = vunpack.c.l.b16 %v6694
  %v6775 = vunpack.c.l.b16 %v6695
  %v6776 = vunpack.c.l.b16 %v6696
  %v6777 = vunpack.c.l.b16 %v6697
  %v6778 = vunpack.c.l.b16 %v6698
  %v6779 = vunpack.c.l.b16 %v6699
  %v6780 = vunpack.c.l.b16 %v6700
  %v6781 = vunpack.c.l.b16 %v6701
  %v6782 = vunpack.c.l.b16 %v6702
  %v6783 = vunpack.c.l.b16 %v6703
  %v6784 = vunpack.c.l.b16 %v6704
  %v6785 = vunpack.c.l.b16 %v6705
  %v6786 = vunpack.c.l.b16 %v6706
  %v6787 = vpack.c.b16 %v6772, %v6771
  %v6788 = vpack.c.b16 %v6774, %v6773
  %v6789 = vpack.c.b16 %v6776, %v6775
  %v6790 = vpack.c.b16 %v6778, %v6777
  %v6791 = vpack.c.b16 %v6780, %v6779
  %v6792 = vpack.c.b16 %v6782, %v6781
  %v6793 = vpack.c.b16 %v6784, %v6783
  %v6794 = vpack.c.b16 %v6786, %v6785
  %6803 = vmatprep.subr.bf16.mxu0 0
  %6804 = vmatpush1.bf16.msra.mxu0 %v6787
  %6805 = vmatprep.subr.bf16.mxu0 0
  %6806 = vmatpush1.bf16.msra.mxu0 %v6788
  %6807 = vmatprep.subr.bf16.mxu0 0
  %6808 = vmatpush1.bf16.msra.mxu0 %v6789
  %6809 = vmatprep.subr.bf16.mxu0 0
  %6810 = vmatpush1.bf16.msra.mxu0 %v6790
  %6811 = vmatprep.subr.bf16.mxu0 0
  %6812 = vmatpush1.bf16.msra.mxu0 %v6791
  %6813 = vmatprep.subr.bf16.mxu0 0
  %6814 = vmatpush1.bf16.msra.mxu0 %v6792
  %6815 = vmatprep.subr.bf16.mxu0 0
  %6816 = vmatpush1.bf16.msra.mxu0 %v6793
  %6817 = vmatprep.subr.bf16.mxu0 0
  %6818 = vmatpush1.bf16.msra.mxu0 %v6794
  %6819 = vmatprep.subr.bf16.mxu0 0
  %6820 = vmatpush1.bf16.msra.mxu0 0
  %6821 = vmatprep.subr.bf16.mxu0 0
  %6822 = vmatpush1.bf16.msra.mxu0 0
  %6823 = vmatprep.subr.bf16.mxu0 0
  %6824 = vmatpush1.bf16.msra.mxu0 0
  %6825 = vmatprep.subr.bf16.mxu0 0
  %6826 = vmatpush1.bf16.msra.mxu0 0
  %6827 = vmatprep.subr.bf16.mxu0 0
  %6828 = vmatpush1.bf16.msra.mxu0 0
  %6829 = vmatprep.subr.bf16.mxu0 0
  %6830 = vmatpush1.bf16.msra.mxu0 0
  %6831 = vmatprep.subr.bf16.mxu0 0
  %6832 = vmatpush1.bf16.msra.mxu0 0
  %6833 = vmatprep.subr.bf16.mxu0 0
  %6834 = vmatpush1.bf16.msra.mxu0 0
  %6835 = vmatprep.mubr.bf16.mxu0 0
  %6836 = vmatmul.mubr.bf16.gmra.mrb[0].mxu0 %v6739
  %v6837 = vpop.f32.mrb[0].mxu0
  %v6838 = vadd.f32 0.0, %v6837
  %v6839 = vpop.f32.mrb[0].mxu0
  %v6840 = vpop.f32.mrb[0].mxu0
  %v6841 = vadd.f32 0.0, %v6840
  %v6842 = vpop.f32.mrb[0].mxu0
  %6843 = vmatprep.mubr.bf16.mxu0 0
  %6844 = vmatmul.mubr.bf16.gmra.mrb[0].mxu0 %v6740
  %v6845 = vpop.f32.mrb[0].mxu0
  %v6846 = vadd.f32 0.0, %v6845
  %v6847 = vpop.f32.mrb[0].mxu0
  %v6848 = vpop.f32.mrb[0].mxu0
  %v6849 = vadd.f32 0.0, %v6848
  %v6850 = vpop.f32.mrb[0].mxu0
  %6851 = vmatprep.mubr.bf16.mxu0 0
  %6852 = vmatmul.mubr.bf16.gmra.mrb[0].mxu0 %v6741
  %v6853 = vpop.f32.mrb[0].mxu0
  %v6854 = vadd.f32 0.0, %v6853
  %v6855 = vpop.f32.mrb[0].mxu0
  %v6856 = vpop.f32.mrb[0].mxu0
  %v6857 = vadd.f32 0.0, %v6856
  %v6858 = vpop.f32.mrb[0].mxu0
  %6859 = vmatprep.mubr.bf16.mxu0 0
  %6860 = vmatmul.mubr.bf16.gmra.mrb[0].mxu0 %v6742
  %v6861 = vpop.f32.mrb[0].mxu0
  %v6862 = vadd.f32 0.0, %v6861
  %v6863 = vpop.f32.mrb[0].mxu0
  %v6864 = vpop.f32.mrb[0].mxu0
  %v6865 = vadd.f32 0.0, %v6864
  %v6866 = vpop.f32.mrb[0].mxu0
  %6867 = vmatprep.mubr.bf16.mxu0 0
  %6868 = vmatmul.mubr.bf16.gmra.mrb[0].mxu0 %v6743
  %v6869 = vpop.f32.mrb[0].mxu0
  %v6870 = vadd.f32 0.0, %v6869
  %v6871 = vpop.f32.mrb[0].mxu0
  %v6872 = vpop.f32.mrb[0].mxu0
  %v6873 = vadd.f32 0.0, %v6872
  %v6874 = vpop.f32.mrb[0].mxu0
  %6875 = vmatprep.mubr.bf16.mxu0 0
  %6876 = vmatmul.mubr.bf16.gmra.mrb[0].mxu0 %v6744
  %v6877 = vpop.f32.mrb[0].mxu0
  %v6878 = vadd.f32 0.0, %v6877
  %v6879 = vpop.f32.mrb[0].mxu0
  %v6880 = vpop.f32.mrb[0].mxu0
  %v6881 = vadd.f32 0.0, %v6880
  %v6882 = vpop.f32.mrb[0].mxu0
  %6883 = vmatprep.mubr.bf16.mxu0 0
  %6884 = vmatmul.mubr.bf16.gmra.mrb[0].mxu0 %v6745
  %v6885 = vpop.f32.mrb[0].mxu0
  %v6886 = vadd.f32 0.0, %v6885
  %v6887 = vpop.f32.mrb[0].mxu0
  %v6888 = vpop.f32.mrb[0].mxu0
  %v6889 = vadd.f32 0.0, %v6888
  %v6890 = vpop.f32.mrb[0].mxu0
  %6891 = vmatprep.mubr.bf16.mxu0 0
  %6892 = vmatmul.mubr.bf16.gmra.mrb[0].mxu0 %v6746
  %v6893 = vpop.f32.mrb[0].mxu0
  %v6894 = vadd.f32 0.0, %v6893
  %v6895 = vpop.f32.mrb[0].mxu0
  %v6896 = vpop.f32.mrb[0].mxu0
  %v6897 = vadd.f32 0.0, %v6896
  %v6898 = vpop.f32.mrb[0].mxu0
  %6899 = vdwg.mxu0
  %v6900 = vadd.f32 %v6674, %v6838
  %v6901 = vadd.f32 %v6675, %v6841
  %v6902 = vadd.f32 %v6676, %v6846
  %v6903 = vadd.f32 %v6677, %v6849
  %v6904 = vadd.f32 %v6678, %v6854
  %v6905 = vadd.f32 %v6679, %v6857
  %v6906 = vadd.f32 %v6680, %v6862
  %v6907 = vadd.f32 %v6681, %v6865
  %v6908 = vadd.f32 %v6682, %v6870
  %v6909 = vadd.f32 %v6683, %v6873
  %v6910 = vadd.f32 %v6684, %v6878
  %v6911 = vadd.f32 %v6685, %v6881
  %v6912 = vadd.f32 %v6686, %v6886
  %v6913 = vadd.f32 %v6687, %v6889
  %v6914 = vadd.f32 %v6688, %v6894
  %v6915 = vadd.f32 %v6689, %v6897
  %v6916 = vld [vmem:[%s6239 + $0x4] sm:$0xf]
  %v6917 = vld [vmem:[%s6239 + $0x8] sm:$0x1]
  %v6918 = vld [vmem:[%s6239 + $0x10] sm:$0xf]
  %v6919 = vld [vmem:[%s6239 + $0x14] sm:$0x1]
  %v6920 = vld [vmem:[%s6239 + $0x1c] sm:$0xf]
  %v6921 = vld [vmem:[%s6239 + $0x20] sm:$0x1]
  %v6922 = vld [vmem:[%s6239 + $0x28] sm:$0xf]
  %v6923 = vld [vmem:[%s6239 + $0x2c] sm:$0x1]
  %v6924 = vld [vmem:[%s6239 + $0x34] sm:$0xf]
  %v6925 = vld [vmem:[%s6239 + $0x38] sm:$0x1]
  %v6926 = vld [vmem:[%s6239 + $0x40] sm:$0xf]
  %v6927 = vld [vmem:[%s6239 + $0x44] sm:$0x1]
  %v6928 = vld [vmem:[%s6239 + $0x4c] sm:$0xf]
  %v6929 = vld [vmem:[%s6239 + $0x50] sm:$0x1]
  %v6930 = vld [vmem:[%s6239 + $0x58] sm:$0xf]
  %v6931 = vld [vmem:[%s6239 + $0x5c] sm:$0x1]
  %v6932 = vld [vmem:[%s6239 + $0x7c] sm:$0xf]
  %v6933 = vld [vmem:[%s6239 + $0x80] sm:$0x1]
  %v6934 = vld [vmem:[%s6239 + $0x88] sm:$0xf]
  %v6935 = vld [vmem:[%s6239 + $0x8c] sm:$0x1]
  %v6936 = vld [vmem:[%s6239 + $0x94] sm:$0xf]
  %v6937 = vld [vmem:[%s6239 + $0x98] sm:$0x1]
  %v6938 = vld [vmem:[%s6239 + $0xa0] sm:$0xf]
  %v6939 = vld [vmem:[%s6239 + $0xa4] sm:$0x1]
  %v6940 = vld [vmem:[%s6239 + $0xac] sm:$0xf]
  %v6941 = vld [vmem:[%s6239 + $0xb0] sm:$0x1]
  %v6942 = vld [vmem:[%s6239 + $0xb8] sm:$0xf]
  %v6943 = vld [vmem:[%s6239 + $0xbc] sm:$0x1]
  %v6944 = vld [vmem:[%s6239 + $0xc4] sm:$0xf]
  %v6945 = vld [vmem:[%s6239 + $0xc8] sm:$0x1]
  %v6946 = vld [vmem:[%s6239 + $0xd0] sm:$0xf]
  %v6947 = vld [vmem:[%s6239 + $0xd4] sm:$0x1]
  %v6949 = vshrl.u32 %v6916, 16
  %v6951 = vrot.slane %v6949, 4
  %v6952 = vshll.u32 %v6916, 16
  %v6954 = vrot.slane %v6952, 5
  %v6955 = vor.u32 %v6951, %v6954
  %v6956 = vrot.slane %v6955, 4
  %v6958 = vshll.u32 %v6917, 16
  %v6960 = vrot.slane %v6958, 5
  %v6961 = vsel %vm1011, %v6956, %v6960
  %v6963 = vshrl.u32 %v6918, 16
  %v6965 = vrot.slane %v6963, 4
  %v6966 = vshll.u32 %v6918, 16
  %v6968 = vrot.slane %v6966, 5
  %v6969 = vor.u32 %v6965, %v6968
  %v6970 = vrot.slane %v6969, 4
  %v6972 = vshll.u32 %v6919, 16
  %v6974 = vrot.slane %v6972, 5
  %v6975 = vsel %vm1011, %v6970, %v6974
  %v6977 = vshrl.u32 %v6920, 16
  %v6979 = vrot.slane %v6977, 4
  %v6980 = vshll.u32 %v6920, 16
  %v6982 = vrot.slane %v6980, 5
  %v6983 = vor.u32 %v6979, %v6982
  %v6984 = vrot.slane %v6983, 4
  %v6986 = vshll.u32 %v6921, 16
  %v6988 = vrot.slane %v6986, 5
  %v6989 = vsel %vm1011, %v6984, %v6988
  %v6991 = vshrl.u32 %v6922, 16
  %v6993 = vrot.slane %v6991, 4
  %v6994 = vshll.u32 %v6922, 16
  %v6996 = vrot.slane %v6994, 5
  %v6997 = vor.u32 %v6993, %v6996
  %v6998 = vrot.slane %v6997, 4
  %v7000 = vshll.u32 %v6923, 16
  %v7002 = vrot.slane %v7000, 5
  %v7003 = vsel %vm1011, %v6998, %v7002
  %v7005 = vshrl.u32 %v6924, 16
  %v7007 = vrot.slane %v7005, 4
  %v7008 = vshll.u32 %v6924, 16
  %v7010 = vrot.slane %v7008, 5
  %v7011 = vor.u32 %v7007, %v7010
  %v7012 = vrot.slane %v7011, 4
  %v7014 = vshll.u32 %v6925, 16
  %v7016 = vrot.slane %v7014, 5
  %v7017 = vsel %vm1011, %v7012, %v7016
  %v7019 = vshrl.u32 %v6926, 16
  %v7021 = vrot.slane %v7019, 4
  %v7022 = vshll.u32 %v6926, 16
  %v7024 = vrot.slane %v7022, 5
  %v7025 = vor.u32 %v7021, %v7024
  %v7026 = vrot.slane %v7025, 4
  %v7028 = vshll.u32 %v6927, 16
  %v7030 = vrot.slane %v7028, 5
  %v7031 = vsel %vm1011, %v7026, %v7030
  %v7033 = vshrl.u32 %v6928, 16
  %v7035 = vrot.slane %v7033, 4
  %v7036 = vshll.u32 %v6928, 16
  %v7038 = vrot.slane %v7036, 5
  %v7039 = vor.u32 %v7035, %v7038
  %v7040 = vrot.slane %v7039, 4
  %v7042 = vshll.u32 %v6929, 16
  %v7044 = vrot.slane %v7042, 5
  %v7045 = vsel %vm1011, %v7040, %v7044
  %v7047 = vshrl.u32 %v6930, 16
  %v7049 = vrot.slane %v7047, 4
  %v7050 = vshll.u32 %v6930, 16
  %v7052 = vrot.slane %v7050, 5
  %v7053 = vor.u32 %v7049, %v7052
  %v7054 = vrot.slane %v7053, 4
  %v7056 = vshll.u32 %v6931, 16
  %v7058 = vrot.slane %v7056, 5
  %v7059 = vsel %vm1011, %v7054, %v7058
  %v7061 = vshrl.u32 %v6932, 16
  %v7063 = vrot.slane %v7061, 4
  %v7064 = vshll.u32 %v6932, 16
  %v7066 = vrot.slane %v7064, 5
  %v7067 = vor.u32 %v7063, %v7066
  %v7068 = vrot.slane %v7067, 4
  %v7070 = vshll.u32 %v6933, 16
  %v7072 = vrot.slane %v7070, 5
  %v7073 = vsel %vm1011, %v7068, %v7072
  %v7075 = vshrl.u32 %v6934, 16
  %v7077 = vrot.slane %v7075, 4
  %v7078 = vshll.u32 %v6934, 16
  %v7080 = vrot.slane %v7078, 5
  %v7081 = vor.u32 %v7077, %v7080
  %v7082 = vrot.slane %v7081, 4
  %v7084 = vshll.u32 %v6935, 16
  %v7086 = vrot.slane %v7084, 5
  %v7087 = vsel %vm1011, %v7082, %v7086
  %v7089 = vshrl.u32 %v6936, 16
  %v7091 = vrot.slane %v7089, 4
  %v7092 = vshll.u32 %v6936, 16
  %v7094 = vrot.slane %v7092, 5
  %v7095 = vor.u32 %v7091, %v7094
  %v7096 = vrot.slane %v7095, 4
  %v7098 = vshll.u32 %v6937, 16
  %v7100 = vrot.slane %v7098, 5
  %v7101 = vsel %vm1011, %v7096, %v7100
  %v7103 = vshrl.u32 %v6938, 16
  %v7105 = vrot.slane %v7103, 4
  %v7106 = vshll.u32 %v6938, 16
  %v7108 = vrot.slane %v7106, 5
  %v7109 = vor.u32 %v7105, %v7108
  %v7110 = vrot.slane %v7109, 4
  %v7112 = vshll.u32 %v6939, 16
  %v7114 = vrot.slane %v7112, 5
  %v7115 = vsel %vm1011, %v7110, %v7114
  %v7117 = vshrl.u32 %v6940, 16
  %v7119 = vrot.slane %v7117, 4
  %v7120 = vshll.u32 %v6940, 16
  %v7122 = vrot.slane %v7120, 5
  %v7123 = vor.u32 %v7119, %v7122
  %v7124 = vrot.slane %v7123, 4
  %v7126 = vshll.u32 %v6941, 16
  %v7128 = vrot.slane %v7126, 5
  %v7129 = vsel %vm1011, %v7124, %v7128
  %v7131 = vshrl.u32 %v6942, 16
  %v7133 = vrot.slane %v7131, 4
  %v7134 = vshll.u32 %v6942, 16
  %v7136 = vrot.slane %v7134, 5
  %v7137 = vor.u32 %v7133, %v7136
  %v7138 = vrot.slane %v7137, 4
  %v7140 = vshll.u32 %v6943, 16
  %v7142 = vrot.slane %v7140, 5
  %v7143 = vsel %vm1011, %v7138, %v7142
  %v7145 = vshrl.u32 %v6944, 16
  %v7147 = vrot.slane %v7145, 4
  %v7148 = vshll.u32 %v6944, 16
  %v7150 = vrot.slane %v7148, 5
  %v7151 = vor.u32 %v7147, %v7150
  %v7152 = vrot.slane %v7151, 4
  %v7154 = vshll.u32 %v6945, 16
  %v7156 = vrot.slane %v7154, 5
  %v7157 = vsel %vm1011, %v7152, %v7156
  %v7159 = vshrl.u32 %v6946, 16
  %v7161 = vrot.slane %v7159, 4
  %v7162 = vshll.u32 %v6946, 16
  %v7164 = vrot.slane %v7162, 5
  %v7165 = vor.u32 %v7161, %v7164
  %v7166 = vrot.slane %v7165, 4
  %v7168 = vshll.u32 %v6947, 16
  %v7170 = vrot.slane %v7168, 5
  %v7171 = vsel %vm1011, %v7166, %v7170
  %s7172 = scalar_lea.vmem %s4, 512
  %v7173 = vld [vmem:[%s7172] sm:$0xf]
  %v7174 = vld [vmem:[%s7172 + $0x4] sm:$0xf]
  %v7175 = vld [vmem:[%s7172 + $0x8] sm:$0xf]
  %v7176 = vld [vmem:[%s7172 + $0xc] sm:$0xf]
  %v7177 = vld [vmem:[%s7172 + $0x10] sm:$0xf]
  %v7178 = vld [vmem:[%s7172 + $0x14] sm:$0xf]
  %v7179 = vld [vmem:[%s7172 + $0x18] sm:$0xf]
  %v7180 = vld [vmem:[%s7172 + $0x1c] sm:$0xf]
  %v7181 = vld [vmem:[%s7172 + $0x20] sm:$0xf]
  %v7182 = vld [vmem:[%s7172 + $0x24] sm:$0xf]
  %v7183 = vld [vmem:[%s7172 + $0x28] sm:$0xf]
  %v7184 = vld [vmem:[%s7172 + $0x2c] sm:$0xf]
  %v7185 = vld [vmem:[%s7172 + $0x30] sm:$0xf]
  %v7186 = vld [vmem:[%s7172 + $0x34] sm:$0xf]
  %v7187 = vld [vmem:[%s7172 + $0x38] sm:$0xf]
  %v7188 = vld [vmem:[%s7172 + $0x3c] sm:$0xf]
  %v7189 = vunpack.c.l.b16 %v6961
  %v7190 = vunpack.c.l.b16 %v6975
  %v7191 = vunpack.c.l.b16 %v6989
  %v7192 = vunpack.c.l.b16 %v7003
  %v7193 = vunpack.c.l.b16 %v7017
  %v7194 = vunpack.c.l.b16 %v7031
  %v7195 = vunpack.c.l.b16 %v7045
  %v7196 = vunpack.c.l.b16 %v7059
  %v7197 = vunpack.c.l.b16 %v7073
  %v7198 = vunpack.c.l.b16 %v7087
  %v7199 = vunpack.c.l.b16 %v7101
  %v7200 = vunpack.c.l.b16 %v7115
  %v7201 = vunpack.c.l.b16 %v7129
  %v7202 = vunpack.c.l.b16 %v7143
  %v7203 = vunpack.c.l.b16 %v7157
  %v7204 = vunpack.c.l.b16 %v7171
  %v7205 = vpack.c.b16 %v7190, %v7189
  %v7206 = vpack.c.b16 %v7192, %v7191
  %v7207 = vpack.c.b16 %v7194, %v7193
  %v7208 = vpack.c.b16 %v7196, %v7195
  %v7209 = vpack.c.b16 %v7198, %v7197
  %v7210 = vpack.c.b16 %v7200, %v7199
  %v7211 = vpack.c.b16 %v7202, %v7201
  %v7212 = vpack.c.b16 %v7204, %v7203
  %v7237 = vunpack.c.l.b16 %v7173
  %v7238 = vunpack.c.l.b16 %v7174
  %v7239 = vunpack.c.l.b16 %v7175
  %v7240 = vunpack.c.l.b16 %v7176
  %v7241 = vunpack.c.l.b16 %v7177
  %v7242 = vunpack.c.l.b16 %v7178
  %v7243 = vunpack.c.l.b16 %v7179
  %v7244 = vunpack.c.l.b16 %v7180
  %v7245 = vunpack.c.l.b16 %v7181
  %v7246 = vunpack.c.l.b16 %v7182
  %v7247 = vunpack.c.l.b16 %v7183
  %v7248 = vunpack.c.l.b16 %v7184
  %v7249 = vunpack.c.l.b16 %v7185
  %v7250 = vunpack.c.l.b16 %v7186
  %v7251 = vunpack.c.l.b16 %v7187
  %v7252 = vunpack.c.l.b16 %v7188
  %v7253 = vpack.c.b16 %v7238, %v7237
  %v7254 = vpack.c.b16 %v7240, %v7239
  %v7255 = vpack.c.b16 %v7242, %v7241
  %v7256 = vpack.c.b16 %v7244, %v7243
  %v7257 = vpack.c.b16 %v7246, %v7245
  %v7258 = vpack.c.b16 %v7248, %v7247
  %v7259 = vpack.c.b16 %v7250, %v7249
  %v7260 = vpack.c.b16 %v7252, %v7251
  %7269 = vmatprep.subr.bf16.mxu0 0
  %7270 = vmatpush1.bf16.msra.mxu0 %v7253
  %7271 = vmatprep.subr.bf16.mxu0 0
  %7272 = vmatpush1.bf16.msra.mxu0 %v7254
  %7273 = vmatprep.subr.bf16.mxu0 0
  %7274 = vmatpush1.bf16.msra.mxu0 %v7255
  %7275 = vmatprep.subr.bf16.mxu0 0
  %7276 = vmatpush1.bf16.msra.mxu0 %v7256
  %7277 = vmatprep.subr.bf16.mxu0 0
  %7278 = vmatpush1.bf16.msra.mxu0 %v7257
  %7279 = vmatprep.subr.bf16.mxu0 0
  %7280 = vmatpush1.bf16.msra.mxu0 %v7258
  %7281 = vmatprep.subr.bf16.mxu0 0
  %7282 = vmatpush1.bf16.msra.mxu0 %v7259
  %7283 = vmatprep.subr.bf16.mxu0 0
  %7284 = vmatpush1.bf16.msra.mxu0 %v7260
  %7285 = vmatprep.subr.bf16.mxu0 0
  %7286 = vmatpush1.bf16.msra.mxu0 0
  %7287 = vmatprep.subr.bf16.mxu0 0
  %7288 = vmatpush1.bf16.msra.mxu0 0
  %7289 = vmatprep.subr.bf16.mxu0 0
  %7290 = vmatpush1.bf16.msra.mxu0 0
  %7291 = vmatprep.subr.bf16.mxu0 0
  %7292 = vmatpush1.bf16.msra.mxu0 0
  %7293 = vmatprep.subr.bf16.mxu0 0
  %7294 = vmatpush1.bf16.msra.mxu0 0
  %7295 = vmatprep.subr.bf16.mxu0 0
  %7296 = vmatpush1.bf16.msra.mxu0 0
  %7297 = vmatprep.subr.bf16.mxu0 0
  %7298 = vmatpush1.bf16.msra.mxu0 0
  %7299 = vmatprep.subr.bf16.mxu0 0
  %7300 = vmatpush1.bf16.msra.mxu0 0
  %7301 = vmatprep.mubr.bf16.mxu0 0
  %7302 = vmatmul.mubr.bf16.gmra.mrb[0].mxu0 %v7205
  %v7303 = vpop.f32.mrb[0].mxu0
  %v7304 = vadd.f32 0.0, %v7303
  %v7305 = vpop.f32.mrb[0].mxu0
  %v7306 = vpop.f32.mrb[0].mxu0
  %v7307 = vadd.f32 0.0, %v7306
  %v7308 = vpop.f32.mrb[0].mxu0
  %7309 = vmatprep.mubr.bf16.mxu0 0
  %7310 = vmatmul.mubr.bf16.gmra.mrb[0].mxu0 %v7206
  %v7311 = vpop.f32.mrb[0].mxu0
  %v7312 = vadd.f32 0.0, %v7311
  %v7313 = vpop.f32.mrb[0].mxu0
  %v7314 = vpop.f32.mrb[0].mxu0
  %v7315 = vadd.f32 0.0, %v7314
  %v7316 = vpop.f32.mrb[0].mxu0
  %7317 = vmatprep.mubr.bf16.mxu0 0
  %7318 = vmatmul.mubr.bf16.gmra.mrb[0].mxu0 %v7207
  %v7319 = vpop.f32.mrb[0].mxu0
  %v7320 = vadd.f32 0.0, %v7319
  %v7321 = vpop.f32.mrb[0].mxu0
  %v7322 = vpop.f32.mrb[0].mxu0
  %v7323 = vadd.f32 0.0, %v7322
  %v7324 = vpop.f32.mrb[0].mxu0
  %7325 = vmatprep.mubr.bf16.mxu0 0
  %7326 = vmatmul.mubr.bf16.gmra.mrb[0].mxu0 %v7208
  %v7327 = vpop.f32.mrb[0].mxu0
  %v7328 = vadd.f32 0.0, %v7327
  %v7329 = vpop.f32.mrb[0].mxu0
  %v7330 = vpop.f32.mrb[0].mxu0
  %v7331 = vadd.f32 0.0, %v7330
  %v7332 = vpop.f32.mrb[0].mxu0
  %7333 = vmatprep.mubr.bf16.mxu0 0
  %7334 = vmatmul.mubr.bf16.gmra.mrb[0].mxu0 %v7209
  %v7335 = vpop.f32.mrb[0].mxu0
  %v7336 = vadd.f32 0.0, %v7335
  %v7337 = vpop.f32.mrb[0].mxu0
  %v7338 = vpop.f32.mrb[0].mxu0
  %v7339 = vadd.f32 0.0, %v7338
  %v7340 = vpop.f32.mrb[0].mxu0
  %7341 = vmatprep.mubr.bf16.mxu0 0
  %7342 = vmatmul.mubr.bf16.gmra.mrb[0].mxu0 %v7210
  %v7343 = vpop.f32.mrb[0].mxu0
  %v7344 = vadd.f32 0.0, %v7343
  %v7345 = vpop.f32.mrb[0].mxu0
  %v7346 = vpop.f32.mrb[0].mxu0
  %v7347 = vadd.f32 0.0, %v7346
  %v7348 = vpop.f32.mrb[0].mxu0
  %7349 = vmatprep.mubr.bf16.mxu0 0
  %7350 = vmatmul.mubr.bf16.gmra.mrb[0].mxu0 %v7211
  %v7351 = vpop.f32.mrb[0].mxu0
  %v7352 = vadd.f32 0.0, %v7351
  %v7353 = vpop.f32.mrb[0].mxu0
  %v7354 = vpop.f32.mrb[0].mxu0
  %v7355 = vadd.f32 0.0, %v7354
  %v7356 = vpop.f32.mrb[0].mxu0
  %7357 = vmatprep.mubr.bf16.mxu0 0
  %7358 = vmatmul.mubr.bf16.gmra.mrb[0].mxu0 %v7212
  %v7359 = vpop.f32.mrb[0].mxu0
  %v7360 = vadd.f32 0.0, %v7359
  %v7361 = vpop.f32.mrb[0].mxu0
  %v7362 = vpop.f32.mrb[0].mxu0
  %v7363 = vadd.f32 0.0, %v7362
  %v7364 = vpop.f32.mrb[0].mxu0
  %7365 = vdwg.mxu0
  %v7366 = vadd.f32 %v6900, %v7304
  %v7367 = vadd.f32 %v6901, %v7307
  %v7368 = vadd.f32 %v6902, %v7312
  %v7369 = vadd.f32 %v6903, %v7315
  %v7370 = vadd.f32 %v6904, %v7320
  %v7371 = vadd.f32 %v6905, %v7323
  %v7372 = vadd.f32 %v6906, %v7328
  %v7373 = vadd.f32 %v6907, %v7331
  %v7374 = vadd.f32 %v6908, %v7336
  %v7375 = vadd.f32 %v6909, %v7339
  %v7376 = vadd.f32 %v6910, %v7344
  %v7377 = vadd.f32 %v6911, %v7347
  %v7378 = vadd.f32 %v6912, %v7352
  %v7379 = vadd.f32 %v6913, %v7355
  %v7380 = vadd.f32 %v6914, %v7360
  %v7381 = vadd.f32 %v6915, %v7363
  %v7382 = vld [vmem:[%s5] sm:$0x1]
  %v7383 = vld [vmem:[%s6] sm:$0x1]
  %v7384 = vadd.f32 %v7366, %v7367
  %v7385 = vadd.f32 %v7384, %v7368
  %v7386 = vadd.f32 %v7385, %v7369
  %v7387 = vadd.f32 %v7386, %v7370
  %v7388 = vadd.f32 %v7387, %v7371
  %v7389 = vadd.f32 %v7388, %v7372
  %v7390 = vadd.f32 %v7389, %v7373
  %v7391 = vadd.f32 %v7390, %v7374
  %v7392 = vadd.f32 %v7391, %v7375
  %v7393 = vadd.f32 %v7392, %v7376
  %v7394 = vadd.f32 %v7393, %v7377
  %v7395 = vadd.f32 %v7394, %v7378
  %v7396 = vadd.f32 %v7395, %v7379
  %v7397 = vadd.f32 %v7396, %v7380
  %v7398 = vadd.f32 %v7397, %v7381
  %v7399 = vrot.slane %v7398, 4
  %v7400 = vadd.f32 %v7398, %v7399
  %v7401 = vrot.slane %v7400, 2
  %v7402 = vadd.f32 %v7400, %v7401
  %v7403 = vrot.slane %v7402, 1
  %v7404 = vadd.f32 %v7402, %v7403
  %v7405 = vmul.f32 %v7404, 0.0078125
  %v7406 = vsub.f32 %v7366, %v7405
  %v7407 = vsub.f32 %v7367, %v7405
  %v7408 = vsub.f32 %v7368, %v7405
  %v7409 = vsub.f32 %v7369, %v7405
  %v7410 = vsub.f32 %v7370, %v7405
  %v7411 = vsub.f32 %v7371, %v7405
  %v7412 = vsub.f32 %v7372, %v7405
  %v7413 = vsub.f32 %v7373, %v7405
  %v7414 = vsub.f32 %v7374, %v7405
  %v7415 = vsub.f32 %v7375, %v7405
  %v7416 = vsub.f32 %v7376, %v7405
  %v7417 = vsub.f32 %v7377, %v7405
  %v7418 = vsub.f32 %v7378, %v7405
  %v7419 = vsub.f32 %v7379, %v7405
  %v7420 = vsub.f32 %v7380, %v7405
  %v7421 = vsub.f32 %v7381, %v7405
  %v7422 = vmul.f32 %v7406, %v7406
  %v7423 = vmul.f32 %v7407, %v7407
  %v7424 = vmul.f32 %v7408, %v7408
  %v7425 = vmul.f32 %v7409, %v7409
  %v7426 = vmul.f32 %v7410, %v7410
  %v7427 = vmul.f32 %v7411, %v7411
  %v7428 = vmul.f32 %v7412, %v7412
  %v7429 = vmul.f32 %v7413, %v7413
  %v7430 = vmul.f32 %v7414, %v7414
  %v7431 = vmul.f32 %v7415, %v7415
  %v7432 = vmul.f32 %v7416, %v7416
  %v7433 = vmul.f32 %v7417, %v7417
  %v7434 = vmul.f32 %v7418, %v7418
  %v7435 = vmul.f32 %v7419, %v7419
  %v7436 = vmul.f32 %v7420, %v7420
  %v7437 = vmul.f32 %v7421, %v7421
  %v7438 = vadd.f32 %v7422, %v7423
  %v7439 = vadd.f32 %v7438, %v7424
  %v7440 = vadd.f32 %v7439, %v7425
  %v7441 = vadd.f32 %v7440, %v7426
  %v7442 = vadd.f32 %v7441, %v7427
  %v7443 = vadd.f32 %v7442, %v7428
  %v7444 = vadd.f32 %v7443, %v7429
  %v7445 = vadd.f32 %v7444, %v7430
  %v7446 = vadd.f32 %v7445, %v7431
  %v7447 = vadd.f32 %v7446, %v7432
  %v7448 = vadd.f32 %v7447, %v7433
  %v7449 = vadd.f32 %v7448, %v7434
  %v7450 = vadd.f32 %v7449, %v7435
  %v7451 = vadd.f32 %v7450, %v7436
  %v7452 = vadd.f32 %v7451, %v7437
  %v7453 = vrot.slane %v7452, 4
  %v7454 = vadd.f32 %v7452, %v7453
  %v7455 = vrot.slane %v7454, 2
  %v7456 = vadd.f32 %v7454, %v7455
  %v7457 = vrot.slane %v7456, 1
  %v7458 = vadd.f32 %v7456, %v7457
  %v7459 = vmul.f32 %v7458, 0.0078125
  %v7460 = vadd.f32 %v7459, 1e-05
  %v7461 = vrsqrt.pop %v7460
  %v7462 = vmul.f32 %v7461, %v7382
  %v7463 = vlaneseq
  %v7464 = vshrl.u32 %v7463, 7
  %v7465 = vsub.s32 0, %v7464
  %v7466 = vrot.slane %v7462, %v7465
  %v7467 = vmul.f32 %v7406, %v7466
  %v7468 = vmul.f32 %v7407, %v7466
  %v7469 = vmul.f32 %v7408, %v7466
  %v7470 = vmul.f32 %v7409, %v7466
  %v7471 = vmul.f32 %v7410, %v7466
  %v7472 = vmul.f32 %v7411, %v7466
  %v7473 = vmul.f32 %v7412, %v7466
  %v7474 = vmul.f32 %v7413, %v7466
  %v7475 = vmul.f32 %v7414, %v7466
  %v7476 = vmul.f32 %v7415, %v7466
  %v7477 = vmul.f32 %v7416, %v7466
  %v7478 = vmul.f32 %v7417, %v7466
  %v7479 = vmul.f32 %v7418, %v7466
  %v7480 = vmul.f32 %v7419, %v7466
  %v7481 = vmul.f32 %v7420, %v7466
  %v7482 = vmul.f32 %v7421, %v7466
  %v7484 = vlaneseq
  %v7485 = vshrl.u32 %v7484, 7
  %v7486 = vsub.s32 0, %v7485
  %v7487 = vrot.slane %v7383, %v7486
  %v7489 = vadd.f32 %v7467, %v7487
  %v7490 = vadd.f32 %v7468, %v7487
  %v7491 = vadd.f32 %v7469, %v7487
  %v7492 = vadd.f32 %v7470, %v7487
  %v7493 = vadd.f32 %v7471, %v7487
  %v7494 = vadd.f32 %v7472, %v7487
  %v7495 = vadd.f32 %v7473, %v7487
  %v7496 = vadd.f32 %v7474, %v7487
  %v7497 = vadd.f32 %v7475, %v7487
  %v7498 = vadd.f32 %v7476, %v7487
  %v7499 = vadd.f32 %v7477, %v7487
  %v7500 = vadd.f32 %v7478, %v7487
  %v7501 = vadd.f32 %v7479, %v7487
  %v7502 = vadd.f32 %v7480, %v7487
  %v7503 = vadd.f32 %v7481, %v7487
  %v7504 = vadd.f32 %v7482, %v7487
  %v7505 = vmax.f32 %v7489, 0.0
  %v7506 = vmax.f32 %v7490, 0.0
  %v7507 = vmax.f32 %v7491, 0.0
  %v7508 = vmax.f32 %v7492, 0.0
  %v7509 = vmax.f32 %v7493, 0.0
  %v7510 = vmax.f32 %v7494, 0.0
  %v7511 = vmax.f32 %v7495, 0.0
  %v7512 = vmax.f32 %v7496, 0.0
  %v7513 = vmax.f32 %v7497, 0.0
  %v7514 = vmax.f32 %v7498, 0.0
  %v7515 = vmax.f32 %v7499, 0.0
  %v7516 = vmax.f32 %v7500, 0.0
  %v7517 = vmax.f32 %v7501, 0.0
  %v7518 = vmax.f32 %v7502, 0.0
  %v7519 = vmax.f32 %v7503, 0.0
  %v7520 = vmax.f32 %v7504, 0.0
  %v7521 = vld [vmem:[%s235 + $0x4] sm:$0xf]
  %v7522 = vld [vmem:[%s235 + $0x10] sm:$0xf]
  %v7523 = vld [vmem:[%s235 + $0x1c] sm:$0xf]
  %v7524 = vld [vmem:[%s235 + $0x28] sm:$0xf]
  %v7525 = vld [vmem:[%s235 + $0x34] sm:$0xf]
  %v7526 = vld [vmem:[%s235 + $0x40] sm:$0xf]
  %v7527 = vld [vmem:[%s235 + $0x4c] sm:$0xf]
  %v7528 = vld [vmem:[%s235 + $0x58] sm:$0xf]
  %v7529 = vld [vmem:[%s235 + $0x7c] sm:$0xf]
  %v7530 = vld [vmem:[%s235 + $0x88] sm:$0xf]
  %v7531 = vld [vmem:[%s235 + $0x94] sm:$0xf]
  %v7532 = vld [vmem:[%s235 + $0xa0] sm:$0xf]
  %v7533 = vld [vmem:[%s235 + $0xac] sm:$0xf]
  %v7534 = vld [vmem:[%s235 + $0xb8] sm:$0xf]
  %v7535 = vld [vmem:[%s235 + $0xc4] sm:$0xf]
  %v7536 = vld [vmem:[%s235 + $0xd0] sm:$0xf]
  %v7537 = vld [vmem:[%s7] sm:$0xf]
  %v7538 = vld [vmem:[%s7 + $0x4] sm:$0xf]
  %v7539 = vld [vmem:[%s7 + $0x8] sm:$0xf]
  %v7540 = vld [vmem:[%s7 + $0xc] sm:$0xf]
  %v7541 = vld [vmem:[%s7 + $0x10] sm:$0xf]
  %v7542 = vld [vmem:[%s7 + $0x14] sm:$0xf]
  %v7543 = vld [vmem:[%s7 + $0x18] sm:$0xf]
  %v7544 = vld [vmem:[%s7 + $0x1c] sm:$0xf]
  %v7545 = vld [vmem:[%s7 + $0x20] sm:$0xf]
  %v7546 = vld [vmem:[%s7 + $0x24] sm:$0xf]
  %v7547 = vld [vmem:[%s7 + $0x28] sm:$0xf]
  %v7548 = vld [vmem:[%s7 + $0x2c] sm:$0xf]
  %v7549 = vld [vmem:[%s7 + $0x30] sm:$0xf]
  %v7550 = vld [vmem:[%s7 + $0x34] sm:$0xf]
  %v7551 = vld [vmem:[%s7 + $0x38] sm:$0xf]
  %v7552 = vld [vmem:[%s7 + $0x3c] sm:$0xf]
  %v7569 = vunpack.c.l.b16 %v7521
  %v7570 = vunpack.c.l.b16 %v7522
  %v7571 = vunpack.c.l.b16 %v7523
  %v7572 = vunpack.c.l.b16 %v7524
  %v7573 = vunpack.c.l.b16 %v7525
  %v7574 = vunpack.c.l.b16 %v7526
  %v7575 = vunpack.c.l.b16 %v7527
  %v7576 = vunpack.c.l.b16 %v7528
  %v7577 = vunpack.c.l.b16 %v7529
  %v7578 = vunpack.c.l.b16 %v7530
  %v7579 = vunpack.c.l.b16 %v7531
  %v7580 = vunpack.c.l.b16 %v7532
  %v7581 = vunpack.c.l.b16 %v7533
  %v7582 = vunpack.c.l.b16 %v7534
  %v7583 = vunpack.c.l.b16 %v7535
  %v7584 = vunpack.c.l.b16 %v7536
  %v7585 = vpack.c.b16 %v7570, %v7569
  %v7586 = vpack.c.b16 %v7572, %v7571
  %v7587 = vpack.c.b16 %v7574, %v7573
  %v7588 = vpack.c.b16 %v7576, %v7575
  %v7589 = vpack.c.b16 %v7578, %v7577
  %v7590 = vpack.c.b16 %v7580, %v7579
  %v7591 = vpack.c.b16 %v7582, %v7581
  %v7592 = vpack.c.b16 %v7584, %v7583
  %v7617 = vunpack.c.l.b16 %v7537
  %v7618 = vunpack.c.l.b16 %v7538
  %v7619 = vunpack.c.l.b16 %v7539
  %v7620 = vunpack.c.l.b16 %v7540
  %v7621 = vunpack.c.l.b16 %v7541
  %v7622 = vunpack.c.l.b16 %v7542
  %v7623 = vunpack.c.l.b16 %v7543
  %v7624 = vunpack.c.l.b16 %v7544
  %v7625 = vunpack.c.l.b16 %v7545
  %v7626 = vunpack.c.l.b16 %v7546
  %v7627 = vunpack.c.l.b16 %v7547
  %v7628 = vunpack.c.l.b16 %v7548
  %v7629 = vunpack.c.l.b16 %v7549
  %v7630 = vunpack.c.l.b16 %v7550
  %v7631 = vunpack.c.l.b16 %v7551
  %v7632 = vunpack.c.l.b16 %v7552
  %v7633 = vpack.c.b16 %v7618, %v7617
  %v7634 = vpack.c.b16 %v7620, %v7619
  %v7635 = vpack.c.b16 %v7622, %v7621
  %v7636 = vpack.c.b16 %v7624, %v7623
  %v7637 = vpack.c.b16 %v7626, %v7625
  %v7638 = vpack.c.b16 %v7628, %v7627
  %v7639 = vpack.c.b16 %v7630, %v7629
  %v7640 = vpack.c.b16 %v7632, %v7631
  %7649 = vmatprep.subr.bf16.mxu0 0
  %7650 = vmatpush1.bf16.msra.mxu0 %v7633
  %7651 = vmatprep.subr.bf16.mxu0 0
  %7652 = vmatpush1.bf16.msra.mxu0 %v7634
  %7653 = vmatprep.subr.bf16.mxu0 0
  %7654 = vmatpush1.bf16.msra.mxu0 %v7635
  %7655 = vmatprep.subr.bf16.mxu0 0
  %7656 = vmatpush1.bf16.msra.mxu0 %v7636
  %7657 = vmatprep.subr.bf16.mxu0 0
  %7658 = vmatpush1.bf16.msra.mxu0 %v7637
  %7659 = vmatprep.subr.bf16.mxu0 0
  %7660 = vmatpush1.bf16.msra.mxu0 %v7638
  %7661 = vmatprep.subr.bf16.mxu0 0
  %7662 = vmatpush1.bf16.msra.mxu0 %v7639
  %7663 = vmatprep.subr.bf16.mxu0 0
  %7664 = vmatpush1.bf16.msra.mxu0 %v7640
  %7665 = vmatprep.subr.bf16.mxu0 0
  %7666 = vmatpush1.bf16.msra.mxu0 0
  %7667 = vmatprep.subr.bf16.mxu0 0
  %7668 = vmatpush1.bf16.msra.mxu0 0
  %7669 = vmatprep.subr.bf16.mxu0 0
  %7670 = vmatpush1.bf16.msra.mxu0 0
  %7671 = vmatprep.subr.bf16.mxu0 0
  %7672 = vmatpush1.bf16.msra.mxu0 0
  %7673 = vmatprep.subr.bf16.mxu0 0
  %7674 = vmatpush1.bf16.msra.mxu0 0
  %7675 = vmatprep.subr.bf16.mxu0 0
  %7676 = vmatpush1.bf16.msra.mxu0 0
  %7677 = vmatprep.subr.bf16.mxu0 0
  %7678 = vmatpush1.bf16.msra.mxu0 0
  %7679 = vmatprep.subr.bf16.mxu0 0
  %7680 = vmatpush1.bf16.msra.mxu0 0
  %7681 = vmatprep.mubr.bf16.mxu0 0
  %7682 = vmatmul.mubr.bf16.gmra.mrb[0].mxu0 %v7585
  %v7683 = vpop.f32.mrb[0].mxu0
  %v7684 = vadd.f32 0.0, %v7683
  %v7685 = vpop.f32.mrb[0].mxu0
  %v7686 = vpop.f32.mrb[0].mxu0
  %v7687 = vadd.f32 0.0, %v7686
  %v7688 = vpop.f32.mrb[0].mxu0
  %7689 = vmatprep.mubr.bf16.mxu0 0
  %7690 = vmatmul.mubr.bf16.gmra.mrb[0].mxu0 %v7586
  %v7691 = vpop.f32.mrb[0].mxu0
  %v7692 = vadd.f32 0.0, %v7691
  %v7693 = vpop.f32.mrb[0].mxu0
  %v7694 = vpop.f32.mrb[0].mxu0
  %v7695 = vadd.f32 0.0, %v7694
  %v7696 = vpop.f32.mrb[0].mxu0
  %7697 = vmatprep.mubr.bf16.mxu0 0
  %7698 = vmatmul.mubr.bf16.gmra.mrb[0].mxu0 %v7587
  %v7699 = vpop.f32.mrb[0].mxu0
  %v7700 = vadd.f32 0.0, %v7699
  %v7701 = vpop.f32.mrb[0].mxu0
  %v7702 = vpop.f32.mrb[0].mxu0
  %v7703 = vadd.f32 0.0, %v7702
  %v7704 = vpop.f32.mrb[0].mxu0
  %7705 = vmatprep.mubr.bf16.mxu0 0
  %7706 = vmatmul.mubr.bf16.gmra.mrb[0].mxu0 %v7588
  %v7707 = vpop.f32.mrb[0].mxu0
  %v7708 = vadd.f32 0.0, %v7707
  %v7709 = vpop.f32.mrb[0].mxu0
  %v7710 = vpop.f32.mrb[0].mxu0
  %v7711 = vadd.f32 0.0, %v7710
  %v7712 = vpop.f32.mrb[0].mxu0
  %7713 = vmatprep.mubr.bf16.mxu0 0
  %7714 = vmatmul.mubr.bf16.gmra.mrb[0].mxu0 %v7589
  %v7715 = vpop.f32.mrb[0].mxu0
  %v7716 = vadd.f32 0.0, %v7715
  %v7717 = vpop.f32.mrb[0].mxu0
  %v7718 = vpop.f32.mrb[0].mxu0
  %v7719 = vadd.f32 0.0, %v7718
  %v7720 = vpop.f32.mrb[0].mxu0
  %7721 = vmatprep.mubr.bf16.mxu0 0
  %7722 = vmatmul.mubr.bf16.gmra.mrb[0].mxu0 %v7590
  %v7723 = vpop.f32.mrb[0].mxu0
  %v7724 = vadd.f32 0.0, %v7723
  %v7725 = vpop.f32.mrb[0].mxu0
  %v7726 = vpop.f32.mrb[0].mxu0
  %v7727 = vadd.f32 0.0, %v7726
  %v7728 = vpop.f32.mrb[0].mxu0
  %7729 = vmatprep.mubr.bf16.mxu0 0
  %7730 = vmatmul.mubr.bf16.gmra.mrb[0].mxu0 %v7591
  %v7731 = vpop.f32.mrb[0].mxu0
  %v7732 = vadd.f32 0.0, %v7731
  %v7733 = vpop.f32.mrb[0].mxu0
  %v7734 = vpop.f32.mrb[0].mxu0
  %v7735 = vadd.f32 0.0, %v7734
  %v7736 = vpop.f32.mrb[0].mxu0
  %7737 = vmatprep.mubr.bf16.mxu0 0
  %7738 = vmatmul.mubr.bf16.gmra.mrb[0].mxu0 %v7592
  %v7739 = vpop.f32.mrb[0].mxu0
  %v7740 = vadd.f32 0.0, %v7739
  %v7741 = vpop.f32.mrb[0].mxu0
  %v7742 = vpop.f32.mrb[0].mxu0
  %v7743 = vadd.f32 0.0, %v7742
  %v7744 = vpop.f32.mrb[0].mxu0
  %7745 = vdwg.mxu0
  %v7746 = vld [vmem:[%s8] sm:$0x1]
  %v7747 = vld [vmem:[%s9] sm:$0x1]
  %v7748 = vadd.f32 %v7684, %v7687
  %v7749 = vadd.f32 %v7748, %v7692
  %v7750 = vadd.f32 %v7749, %v7695
  %v7751 = vadd.f32 %v7750, %v7700
  %v7752 = vadd.f32 %v7751, %v7703
  %v7753 = vadd.f32 %v7752, %v7708
  %v7754 = vadd.f32 %v7753, %v7711
  %v7755 = vadd.f32 %v7754, %v7716
  %v7756 = vadd.f32 %v7755, %v7719
  %v7757 = vadd.f32 %v7756, %v7724
  %v7758 = vadd.f32 %v7757, %v7727
  %v7759 = vadd.f32 %v7758, %v7732
  %v7760 = vadd.f32 %v7759, %v7735
  %v7761 = vadd.f32 %v7760, %v7740
  %v7762 = vadd.f32 %v7761, %v7743
  %v7763 = vrot.slane %v7762, 4
  %v7764 = vadd.f32 %v7762, %v7763
  %v7765 = vrot.slane %v7764, 2
  %v7766 = vadd.f32 %v7764, %v7765
  %v7767 = vrot.slane %v7766, 1
  %v7768 = vadd.f32 %v7766, %v7767
  %v7769 = vmul.f32 %v7768, 0.0078125
  %v7770 = vsub.f32 %v7684, %v7769
  %v7771 = vsub.f32 %v7687, %v7769
  %v7772 = vsub.f32 %v7692, %v7769
  %v7773 = vsub.f32 %v7695, %v7769
  %v7774 = vsub.f32 %v7700, %v7769
  %v7775 = vsub.f32 %v7703, %v7769
  %v7776 = vsub.f32 %v7708, %v7769
  %v7777 = vsub.f32 %v7711, %v7769
  %v7778 = vsub.f32 %v7716, %v7769
  %v7779 = vsub.f32 %v7719, %v7769
  %v7780 = vsub.f32 %v7724, %v7769
  %v7781 = vsub.f32 %v7727, %v7769
  %v7782 = vsub.f32 %v7732, %v7769
  %v7783 = vsub.f32 %v7735, %v7769
  %v7784 = vsub.f32 %v7740, %v7769
  %v7785 = vsub.f32 %v7743, %v7769
  %v7786 = vmul.f32 %v7770, %v7770
  %v7787 = vmul.f32 %v7771, %v7771
  %v7788 = vmul.f32 %v7772, %v7772
  %v7789 = vmul.f32 %v7773, %v7773
  %v7790 = vmul.f32 %v7774, %v7774
  %v7791 = vmul.f32 %v7775, %v7775
  %v7792 = vmul.f32 %v7776, %v7776
  %v7793 = vmul.f32 %v7777, %v7777
  %v7794 = vmul.f32 %v7778, %v7778
  %v7795 = vmul.f32 %v7779, %v7779
  %v7796 = vmul.f32 %v7780, %v7780
  %v7797 = vmul.f32 %v7781, %v7781
  %v7798 = vmul.f32 %v7782, %v7782
  %v7799 = vmul.f32 %v7783, %v7783
  %v7800 = vmul.f32 %v7784, %v7784
  %v7801 = vmul.f32 %v7785, %v7785
  %v7802 = vadd.f32 %v7786, %v7787
  %v7803 = vadd.f32 %v7802, %v7788
  %v7804 = vadd.f32 %v7803, %v7789
  %v7805 = vadd.f32 %v7804, %v7790
  %v7806 = vadd.f32 %v7805, %v7791
  %v7807 = vadd.f32 %v7806, %v7792
  %v7808 = vadd.f32 %v7807, %v7793
  %v7809 = vadd.f32 %v7808, %v7794
  %v7810 = vadd.f32 %v7809, %v7795
  %v7811 = vadd.f32 %v7810, %v7796
  %v7812 = vadd.f32 %v7811, %v7797
  %v7813 = vadd.f32 %v7812, %v7798
  %v7814 = vadd.f32 %v7813, %v7799
  %v7815 = vadd.f32 %v7814, %v7800
  %v7816 = vadd.f32 %v7815, %v7801
  %v7817 = vrot.slane %v7816, 4
  %v7818 = vadd.f32 %v7816, %v7817
  %v7819 = vrot.slane %v7818, 2
  %v7820 = vadd.f32 %v7818, %v7819
  %v7821 = vrot.slane %v7820, 1
  %v7822 = vadd.f32 %v7820, %v7821
  %v7823 = vmul.f32 %v7822, 0.0078125
  %v7824 = vadd.f32 %v7823, 1e-05
  %v7825 = vrsqrt.pop %v7824
  %v7826 = vmul.f32 %v7825, %v7746
  %v7827 = vlaneseq
  %v7828 = vshrl.u32 %v7827, 7
  %v7829 = vsub.s32 0, %v7828
  %v7830 = vrot.slane %v7826, %v7829
  %v7831 = vmul.f32 %v7770, %v7830
  %v7832 = vmul.f32 %v7771, %v7830
  %v7833 = vmul.f32 %v7772, %v7830
  %v7834 = vmul.f32 %v7773, %v7830
  %v7835 = vmul.f32 %v7774, %v7830
  %v7836 = vmul.f32 %v7775, %v7830
  %v7837 = vmul.f32 %v7776, %v7830
  %v7838 = vmul.f32 %v7777, %v7830
  %v7839 = vmul.f32 %v7778, %v7830
  %v7840 = vmul.f32 %v7779, %v7830
  %v7841 = vmul.f32 %v7780, %v7830
  %v7842 = vmul.f32 %v7781, %v7830
  %v7843 = vmul.f32 %v7782, %v7830
  %v7844 = vmul.f32 %v7783, %v7830
  %v7845 = vmul.f32 %v7784, %v7830
  %v7846 = vmul.f32 %v7785, %v7830
  %v7848 = vlaneseq
  %v7849 = vshrl.u32 %v7848, 7
  %v7850 = vsub.s32 0, %v7849
  %v7851 = vrot.slane %v7747, %v7850
  %v7853 = vadd.f32 %v7831, %v7851
  %v7854 = vadd.f32 %v7832, %v7851
  %v7855 = vadd.f32 %v7833, %v7851
  %v7856 = vadd.f32 %v7834, %v7851
  %v7857 = vadd.f32 %v7835, %v7851
  %v7858 = vadd.f32 %v7836, %v7851
  %v7859 = vadd.f32 %v7837, %v7851
  %v7860 = vadd.f32 %v7838, %v7851
  %v7861 = vadd.f32 %v7839, %v7851
  %v7862 = vadd.f32 %v7840, %v7851
  %v7863 = vadd.f32 %v7841, %v7851
  %v7864 = vadd.f32 %v7842, %v7851
  %v7865 = vadd.f32 %v7843, %v7851
  %v7866 = vadd.f32 %v7844, %v7851
  %v7867 = vadd.f32 %v7845, %v7851
  %v7868 = vadd.f32 %v7846, %v7851
  %v7869 = vadd.f32 %v7505, %v7853
  %v7870 = vadd.f32 %v7506, %v7854
  %v7871 = vadd.f32 %v7507, %v7855
  %v7872 = vadd.f32 %v7508, %v7856
  %v7873 = vadd.f32 %v7509, %v7857
  %v7874 = vadd.f32 %v7510, %v7858
  %v7875 = vadd.f32 %v7511, %v7859
  %v7876 = vadd.f32 %v7512, %v7860
  %v7877 = vadd.f32 %v7513, %v7861
  %v7878 = vadd.f32 %v7514, %v7862
  %v7879 = vadd.f32 %v7515, %v7863
  %v7880 = vadd.f32 %v7516, %v7864
  %v7881 = vadd.f32 %v7517, %v7865
  %v7882 = vadd.f32 %v7518, %v7866
  %v7883 = vadd.f32 %v7519, %v7867
  %v7884 = vadd.f32 %v7520, %v7868
  %7885 = vst [vmem:[%s10] sm:$0xff] %v7869
  %7886 = vst [vmem:[%s10 + $0x8] sm:$0xff] %v7870
  %7887 = vst [vmem:[%s10 + $0x10] sm:$0xff] %v7871
  %7888 = vst [vmem:[%s10 + $0x18] sm:$0xff] %v7872
  %7889 = vst [vmem:[%s10 + $0x20] sm:$0xff] %v7873
  %7890 = vst [vmem:[%s10 + $0x28] sm:$0xff] %v7874
  %7891 = vst [vmem:[%s10 + $0x30] sm:$0xff] %v7875
  %7892 = vst [vmem:[%s10 + $0x38] sm:$0xff] %v7876
  %7893 = vst [vmem:[%s10 + $0x40] sm:$0xff] %v7877
  %7894 = vst [vmem:[%s10 + $0x48] sm:$0xff] %v7878
  %7895 = vst [vmem:[%s10 + $0x50] sm:$0xff] %v7879
  %7896 = vst [vmem:[%s10 + $0x58] sm:$0xff] %v7880
  %7897 = vst [vmem:[%s10 + $0x60] sm:$0xff] %v7881
  %7898 = vst [vmem:[%s10 + $0x68] sm:$0xff] %v7882
  %7899 = vst [vmem:[%s10 + $0x70] sm:$0xff] %v7883
  %7900 = vst [vmem:[%s10 + $0x78] sm:$0xff] %v7884
  // Predicated region
  $region42: #{down_forward.1} parent=0 // pred_check
    _
  $region43: #{down_forward.1} parent=0 // pred_check_branch
    %7902 = sbr.rel (0) target = $region45
  $region44: #{down_forward.1} parent=0 // pred_region
    _
  $region45: #{down_forward.1} parent=0 // pred_fallthru
    _
  // Predicated region
  $region46: #{down_forward.1} parent=0 // pred_check
    _
  $region47: #{down_forward.1} parent=0 // pred_check_branch
    %7904 = sbr.rel (0) target = $region49
  $region48: #{down_forward.1} parent=0 // pred_region
    _
  $region49: #{down_forward.1} parent=0 // pred_fallthru
    _

</llo_original>
